<compile_context>
chip_gen: v7x
topology: tpu7x:2x2x1
jax: 0.10.0
libtpu: 0.0.40
codegen_flags: <defaults>
</compile_context>

<pallas_src>
import functools

import jax
import jax.numpy as jnp
from jax import lax
from jax.experimental import pallas as pl
from jax.experimental.pallas import tpu as pltpu


def _ln(x, g, b, eps=1e-5):
    # nn.LayerNorm over the last axis (biased variance, eps=1e-5), f32 math.
    mu = jnp.mean(x, axis=-1, keepdims=True)
    var = jnp.mean((x - mu) ** 2, axis=-1, keepdims=True)
    return (x - mu) * lax.rsqrt(var + eps) * g + b


# ---------------------------------------------------------------------------
# Fused multi-layer mutual-attention kernel.
# grid = (num_layers, direction); activations persist in the output refs.
# ---------------------------------------------------------------------------
def _mma_stack_kernel(num_heads, H, T,
                      head0_ref, tail0_ref, kbias_tail_ref, kbias_head_ref,
                      wq_ref, bq_ref, wk_ref, bk_ref, wv_ref, bv_ref,
                      wo_ref, bo_ref, g1_ref, be1_ref,
                      w1_ref, b1_ref, w2_ref, b2_ref, g2_ref, be2_ref,
                      fnorm_ref,
                      head_out_ref, tail_out_ref,
                      pending_head_ref):
    layer = pl.program_id(0)
    direction = pl.program_id(1)        # 0: head attends tail, 1: tail attends head
    num_layers = pl.num_programs(0)

    @pl.when(jnp.logical_and(layer == 0, direction == 0))
    def _init():
        head_out_ref[...] = head0_ref[...]
        tail_out_ref[...] = tail0_ref[...]

    def encoder(tgt, src, kbias, Lq, Lk):
        """One EncoderLayer. tgt:(NR*Lq,E) src:(NR*Lk,E) kbias:(NR,Lk) additive."""
        Sq, E = tgt.shape
        NR = Sq // Lq
        hd = E // num_heads
        bf = jnp.bfloat16
        tgt_bf = tgt.astype(bf)
        src_bf = src.astype(bf)
        # key-padding bias, hoisted out of the head loop (broadcast once)
        bias = jnp.broadcast_to(kbias.reshape(NR, 1, Lk), (NR, Lq, Lk))

        acc = jnp.zeros((Sq, E), jnp.float32)
        for h in range(num_heads):  # static unroll; per-head weights via leading index
            qh = jnp.dot(tgt_bf, wq_ref[0, 0, h],
                         preferred_element_type=jnp.float32) + bq_ref[0, 0, h]
            kh = jnp.dot(src_bf, wk_ref[0, 0, h],
                         preferred_element_type=jnp.float32) + bk_ref[0, 0, h]
            vh = jnp.dot(src_bf, wv_ref[0, 0, h],
                         preferred_element_type=jnp.float32) + bv_ref[0, 0, h]
            q3 = qh.reshape(NR, Lq, hd).astype(bf)      # 1/sqrt(hd) pre-folded in wq
            k3 = kh.reshape(NR, Lk, hd).astype(bf)
            v3 = vh.reshape(NR, Lk, hd).astype(bf)
            # NR-batched scores: no O(NR^2) block-diagonal waste.
            s = jnp.einsum('bqd,bkd->bqk', q3, k3,
                           preferred_element_type=jnp.float32) + bias
            m = jnp.max(s, axis=-1, keepdims=True)      # softmax stats in f32
            p = jnp.exp(s - m)
            denom = jnp.sum(p, axis=-1, keepdims=True)
            ctx = jnp.einsum('bqk,bkd->bqd', p.astype(bf), v3,
                             preferred_element_type=jnp.float32)
            ctx = ctx * pl.reciprocal(denom, approx=True)   # EUP, off the VALU
            # fold this head's slice of the output projection (no concat)
            acc = acc + jnp.dot(ctx.reshape(Sq, hd).astype(bf), wo_ref[0, 0, h],
                                preferred_element_type=jnp.float32)
        attn = acc + bo_ref[0, 0]

        # residual + norm1  (dropout1 identity in eval)
        x = _ln(tgt + attn, g1_ref[0, 0], be1_ref[0, 0])

        # feed-forward: linear1 -> relu -> linear2  (dropout identity in eval)
        h1 = jnp.maximum(
            jnp.dot(x.astype(bf), w1_ref[0, 0],
                    preferred_element_type=jnp.float32) + b1_ref[0, 0], 0.0)
        ff = jnp.dot(h1.astype(bf), w2_ref[0, 0],
                     preferred_element_type=jnp.float32) + b2_ref[0, 0]

        # residual + norm2  (dropout2 identity in eval)
        return _ln(x + ff, g2_ref[0, 0], be2_ref[0, 0])

    # Both directions consume the PREVIOUS layer's activations (mutual attend);
    # head_out_ref / tail_out_ref still hold them until direction==1 commits.
    h_prev = head_out_ref[...]
    t_prev = tail_out_ref[...]

    @pl.when(direction == 0)     # head attends tail (direction-0 weights streamed)
    def _head_dir():
        pending_head_ref[...] = encoder(h_prev, t_prev, kbias_tail_ref[...], H, T)

    @pl.when(direction == 1)     # tail attends head (direction-1 weights streamed)
    def _tail_dir():
        new_tail = encoder(t_prev, h_prev, kbias_head_ref[...], T, H)
        head_out_ref[...] = pending_head_ref[...]
        tail_out_ref[...] = new_tail

        @pl.when(layer == num_layers - 1)
        def _finalize():
            fn = fnorm_ref[...]                          # (4, E)
            head_out_ref[...] = _ln(pending_head_ref[...], fn[0:1, :], fn[1:2, :])
            tail_out_ref[...] = _ln(new_tail, fn[2:3, :], fn[3:4, :])


def _pick_vmem_limit():
    # Scale the scoped-VMEM request to the part: v5e/v6e 128 MiB, v7x 64 MiB.
    try:
        cap = pltpu.get_tpu_info().vmem_capacity_bytes
    except Exception:
        cap = 64 * 1024 * 1024
    return int(min(cap * 3 // 4, 96 * 1024 * 1024))


def _cost_estimate(num_layers, NR, H, T, E, FF, num_heads):
    def enc(Lq, Lk):
        Sq, Sk = NR * Lq, NR * Lk
        proj = 2 * Sq * E * E + 4 * Sk * E * E
        attn = 4 * NR * Lq * Lk * E + 2 * Sq * E * E
        ffn = 4 * Sq * E * FF
        norms = 10 * Sq * E
        return proj + attn + ffn + norms

    flops = num_layers * (enc(H, T) + enc(T, H))
    transcendentals = num_layers * num_heads * NR * 2 * H * T
    weight_bytes = num_layers * 2 * (2 * (4 * E * E + 2 * E * FF)   # bf16 matmul weights
                                     + 4 * (8 * E + FF))            # f32 biases / gains
    io_bytes = 4 * (3 * NR * (H + T) * E + NR * (H + T) + 4 * E)
    return pl.CostEstimate(flops=int(flops),
                           transcendentals=int(transcendentals),
                           bytes_accessed=int(weight_bytes + io_bytes))


# ---------------------------------------------------------------------------
# Parameter initialization (deterministic, synthetic, canonical f32 layout).
# Linear weights are stored as (in_features, out_features):  y = x @ W + b.
# (A PyTorch state_dict would need a transpose before use.)
# ---------------------------------------------------------------------------
def init_multi_layer_mma_params(key, num_layers, E, FF):
    ks = jax.random.split(key, 6)
    s = 0.05
    L2 = (num_layers, 2)   # (layer, direction): 0=head_attend_tail, 1=tail_attend_head
    return {
        "wq": jax.random.normal(ks[0], L2 + (E, E), jnp.float32) * s,
        "wk": jax.random.normal(ks[1], L2 + (E, E), jnp.float32) * s,
        "wv": jax.random.normal(ks[2], L2 + (E, E), jnp.float32) * s,
        "wo": jax.random.normal(ks[3], L2 + (E, E), jnp.float32) * s,
        "bq": jnp.zeros(L2 + (1, E), jnp.float32),
        "bk": jnp.zeros(L2 + (1, E), jnp.float32),
        "bv": jnp.zeros(L2 + (1, E), jnp.float32),
        "bo": jnp.zeros(L2 + (1, E), jnp.float32),
        "g1": jnp.ones(L2 + (1, E), jnp.float32),
        "be1": jnp.zeros(L2 + (1, E), jnp.float32),
        "w1": jax.random.normal(ks[4], L2 + (E, FF), jnp.float32) * s,
        "b1": jnp.zeros(L2 + (1, FF), jnp.float32),
        "w2": jax.random.normal(ks[5], L2 + (FF, E), jnp.float32) * s,
        "b2": jnp.zeros(L2 + (1, E), jnp.float32),
        "g2": jnp.ones(L2 + (1, E), jnp.float32),
        "be2": jnp.zeros(L2 + (1, E), jnp.float32),
        # rows: [head_norm.gamma, head_norm.beta, tail_norm.gamma, tail_norm.beta]
        "final_norms": jnp.concatenate(
            [jnp.ones((1, E)), jnp.zeros((1, E)),
             jnp.ones((1, E)), jnp.zeros((1, E))], axis=0).astype(jnp.float32),
    }


# ---------------------------------------------------------------------------
# Host-side restack into the kernel layout: per-head weight slabs, bf16 matmul
# operands, 1/sqrt(hd) folded into the query projection.
# ---------------------------------------------------------------------------
def _prepare_kernel_weights(params, num_heads):
    L = params["wq"].shape[0]
    E = params["wq"].shape[2]
    hd = E // num_heads
    scale = 1.0 / float(hd) ** 0.5
    bf, f32 = jnp.bfloat16, jnp.float32

    def heads_out(w):   # (L,2,E,E) -> (L,2,nH,E,hd): split OUTPUT features by head
        return w.reshape(L, 2, E, num_heads, hd).transpose(0, 1, 3, 2, 4)

    def heads_bias(b):  # (L,2,1,E) -> (L,2,nH,1,hd)
        return b.reshape(L, 2, 1, num_heads, hd).transpose(0, 1, 3, 2, 4)

    def heads_in(w):    # (L,2,E,E) -> (L,2,nH,hd,E): split INPUT features by head
        return w.reshape(L, 2, num_heads, hd, E)

    return {
        "wq": (heads_out(params["wq"]) * scale).astype(bf),
        "bq": (heads_bias(params["bq"]) * scale).astype(f32),
        "wk": heads_out(params["wk"]).astype(bf),
        "bk": heads_bias(params["bk"]).astype(f32),
        "wv": heads_out(params["wv"]).astype(bf),
        "bv": heads_bias(params["bv"]).astype(f32),
        "wo": heads_in(params["wo"]).astype(bf),
        "bo": params["bo"].astype(f32),
        "g1": params["g1"].astype(f32), "be1": params["be1"].astype(f32),
        "w1": params["w1"].astype(bf), "b1": params["b1"].astype(f32),
        "w2": params["w2"].astype(bf), "b2": params["b2"].astype(f32),
        "g2": params["g2"].astype(f32), "be2": params["be2"].astype(f32),
    }


# ---------------------------------------------------------------------------
# MultiLayerMMA forward — single fused pallas_call + JAX glue for the
# return_repeat epilogue.
# ---------------------------------------------------------------------------
def multi_layer_mma_forward(params, head_emb, tail_emb, ht_pair_pos,
                            head_mask, tail_mask, NRHET, num_heads,
                            return_repeat=True):
    N, R, H, E, T = NRHET
    NR = N * R
    num_layers = params["wq"].shape[0]
    FF = params["w1"].shape[-1]
    SH, ST = NR * H, NR * T

    kw = _prepare_kernel_weights(params, num_heads)

    head0 = head_emb.reshape(SH, E).astype(jnp.float32)
    tail0 = tail_emb.reshape(ST, E).astype(jnp.float32)

    # Small additive key-padding biases (0 for a real mention, -1e30 for padding).
    # NOTE: like PyTorch, assumes every query row has >= 1 valid key; a fully
    # masked row would give a finite uniform distribution instead of NaN.
    neg = jnp.float32(-1e30)
    kbias_tail = jnp.where(tail_mask.reshape(NR, T) > 0.5, 0.0, neg).astype(jnp.float32)
    kbias_head = jnp.where(head_mask.reshape(NR, H) > 0.5, 0.0, neg).astype(jnp.float32)

    def const_spec(shape):
        nd = len(shape)
        return pl.BlockSpec(shape, lambda l, d, _nd=nd: (0,) * _nd)

    def weight_spec(arr):
        block = (1, 1) + tuple(arr.shape[2:])
        nrest = arr.ndim - 2
        return pl.BlockSpec(block, lambda l, d, _n=nrest: (l, d) + (0,) * _n)

    weight_names = ["wq", "bq", "wk", "bk", "wv", "bv", "wo", "bo",
                    "g1", "be1", "w1", "b1", "w2", "b2", "g2", "be2"]
    weight_args = [kw[n] for n in weight_names]

    in_specs = ([const_spec((SH, E)), const_spec((ST, E)),
                 const_spec((NR, T)), const_spec((NR, H))]
                + [weight_spec(a) for a in weight_args]
                + [const_spec(params["final_norms"].shape)])

    out_specs = (pl.BlockSpec((SH, E), lambda l, d: (0, 0)),
                 pl.BlockSpec((ST, E), lambda l, d: (0, 0)))
    out_shape = (jax.ShapeDtypeStruct((SH, E), jnp.float32),
                 jax.ShapeDtypeStruct((ST, E), jnp.float32))

    kernel = functools.partial(_mma_stack_kernel, num_heads, H, T)

    head_out, tail_out = pl.pallas_call(
        kernel,
        out_shape=out_shape,
        grid=(num_layers, 2),
        in_specs=in_specs,
        out_specs=out_specs,
        scratch_shapes=[pltpu.VMEM((SH, E), jnp.float32)],   # pending head (dir0 -> dir1)
        compiler_params=pltpu.CompilerParams(
            dimension_semantics=("arbitrary", "arbitrary"),  # layers/dirs sequential
            vmem_limit_bytes=_pick_vmem_limit()),
        cost_estimate=_cost_estimate(num_layers, NR, H, T, E, FF, num_heads),
    )(head0, tail0, kbias_tail, kbias_head, *weight_args, params["final_norms"])

    attended_head = head_out.reshape(NR, H, E)
    attended_tail = tail_out.reshape(NR, T, E)
    # residual=False (module default): no gated residual branch.

    if not return_repeat:
        return attended_head, attended_tail

    # .repeat(1,1,T).view(NR, H*T, E): head[nr, h*T + t] = head[nr, h]
    attended_head = jnp.repeat(attended_head, T, axis=1)        # (NR, H*T, E)
    # .repeat(1, H, 1): tail[nr, h*T + t] = tail[nr, t]
    attended_tail = jnp.tile(attended_tail, (1, H, 1))          # (NR, H*T, E)
    assert attended_head.shape == attended_tail.shape
    assert attended_head.shape[1] == ht_pair_pos.shape[2]
    return attended_head, attended_tail


# ---------------------------------------------------------------------------
# Pure-JAX reference (same math; matmul operand dtype configurable so the
# kernel's bf16 MXU path can be checked tightly).
# ---------------------------------------------------------------------------
def multi_layer_mma_reference(params, head_emb, tail_emb, head_mask, tail_mask,
                              NRHET, num_heads, matmul_dtype=jnp.float32):
    N, R, H, E, T = NRHET
    NR = N * R
    num_layers = params["wq"].shape[0]
    hd = E // num_heads
    scale = 1.0 / (hd ** 0.5)

    def mm(eq, a, b):
        return jnp.einsum(eq, a.astype(matmul_dtype), b.astype(matmul_dtype),
                          preferred_element_type=jnp.float32)

    def ln(x, g, b):
        mu = x.mean(-1, keepdims=True)
        var = ((x - mu) ** 2).mean(-1, keepdims=True)
        return (x - mu) / jnp.sqrt(var + 1e-5) * g + b

    def encoder(tgt, src, key_valid, l, d):
        def get(n):
            return params[n][l, d]
        q = mm("ble,ef->blf", tgt, get("wq")) + get("bq")[0]
        k = mm("ble,ef->blf", src, get("wk")) + get("bk")[0]
        v = mm("ble,ef->blf", src, get("wv")) + get("bv")[0]
        B, Lq, _ = q.shape
        Lk = k.shape[1]
        qh = q.reshape(B, Lq, num_heads, hd)
        kh = k.reshape(B, Lk, num_heads, hd)
        vh = v.reshape(B, Lk, num_heads, hd)
        s = mm("bqhd,bkhd->bhqk", qh, kh) * scale
        s = jnp.where(key_valid[:, None, None, :], s, -1e30)
        p = jax.nn.softmax(s, axis=-1)
        ctx = mm("bhqk,bkhd->bqhd", p, vh).reshape(B, Lq, E)
        attn = mm("ble,ef->blf", ctx, get("wo")) + get("bo")[0]
        x = ln(tgt + attn, get("g1")[0], get("be1")[0])
        h1 = jax.nn.relu(mm("ble,ef->blf", x, get("w1")) + get("b1")[0])
        ff = mm("blf,fe->ble", h1, get("w2")) + get("b2")[0]
        return ln(x + ff, get("g2")[0], get("be2")[0])

    head_valid = head_mask.reshape(NR, H) > 0.5
    tail_valid = tail_mask.reshape(NR, T) > 0.5
    ah, at = head_emb, tail_emb
    for l in range(num_layers):
        nh_ = encoder(ah, at, tail_valid, l, 0)
        nt_ = encoder(at, ah, head_valid, l, 1)
        ah, at = nh_, nt_
    fn = params["final_norms"]
    ah = ln(ah, fn[0], fn[1])
    at = ln(at, fn[2], fn[3])
    return ah, at


if __name__ == "__main__":
    # Small shapes implied by the forward pass
    N, R, H, E, T = 2, 2, 8, 32, 8
    num_heads = 4
    num_layers = 2
    dim_feedforward = 64
    NR = N * R
    NRHET = (N, R, H, E, T)

    key = jax.random.PRNGKey(0)
    k_params, k_head, k_tail = jax.random.split(key, 3)

    params = init_multi_layer_mma_params(k_params, num_layers, E, dim_feedforward)

    head_emb = jax.random.normal(k_head, (NR, H, E), jnp.float32)
    tail_emb = jax.random.normal(k_tail, (NR, T, E), jnp.float32)
    ht_pair_pos = jnp.zeros((N, R, H * T), jnp.int32)

    # mention masks: 1 = real mention, 0 = padding (>=1 valid per row)
    head_lens = jnp.array([8, 5, 3, 1], dtype=jnp.int32)
    tail_lens = jnp.array([8, 4, 6, 2], dtype=jnp.int32)
    head_mask = (jnp.arange(H)[None, :] < head_lens[:, None]).astype(jnp.float32)
    tail_mask = (jnp.arange(T)[None, :] < tail_lens[:, None]).astype(jnp.float32)

    att_head, att_tail = multi_layer_mma_forward(
        params, head_emb, tail_emb, ht_pair_pos,
        head_mask, tail_mask, NRHET, num_heads, return_repeat=True)
    jax.block_until_ready((att_head, att_tail))

    assert att_head.shape == (NR, H * T, E)
    assert att_tail.shape == (NR, H * T, E)
    assert bool(jnp.all(jnp.isfinite(att_head)))
    assert bool(jnp.all(jnp.isfinite(att_tail)))

    # Correctness check against a pure-JAX reference that mirrors the kernel's
    # bf16 matmul operands (softmax/LN in f32). Residual diff: approx
    # reciprocal + folded q-scale rounding + accumulation order.
    ref_head, ref_tail = multi_layer_mma_reference(
        params, head_emb, tail_emb, head_mask, tail_mask, NRHET, num_heads,
        matmul_dtype=jnp.bfloat16)
    ref_head = jnp.repeat(ref_head, T, axis=1)
    ref_tail = jnp.tile(ref_tail, (1, H, 1))
    err_h = float(jnp.max(jnp.abs(att_head - ref_head)))
    err_t = float(jnp.max(jnp.abs(att_tail - ref_tail)))
    assert err_h < 4e-2 and err_t < 4e-2, (err_h, err_t)

    print("KERNEL_OK")
</pallas_src>

<mosaic_0001>
module attributes {stable_mosaic.version = 11 : i64} {
  func.func @_mma_stack_kernel(%arg0: i32, %arg1: i32, %arg2: memref<32x32xf32, #tpu.memory_space<vmem>>, %arg3: memref<32x32xf32, #tpu.memory_space<vmem>>, %arg4: memref<4x8xf32, #tpu.memory_space<vmem>>, %arg5: memref<4x8xf32, #tpu.memory_space<vmem>>, %arg6: memref<1x1x4x32x8xbf16, #tpu.memory_space<vmem>>, %arg7: memref<1x1x4x1x8xf32, #tpu.memory_space<vmem>>, %arg8: memref<1x1x4x32x8xbf16, #tpu.memory_space<vmem>>, %arg9: memref<1x1x4x1x8xf32, #tpu.memory_space<vmem>>, %arg10: memref<1x1x4x32x8xbf16, #tpu.memory_space<vmem>>, %arg11: memref<1x1x4x1x8xf32, #tpu.memory_space<vmem>>, %arg12: memref<1x1x4x8x32xbf16, #tpu.memory_space<vmem>>, %arg13: memref<1x1x1x32xf32, #tpu.memory_space<vmem>>, %arg14: memref<1x1x1x32xf32, #tpu.memory_space<vmem>>, %arg15: memref<1x1x1x32xf32, #tpu.memory_space<vmem>>, %arg16: memref<1x1x32x64xbf16, #tpu.memory_space<vmem>>, %arg17: memref<1x1x1x64xf32, #tpu.memory_space<vmem>>, %arg18: memref<1x1x64x32xbf16, #tpu.memory_space<vmem>>, %arg19: memref<1x1x1x32xf32, #tpu.memory_space<vmem>>, %arg20: memref<1x1x1x32xf32, #tpu.memory_space<vmem>>, %arg21: memref<1x1x1x32xf32, #tpu.memory_space<vmem>>, %arg22: memref<4x32xf32, #tpu.memory_space<vmem>>, %arg23: memref<32x32xf32, #tpu.memory_space<vmem>>, %arg24: memref<32x32xf32, #tpu.memory_space<vmem>>, %arg25: memref<32x32xf32, #tpu.memory_space<vmem>>) attributes {dimension_semantics = [#tpu.dimension_semantics<arbitrary>, #tpu.dimension_semantics<arbitrary>], iteration_bounds = array<i64: 2, 2>, scalar_prefetch = 0 : i64, scratch_operands = 1 : i64, tpu.core_type = #tpu.core_type<tc>, window_params = [{pipeline_mode = #tpu.pipeline_mode<synchronous>, transform_indices = @transform_0, window_bounds = array<i64: 32, 32>}, {pipeline_mode = #tpu.pipeline_mode<synchronous>, transform_indices = @transform_1, window_bounds = array<i64: 32, 32>}, {pipeline_mode = #tpu.pipeline_mode<synchronous>, transform_indices = @transform_2, window_bounds = array<i64: 4, 8>}, {pipeline_mode = #tpu.pipeline_mode<synchronous>, transform_indices = @transform_3, window_bounds = array<i64: 4, 8>}, {transform_indices = @transform_4, window_bounds = array<i64: 1, 1, 4, 32, 8>}, {transform_indices = @transform_5, window_bounds = array<i64: 1, 1, 4, 1, 8>}, {transform_indices = @transform_6, window_bounds = array<i64: 1, 1, 4, 32, 8>}, {transform_indices = @transform_7, window_bounds = array<i64: 1, 1, 4, 1, 8>}, {transform_indices = @transform_8, window_bounds = array<i64: 1, 1, 4, 32, 8>}, {transform_indices = @transform_9, window_bounds = array<i64: 1, 1, 4, 1, 8>}, {transform_indices = @transform_10, window_bounds = array<i64: 1, 1, 4, 8, 32>}, {transform_indices = @transform_11, window_bounds = array<i64: 1, 1, 1, 32>}, {transform_indices = @transform_12, window_bounds = array<i64: 1, 1, 1, 32>}, {transform_indices = @transform_13, window_bounds = array<i64: 1, 1, 1, 32>}, {transform_indices = @transform_14, window_bounds = array<i64: 1, 1, 32, 64>}, {transform_indices = @transform_15, window_bounds = array<i64: 1, 1, 1, 64>}, {transform_indices = @transform_16, window_bounds = array<i64: 1, 1, 64, 32>}, {transform_indices = @transform_17, window_bounds = array<i64: 1, 1, 1, 32>}, {transform_indices = @transform_18, window_bounds = array<i64: 1, 1, 1, 32>}, {transform_indices = @transform_19, window_bounds = array<i64: 1, 1, 1, 32>}, {pipeline_mode = #tpu.pipeline_mode<synchronous>, transform_indices = @transform_20, window_bounds = array<i64: 4, 32>}, {pipeline_mode = #tpu.pipeline_mode<synchronous>, transform_indices = @transform_21, window_bounds = array<i64: 32, 32>}, {pipeline_mode = #tpu.pipeline_mode<synchronous>, transform_indices = @transform_22, window_bounds = array<i64: 32, 32>}]} {
    %c0_i32 = arith.constant 0 : i32
    %0 = arith.cmpi eq, %arg0, %c0_i32 : i32
    %c0_i32_0 = arith.constant 0 : i32
    %1 = arith.cmpi eq, %arg1, %c0_i32_0 : i32
    %2 = arith.andi %0, %1 : i1
    %3 = arith.extui %2 : i1 to i32
    %c0_i32_1 = arith.constant 0 : i32
    %4 = arith.cmpi ne, %3, %c0_i32_1 : i32
    scf.if %4 {
      %c0_8 = arith.constant 0 : index
      %c0_9 = arith.constant 0 : index
      %13 = vector.load %arg2[%c0_8, %c0_9] : memref<32x32xf32, #tpu.memory_space<vmem>>, vector<32x32xf32>
      %c0_10 = arith.constant 0 : index
      %c0_11 = arith.constant 0 : index
      %14 = vector.load %arg23[%c0_10, %c0_11] : memref<32x32xf32, #tpu.memory_space<vmem>>, vector<32x32xf32>
      tpu.vector_store %arg23[%c0_10, %c0_11], %13 {strides = array<i32>} : memref<32x32xf32, #tpu.memory_space<vmem>>, vector<32x32xf32>,
      %c0_12 = arith.constant 0 : index
      %c0_13 = arith.constant 0 : index
      %15 = vector.load %arg3[%c0_12, %c0_13] : memref<32x32xf32, #tpu.memory_space<vmem>>, vector<32x32xf32>
      %c0_14 = arith.constant 0 : index
      %c0_15 = arith.constant 0 : index
      %16 = vector.load %arg24[%c0_14, %c0_15] : memref<32x32xf32, #tpu.memory_space<vmem>>, vector<32x32xf32>
      tpu.vector_store %arg24[%c0_14, %c0_15], %15 {strides = array<i32>} : memref<32x32xf32, #tpu.memory_space<vmem>>, vector<32x32xf32>,
    } else {
    }
    %c0 = arith.constant 0 : index
    %c0_2 = arith.constant 0 : index
    %5 = vector.load %arg23[%c0, %c0_2] : memref<32x32xf32, #tpu.memory_space<vmem>>, vector<32x32xf32>
    %c0_3 = arith.constant 0 : index
    %c0_4 = arith.constant 0 : index
    %6 = vector.load %arg24[%c0_3, %c0_4] : memref<32x32xf32, #tpu.memory_space<vmem>>, vector<32x32xf32>
    %c0_i32_5 = arith.constant 0 : i32
    %7 = arith.cmpi eq, %arg1, %c0_i32_5 : i32
    %8 = arith.extui %7 : i1 to i32
    %c0_i32_6 = arith.constant 0 : i32
    %9 = arith.cmpi ne, %8, %c0_i32_6 : i32
    scf.if %9 {
      %c0_8 = arith.constant 0 : index
      %c0_9 = arith.constant 0 : index
      %13 = vector.load %arg4[%c0_8, %c0_9] : memref<4x8xf32, #tpu.memory_space<vmem>>, vector<4x8xf32>
      %14 = arith.truncf %5 : vector<32x32xf32> to vector<32x32xbf16>
      %15 = arith.truncf %6 : vector<32x32xf32> to vector<32x32xbf16>
      %16 = vector.shape_cast %13 : vector<4x8xf32> to vector<4x1x8xf32>
      %17 = vector.shape_cast %16 : vector<4x1x8xf32> to vector<4x1x8xf32>
      %18 = vector.broadcast %17 : vector<4x1x8xf32> to vector<4x8x8xf32>
      %cst = arith.constant 0.000000e+00 : f32
      %19 = vector.broadcast %cst : f32 to vector<32x32xf32>
      %c0_10 = arith.constant 0 : index
      %c0_11 = arith.constant 0 : index
      %c0_12 = arith.constant 0 : index
      %c0_13 = arith.constant 0 : index
      %c0_14 = arith.constant 0 : index
      %20 = vector.load %arg6[%c0_10, %c0_11, %c0_12, %c0_13, %c0_14] : memref<1x1x4x32x8xbf16, #tpu.memory_space<vmem>>, vector<1x1x1x32x8xbf16>
      %21 = vector.shape_cast %20 : vector<1x1x1x32x8xbf16> to vector<32x8xbf16>
      %cst_15 = arith.constant dense<0.000000e+00> : vector<32x8xf32>
      %22 = tpu.matmul %14, %21, %cst_15 {dimension_numbers = #tpu.dot_dimension_numbers<[1], [0], [0], [1], [0, 0, 1, 1], [], []>} : vector<32x32xbf16>, vector<32x8xbf16>, vector<32x8xf32> -> vector<32x8xf32>
      %c0_16 = arith.constant 0 : index
      %c0_17 = arith.constant 0 : index
      %c0_18 = arith.constant 0 : index
      %c0_19 = arith.constant 0 : index
      %c0_20 = arith.constant 0 : index
      %23 = vector.load %arg7[%c0_16, %c0_17, %c0_18, %c0_19, %c0_20] : memref<1x1x4x1x8xf32, #tpu.memory_space<vmem>>, vector<1x1x1x1x8xf32>
      %24 = vector.shape_cast %23 : vector<1x1x1x1x8xf32> to vector<1x8xf32>
      %25 = vector.broadcast %24 : vector<1x8xf32> to vector<32x8xf32>
      %26 = arith.addf %22, %25 : vector<32x8xf32>
      %c0_21 = arith.constant 0 : index
      %c0_22 = arith.constant 0 : index
      %c0_23 = arith.constant 0 : index
      %c0_24 = arith.constant 0 : index
      %c0_25 = arith.constant 0 : index
      %27 = vector.load %arg8[%c0_21, %c0_22, %c0_23, %c0_24, %c0_25] : memref<1x1x4x32x8xbf16, #tpu.memory_space<vmem>>, vector<1x1x1x32x8xbf16>
      %28 = vector.shape_cast %27 : vector<1x1x1x32x8xbf16> to vector<32x8xbf16>
      %cst_26 = arith.constant dense<0.000000e+00> : vector<32x8xf32>
      %29 = tpu.matmul %15, %28, %cst_26 {dimension_numbers = #tpu.dot_dimension_numbers<[1], [0], [0], [1], [0, 0, 1, 1], [], []>} : vector<32x32xbf16>, vector<32x8xbf16>, vector<32x8xf32> -> vector<32x8xf32>
      %c0_27 = arith.constant 0 : index
      %c0_28 = arith.constant 0 : index
      %c0_29 = arith.constant 0 : index
      %c0_30 = arith.constant 0 : index
      %c0_31 = arith.constant 0 : index
      %30 = vector.load %arg9[%c0_27, %c0_28, %c0_29, %c0_30, %c0_31] : memref<1x1x4x1x8xf32, #tpu.memory_space<vmem>>, vector<1x1x1x1x8xf32>
      %31 = vector.shape_cast %30 : vector<1x1x1x1x8xf32> to vector<1x8xf32>
      %32 = vector.broadcast %31 : vector<1x8xf32> to vector<32x8xf32>
      %33 = arith.addf %29, %32 : vector<32x8xf32>
      %c0_32 = arith.constant 0 : index
      %c0_33 = arith.constant 0 : index
      %c0_34 = arith.constant 0 : index
      %c0_35 = arith.constant 0 : index
      %c0_36 = arith.constant 0 : index
      %34 = vector.load %arg10[%c0_32, %c0_33, %c0_34, %c0_35, %c0_36] : memref<1x1x4x32x8xbf16, #tpu.memory_space<vmem>>, vector<1x1x1x32x8xbf16>
      %35 = vector.shape_cast %34 : vector<1x1x1x32x8xbf16> to vector<32x8xbf16>
      %cst_37 = arith.constant dense<0.000000e+00> : vector<32x8xf32>
      %36 = tpu.matmul %15, %35, %cst_37 {dimension_numbers = #tpu.dot_dimension_numbers<[1], [0], [0], [1], [0, 0, 1, 1], [], []>} : vector<32x32xbf16>, vector<32x8xbf16>, vector<32x8xf32> -> vector<32x8xf32>
      %c0_38 = arith.constant 0 : index
      %c0_39 = arith.constant 0 : index
      %c0_40 = arith.constant 0 : index
      %c0_41 = arith.constant 0 : index
      %c0_42 = arith.constant 0 : index
      %37 = vector.load %arg11[%c0_38, %c0_39, %c0_40, %c0_41, %c0_42] : memref<1x1x4x1x8xf32, #tpu.memory_space<vmem>>, vector<1x1x1x1x8xf32>
      %38 = vector.shape_cast %37 : vector<1x1x1x1x8xf32> to vector<1x8xf32>
      %39 = vector.broadcast %38 : vector<1x8xf32> to vector<32x8xf32>
      %40 = arith.addf %36, %39 : vector<32x8xf32>
      %41 = vector.shape_cast %26 : vector<32x8xf32> to vector<4x8x8xf32>
      %42 = arith.truncf %41 : vector<4x8x8xf32> to vector<4x8x8xbf16>
      %43 = vector.shape_cast %33 : vector<32x8xf32> to vector<4x8x8xf32>
      %44 = arith.truncf %43 : vector<4x8x8xf32> to vector<4x8x8xbf16>
      %45 = vector.shape_cast %40 : vector<32x8xf32> to vector<4x8x8xf32>
      %46 = arith.truncf %45 : vector<4x8x8xf32> to vector<4x8x8xbf16>
      "tpu.trace_start"() <{level = 10 : i32, message = "bqd,bkd->bqk"}> : () -> ()
      %cst_43 = arith.constant dense<0.000000e+00> : vector<4x8x8xf32>
      %47 = tpu.matmul %42, %44, %cst_43 {dimension_numbers = #tpu.dot_dimension_numbers<[2], [2], [1], [1], [0, 0, 0, 1, 1, 1], [0], [0]>} : vector<4x8x8xbf16>, vector<4x8x8xbf16>, vector<4x8x8xf32> -> vector<4x8x8xf32>
      "tpu.trace_stop"() : () -> ()
      %48 = arith.addf %47, %18 : vector<4x8x8xf32>
      %cst_44 = arith.constant dense<0xFF800000> : vector<4x8xf32>
      %49 = vector.multi_reduction <maximumf>, %48, %cst_44 [2] : vector<4x8x8xf32> to vector<4x8xf32>
      %50 = vector.shape_cast %49 : vector<4x8xf32> to vector<4x8x1xf32>
      %51 = vector.broadcast %50 : vector<4x8x1xf32> to vector<4x8x8xf32>
      %52 = arith.subf %48, %51 : vector<4x8x8xf32>
      %53 = math.exp %52 : vector<4x8x8xf32>
      %cst_45 = arith.constant dense<0.000000e+00> : vector<4x8xf32>
      %54 = vector.multi_reduction <add>, %53, %cst_45 [2] : vector<4x8x8xf32> to vector<4x8xf32>
      %55 = vector.shape_cast %54 : vector<4x8xf32> to vector<4x8x1xf32>
      %56 = arith.truncf %53 : vector<4x8x8xf32> to vector<4x8x8xbf16>
      "tpu.trace_start"() <{level = 10 : i32, message = "bqk,bkd->bqd"}> : () -> ()
      %cst_46 = arith.constant dense<0.000000e+00> : vector<4x8x8xf32>
      %57 = tpu.matmul %56, %46, %cst_46 {dimension_numbers = #tpu.dot_dimension_numbers<[2], [1], [1], [2], [0, 0, 0, 1, 1, 2], [0], [0]>} : vector<4x8x8xbf16>, vector<4x8x8xbf16>, vector<4x8x8xf32> -> vector<4x8x8xf32>
      "tpu.trace_stop"() : () -> ()
      %58 = tpu.reciprocal %55 {approx = true} : vector<4x8x1xf32> -> vector<4x8x1xf32>
      %59 = vector.broadcast %58 : vector<4x8x1xf32> to vector<4x8x8xf32>
      %60 = arith.mulf %57, %59 : vector<4x8x8xf32>
      %61 = vector.shape_cast %60 : vector<4x8x8xf32> to vector<32x8xf32>
      %62 = arith.truncf %61 : vector<32x8xf32> to vector<32x8xbf16>
      %c0_47 = arith.constant 0 : index
      %c0_48 = arith.constant 0 : index
      %c0_49 = arith.constant 0 : index
      %c0_50 = arith.constant 0 : index
      %c0_51 = arith.constant 0 : index
      %63 = vector.load %arg12[%c0_47, %c0_48, %c0_49, %c0_50, %c0_51] : memref<1x1x4x8x32xbf16, #tpu.memory_space<vmem>>, vector<1x1x1x8x32xbf16>
      %64 = vector.shape_cast %63 : vector<1x1x1x8x32xbf16> to vector<8x32xbf16>
      %cst_52 = arith.constant dense<0.000000e+00> : vector<32x32xf32>
      %65 = tpu.matmul %62, %64, %cst_52 {dimension_numbers = #tpu.dot_dimension_numbers<[1], [0], [0], [1], [0, 0, 1, 1], [], []>} : vector<32x8xbf16>, vector<8x32xbf16>, vector<32x32xf32> -> vector<32x32xf32>
      %66 = arith.addf %19, %65 : vector<32x32xf32>
      %c0_53 = arith.constant 0 : index
      %c0_54 = arith.constant 0 : index
      %c1 = arith.constant 1 : index
      %c0_55 = arith.constant 0 : index
      %c0_56 = arith.constant 0 : index
      %67 = vector.load %arg6[%c0_53, %c0_54, %c1, %c0_55, %c0_56] : memref<1x1x4x32x8xbf16, #tpu.memory_space<vmem>>, vector<1x1x1x32x8xbf16>
      %68 = vector.shape_cast %67 : vector<1x1x1x32x8xbf16> to vector<32x8xbf16>
      %cst_57 = arith.constant dense<0.000000e+00> : vector<32x8xf32>
      %69 = tpu.matmul %14, %68, %cst_57 {dimension_numbers = #tpu.dot_dimension_numbers<[1], [0], [0], [1], [0, 0, 1, 1], [], []>} : vector<32x32xbf16>, vector<32x8xbf16>, vector<32x8xf32> -> vector<32x8xf32>
      %c0_58 = arith.constant 0 : index
      %c0_59 = arith.constant 0 : index
      %c1_60 = arith.constant 1 : index
      %c0_61 = arith.constant 0 : index
      %c0_62 = arith.constant 0 : index
      %70 = vector.load %arg7[%c0_58, %c0_59, %c1_60, %c0_61, %c0_62] : memref<1x1x4x1x8xf32, #tpu.memory_space<vmem>>, vector<1x1x1x1x8xf32>
      %71 = vector.shape_cast %70 : vector<1x1x1x1x8xf32> to vector<1x8xf32>
      %72 = vector.broadcast %71 : vector<1x8xf32> to vector<32x8xf32>
      %73 = arith.addf %69, %72 : vector<32x8xf32>
      %c0_63 = arith.constant 0 : index
      %c0_64 = arith.constant 0 : index
      %c1_65 = arith.constant 1 : index
      %c0_66 = arith.constant 0 : index
      %c0_67 = arith.constant 0 : index
      %74 = vector.load %arg8[%c0_63, %c0_64, %c1_65, %c0_66, %c0_67] : memref<1x1x4x32x8xbf16, #tpu.memory_space<vmem>>, vector<1x1x1x32x8xbf16>
      %75 = vector.shape_cast %74 : vector<1x1x1x32x8xbf16> to vector<32x8xbf16>
      %cst_68 = arith.constant dense<0.000000e+00> : vector<32x8xf32>
      %76 = tpu.matmul %15, %75, %cst_68 {dimension_numbers = #tpu.dot_dimension_numbers<[1], [0], [0], [1], [0, 0, 1, 1], [], []>} : vector<32x32xbf16>, vector<32x8xbf16>, vector<32x8xf32> -> vector<32x8xf32>
      %c0_69 = arith.constant 0 : index
      %c0_70 = arith.constant 0 : index
      %c1_71 = arith.constant 1 : index
      %c0_72 = arith.constant 0 : index
      %c0_73 = arith.constant 0 : index
      %77 = vector.load %arg9[%c0_69, %c0_70, %c1_71, %c0_72, %c0_73] : memref<1x1x4x1x8xf32, #tpu.memory_space<vmem>>, vector<1x1x1x1x8xf32>
      %78 = vector.shape_cast %77 : vector<1x1x1x1x8xf32> to vector<1x8xf32>
      %79 = vector.broadcast %78 : vector<1x8xf32> to vector<32x8xf32>
      %80 = arith.addf %76, %79 : vector<32x8xf32>
      %c0_74 = arith.constant 0 : index
      %c0_75 = arith.constant 0 : index
      %c1_76 = arith.constant 1 : index
      %c0_77 = arith.constant 0 : index
      %c0_78 = arith.constant 0 : index
      %81 = vector.load %arg10[%c0_74, %c0_75, %c1_76, %c0_77, %c0_78] : memref<1x1x4x32x8xbf16, #tpu.memory_space<vmem>>, vector<1x1x1x32x8xbf16>
      %82 = vector.shape_cast %81 : vector<1x1x1x32x8xbf16> to vector<32x8xbf16>
      %cst_79 = arith.constant dense<0.000000e+00> : vector<32x8xf32>
      %83 = tpu.matmul %15, %82, %cst_79 {dimension_numbers = #tpu.dot_dimension_numbers<[1], [0], [0], [1], [0, 0, 1, 1], [], []>} : vector<32x32xbf16>, vector<32x8xbf16>, vector<32x8xf32> -> vector<32x8xf32>
      %c0_80 = arith.constant 0 : index
      %c0_81 = arith.constant 0 : index
      %c1_82 = arith.constant 1 : index
      %c0_83 = arith.constant 0 : index
      %c0_84 = arith.constant 0 : index
      %84 = vector.load %arg11[%c0_80, %c0_81, %c1_82, %c0_83, %c0_84] : memref<1x1x4x1x8xf32, #tpu.memory_space<vmem>>, vector<1x1x1x1x8xf32>
      %85 = vector.shape_cast %84 : vector<1x1x1x1x8xf32> to vector<1x8xf32>
      %86 = vector.broadcast %85 : vector<1x8xf32> to vector<32x8xf32>
      %87 = arith.addf %83, %86 : vector<32x8xf32>
      %88 = vector.shape_cast %73 : vector<32x8xf32> to vector<4x8x8xf32>
      %89 = arith.truncf %88 : vector<4x8x8xf32> to vector<4x8x8xbf16>
      %90 = vector.shape_cast %80 : vector<32x8xf32> to vector<4x8x8xf32>
      %91 = arith.truncf %90 : vector<4x8x8xf32> to vector<4x8x8xbf16>
      %92 = vector.shape_cast %87 : vector<32x8xf32> to vector<4x8x8xf32>
      %93 = arith.truncf %92 : vector<4x8x8xf32> to vector<4x8x8xbf16>
      "tpu.trace_start"() <{level = 10 : i32, message = "bqd,bkd->bqk"}> : () -> ()
      %cst_85 = arith.constant dense<0.000000e+00> : vector<4x8x8xf32>
      %94 = tpu.matmul %89, %91, %cst_85 {dimension_numbers = #tpu.dot_dimension_numbers<[2], [2], [1], [1], [0, 0, 0, 1, 1, 1], [0], [0]>} : vector<4x8x8xbf16>, vector<4x8x8xbf16>, vector<4x8x8xf32> -> vector<4x8x8xf32>
      "tpu.trace_stop"() : () -> ()
      %95 = arith.addf %94, %18 : vector<4x8x8xf32>
      %cst_86 = arith.constant dense<0xFF800000> : vector<4x8xf32>
      %96 = vector.multi_reduction <maximumf>, %95, %cst_86 [2] : vector<4x8x8xf32> to vector<4x8xf32>
      %97 = vector.shape_cast %96 : vector<4x8xf32> to vector<4x8x1xf32>
      %98 = vector.broadcast %97 : vector<4x8x1xf32> to vector<4x8x8xf32>
      %99 = arith.subf %95, %98 : vector<4x8x8xf32>
      %100 = math.exp %99 : vector<4x8x8xf32>
      %cst_87 = arith.constant dense<0.000000e+00> : vector<4x8xf32>
      %101 = vector.multi_reduction <add>, %100, %cst_87 [2] : vector<4x8x8xf32> to vector<4x8xf32>
      %102 = vector.shape_cast %101 : vector<4x8xf32> to vector<4x8x1xf32>
      %103 = arith.truncf %100 : vector<4x8x8xf32> to vector<4x8x8xbf16>
      "tpu.trace_start"() <{level = 10 : i32, message = "bqk,bkd->bqd"}> : () -> ()
      %cst_88 = arith.constant dense<0.000000e+00> : vector<4x8x8xf32>
      %104 = tpu.matmul %103, %93, %cst_88 {dimension_numbers = #tpu.dot_dimension_numbers<[2], [1], [1], [2], [0, 0, 0, 1, 1, 2], [0], [0]>} : vector<4x8x8xbf16>, vector<4x8x8xbf16>, vector<4x8x8xf32> -> vector<4x8x8xf32>
      "tpu.trace_stop"() : () -> ()
      %105 = tpu.reciprocal %102 {approx = true} : vector<4x8x1xf32> -> vector<4x8x1xf32>
      %106 = vector.broadcast %105 : vector<4x8x1xf32> to vector<4x8x8xf32>
      %107 = arith.mulf %104, %106 : vector<4x8x8xf32>
      %108 = vector.shape_cast %107 : vector<4x8x8xf32> to vector<32x8xf32>
      %109 = arith.truncf %108 : vector<32x8xf32> to vector<32x8xbf16>
      %c0_89 = arith.constant 0 : index
      %c0_90 = arith.constant 0 : index
      %c1_91 = arith.constant 1 : index
      %c0_92 = arith.constant 0 : index
      %c0_93 = arith.constant 0 : index
      %110 = vector.load %arg12[%c0_89, %c0_90, %c1_91, %c0_92, %c0_93] : memref<1x1x4x8x32xbf16, #tpu.memory_space<vmem>>, vector<1x1x1x8x32xbf16>
      %111 = vector.shape_cast %110 : vector<1x1x1x8x32xbf16> to vector<8x32xbf16>
      %cst_94 = arith.constant dense<0.000000e+00> : vector<32x32xf32>
      %112 = tpu.matmul %109, %111, %cst_94 {dimension_numbers = #tpu.dot_dimension_numbers<[1], [0], [0], [1], [0, 0, 1, 1], [], []>} : vector<32x8xbf16>, vector<8x32xbf16>, vector<32x32xf32> -> vector<32x32xf32>
      %113 = arith.addf %66, %112 : vector<32x32xf32>
      %c0_95 = arith.constant 0 : index
      %c0_96 = arith.constant 0 : index
      %c2 = arith.constant 2 : index
      %c0_97 = arith.constant 0 : index
      %c0_98 = arith.constant 0 : index
      %114 = vector.load %arg6[%c0_95, %c0_96, %c2, %c0_97, %c0_98] : memref<1x1x4x32x8xbf16, #tpu.memory_space<vmem>>, vector<1x1x1x32x8xbf16>
      %115 = vector.shape_cast %114 : vector<1x1x1x32x8xbf16> to vector<32x8xbf16>
      %cst_99 = arith.constant dense<0.000000e+00> : vector<32x8xf32>
      %116 = tpu.matmul %14, %115, %cst_99 {dimension_numbers = #tpu.dot_dimension_numbers<[1], [0], [0], [1], [0, 0, 1, 1], [], []>} : vector<32x32xbf16>, vector<32x8xbf16>, vector<32x8xf32> -> vector<32x8xf32>
      %c0_100 = arith.constant 0 : index
      %c0_101 = arith.constant 0 : index
      %c2_102 = arith.constant 2 : index
      %c0_103 = arith.constant 0 : index
      %c0_104 = arith.constant 0 : index
      %117 = vector.load %arg7[%c0_100, %c0_101, %c2_102, %c0_103, %c0_104] : memref<1x1x4x1x8xf32, #tpu.memory_space<vmem>>, vector<1x1x1x1x8xf32>
      %118 = vector.shape_cast %117 : vector<1x1x1x1x8xf32> to vector<1x8xf32>
      %119 = vector.broadcast %118 : vector<1x8xf32> to vector<32x8xf32>
      %120 = arith.addf %116, %119 : vector<32x8xf32>
      %c0_105 = arith.constant 0 : index
      %c0_106 = arith.constant 0 : index
      %c2_107 = arith.constant 2 : index
      %c0_108 = arith.constant 0 : index
      %c0_109 = arith.constant 0 : index
      %121 = vector.load %arg8[%c0_105, %c0_106, %c2_107, %c0_108, %c0_109] : memref<1x1x4x32x8xbf16, #tpu.memory_space<vmem>>, vector<1x1x1x32x8xbf16>
      %122 = vector.shape_cast %121 : vector<1x1x1x32x8xbf16> to vector<32x8xbf16>
      %cst_110 = arith.constant dense<0.000000e+00> : vector<32x8xf32>
      %123 = tpu.matmul %15, %122, %cst_110 {dimension_numbers = #tpu.dot_dimension_numbers<[1], [0], [0], [1], [0, 0, 1, 1], [], []>} : vector<32x32xbf16>, vector<32x8xbf16>, vector<32x8xf32> -> vector<32x8xf32>
      %c0_111 = arith.constant 0 : index
      %c0_112 = arith.constant 0 : index
      %c2_113 = arith.constant 2 : index
      %c0_114 = arith.constant 0 : index
      %c0_115 = arith.constant 0 : index
      %124 = vector.load %arg9[%c0_111, %c0_112, %c2_113, %c0_114, %c0_115] : memref<1x1x4x1x8xf32, #tpu.memory_space<vmem>>, vector<1x1x1x1x8xf32>
      %125 = vector.shape_cast %124 : vector<1x1x1x1x8xf32> to vector<1x8xf32>
      %126 = vector.broadcast %125 : vector<1x8xf32> to vector<32x8xf32>
      %127 = arith.addf %123, %126 : vector<32x8xf32>
      %c0_116 = arith.constant 0 : index
      %c0_117 = arith.constant 0 : index
      %c2_118 = arith.constant 2 : index
      %c0_119 = arith.constant 0 : index
      %c0_120 = arith.constant 0 : index
      %128 = vector.load %arg10[%c0_116, %c0_117, %c2_118, %c0_119, %c0_120] : memref<1x1x4x32x8xbf16, #tpu.memory_space<vmem>>, vector<1x1x1x32x8xbf16>
      %129 = vector.shape_cast %128 : vector<1x1x1x32x8xbf16> to vector<32x8xbf16>
      %cst_121 = arith.constant dense<0.000000e+00> : vector<32x8xf32>
      %130 = tpu.matmul %15, %129, %cst_121 {dimension_numbers = #tpu.dot_dimension_numbers<[1], [0], [0], [1], [0, 0, 1, 1], [], []>} : vector<32x32xbf16>, vector<32x8xbf16>, vector<32x8xf32> -> vector<32x8xf32>
      %c0_122 = arith.constant 0 : index
      %c0_123 = arith.constant 0 : index
      %c2_124 = arith.constant 2 : index
      %c0_125 = arith.constant 0 : index
      %c0_126 = arith.constant 0 : index
      %131 = vector.load %arg11[%c0_122, %c0_123, %c2_124, %c0_125, %c0_126] : memref<1x1x4x1x8xf32, #tpu.memory_space<vmem>>, vector<1x1x1x1x8xf32>
      %132 = vector.shape_cast %131 : vector<1x1x1x1x8xf32> to vector<1x8xf32>
      %133 = vector.broadcast %132 : vector<1x8xf32> to vector<32x8xf32>
      %134 = arith.addf %130, %133 : vector<32x8xf32>
      %135 = vector.shape_cast %120 : vector<32x8xf32> to vector<4x8x8xf32>
      %136 = arith.truncf %135 : vector<4x8x8xf32> to vector<4x8x8xbf16>
      %137 = vector.shape_cast %127 : vector<32x8xf32> to vector<4x8x8xf32>
      %138 = arith.truncf %137 : vector<4x8x8xf32> to vector<4x8x8xbf16>
      %139 = vector.shape_cast %134 : vector<32x8xf32> to vector<4x8x8xf32>
      %140 = arith.truncf %139 : vector<4x8x8xf32> to vector<4x8x8xbf16>
      "tpu.trace_start"() <{level = 10 : i32, message = "bqd,bkd->bqk"}> : () -> ()
      %cst_127 = arith.constant dense<0.000000e+00> : vector<4x8x8xf32>
      %141 = tpu.matmul %136, %138, %cst_127 {dimension_numbers = #tpu.dot_dimension_numbers<[2], [2], [1], [1], [0, 0, 0, 1, 1, 1], [0], [0]>} : vector<4x8x8xbf16>, vector<4x8x8xbf16>, vector<4x8x8xf32> -> vector<4x8x8xf32>
      "tpu.trace_stop"() : () -> ()
      %142 = arith.addf %141, %18 : vector<4x8x8xf32>
      %cst_128 = arith.constant dense<0xFF800000> : vector<4x8xf32>
      %143 = vector.multi_reduction <maximumf>, %142, %cst_128 [2] : vector<4x8x8xf32> to vector<4x8xf32>
      %144 = vector.shape_cast %143 : vector<4x8xf32> to vector<4x8x1xf32>
      %145 = vector.broadcast %144 : vector<4x8x1xf32> to vector<4x8x8xf32>
      %146 = arith.subf %142, %145 : vector<4x8x8xf32>
      %147 = math.exp %146 : vector<4x8x8xf32>
      %cst_129 = arith.constant dense<0.000000e+00> : vector<4x8xf32>
      %148 = vector.multi_reduction <add>, %147, %cst_129 [2] : vector<4x8x8xf32> to vector<4x8xf32>
      %149 = vector.shape_cast %148 : vector<4x8xf32> to vector<4x8x1xf32>
      %150 = arith.truncf %147 : vector<4x8x8xf32> to vector<4x8x8xbf16>
      "tpu.trace_start"() <{level = 10 : i32, message = "bqk,bkd->bqd"}> : () -> ()
      %cst_130 = arith.constant dense<0.000000e+00> : vector<4x8x8xf32>
      %151 = tpu.matmul %150, %140, %cst_130 {dimension_numbers = #tpu.dot_dimension_numbers<[2], [1], [1], [2], [0, 0, 0, 1, 1, 2], [0], [0]>} : vector<4x8x8xbf16>, vector<4x8x8xbf16>, vector<4x8x8xf32> -> vector<4x8x8xf32>
      "tpu.trace_stop"() : () -> ()
      %152 = tpu.reciprocal %149 {approx = true} : vector<4x8x1xf32> -> vector<4x8x1xf32>
      %153 = vector.broadcast %152 : vector<4x8x1xf32> to vector<4x8x8xf32>
      %154 = arith.mulf %151, %153 : vector<4x8x8xf32>
      %155 = vector.shape_cast %154 : vector<4x8x8xf32> to vector<32x8xf32>
      %156 = arith.truncf %155 : vector<32x8xf32> to vector<32x8xbf16>
      %c0_131 = arith.constant 0 : index
      %c0_132 = arith.constant 0 : index
      %c2_133 = arith.constant 2 : index
      %c0_134 = arith.constant 0 : index
      %c0_135 = arith.constant 0 : index
      %157 = vector.load %arg12[%c0_131, %c0_132, %c2_133, %c0_134, %c0_135] : memref<1x1x4x8x32xbf16, #tpu.memory_space<vmem>>, vector<1x1x1x8x32xbf16>
      %158 = vector.shape_cast %157 : vector<1x1x1x8x32xbf16> to vector<8x32xbf16>
      %cst_136 = arith.constant dense<0.000000e+00> : vector<32x32xf32>
      %159 = tpu.matmul %156, %158, %cst_136 {dimension_numbers = #tpu.dot_dimension_numbers<[1], [0], [0], [1], [0, 0, 1, 1], [], []>} : vector<32x8xbf16>, vector<8x32xbf16>, vector<32x32xf32> -> vector<32x32xf32>
      %160 = arith.addf %113, %159 : vector<32x32xf32>
      %c0_137 = arith.constant 0 : index
      %c0_138 = arith.constant 0 : index
      %c3 = arith.constant 3 : index
      %c0_139 = arith.constant 0 : index
      %c0_140 = arith.constant 0 : index
      %161 = vector.load %arg6[%c0_137, %c0_138, %c3, %c0_139, %c0_140] : memref<1x1x4x32x8xbf16, #tpu.memory_space<vmem>>, vector<1x1x1x32x8xbf16>
      %162 = vector.shape_cast %161 : vector<1x1x1x32x8xbf16> to vector<32x8xbf16>
      %cst_141 = arith.constant dense<0.000000e+00> : vector<32x8xf32>
      %163 = tpu.matmul %14, %162, %cst_141 {dimension_numbers = #tpu.dot_dimension_numbers<[1], [0], [0], [1], [0, 0, 1, 1], [], []>} : vector<32x32xbf16>, vector<32x8xbf16>, vector<32x8xf32> -> vector<32x8xf32>
      %c0_142 = arith.constant 0 : index
      %c0_143 = arith.constant 0 : index
      %c3_144 = arith.constant 3 : index
      %c0_145 = arith.constant 0 : index
      %c0_146 = arith.constant 0 : index
      %164 = vector.load %arg7[%c0_142, %c0_143, %c3_144, %c0_145, %c0_146] : memref<1x1x4x1x8xf32, #tpu.memory_space<vmem>>, vector<1x1x1x1x8xf32>
      %165 = vector.shape_cast %164 : vector<1x1x1x1x8xf32> to vector<1x8xf32>
      %166 = vector.broadcast %165 : vector<1x8xf32> to vector<32x8xf32>
      %167 = arith.addf %163, %166 : vector<32x8xf32>
      %c0_147 = arith.constant 0 : index
      %c0_148 = arith.constant 0 : index
      %c3_149 = arith.constant 3 : index
      %c0_150 = arith.constant 0 : index
      %c0_151 = arith.constant 0 : index
      %168 = vector.load %arg8[%c0_147, %c0_148, %c3_149, %c0_150, %c0_151] : memref<1x1x4x32x8xbf16, #tpu.memory_space<vmem>>, vector<1x1x1x32x8xbf16>
      %169 = vector.shape_cast %168 : vector<1x1x1x32x8xbf16> to vector<32x8xbf16>
      %cst_152 = arith.constant dense<0.000000e+00> : vector<32x8xf32>
      %170 = tpu.matmul %15, %169, %cst_152 {dimension_numbers = #tpu.dot_dimension_numbers<[1], [0], [0], [1], [0, 0, 1, 1], [], []>} : vector<32x32xbf16>, vector<32x8xbf16>, vector<32x8xf32> -> vector<32x8xf32>
      %c0_153 = arith.constant 0 : index
      %c0_154 = arith.constant 0 : index
      %c3_155 = arith.constant 3 : index
      %c0_156 = arith.constant 0 : index
      %c0_157 = arith.constant 0 : index
      %171 = vector.load %arg9[%c0_153, %c0_154, %c3_155, %c0_156, %c0_157] : memref<1x1x4x1x8xf32, #tpu.memory_space<vmem>>, vector<1x1x1x1x8xf32>
      %172 = vector.shape_cast %171 : vector<1x1x1x1x8xf32> to vector<1x8xf32>
      %173 = vector.broadcast %172 : vector<1x8xf32> to vector<32x8xf32>
      %174 = arith.addf %170, %173 : vector<32x8xf32>
      %c0_158 = arith.constant 0 : index
      %c0_159 = arith.constant 0 : index
      %c3_160 = arith.constant 3 : index
      %c0_161 = arith.constant 0 : index
      %c0_162 = arith.constant 0 : index
      %175 = vector.load %arg10[%c0_158, %c0_159, %c3_160, %c0_161, %c0_162] : memref<1x1x4x32x8xbf16, #tpu.memory_space<vmem>>, vector<1x1x1x32x8xbf16>
      %176 = vector.shape_cast %175 : vector<1x1x1x32x8xbf16> to vector<32x8xbf16>
      %cst_163 = arith.constant dense<0.000000e+00> : vector<32x8xf32>
      %177 = tpu.matmul %15, %176, %cst_163 {dimension_numbers = #tpu.dot_dimension_numbers<[1], [0], [0], [1], [0, 0, 1, 1], [], []>} : vector<32x32xbf16>, vector<32x8xbf16>, vector<32x8xf32> -> vector<32x8xf32>
      %c0_164 = arith.constant 0 : index
      %c0_165 = arith.constant 0 : index
      %c3_166 = arith.constant 3 : index
      %c0_167 = arith.constant 0 : index
      %c0_168 = arith.constant 0 : index
      %178 = vector.load %arg11[%c0_164, %c0_165, %c3_166, %c0_167, %c0_168] : memref<1x1x4x1x8xf32, #tpu.memory_space<vmem>>, vector<1x1x1x1x8xf32>
      %179 = vector.shape_cast %178 : vector<1x1x1x1x8xf32> to vector<1x8xf32>
      %180 = vector.broadcast %179 : vector<1x8xf32> to vector<32x8xf32>
      %181 = arith.addf %177, %180 : vector<32x8xf32>
      %182 = vector.shape_cast %167 : vector<32x8xf32> to vector<4x8x8xf32>
      %183 = arith.truncf %182 : vector<4x8x8xf32> to vector<4x8x8xbf16>
      %184 = vector.shape_cast %174 : vector<32x8xf32> to vector<4x8x8xf32>
      %185 = arith.truncf %184 : vector<4x8x8xf32> to vector<4x8x8xbf16>
      %186 = vector.shape_cast %181 : vector<32x8xf32> to vector<4x8x8xf32>
      %187 = arith.truncf %186 : vector<4x8x8xf32> to vector<4x8x8xbf16>
      "tpu.trace_start"() <{level = 10 : i32, message = "bqd,bkd->bqk"}> : () -> ()
      %cst_169 = arith.constant dense<0.000000e+00> : vector<4x8x8xf32>
      %188 = tpu.matmul %183, %185, %cst_169 {dimension_numbers = #tpu.dot_dimension_numbers<[2], [2], [1], [1], [0, 0, 0, 1, 1, 1], [0], [0]>} : vector<4x8x8xbf16>, vector<4x8x8xbf16>, vector<4x8x8xf32> -> vector<4x8x8xf32>
      "tpu.trace_stop"() : () -> ()
      %189 = arith.addf %188, %18 : vector<4x8x8xf32>
      %cst_170 = arith.constant dense<0xFF800000> : vector<4x8xf32>
      %190 = vector.multi_reduction <maximumf>, %189, %cst_170 [2] : vector<4x8x8xf32> to vector<4x8xf32>
      %191 = vector.shape_cast %190 : vector<4x8xf32> to vector<4x8x1xf32>
      %192 = vector.broadcast %191 : vector<4x8x1xf32> to vector<4x8x8xf32>
      %193 = arith.subf %189, %192 : vector<4x8x8xf32>
      %194 = math.exp %193 : vector<4x8x8xf32>
      %cst_171 = arith.constant dense<0.000000e+00> : vector<4x8xf32>
      %195 = vector.multi_reduction <add>, %194, %cst_171 [2] : vector<4x8x8xf32> to vector<4x8xf32>
      %196 = vector.shape_cast %195 : vector<4x8xf32> to vector<4x8x1xf32>
      %197 = arith.truncf %194 : vector<4x8x8xf32> to vector<4x8x8xbf16>
      "tpu.trace_start"() <{level = 10 : i32, message = "bqk,bkd->bqd"}> : () -> ()
      %cst_172 = arith.constant dense<0.000000e+00> : vector<4x8x8xf32>
      %198 = tpu.matmul %197, %187, %cst_172 {dimension_numbers = #tpu.dot_dimension_numbers<[2], [1], [1], [2], [0, 0, 0, 1, 1, 2], [0], [0]>} : vector<4x8x8xbf16>, vector<4x8x8xbf16>, vector<4x8x8xf32> -> vector<4x8x8xf32>
      "tpu.trace_stop"() : () -> ()
      %199 = tpu.reciprocal %196 {approx = true} : vector<4x8x1xf32> -> vector<4x8x1xf32>
      %200 = vector.broadcast %199 : vector<4x8x1xf32> to vector<4x8x8xf32>
      %201 = arith.mulf %198, %200 : vector<4x8x8xf32>
      %202 = vector.shape_cast %201 : vector<4x8x8xf32> to vector<32x8xf32>
      %203 = arith.truncf %202 : vector<32x8xf32> to vector<32x8xbf16>
      %c0_173 = arith.constant 0 : index
      %c0_174 = arith.constant 0 : index
      %c3_175 = arith.constant 3 : index
      %c0_176 = arith.constant 0 : index
      %c0_177 = arith.constant 0 : index
      %204 = vector.load %arg12[%c0_173, %c0_174, %c3_175, %c0_176, %c0_177] : memref<1x1x4x8x32xbf16, #tpu.memory_space<vmem>>, vector<1x1x1x8x32xbf16>
      %205 = vector.shape_cast %204 : vector<1x1x1x8x32xbf16> to vector<8x32xbf16>
      %cst_178 = arith.constant dense<0.000000e+00> : vector<32x32xf32>
      %206 = tpu.matmul %203, %205, %cst_178 {dimension_numbers = #tpu.dot_dimension_numbers<[1], [0], [0], [1], [0, 0, 1, 1], [], []>} : vector<32x8xbf16>, vector<8x32xbf16>, vector<32x32xf32> -> vector<32x32xf32>
      %207 = arith.addf %160, %206 : vector<32x32xf32>
      %c0_179 = arith.constant 0 : index
      %c0_180 = arith.constant 0 : index
      %c0_181 = arith.constant 0 : index
      %c0_182 = arith.constant 0 : index
      %208 = vector.load %arg13[%c0_179, %c0_180, %c0_181, %c0_182] : memref<1x1x1x32xf32, #tpu.memory_space<vmem>>, vector<1x1x1x32xf32>
      %209 = vector.shape_cast %208 : vector<1x1x1x32xf32> to vector<1x32xf32>
      %210 = vector.broadcast %209 : vector<1x32xf32> to vector<32x32xf32>
      %211 = arith.addf %207, %210 : vector<32x32xf32>
      %212 = arith.addf %5, %211 : vector<32x32xf32>
      %c0_183 = arith.constant 0 : index
      %c0_184 = arith.constant 0 : index
      %c0_185 = arith.constant 0 : index
      %c0_186 = arith.constant 0 : index
      %213 = vector.load %arg14[%c0_183, %c0_184, %c0_185, %c0_186] : memref<1x1x1x32xf32, #tpu.memory_space<vmem>>, vector<1x1x1x32xf32>
      %214 = vector.shape_cast %213 : vector<1x1x1x32xf32> to vector<1x32xf32>
      %c0_187 = arith.constant 0 : index
      %c0_188 = arith.constant 0 : index
      %c0_189 = arith.constant 0 : index
      %c0_190 = arith.constant 0 : index
      %215 = vector.load %arg15[%c0_187, %c0_188, %c0_189, %c0_190] : memref<1x1x1x32xf32, #tpu.memory_space<vmem>>, vector<1x1x1x32xf32>
      %216 = vector.shape_cast %215 : vector<1x1x1x32xf32> to vector<1x32xf32>
      %cst_191 = arith.constant dense<0.000000e+00> : vector<32xf32>
      %217 = vector.multi_reduction <add>, %212, %cst_191 [1] : vector<32x32xf32> to vector<32xf32>
      %218 = vector.shape_cast %217 : vector<32xf32> to vector<32x1xf32>
      %cst_192 = arith.constant 3.200000e+01 : f32
      %219 = vector.broadcast %cst_192 : f32 to vector<32x1xf32>
      %220 = arith.divf %218, %219 : vector<32x1xf32>
      %221 = vector.broadcast %220 : vector<32x1xf32> to vector<32x32xf32>
      %222 = arith.subf %212, %221 : vector<32x32xf32>
      %223 = arith.mulf %222, %222 : vector<32x32xf32>
      %cst_193 = arith.constant dense<0.000000e+00> : vector<32xf32>
      %224 = vector.multi_reduction <add>, %223, %cst_193 [1] : vector<32x32xf32> to vector<32xf32>
      %225 = vector.shape_cast %224 : vector<32xf32> to vector<32x1xf32>
      %cst_194 = arith.constant 3.200000e+01 : f32
      %226 = vector.broadcast %cst_194 : f32 to vector<32x1xf32>
      %227 = arith.divf %225, %226 : vector<32x1xf32>
      %228 = vector.broadcast %220 : vector<32x1xf32> to vector<32x32xf32>
      %229 = arith.subf %212, %228 : vector<32x32xf32>
      %cst_195 = arith.constant 9.99999974E-6 : f32
      %230 = vector.broadcast %cst_195 : f32 to vector<32x1xf32>
      %231 = arith.addf %227, %230 : vector<32x1xf32>
      %232 = math.rsqrt %231 : vector<32x1xf32>
      %233 = vector.broadcast %232 : vector<32x1xf32> to vector<32x32xf32>
      %234 = arith.mulf %229, %233 : vector<32x32xf32>
      %235 = vector.broadcast %214 : vector<1x32xf32> to vector<32x32xf32>
      %236 = arith.mulf %234, %235 : vector<32x32xf32>
      %237 = vector.broadcast %216 : vector<1x32xf32> to vector<32x32xf32>
      %238 = arith.addf %236, %237 : vector<32x32xf32>
      %239 = arith.truncf %238 : vector<32x32xf32> to vector<32x32xbf16>
      %c0_196 = arith.constant 0 : index
      %c0_197 = arith.constant 0 : index
      %c0_198 = arith.constant 0 : index
      %c0_199 = arith.constant 0 : index
      %240 = vector.load %arg16[%c0_196, %c0_197, %c0_198, %c0_199] : memref<1x1x32x64xbf16, #tpu.memory_space<vmem>>, vector<1x1x32x64xbf16>
      %241 = vector.shape_cast %240 : vector<1x1x32x64xbf16> to vector<32x64xbf16>
      %cst_200 = arith.constant dense<0.000000e+00> : vector<32x64xf32>
      %242 = tpu.matmul %239, %241, %cst_200 {dimension_numbers = #tpu.dot_dimension_numbers<[1], [0], [0], [1], [0, 0, 1, 1], [], []>} : vector<32x32xbf16>, vector<32x64xbf16>, vector<32x64xf32> -> vector<32x64xf32>
      %c0_201 = arith.constant 0 : index
      %c0_202 = arith.constant 0 : index
      %c0_203 = arith.constant 0 : index
      %c0_204 = arith.constant 0 : index
      %243 = vector.load %arg17[%c0_201, %c0_202, %c0_203, %c0_204] : memref<1x1x1x64xf32, #tpu.memory_space<vmem>>, vector<1x1x1x64xf32>
      %244 = vector.shape_cast %243 : vector<1x1x1x64xf32> to vector<1x64xf32>
      %245 = vector.broadcast %244 : vector<1x64xf32> to vector<32x64xf32>
      %246 = arith.addf %242, %245 : vector<32x64xf32>
      %cst_205 = arith.constant 0.000000e+00 : f32
      %247 = vector.broadcast %cst_205 : f32 to vector<32x64xf32>
      %248 = arith.maximumf %246, %247 : vector<32x64xf32>
      %249 = arith.truncf %248 : vector<32x64xf32> to vector<32x64xbf16>
      %c0_206 = arith.constant 0 : index
      %c0_207 = arith.constant 0 : index
      %c0_208 = arith.constant 0 : index
      %c0_209 = arith.constant 0 : index
      %250 = vector.load %arg18[%c0_206, %c0_207, %c0_208, %c0_209] : memref<1x1x64x32xbf16, #tpu.memory_space<vmem>>, vector<1x1x64x32xbf16>
      %251 = vector.shape_cast %250 : vector<1x1x64x32xbf16> to vector<64x32xbf16>
      %cst_210 = arith.constant dense<0.000000e+00> : vector<32x32xf32>
      %252 = tpu.matmul %249, %251, %cst_210 {dimension_numbers = #tpu.dot_dimension_numbers<[1], [0], [0], [1], [0, 0, 1, 1], [], []>} : vector<32x64xbf16>, vector<64x32xbf16>, vector<32x32xf32> -> vector<32x32xf32>
      %c0_211 = arith.constant 0 : index
      %c0_212 = arith.constant 0 : index
      %c0_213 = arith.constant 0 : index
      %c0_214 = arith.constant 0 : index
      %253 = vector.load %arg19[%c0_211, %c0_212, %c0_213, %c0_214] : memref<1x1x1x32xf32, #tpu.memory_space<vmem>>, vector<1x1x1x32xf32>
      %254 = vector.shape_cast %253 : vector<1x1x1x32xf32> to vector<1x32xf32>
      %255 = vector.broadcast %254 : vector<1x32xf32> to vector<32x32xf32>
      %256 = arith.addf %252, %255 : vector<32x32xf32>
      %257 = arith.addf %238, %256 : vector<32x32xf32>
      %c0_215 = arith.constant 0 : index
      %c0_216 = arith.constant 0 : index
      %c0_217 = arith.constant 0 : index
      %c0_218 = arith.constant 0 : index
      %258 = vector.load %arg20[%c0_215, %c0_216, %c0_217, %c0_218] : memref<1x1x1x32xf32, #tpu.memory_space<vmem>>, vector<1x1x1x32xf32>
      %259 = vector.shape_cast %258 : vector<1x1x1x32xf32> to vector<1x32xf32>
      %c0_219 = arith.constant 0 : index
      %c0_220 = arith.constant 0 : index
      %c0_221 = arith.constant 0 : index
      %c0_222 = arith.constant 0 : index
      %260 = vector.load %arg21[%c0_219, %c0_220, %c0_221, %c0_222] : memref<1x1x1x32xf32, #tpu.memory_space<vmem>>, vector<1x1x1x32xf32>
      %261 = vector.shape_cast %260 : vector<1x1x1x32xf32> to vector<1x32xf32>
      %cst_223 = arith.constant dense<0.000000e+00> : vector<32xf32>
      %262 = vector.multi_reduction <add>, %257, %cst_223 [1] : vector<32x32xf32> to vector<32xf32>
      %263 = vector.shape_cast %262 : vector<32xf32> to vector<32x1xf32>
      %cst_224 = arith.constant 3.200000e+01 : f32
      %264 = vector.broadcast %cst_224 : f32 to vector<32x1xf32>
      %265 = arith.divf %263, %264 : vector<32x1xf32>
      %266 = vector.broadcast %265 : vector<32x1xf32> to vector<32x32xf32>
      %267 = arith.subf %257, %266 : vector<32x32xf32>
      %268 = arith.mulf %267, %267 : vector<32x32xf32>
      %cst_225 = arith.constant dense<0.000000e+00> : vector<32xf32>
      %269 = vector.multi_reduction <add>, %268, %cst_225 [1] : vector<32x32xf32> to vector<32xf32>
      %270 = vector.shape_cast %269 : vector<32xf32> to vector<32x1xf32>
      %cst_226 = arith.constant 3.200000e+01 : f32
      %271 = vector.broadcast %cst_226 : f32 to vector<32x1xf32>
      %272 = arith.divf %270, %271 : vector<32x1xf32>
      %273 = vector.broadcast %265 : vector<32x1xf32> to vector<32x32xf32>
      %274 = arith.subf %257, %273 : vector<32x32xf32>
      %cst_227 = arith.constant 9.99999974E-6 : f32
      %275 = vector.broadcast %cst_227 : f32 to vector<32x1xf32>
      %276 = arith.addf %272, %275 : vector<32x1xf32>
      %277 = math.rsqrt %276 : vector<32x1xf32>
      %278 = vector.broadcast %277 : vector<32x1xf32> to vector<32x32xf32>
      %279 = arith.mulf %274, %278 : vector<32x32xf32>
      %280 = vector.broadcast %259 : vector<1x32xf32> to vector<32x32xf32>
      %281 = arith.mulf %279, %280 : vector<32x32xf32>
      %282 = vector.broadcast %261 : vector<1x32xf32> to vector<32x32xf32>
      %283 = arith.addf %281, %282 : vector<32x32xf32>
      %c0_228 = arith.constant 0 : index
      %c0_229 = arith.constant 0 : index
      %284 = vector.load %arg25[%c0_228, %c0_229] : memref<32x32xf32, #tpu.memory_space<vmem>>, vector<32x32xf32>
      tpu.vector_store %arg25[%c0_228, %c0_229], %283 {strides = array<i32>} : memref<32x32xf32, #tpu.memory_space<vmem>>, vector<32x32xf32>,
    } else {
    }
    %c1_i32 = arith.constant 1 : i32
    %10 = arith.cmpi eq, %arg1, %c1_i32 : i32
    %11 = arith.extui %10 : i1 to i32
    %c0_i32_7 = arith.constant 0 : i32
    %12 = arith.cmpi ne, %11, %c0_i32_7 : i32
    scf.if %12 {
      %c0_8 = arith.constant 0 : index
      %c0_9 = arith.constant 0 : index
      %13 = vector.load %arg5[%c0_8, %c0_9] : memref<4x8xf32, #tpu.memory_space<vmem>>, vector<4x8xf32>
      %14 = arith.truncf %6 : vector<32x32xf32> to vector<32x32xbf16>
      %15 = arith.truncf %5 : vector<32x32xf32> to vector<32x32xbf16>
      %16 = vector.shape_cast %13 : vector<4x8xf32> to vector<4x1x8xf32>
      %17 = vector.shape_cast %16 : vector<4x1x8xf32> to vector<4x1x8xf32>
      %18 = vector.broadcast %17 : vector<4x1x8xf32> to vector<4x8x8xf32>
      %cst = arith.constant 0.000000e+00 : f32
      %19 = vector.broadcast %cst : f32 to vector<32x32xf32>
      %c0_10 = arith.constant 0 : index
      %c0_11 = arith.constant 0 : index
      %c0_12 = arith.constant 0 : index
      %c0_13 = arith.constant 0 : index
      %c0_14 = arith.constant 0 : index
      %20 = vector.load %arg6[%c0_10, %c0_11, %c0_12, %c0_13, %c0_14] : memref<1x1x4x32x8xbf16, #tpu.memory_space<vmem>>, vector<1x1x1x32x8xbf16>
      %21 = vector.shape_cast %20 : vector<1x1x1x32x8xbf16> to vector<32x8xbf16>
      %cst_15 = arith.constant dense<0.000000e+00> : vector<32x8xf32>
      %22 = tpu.matmul %14, %21, %cst_15 {dimension_numbers = #tpu.dot_dimension_numbers<[1], [0], [0], [1], [0, 0, 1, 1], [], []>} : vector<32x32xbf16>, vector<32x8xbf16>, vector<32x8xf32> -> vector<32x8xf32>
      %c0_16 = arith.constant 0 : index
      %c0_17 = arith.constant 0 : index
      %c0_18 = arith.constant 0 : index
      %c0_19 = arith.constant 0 : index
      %c0_20 = arith.constant 0 : index
      %23 = vector.load %arg7[%c0_16, %c0_17, %c0_18, %c0_19, %c0_20] : memref<1x1x4x1x8xf32, #tpu.memory_space<vmem>>, vector<1x1x1x1x8xf32>
      %24 = vector.shape_cast %23 : vector<1x1x1x1x8xf32> to vector<1x8xf32>
      %25 = vector.broadcast %24 : vector<1x8xf32> to vector<32x8xf32>
      %26 = arith.addf %22, %25 : vector<32x8xf32>
      %c0_21 = arith.constant 0 : index
      %c0_22 = arith.constant 0 : index
      %c0_23 = arith.constant 0 : index
      %c0_24 = arith.constant 0 : index
      %c0_25 = arith.constant 0 : index
      %27 = vector.load %arg8[%c0_21, %c0_22, %c0_23, %c0_24, %c0_25] : memref<1x1x4x32x8xbf16, #tpu.memory_space<vmem>>, vector<1x1x1x32x8xbf16>
      %28 = vector.shape_cast %27 : vector<1x1x1x32x8xbf16> to vector<32x8xbf16>
      %cst_26 = arith.constant dense<0.000000e+00> : vector<32x8xf32>
      %29 = tpu.matmul %15, %28, %cst_26 {dimension_numbers = #tpu.dot_dimension_numbers<[1], [0], [0], [1], [0, 0, 1, 1], [], []>} : vector<32x32xbf16>, vector<32x8xbf16>, vector<32x8xf32> -> vector<32x8xf32>
      %c0_27 = arith.constant 0 : index
      %c0_28 = arith.constant 0 : index
      %c0_29 = arith.constant 0 : index
      %c0_30 = arith.constant 0 : index
      %c0_31 = arith.constant 0 : index
      %30 = vector.load %arg9[%c0_27, %c0_28, %c0_29, %c0_30, %c0_31] : memref<1x1x4x1x8xf32, #tpu.memory_space<vmem>>, vector<1x1x1x1x8xf32>
      %31 = vector.shape_cast %30 : vector<1x1x1x1x8xf32> to vector<1x8xf32>
      %32 = vector.broadcast %31 : vector<1x8xf32> to vector<32x8xf32>
      %33 = arith.addf %29, %32 : vector<32x8xf32>
      %c0_32 = arith.constant 0 : index
      %c0_33 = arith.constant 0 : index
      %c0_34 = arith.constant 0 : index
      %c0_35 = arith.constant 0 : index
      %c0_36 = arith.constant 0 : index
      %34 = vector.load %arg10[%c0_32, %c0_33, %c0_34, %c0_35, %c0_36] : memref<1x1x4x32x8xbf16, #tpu.memory_space<vmem>>, vector<1x1x1x32x8xbf16>
      %35 = vector.shape_cast %34 : vector<1x1x1x32x8xbf16> to vector<32x8xbf16>
      %cst_37 = arith.constant dense<0.000000e+00> : vector<32x8xf32>
      %36 = tpu.matmul %15, %35, %cst_37 {dimension_numbers = #tpu.dot_dimension_numbers<[1], [0], [0], [1], [0, 0, 1, 1], [], []>} : vector<32x32xbf16>, vector<32x8xbf16>, vector<32x8xf32> -> vector<32x8xf32>
      %c0_38 = arith.constant 0 : index
      %c0_39 = arith.constant 0 : index
      %c0_40 = arith.constant 0 : index
      %c0_41 = arith.constant 0 : index
      %c0_42 = arith.constant 0 : index
      %37 = vector.load %arg11[%c0_38, %c0_39, %c0_40, %c0_41, %c0_42] : memref<1x1x4x1x8xf32, #tpu.memory_space<vmem>>, vector<1x1x1x1x8xf32>
      %38 = vector.shape_cast %37 : vector<1x1x1x1x8xf32> to vector<1x8xf32>
      %39 = vector.broadcast %38 : vector<1x8xf32> to vector<32x8xf32>
      %40 = arith.addf %36, %39 : vector<32x8xf32>
      %41 = vector.shape_cast %26 : vector<32x8xf32> to vector<4x8x8xf32>
      %42 = arith.truncf %41 : vector<4x8x8xf32> to vector<4x8x8xbf16>
      %43 = vector.shape_cast %33 : vector<32x8xf32> to vector<4x8x8xf32>
      %44 = arith.truncf %43 : vector<4x8x8xf32> to vector<4x8x8xbf16>
      %45 = vector.shape_cast %40 : vector<32x8xf32> to vector<4x8x8xf32>
      %46 = arith.truncf %45 : vector<4x8x8xf32> to vector<4x8x8xbf16>
      "tpu.trace_start"() <{level = 10 : i32, message = "bqd,bkd->bqk"}> : () -> ()
      %cst_43 = arith.constant dense<0.000000e+00> : vector<4x8x8xf32>
      %47 = tpu.matmul %42, %44, %cst_43 {dimension_numbers = #tpu.dot_dimension_numbers<[2], [2], [1], [1], [0, 0, 0, 1, 1, 1], [0], [0]>} : vector<4x8x8xbf16>, vector<4x8x8xbf16>, vector<4x8x8xf32> -> vector<4x8x8xf32>
      "tpu.trace_stop"() : () -> ()
      %48 = arith.addf %47, %18 : vector<4x8x8xf32>
      %cst_44 = arith.constant dense<0xFF800000> : vector<4x8xf32>
      %49 = vector.multi_reduction <maximumf>, %48, %cst_44 [2] : vector<4x8x8xf32> to vector<4x8xf32>
      %50 = vector.shape_cast %49 : vector<4x8xf32> to vector<4x8x1xf32>
      %51 = vector.broadcast %50 : vector<4x8x1xf32> to vector<4x8x8xf32>
      %52 = arith.subf %48, %51 : vector<4x8x8xf32>
      %53 = math.exp %52 : vector<4x8x8xf32>
      %cst_45 = arith.constant dense<0.000000e+00> : vector<4x8xf32>
      %54 = vector.multi_reduction <add>, %53, %cst_45 [2] : vector<4x8x8xf32> to vector<4x8xf32>
      %55 = vector.shape_cast %54 : vector<4x8xf32> to vector<4x8x1xf32>
      %56 = arith.truncf %53 : vector<4x8x8xf32> to vector<4x8x8xbf16>
      "tpu.trace_start"() <{level = 10 : i32, message = "bqk,bkd->bqd"}> : () -> ()
      %cst_46 = arith.constant dense<0.000000e+00> : vector<4x8x8xf32>
      %57 = tpu.matmul %56, %46, %cst_46 {dimension_numbers = #tpu.dot_dimension_numbers<[2], [1], [1], [2], [0, 0, 0, 1, 1, 2], [0], [0]>} : vector<4x8x8xbf16>, vector<4x8x8xbf16>, vector<4x8x8xf32> -> vector<4x8x8xf32>
      "tpu.trace_stop"() : () -> ()
      %58 = tpu.reciprocal %55 {approx = true} : vector<4x8x1xf32> -> vector<4x8x1xf32>
      %59 = vector.broadcast %58 : vector<4x8x1xf32> to vector<4x8x8xf32>
      %60 = arith.mulf %57, %59 : vector<4x8x8xf32>
      %61 = vector.shape_cast %60 : vector<4x8x8xf32> to vector<32x8xf32>
      %62 = arith.truncf %61 : vector<32x8xf32> to vector<32x8xbf16>
      %c0_47 = arith.constant 0 : index
      %c0_48 = arith.constant 0 : index
      %c0_49 = arith.constant 0 : index
      %c0_50 = arith.constant 0 : index
      %c0_51 = arith.constant 0 : index
      %63 = vector.load %arg12[%c0_47, %c0_48, %c0_49, %c0_50, %c0_51] : memref<1x1x4x8x32xbf16, #tpu.memory_space<vmem>>, vector<1x1x1x8x32xbf16>
      %64 = vector.shape_cast %63 : vector<1x1x1x8x32xbf16> to vector<8x32xbf16>
      %cst_52 = arith.constant dense<0.000000e+00> : vector<32x32xf32>
      %65 = tpu.matmul %62, %64, %cst_52 {dimension_numbers = #tpu.dot_dimension_numbers<[1], [0], [0], [1], [0, 0, 1, 1], [], []>} : vector<32x8xbf16>, vector<8x32xbf16>, vector<32x32xf32> -> vector<32x32xf32>
      %66 = arith.addf %19, %65 : vector<32x32xf32>
      %c0_53 = arith.constant 0 : index
      %c0_54 = arith.constant 0 : index
      %c1 = arith.constant 1 : index
      %c0_55 = arith.constant 0 : index
      %c0_56 = arith.constant 0 : index
      %67 = vector.load %arg6[%c0_53, %c0_54, %c1, %c0_55, %c0_56] : memref<1x1x4x32x8xbf16, #tpu.memory_space<vmem>>, vector<1x1x1x32x8xbf16>
      %68 = vector.shape_cast %67 : vector<1x1x1x32x8xbf16> to vector<32x8xbf16>
      %cst_57 = arith.constant dense<0.000000e+00> : vector<32x8xf32>
      %69 = tpu.matmul %14, %68, %cst_57 {dimension_numbers = #tpu.dot_dimension_numbers<[1], [0], [0], [1], [0, 0, 1, 1], [], []>} : vector<32x32xbf16>, vector<32x8xbf16>, vector<32x8xf32> -> vector<32x8xf32>
      %c0_58 = arith.constant 0 : index
      %c0_59 = arith.constant 0 : index
      %c1_60 = arith.constant 1 : index
      %c0_61 = arith.constant 0 : index
      %c0_62 = arith.constant 0 : index
      %70 = vector.load %arg7[%c0_58, %c0_59, %c1_60, %c0_61, %c0_62] : memref<1x1x4x1x8xf32, #tpu.memory_space<vmem>>, vector<1x1x1x1x8xf32>
      %71 = vector.shape_cast %70 : vector<1x1x1x1x8xf32> to vector<1x8xf32>
      %72 = vector.broadcast %71 : vector<1x8xf32> to vector<32x8xf32>
      %73 = arith.addf %69, %72 : vector<32x8xf32>
      %c0_63 = arith.constant 0 : index
      %c0_64 = arith.constant 0 : index
      %c1_65 = arith.constant 1 : index
      %c0_66 = arith.constant 0 : index
      %c0_67 = arith.constant 0 : index
      %74 = vector.load %arg8[%c0_63, %c0_64, %c1_65, %c0_66, %c0_67] : memref<1x1x4x32x8xbf16, #tpu.memory_space<vmem>>, vector<1x1x1x32x8xbf16>
      %75 = vector.shape_cast %74 : vector<1x1x1x32x8xbf16> to vector<32x8xbf16>
      %cst_68 = arith.constant dense<0.000000e+00> : vector<32x8xf32>
      %76 = tpu.matmul %15, %75, %cst_68 {dimension_numbers = #tpu.dot_dimension_numbers<[1], [0], [0], [1], [0, 0, 1, 1], [], []>} : vector<32x32xbf16>, vector<32x8xbf16>, vector<32x8xf32> -> vector<32x8xf32>
      %c0_69 = arith.constant 0 : index
      %c0_70 = arith.constant 0 : index
      %c1_71 = arith.constant 1 : index
      %c0_72 = arith.constant 0 : index
      %c0_73 = arith.constant 0 : index
      %77 = vector.load %arg9[%c0_69, %c0_70, %c1_71, %c0_72, %c0_73] : memref<1x1x4x1x8xf32, #tpu.memory_space<vmem>>, vector<1x1x1x1x8xf32>
      %78 = vector.shape_cast %77 : vector<1x1x1x1x8xf32> to vector<1x8xf32>
      %79 = vector.broadcast %78 : vector<1x8xf32> to vector<32x8xf32>
      %80 = arith.addf %76, %79 : vector<32x8xf32>
      %c0_74 = arith.constant 0 : index
      %c0_75 = arith.constant 0 : index
      %c1_76 = arith.constant 1 : index
      %c0_77 = arith.constant 0 : index
      %c0_78 = arith.constant 0 : index
      %81 = vector.load %arg10[%c0_74, %c0_75, %c1_76, %c0_77, %c0_78] : memref<1x1x4x32x8xbf16, #tpu.memory_space<vmem>>, vector<1x1x1x32x8xbf16>
      %82 = vector.shape_cast %81 : vector<1x1x1x32x8xbf16> to vector<32x8xbf16>
      %cst_79 = arith.constant dense<0.000000e+00> : vector<32x8xf32>
      %83 = tpu.matmul %15, %82, %cst_79 {dimension_numbers = #tpu.dot_dimension_numbers<[1], [0], [0], [1], [0, 0, 1, 1], [], []>} : vector<32x32xbf16>, vector<32x8xbf16>, vector<32x8xf32> -> vector<32x8xf32>
      %c0_80 = arith.constant 0 : index
      %c0_81 = arith.constant 0 : index
      %c1_82 = arith.constant 1 : index
      %c0_83 = arith.constant 0 : index
      %c0_84 = arith.constant 0 : index
      %84 = vector.load %arg11[%c0_80, %c0_81, %c1_82, %c0_83, %c0_84] : memref<1x1x4x1x8xf32, #tpu.memory_space<vmem>>, vector<1x1x1x1x8xf32>
      %85 = vector.shape_cast %84 : vector<1x1x1x1x8xf32> to vector<1x8xf32>
      %86 = vector.broadcast %85 : vector<1x8xf32> to vector<32x8xf32>
      %87 = arith.addf %83, %86 : vector<32x8xf32>
      %88 = vector.shape_cast %73 : vector<32x8xf32> to vector<4x8x8xf32>
      %89 = arith.truncf %88 : vector<4x8x8xf32> to vector<4x8x8xbf16>
      %90 = vector.shape_cast %80 : vector<32x8xf32> to vector<4x8x8xf32>
      %91 = arith.truncf %90 : vector<4x8x8xf32> to vector<4x8x8xbf16>
      %92 = vector.shape_cast %87 : vector<32x8xf32> to vector<4x8x8xf32>
      %93 = arith.truncf %92 : vector<4x8x8xf32> to vector<4x8x8xbf16>
      "tpu.trace_start"() <{level = 10 : i32, message = "bqd,bkd->bqk"}> : () -> ()
      %cst_85 = arith.constant dense<0.000000e+00> : vector<4x8x8xf32>
      %94 = tpu.matmul %89, %91, %cst_85 {dimension_numbers = #tpu.dot_dimension_numbers<[2], [2], [1], [1], [0, 0, 0, 1, 1, 1], [0], [0]>} : vector<4x8x8xbf16>, vector<4x8x8xbf16>, vector<4x8x8xf32> -> vector<4x8x8xf32>
      "tpu.trace_stop"() : () -> ()
      %95 = arith.addf %94, %18 : vector<4x8x8xf32>
      %cst_86 = arith.constant dense<0xFF800000> : vector<4x8xf32>
      %96 = vector.multi_reduction <maximumf>, %95, %cst_86 [2] : vector<4x8x8xf32> to vector<4x8xf32>
      %97 = vector.shape_cast %96 : vector<4x8xf32> to vector<4x8x1xf32>
      %98 = vector.broadcast %97 : vector<4x8x1xf32> to vector<4x8x8xf32>
      %99 = arith.subf %95, %98 : vector<4x8x8xf32>
      %100 = math.exp %99 : vector<4x8x8xf32>
      %cst_87 = arith.constant dense<0.000000e+00> : vector<4x8xf32>
      %101 = vector.multi_reduction <add>, %100, %cst_87 [2] : vector<4x8x8xf32> to vector<4x8xf32>
      %102 = vector.shape_cast %101 : vector<4x8xf32> to vector<4x8x1xf32>
      %103 = arith.truncf %100 : vector<4x8x8xf32> to vector<4x8x8xbf16>
      "tpu.trace_start"() <{level = 10 : i32, message = "bqk,bkd->bqd"}> : () -> ()
      %cst_88 = arith.constant dense<0.000000e+00> : vector<4x8x8xf32>
      %104 = tpu.matmul %103, %93, %cst_88 {dimension_numbers = #tpu.dot_dimension_numbers<[2], [1], [1], [2], [0, 0, 0, 1, 1, 2], [0], [0]>} : vector<4x8x8xbf16>, vector<4x8x8xbf16>, vector<4x8x8xf32> -> vector<4x8x8xf32>
      "tpu.trace_stop"() : () -> ()
      %105 = tpu.reciprocal %102 {approx = true} : vector<4x8x1xf32> -> vector<4x8x1xf32>
      %106 = vector.broadcast %105 : vector<4x8x1xf32> to vector<4x8x8xf32>
      %107 = arith.mulf %104, %106 : vector<4x8x8xf32>
      %108 = vector.shape_cast %107 : vector<4x8x8xf32> to vector<32x8xf32>
      %109 = arith.truncf %108 : vector<32x8xf32> to vector<32x8xbf16>
      %c0_89 = arith.constant 0 : index
      %c0_90 = arith.constant 0 : index
      %c1_91 = arith.constant 1 : index
      %c0_92 = arith.constant 0 : index
      %c0_93 = arith.constant 0 : index
      %110 = vector.load %arg12[%c0_89, %c0_90, %c1_91, %c0_92, %c0_93] : memref<1x1x4x8x32xbf16, #tpu.memory_space<vmem>>, vector<1x1x1x8x32xbf16>
      %111 = vector.shape_cast %110 : vector<1x1x1x8x32xbf16> to vector<8x32xbf16>
      %cst_94 = arith.constant dense<0.000000e+00> : vector<32x32xf32>
      %112 = tpu.matmul %109, %111, %cst_94 {dimension_numbers = #tpu.dot_dimension_numbers<[1], [0], [0], [1], [0, 0, 1, 1], [], []>} : vector<32x8xbf16>, vector<8x32xbf16>, vector<32x32xf32> -> vector<32x32xf32>
      %113 = arith.addf %66, %112 : vector<32x32xf32>
      %c0_95 = arith.constant 0 : index
      %c0_96 = arith.constant 0 : index
      %c2 = arith.constant 2 : index
      %c0_97 = arith.constant 0 : index
      %c0_98 = arith.constant 0 : index
      %114 = vector.load %arg6[%c0_95, %c0_96, %c2, %c0_97, %c0_98] : memref<1x1x4x32x8xbf16, #tpu.memory_space<vmem>>, vector<1x1x1x32x8xbf16>
      %115 = vector.shape_cast %114 : vector<1x1x1x32x8xbf16> to vector<32x8xbf16>
      %cst_99 = arith.constant dense<0.000000e+00> : vector<32x8xf32>
      %116 = tpu.matmul %14, %115, %cst_99 {dimension_numbers = #tpu.dot_dimension_numbers<[1], [0], [0], [1], [0, 0, 1, 1], [], []>} : vector<32x32xbf16>, vector<32x8xbf16>, vector<32x8xf32> -> vector<32x8xf32>
      %c0_100 = arith.constant 0 : index
      %c0_101 = arith.constant 0 : index
      %c2_102 = arith.constant 2 : index
      %c0_103 = arith.constant 0 : index
      %c0_104 = arith.constant 0 : index
      %117 = vector.load %arg7[%c0_100, %c0_101, %c2_102, %c0_103, %c0_104] : memref<1x1x4x1x8xf32, #tpu.memory_space<vmem>>, vector<1x1x1x1x8xf32>
      %118 = vector.shape_cast %117 : vector<1x1x1x1x8xf32> to vector<1x8xf32>
      %119 = vector.broadcast %118 : vector<1x8xf32> to vector<32x8xf32>
      %120 = arith.addf %116, %119 : vector<32x8xf32>
      %c0_105 = arith.constant 0 : index
      %c0_106 = arith.constant 0 : index
      %c2_107 = arith.constant 2 : index
      %c0_108 = arith.constant 0 : index
      %c0_109 = arith.constant 0 : index
      %121 = vector.load %arg8[%c0_105, %c0_106, %c2_107, %c0_108, %c0_109] : memref<1x1x4x32x8xbf16, #tpu.memory_space<vmem>>, vector<1x1x1x32x8xbf16>
      %122 = vector.shape_cast %121 : vector<1x1x1x32x8xbf16> to vector<32x8xbf16>
      %cst_110 = arith.constant dense<0.000000e+00> : vector<32x8xf32>
      %123 = tpu.matmul %15, %122, %cst_110 {dimension_numbers = #tpu.dot_dimension_numbers<[1], [0], [0], [1], [0, 0, 1, 1], [], []>} : vector<32x32xbf16>, vector<32x8xbf16>, vector<32x8xf32> -> vector<32x8xf32>
      %c0_111 = arith.constant 0 : index
      %c0_112 = arith.constant 0 : index
      %c2_113 = arith.constant 2 : index
      %c0_114 = arith.constant 0 : index
      %c0_115 = arith.constant 0 : index
      %124 = vector.load %arg9[%c0_111, %c0_112, %c2_113, %c0_114, %c0_115] : memref<1x1x4x1x8xf32, #tpu.memory_space<vmem>>, vector<1x1x1x1x8xf32>
      %125 = vector.shape_cast %124 : vector<1x1x1x1x8xf32> to vector<1x8xf32>
      %126 = vector.broadcast %125 : vector<1x8xf32> to vector<32x8xf32>
      %127 = arith.addf %123, %126 : vector<32x8xf32>
      %c0_116 = arith.constant 0 : index
      %c0_117 = arith.constant 0 : index
      %c2_118 = arith.constant 2 : index
      %c0_119 = arith.constant 0 : index
      %c0_120 = arith.constant 0 : index
      %128 = vector.load %arg10[%c0_116, %c0_117, %c2_118, %c0_119, %c0_120] : memref<1x1x4x32x8xbf16, #tpu.memory_space<vmem>>, vector<1x1x1x32x8xbf16>
      %129 = vector.shape_cast %128 : vector<1x1x1x32x8xbf16> to vector<32x8xbf16>
      %cst_121 = arith.constant dense<0.000000e+00> : vector<32x8xf32>
      %130 = tpu.matmul %15, %129, %cst_121 {dimension_numbers = #tpu.dot_dimension_numbers<[1], [0], [0], [1], [0, 0, 1, 1], [], []>} : vector<32x32xbf16>, vector<32x8xbf16>, vector<32x8xf32> -> vector<32x8xf32>
      %c0_122 = arith.constant 0 : index
      %c0_123 = arith.constant 0 : index
      %c2_124 = arith.constant 2 : index
      %c0_125 = arith.constant 0 : index
      %c0_126 = arith.constant 0 : index
      %131 = vector.load %arg11[%c0_122, %c0_123, %c2_124, %c0_125, %c0_126] : memref<1x1x4x1x8xf32, #tpu.memory_space<vmem>>, vector<1x1x1x1x8xf32>
      %132 = vector.shape_cast %131 : vector<1x1x1x1x8xf32> to vector<1x8xf32>
      %133 = vector.broadcast %132 : vector<1x8xf32> to vector<32x8xf32>
      %134 = arith.addf %130, %133 : vector<32x8xf32>
      %135 = vector.shape_cast %120 : vector<32x8xf32> to vector<4x8x8xf32>
      %136 = arith.truncf %135 : vector<4x8x8xf32> to vector<4x8x8xbf16>
      %137 = vector.shape_cast %127 : vector<32x8xf32> to vector<4x8x8xf32>
      %138 = arith.truncf %137 : vector<4x8x8xf32> to vector<4x8x8xbf16>
      %139 = vector.shape_cast %134 : vector<32x8xf32> to vector<4x8x8xf32>
      %140 = arith.truncf %139 : vector<4x8x8xf32> to vector<4x8x8xbf16>
      "tpu.trace_start"() <{level = 10 : i32, message = "bqd,bkd->bqk"}> : () -> ()
      %cst_127 = arith.constant dense<0.000000e+00> : vector<4x8x8xf32>
      %141 = tpu.matmul %136, %138, %cst_127 {dimension_numbers = #tpu.dot_dimension_numbers<[2], [2], [1], [1], [0, 0, 0, 1, 1, 1], [0], [0]>} : vector<4x8x8xbf16>, vector<4x8x8xbf16>, vector<4x8x8xf32> -> vector<4x8x8xf32>
      "tpu.trace_stop"() : () -> ()
      %142 = arith.addf %141, %18 : vector<4x8x8xf32>
      %cst_128 = arith.constant dense<0xFF800000> : vector<4x8xf32>
      %143 = vector.multi_reduction <maximumf>, %142, %cst_128 [2] : vector<4x8x8xf32> to vector<4x8xf32>
      %144 = vector.shape_cast %143 : vector<4x8xf32> to vector<4x8x1xf32>
      %145 = vector.broadcast %144 : vector<4x8x1xf32> to vector<4x8x8xf32>
      %146 = arith.subf %142, %145 : vector<4x8x8xf32>
      %147 = math.exp %146 : vector<4x8x8xf32>
      %cst_129 = arith.constant dense<0.000000e+00> : vector<4x8xf32>
      %148 = vector.multi_reduction <add>, %147, %cst_129 [2] : vector<4x8x8xf32> to vector<4x8xf32>
      %149 = vector.shape_cast %148 : vector<4x8xf32> to vector<4x8x1xf32>
      %150 = arith.truncf %147 : vector<4x8x8xf32> to vector<4x8x8xbf16>
      "tpu.trace_start"() <{level = 10 : i32, message = "bqk,bkd->bqd"}> : () -> ()
      %cst_130 = arith.constant dense<0.000000e+00> : vector<4x8x8xf32>
      %151 = tpu.matmul %150, %140, %cst_130 {dimension_numbers = #tpu.dot_dimension_numbers<[2], [1], [1], [2], [0, 0, 0, 1, 1, 2], [0], [0]>} : vector<4x8x8xbf16>, vector<4x8x8xbf16>, vector<4x8x8xf32> -> vector<4x8x8xf32>
      "tpu.trace_stop"() : () -> ()
      %152 = tpu.reciprocal %149 {approx = true} : vector<4x8x1xf32> -> vector<4x8x1xf32>
      %153 = vector.broadcast %152 : vector<4x8x1xf32> to vector<4x8x8xf32>
      %154 = arith.mulf %151, %153 : vector<4x8x8xf32>
      %155 = vector.shape_cast %154 : vector<4x8x8xf32> to vector<32x8xf32>
      %156 = arith.truncf %155 : vector<32x8xf32> to vector<32x8xbf16>
      %c0_131 = arith.constant 0 : index
      %c0_132 = arith.constant 0 : index
      %c2_133 = arith.constant 2 : index
      %c0_134 = arith.constant 0 : index
      %c0_135 = arith.constant 0 : index
      %157 = vector.load %arg12[%c0_131, %c0_132, %c2_133, %c0_134, %c0_135] : memref<1x1x4x8x32xbf16, #tpu.memory_space<vmem>>, vector<1x1x1x8x32xbf16>
      %158 = vector.shape_cast %157 : vector<1x1x1x8x32xbf16> to vector<8x32xbf16>
      %cst_136 = arith.constant dense<0.000000e+00> : vector<32x32xf32>
      %159 = tpu.matmul %156, %158, %cst_136 {dimension_numbers = #tpu.dot_dimension_numbers<[1], [0], [0], [1], [0, 0, 1, 1], [], []>} : vector<32x8xbf16>, vector<8x32xbf16>, vector<32x32xf32> -> vector<32x32xf32>
      %160 = arith.addf %113, %159 : vector<32x32xf32>
      %c0_137 = arith.constant 0 : index
      %c0_138 = arith.constant 0 : index
      %c3 = arith.constant 3 : index
      %c0_139 = arith.constant 0 : index
      %c0_140 = arith.constant 0 : index
      %161 = vector.load %arg6[%c0_137, %c0_138, %c3, %c0_139, %c0_140] : memref<1x1x4x32x8xbf16, #tpu.memory_space<vmem>>, vector<1x1x1x32x8xbf16>
      %162 = vector.shape_cast %161 : vector<1x1x1x32x8xbf16> to vector<32x8xbf16>
      %cst_141 = arith.constant dense<0.000000e+00> : vector<32x8xf32>
      %163 = tpu.matmul %14, %162, %cst_141 {dimension_numbers = #tpu.dot_dimension_numbers<[1], [0], [0], [1], [0, 0, 1, 1], [], []>} : vector<32x32xbf16>, vector<32x8xbf16>, vector<32x8xf32> -> vector<32x8xf32>
      %c0_142 = arith.constant 0 : index
      %c0_143 = arith.constant 0 : index
      %c3_144 = arith.constant 3 : index
      %c0_145 = arith.constant 0 : index
      %c0_146 = arith.constant 0 : index
      %164 = vector.load %arg7[%c0_142, %c0_143, %c3_144, %c0_145, %c0_146] : memref<1x1x4x1x8xf32, #tpu.memory_space<vmem>>, vector<1x1x1x1x8xf32>
      %165 = vector.shape_cast %164 : vector<1x1x1x1x8xf32> to vector<1x8xf32>
      %166 = vector.broadcast %165 : vector<1x8xf32> to vector<32x8xf32>
      %167 = arith.addf %163, %166 : vector<32x8xf32>
      %c0_147 = arith.constant 0 : index
      %c0_148 = arith.constant 0 : index
      %c3_149 = arith.constant 3 : index
      %c0_150 = arith.constant 0 : index
      %c0_151 = arith.constant 0 : index
      %168 = vector.load %arg8[%c0_147, %c0_148, %c3_149, %c0_150, %c0_151] : memref<1x1x4x32x8xbf16, #tpu.memory_space<vmem>>, vector<1x1x1x32x8xbf16>
      %169 = vector.shape_cast %168 : vector<1x1x1x32x8xbf16> to vector<32x8xbf16>
      %cst_152 = arith.constant dense<0.000000e+00> : vector<32x8xf32>
      %170 = tpu.matmul %15, %169, %cst_152 {dimension_numbers = #tpu.dot_dimension_numbers<[1], [0], [0], [1], [0, 0, 1, 1], [], []>} : vector<32x32xbf16>, vector<32x8xbf16>, vector<32x8xf32> -> vector<32x8xf32>
      %c0_153 = arith.constant 0 : index
      %c0_154 = arith.constant 0 : index
      %c3_155 = arith.constant 3 : index
      %c0_156 = arith.constant 0 : index
      %c0_157 = arith.constant 0 : index
      %171 = vector.load %arg9[%c0_153, %c0_154, %c3_155, %c0_156, %c0_157] : memref<1x1x4x1x8xf32, #tpu.memory_space<vmem>>, vector<1x1x1x1x8xf32>
      %172 = vector.shape_cast %171 : vector<1x1x1x1x8xf32> to vector<1x8xf32>
      %173 = vector.broadcast %172 : vector<1x8xf32> to vector<32x8xf32>
      %174 = arith.addf %170, %173 : vector<32x8xf32>
      %c0_158 = arith.constant 0 : index
      %c0_159 = arith.constant 0 : index
      %c3_160 = arith.constant 3 : index
      %c0_161 = arith.constant 0 : index
      %c0_162 = arith.constant 0 : index
      %175 = vector.load %arg10[%c0_158, %c0_159, %c3_160, %c0_161, %c0_162] : memref<1x1x4x32x8xbf16, #tpu.memory_space<vmem>>, vector<1x1x1x32x8xbf16>
      %176 = vector.shape_cast %175 : vector<1x1x1x32x8xbf16> to vector<32x8xbf16>
      %cst_163 = arith.constant dense<0.000000e+00> : vector<32x8xf32>
      %177 = tpu.matmul %15, %176, %cst_163 {dimension_numbers = #tpu.dot_dimension_numbers<[1], [0], [0], [1], [0, 0, 1, 1], [], []>} : vector<32x32xbf16>, vector<32x8xbf16>, vector<32x8xf32> -> vector<32x8xf32>
      %c0_164 = arith.constant 0 : index
      %c0_165 = arith.constant 0 : index
      %c3_166 = arith.constant 3 : index
      %c0_167 = arith.constant 0 : index
      %c0_168 = arith.constant 0 : index
      %178 = vector.load %arg11[%c0_164, %c0_165, %c3_166, %c0_167, %c0_168] : memref<1x1x4x1x8xf32, #tpu.memory_space<vmem>>, vector<1x1x1x1x8xf32>
      %179 = vector.shape_cast %178 : vector<1x1x1x1x8xf32> to vector<1x8xf32>
      %180 = vector.broadcast %179 : vector<1x8xf32> to vector<32x8xf32>
      %181 = arith.addf %177, %180 : vector<32x8xf32>
      %182 = vector.shape_cast %167 : vector<32x8xf32> to vector<4x8x8xf32>
      %183 = arith.truncf %182 : vector<4x8x8xf32> to vector<4x8x8xbf16>
      %184 = vector.shape_cast %174 : vector<32x8xf32> to vector<4x8x8xf32>
      %185 = arith.truncf %184 : vector<4x8x8xf32> to vector<4x8x8xbf16>
      %186 = vector.shape_cast %181 : vector<32x8xf32> to vector<4x8x8xf32>
      %187 = arith.truncf %186 : vector<4x8x8xf32> to vector<4x8x8xbf16>
      "tpu.trace_start"() <{level = 10 : i32, message = "bqd,bkd->bqk"}> : () -> ()
      %cst_169 = arith.constant dense<0.000000e+00> : vector<4x8x8xf32>
      %188 = tpu.matmul %183, %185, %cst_169 {dimension_numbers = #tpu.dot_dimension_numbers<[2], [2], [1], [1], [0, 0, 0, 1, 1, 1], [0], [0]>} : vector<4x8x8xbf16>, vector<4x8x8xbf16>, vector<4x8x8xf32> -> vector<4x8x8xf32>
      "tpu.trace_stop"() : () -> ()
      %189 = arith.addf %188, %18 : vector<4x8x8xf32>
      %cst_170 = arith.constant dense<0xFF800000> : vector<4x8xf32>
      %190 = vector.multi_reduction <maximumf>, %189, %cst_170 [2] : vector<4x8x8xf32> to vector<4x8xf32>
      %191 = vector.shape_cast %190 : vector<4x8xf32> to vector<4x8x1xf32>
      %192 = vector.broadcast %191 : vector<4x8x1xf32> to vector<4x8x8xf32>
      %193 = arith.subf %189, %192 : vector<4x8x8xf32>
      %194 = math.exp %193 : vector<4x8x8xf32>
      %cst_171 = arith.constant dense<0.000000e+00> : vector<4x8xf32>
      %195 = vector.multi_reduction <add>, %194, %cst_171 [2] : vector<4x8x8xf32> to vector<4x8xf32>
      %196 = vector.shape_cast %195 : vector<4x8xf32> to vector<4x8x1xf32>
      %197 = arith.truncf %194 : vector<4x8x8xf32> to vector<4x8x8xbf16>
      "tpu.trace_start"() <{level = 10 : i32, message = "bqk,bkd->bqd"}> : () -> ()
      %cst_172 = arith.constant dense<0.000000e+00> : vector<4x8x8xf32>
      %198 = tpu.matmul %197, %187, %cst_172 {dimension_numbers = #tpu.dot_dimension_numbers<[2], [1], [1], [2], [0, 0, 0, 1, 1, 2], [0], [0]>} : vector<4x8x8xbf16>, vector<4x8x8xbf16>, vector<4x8x8xf32> -> vector<4x8x8xf32>
      "tpu.trace_stop"() : () -> ()
      %199 = tpu.reciprocal %196 {approx = true} : vector<4x8x1xf32> -> vector<4x8x1xf32>
      %200 = vector.broadcast %199 : vector<4x8x1xf32> to vector<4x8x8xf32>
      %201 = arith.mulf %198, %200 : vector<4x8x8xf32>
      %202 = vector.shape_cast %201 : vector<4x8x8xf32> to vector<32x8xf32>
      %203 = arith.truncf %202 : vector<32x8xf32> to vector<32x8xbf16>
      %c0_173 = arith.constant 0 : index
      %c0_174 = arith.constant 0 : index
      %c3_175 = arith.constant 3 : index
      %c0_176 = arith.constant 0 : index
      %c0_177 = arith.constant 0 : index
      %204 = vector.load %arg12[%c0_173, %c0_174, %c3_175, %c0_176, %c0_177] : memref<1x1x4x8x32xbf16, #tpu.memory_space<vmem>>, vector<1x1x1x8x32xbf16>
      %205 = vector.shape_cast %204 : vector<1x1x1x8x32xbf16> to vector<8x32xbf16>
      %cst_178 = arith.constant dense<0.000000e+00> : vector<32x32xf32>
      %206 = tpu.matmul %203, %205, %cst_178 {dimension_numbers = #tpu.dot_dimension_numbers<[1], [0], [0], [1], [0, 0, 1, 1], [], []>} : vector<32x8xbf16>, vector<8x32xbf16>, vector<32x32xf32> -> vector<32x32xf32>
      %207 = arith.addf %160, %206 : vector<32x32xf32>
      %c0_179 = arith.constant 0 : index
      %c0_180 = arith.constant 0 : index
      %c0_181 = arith.constant 0 : index
      %c0_182 = arith.constant 0 : index
      %208 = vector.load %arg13[%c0_179, %c0_180, %c0_181, %c0_182] : memref<1x1x1x32xf32, #tpu.memory_space<vmem>>, vector<1x1x1x32xf32>
      %209 = vector.shape_cast %208 : vector<1x1x1x32xf32> to vector<1x32xf32>
      %210 = vector.broadcast %209 : vector<1x32xf32> to vector<32x32xf32>
      %211 = arith.addf %207, %210 : vector<32x32xf32>
      %212 = arith.addf %6, %211 : vector<32x32xf32>
      %c0_183 = arith.constant 0 : index
      %c0_184 = arith.constant 0 : index
      %c0_185 = arith.constant 0 : index
      %c0_186 = arith.constant 0 : index
      %213 = vector.load %arg14[%c0_183, %c0_184, %c0_185, %c0_186] : memref<1x1x1x32xf32, #tpu.memory_space<vmem>>, vector<1x1x1x32xf32>
      %214 = vector.shape_cast %213 : vector<1x1x1x32xf32> to vector<1x32xf32>
      %c0_187 = arith.constant 0 : index
      %c0_188 = arith.constant 0 : index
      %c0_189 = arith.constant 0 : index
      %c0_190 = arith.constant 0 : index
      %215 = vector.load %arg15[%c0_187, %c0_188, %c0_189, %c0_190] : memref<1x1x1x32xf32, #tpu.memory_space<vmem>>, vector<1x1x1x32xf32>
      %216 = vector.shape_cast %215 : vector<1x1x1x32xf32> to vector<1x32xf32>
      %cst_191 = arith.constant dense<0.000000e+00> : vector<32xf32>
      %217 = vector.multi_reduction <add>, %212, %cst_191 [1] : vector<32x32xf32> to vector<32xf32>
      %218 = vector.shape_cast %217 : vector<32xf32> to vector<32x1xf32>
      %cst_192 = arith.constant 3.200000e+01 : f32
      %219 = vector.broadcast %cst_192 : f32 to vector<32x1xf32>
      %220 = arith.divf %218, %219 : vector<32x1xf32>
      %221 = vector.broadcast %220 : vector<32x1xf32> to vector<32x32xf32>
      %222 = arith.subf %212, %221 : vector<32x32xf32>
      %223 = arith.mulf %222, %222 : vector<32x32xf32>
      %cst_193 = arith.constant dense<0.000000e+00> : vector<32xf32>
      %224 = vector.multi_reduction <add>, %223, %cst_193 [1] : vector<32x32xf32> to vector<32xf32>
      %225 = vector.shape_cast %224 : vector<32xf32> to vector<32x1xf32>
      %cst_194 = arith.constant 3.200000e+01 : f32
      %226 = vector.broadcast %cst_194 : f32 to vector<32x1xf32>
      %227 = arith.divf %225, %226 : vector<32x1xf32>
      %228 = vector.broadcast %220 : vector<32x1xf32> to vector<32x32xf32>
      %229 = arith.subf %212, %228 : vector<32x32xf32>
      %cst_195 = arith.constant 9.99999974E-6 : f32
      %230 = vector.broadcast %cst_195 : f32 to vector<32x1xf32>
      %231 = arith.addf %227, %230 : vector<32x1xf32>
      %232 = math.rsqrt %231 : vector<32x1xf32>
      %233 = vector.broadcast %232 : vector<32x1xf32> to vector<32x32xf32>
      %234 = arith.mulf %229, %233 : vector<32x32xf32>
      %235 = vector.broadcast %214 : vector<1x32xf32> to vector<32x32xf32>
      %236 = arith.mulf %234, %235 : vector<32x32xf32>
      %237 = vector.broadcast %216 : vector<1x32xf32> to vector<32x32xf32>
      %238 = arith.addf %236, %237 : vector<32x32xf32>
      %239 = arith.truncf %238 : vector<32x32xf32> to vector<32x32xbf16>
      %c0_196 = arith.constant 0 : index
      %c0_197 = arith.constant 0 : index
      %c0_198 = arith.constant 0 : index
      %c0_199 = arith.constant 0 : index
      %240 = vector.load %arg16[%c0_196, %c0_197, %c0_198, %c0_199] : memref<1x1x32x64xbf16, #tpu.memory_space<vmem>>, vector<1x1x32x64xbf16>
      %241 = vector.shape_cast %240 : vector<1x1x32x64xbf16> to vector<32x64xbf16>
      %cst_200 = arith.constant dense<0.000000e+00> : vector<32x64xf32>
      %242 = tpu.matmul %239, %241, %cst_200 {dimension_numbers = #tpu.dot_dimension_numbers<[1], [0], [0], [1], [0, 0, 1, 1], [], []>} : vector<32x32xbf16>, vector<32x64xbf16>, vector<32x64xf32> -> vector<32x64xf32>
      %c0_201 = arith.constant 0 : index
      %c0_202 = arith.constant 0 : index
      %c0_203 = arith.constant 0 : index
      %c0_204 = arith.constant 0 : index
      %243 = vector.load %arg17[%c0_201, %c0_202, %c0_203, %c0_204] : memref<1x1x1x64xf32, #tpu.memory_space<vmem>>, vector<1x1x1x64xf32>
      %244 = vector.shape_cast %243 : vector<1x1x1x64xf32> to vector<1x64xf32>
      %245 = vector.broadcast %244 : vector<1x64xf32> to vector<32x64xf32>
      %246 = arith.addf %242, %245 : vector<32x64xf32>
      %cst_205 = arith.constant 0.000000e+00 : f32
      %247 = vector.broadcast %cst_205 : f32 to vector<32x64xf32>
      %248 = arith.maximumf %246, %247 : vector<32x64xf32>
      %249 = arith.truncf %248 : vector<32x64xf32> to vector<32x64xbf16>
      %c0_206 = arith.constant 0 : index
      %c0_207 = arith.constant 0 : index
      %c0_208 = arith.constant 0 : index
      %c0_209 = arith.constant 0 : index
      %250 = vector.load %arg18[%c0_206, %c0_207, %c0_208, %c0_209] : memref<1x1x64x32xbf16, #tpu.memory_space<vmem>>, vector<1x1x64x32xbf16>
      %251 = vector.shape_cast %250 : vector<1x1x64x32xbf16> to vector<64x32xbf16>
      %cst_210 = arith.constant dense<0.000000e+00> : vector<32x32xf32>
      %252 = tpu.matmul %249, %251, %cst_210 {dimension_numbers = #tpu.dot_dimension_numbers<[1], [0], [0], [1], [0, 0, 1, 1], [], []>} : vector<32x64xbf16>, vector<64x32xbf16>, vector<32x32xf32> -> vector<32x32xf32>
      %c0_211 = arith.constant 0 : index
      %c0_212 = arith.constant 0 : index
      %c0_213 = arith.constant 0 : index
      %c0_214 = arith.constant 0 : index
      %253 = vector.load %arg19[%c0_211, %c0_212, %c0_213, %c0_214] : memref<1x1x1x32xf32, #tpu.memory_space<vmem>>, vector<1x1x1x32xf32>
      %254 = vector.shape_cast %253 : vector<1x1x1x32xf32> to vector<1x32xf32>
      %255 = vector.broadcast %254 : vector<1x32xf32> to vector<32x32xf32>
      %256 = arith.addf %252, %255 : vector<32x32xf32>
      %257 = arith.addf %238, %256 : vector<32x32xf32>
      %c0_215 = arith.constant 0 : index
      %c0_216 = arith.constant 0 : index
      %c0_217 = arith.constant 0 : index
      %c0_218 = arith.constant 0 : index
      %258 = vector.load %arg20[%c0_215, %c0_216, %c0_217, %c0_218] : memref<1x1x1x32xf32, #tpu.memory_space<vmem>>, vector<1x1x1x32xf32>
      %259 = vector.shape_cast %258 : vector<1x1x1x32xf32> to vector<1x32xf32>
      %c0_219 = arith.constant 0 : index
      %c0_220 = arith.constant 0 : index
      %c0_221 = arith.constant 0 : index
      %c0_222 = arith.constant 0 : index
      %260 = vector.load %arg21[%c0_219, %c0_220, %c0_221, %c0_222] : memref<1x1x1x32xf32, #tpu.memory_space<vmem>>, vector<1x1x1x32xf32>
      %261 = vector.shape_cast %260 : vector<1x1x1x32xf32> to vector<1x32xf32>
      %cst_223 = arith.constant dense<0.000000e+00> : vector<32xf32>
      %262 = vector.multi_reduction <add>, %257, %cst_223 [1] : vector<32x32xf32> to vector<32xf32>
      %263 = vector.shape_cast %262 : vector<32xf32> to vector<32x1xf32>
      %cst_224 = arith.constant 3.200000e+01 : f32
      %264 = vector.broadcast %cst_224 : f32 to vector<32x1xf32>
      %265 = arith.divf %263, %264 : vector<32x1xf32>
      %266 = vector.broadcast %265 : vector<32x1xf32> to vector<32x32xf32>
      %267 = arith.subf %257, %266 : vector<32x32xf32>
      %268 = arith.mulf %267, %267 : vector<32x32xf32>
      %cst_225 = arith.constant dense<0.000000e+00> : vector<32xf32>
      %269 = vector.multi_reduction <add>, %268, %cst_225 [1] : vector<32x32xf32> to vector<32xf32>
      %270 = vector.shape_cast %269 : vector<32xf32> to vector<32x1xf32>
      %cst_226 = arith.constant 3.200000e+01 : f32
      %271 = vector.broadcast %cst_226 : f32 to vector<32x1xf32>
      %272 = arith.divf %270, %271 : vector<32x1xf32>
      %273 = vector.broadcast %265 : vector<32x1xf32> to vector<32x32xf32>
      %274 = arith.subf %257, %273 : vector<32x32xf32>
      %cst_227 = arith.constant 9.99999974E-6 : f32
      %275 = vector.broadcast %cst_227 : f32 to vector<32x1xf32>
      %276 = arith.addf %272, %275 : vector<32x1xf32>
      %277 = math.rsqrt %276 : vector<32x1xf32>
      %278 = vector.broadcast %277 : vector<32x1xf32> to vector<32x32xf32>
      %279 = arith.mulf %274, %278 : vector<32x32xf32>
      %280 = vector.broadcast %259 : vector<1x32xf32> to vector<32x32xf32>
      %281 = arith.mulf %279, %280 : vector<32x32xf32>
      %282 = vector.broadcast %261 : vector<1x32xf32> to vector<32x32xf32>
      %283 = arith.addf %281, %282 : vector<32x32xf32>
      %c0_228 = arith.constant 0 : index
      %c0_229 = arith.constant 0 : index
      %284 = vector.load %arg25[%c0_228, %c0_229] : memref<32x32xf32, #tpu.memory_space<vmem>>, vector<32x32xf32>
      %c0_230 = arith.constant 0 : index
      %c0_231 = arith.constant 0 : index
      %285 = vector.load %arg23[%c0_230, %c0_231] : memref<32x32xf32, #tpu.memory_space<vmem>>, vector<32x32xf32>
      tpu.vector_store %arg23[%c0_230, %c0_231], %284 {strides = array<i32>} : memref<32x32xf32, #tpu.memory_space<vmem>>, vector<32x32xf32>,
      %c0_232 = arith.constant 0 : index
      %c0_233 = arith.constant 0 : index
      %286 = vector.load %arg24[%c0_232, %c0_233] : memref<32x32xf32, #tpu.memory_space<vmem>>, vector<32x32xf32>
      tpu.vector_store %arg24[%c0_232, %c0_233], %283 {strides = array<i32>} : memref<32x32xf32, #tpu.memory_space<vmem>>, vector<32x32xf32>,
      %c1_i32_234 = arith.constant 1 : i32
      %287 = arith.cmpi eq, %arg0, %c1_i32_234 : i32
      %288 = arith.extui %287 : i1 to i32
      %c0_i32_235 = arith.constant 0 : i32
      %289 = arith.cmpi ne, %288, %c0_i32_235 : i32
      scf.if %289 {
        %c0_236 = arith.constant 0 : index
        %c0_237 = arith.constant 0 : index
        %290 = vector.load %arg22[%c0_236, %c0_237] : memref<4x32xf32, #tpu.memory_space<vmem>>, vector<4x32xf32>
        %c0_238 = arith.constant 0 : index
        %c0_239 = arith.constant 0 : index
        %291 = vector.load %arg25[%c0_238, %c0_239] : memref<32x32xf32, #tpu.memory_space<vmem>>, vector<32x32xf32>
        %292 = vector.extract_strided_slice %290 {offsets = [0, 0], sizes = [1, 32], strides = [1, 1]} : vector<4x32xf32> to vector<1x32xf32>
        %293 = vector.extract_strided_slice %290 {offsets = [1, 0], sizes = [1, 32], strides = [1, 1]} : vector<4x32xf32> to vector<1x32xf32>
        %cst_240 = arith.constant dense<0.000000e+00> : vector<32xf32>
        %294 = vector.multi_reduction <add>, %291, %cst_240 [1] : vector<32x32xf32> to vector<32xf32>
        %295 = vector.shape_cast %294 : vector<32xf32> to vector<32x1xf32>
        %cst_241 = arith.constant 3.200000e+01 : f32
        %296 = vector.broadcast %cst_241 : f32 to vector<32x1xf32>
        %297 = arith.divf %295, %296 : vector<32x1xf32>
        %298 = vector.broadcast %297 : vector<32x1xf32> to vector<32x32xf32>
        %299 = arith.subf %291, %298 : vector<32x32xf32>
        %300 = arith.mulf %299, %299 : vector<32x32xf32>
        %cst_242 = arith.constant dense<0.000000e+00> : vector<32xf32>
        %301 = vector.multi_reduction <add>, %300, %cst_242 [1] : vector<32x32xf32> to vector<32xf32>
        %302 = vector.shape_cast %301 : vector<32xf32> to vector<32x1xf32>
        %cst_243 = arith.constant 3.200000e+01 : f32
        %303 = vector.broadcast %cst_243 : f32 to vector<32x1xf32>
        %304 = arith.divf %302, %303 : vector<32x1xf32>
        %305 = vector.broadcast %297 : vector<32x1xf32> to vector<32x32xf32>
        %306 = arith.subf %291, %305 : vector<32x32xf32>
        %cst_244 = arith.constant 9.99999974E-6 : f32
        %307 = vector.broadcast %cst_244 : f32 to vector<32x1xf32>
        %308 = arith.addf %304, %307 : vector<32x1xf32>
        %309 = math.rsqrt %308 : vector<32x1xf32>
        %310 = vector.broadcast %309 : vector<32x1xf32> to vector<32x32xf32>
        %311 = arith.mulf %306, %310 : vector<32x32xf32>
        %312 = vector.broadcast %292 : vector<1x32xf32> to vector<32x32xf32>
        %313 = arith.mulf %311, %312 : vector<32x32xf32>
        %314 = vector.broadcast %293 : vector<1x32xf32> to vector<32x32xf32>
        %315 = arith.addf %313, %314 : vector<32x32xf32>
        %c0_245 = arith.constant 0 : index
        %c0_246 = arith.constant 0 : index
        %316 = vector.load %arg23[%c0_245, %c0_246] : memref<32x32xf32, #tpu.memory_space<vmem>>, vector<32x32xf32>
        tpu.vector_store %arg23[%c0_245, %c0_246], %315 {strides = array<i32>} : memref<32x32xf32, #tpu.memory_space<vmem>>, vector<32x32xf32>,
        %317 = vector.extract_strided_slice %290 {offsets = [2, 0], sizes = [1, 32], strides = [1, 1]} : vector<4x32xf32> to vector<1x32xf32>
        %318 = vector.extract_strided_slice %290 {offsets = [3, 0], sizes = [1, 32], strides = [1, 1]} : vector<4x32xf32> to vector<1x32xf32>
        %cst_247 = arith.constant dense<0.000000e+00> : vector<32xf32>
        %319 = vector.multi_reduction <add>, %283, %cst_247 [1] : vector<32x32xf32> to vector<32xf32>
        %320 = vector.shape_cast %319 : vector<32xf32> to vector<32x1xf32>
        %cst_248 = arith.constant 3.200000e+01 : f32
        %321 = vector.broadcast %cst_248 : f32 to vector<32x1xf32>
        %322 = arith.divf %320, %321 : vector<32x1xf32>
        %323 = vector.broadcast %322 : vector<32x1xf32> to vector<32x32xf32>
        %324 = arith.subf %283, %323 : vector<32x32xf32>
        %325 = arith.mulf %324, %324 : vector<32x32xf32>
        %cst_249 = arith.constant dense<0.000000e+00> : vector<32xf32>
        %326 = vector.multi_reduction <add>, %325, %cst_249 [1] : vector<32x32xf32> to vector<32xf32>
        %327 = vector.shape_cast %326 : vector<32xf32> to vector<32x1xf32>
        %cst_250 = arith.constant 3.200000e+01 : f32
        %328 = vector.broadcast %cst_250 : f32 to vector<32x1xf32>
        %329 = arith.divf %327, %328 : vector<32x1xf32>
        %330 = vector.broadcast %322 : vector<32x1xf32> to vector<32x32xf32>
        %331 = arith.subf %283, %330 : vector<32x32xf32>
        %cst_251 = arith.constant 9.99999974E-6 : f32
        %332 = vector.broadcast %cst_251 : f32 to vector<32x1xf32>
        %333 = arith.addf %329, %332 : vector<32x1xf32>
        %334 = math.rsqrt %333 : vector<32x1xf32>
        %335 = vector.broadcast %334 : vector<32x1xf32> to vector<32x32xf32>
        %336 = arith.mulf %331, %335 : vector<32x32xf32>
        %337 = vector.broadcast %317 : vector<1x32xf32> to vector<32x32xf32>
        %338 = arith.mulf %336, %337 : vector<32x32xf32>
        %339 = vector.broadcast %318 : vector<1x32xf32> to vector<32x32xf32>
        %340 = arith.addf %338, %339 : vector<32x32xf32>
        %c0_252 = arith.constant 0 : index
        %c0_253 = arith.constant 0 : index
        %341 = vector.load %arg24[%c0_252, %c0_253] : memref<32x32xf32, #tpu.memory_space<vmem>>, vector<32x32xf32>
        tpu.vector_store %arg24[%c0_252, %c0_253], %340 {strides = array<i32>} : memref<32x32xf32, #tpu.memory_space<vmem>>, vector<32x32xf32>,
      } else {
      }
    } else {
    }
    return
  }
  func.func @transform_0(%arg0: i32, %arg1: i32) -> (i32, i32) {
    %c0_i32 = arith.constant 0 : i32
    %c0_i32_0 = arith.constant 0 : i32
    %c0_i32_1 = arith.constant 0 : i32
    return %c0_i32, %c0_i32_0 : i32, i32
  }
  func.func @transform_1(%arg0: i32, %arg1: i32) -> (i32, i32) {
    %c0_i32 = arith.constant 0 : i32
    %c0_i32_0 = arith.constant 0 : i32
    %c0_i32_1 = arith.constant 0 : i32
    return %c0_i32, %c0_i32_0 : i32, i32
  }
  func.func @transform_2(%arg0: i32, %arg1: i32) -> (i32, i32) {
    %c0_i32 = arith.constant 0 : i32
    %c0_i32_0 = arith.constant 0 : i32
    %c0_i32_1 = arith.constant 0 : i32
    return %c0_i32, %c0_i32_0 : i32, i32
  }
  func.func @transform_3(%arg0: i32, %arg1: i32) -> (i32, i32) {
    %c0_i32 = arith.constant 0 : i32
    %c0_i32_0 = arith.constant 0 : i32
    %c0_i32_1 = arith.constant 0 : i32
    return %c0_i32, %c0_i32_0 : i32, i32
  }
  func.func @transform_4(%arg0: i32, %arg1: i32) -> (i32, i32, i32, i32, i32) {
    %c0_i32 = arith.constant 0 : i32
    %c0_i32_0 = arith.constant 0 : i32
    %c0_i32_1 = arith.constant 0 : i32
    %c0_i32_2 = arith.constant 0 : i32
    return %arg0, %arg1, %c0_i32, %c0_i32_0, %c0_i32_1 : i32, i32, i32, i32, i32
  }
  func.func @transform_5(%arg0: i32, %arg1: i32) -> (i32, i32, i32, i32, i32) {
    %c0_i32 = arith.constant 0 : i32
    %c0_i32_0 = arith.constant 0 : i32
    %c0_i32_1 = arith.constant 0 : i32
    %c0_i32_2 = arith.constant 0 : i32
    return %arg0, %arg1, %c0_i32, %c0_i32_0, %c0_i32_1 : i32, i32, i32, i32, i32
  }
  func.func @transform_6(%arg0: i32, %arg1: i32) -> (i32, i32, i32, i32, i32) {
    %c0_i32 = arith.constant 0 : i32
    %c0_i32_0 = arith.constant 0 : i32
    %c0_i32_1 = arith.constant 0 : i32
    %c0_i32_2 = arith.constant 0 : i32
    return %arg0, %arg1, %c0_i32, %c0_i32_0, %c0_i32_1 : i32, i32, i32, i32, i32
  }
  func.func @transform_7(%arg0: i32, %arg1: i32) -> (i32, i32, i32, i32, i32) {
    %c0_i32 = arith.constant 0 : i32
    %c0_i32_0 = arith.constant 0 : i32
    %c0_i32_1 = arith.constant 0 : i32
    %c0_i32_2 = arith.constant 0 : i32
    return %arg0, %arg1, %c0_i32, %c0_i32_0, %c0_i32_1 : i32, i32, i32, i32, i32
  }
  func.func @transform_8(%arg0: i32, %arg1: i32) -> (i32, i32, i32, i32, i32) {
    %c0_i32 = arith.constant 0 : i32
    %c0_i32_0 = arith.constant 0 : i32
    %c0_i32_1 = arith.constant 0 : i32
    %c0_i32_2 = arith.constant 0 : i32
    return %arg0, %arg1, %c0_i32, %c0_i32_0, %c0_i32_1 : i32, i32, i32, i32, i32
  }
  func.func @transform_9(%arg0: i32, %arg1: i32) -> (i32, i32, i32, i32, i32) {
    %c0_i32 = arith.constant 0 : i32
    %c0_i32_0 = arith.constant 0 : i32
    %c0_i32_1 = arith.constant 0 : i32
    %c0_i32_2 = arith.constant 0 : i32
    return %arg0, %arg1, %c0_i32, %c0_i32_0, %c0_i32_1 : i32, i32, i32, i32, i32
  }
  func.func @transform_10(%arg0: i32, %arg1: i32) -> (i32, i32, i32, i32, i32) {
    %c0_i32 = arith.constant 0 : i32
    %c0_i32_0 = arith.constant 0 : i32
    %c0_i32_1 = arith.constant 0 : i32
    %c0_i32_2 = arith.constant 0 : i32
    return %arg0, %arg1, %c0_i32, %c0_i32_0, %c0_i32_1 : i32, i32, i32, i32, i32
  }
  func.func @transform_11(%arg0: i32, %arg1: i32) -> (i32, i32, i32, i32) {
    %c0_i32 = arith.constant 0 : i32
    %c0_i32_0 = arith.constant 0 : i32
    %c0_i32_1 = arith.constant 0 : i32
    return %arg0, %arg1, %c0_i32, %c0_i32_0 : i32, i32, i32, i32
  }
  func.func @transform_12(%arg0: i32, %arg1: i32) -> (i32, i32, i32, i32) {
    %c0_i32 = arith.constant 0 : i32
    %c0_i32_0 = arith.constant 0 : i32
    %c0_i32_1 = arith.constant 0 : i32
    return %arg0, %arg1, %c0_i32, %c0_i32_0 : i32, i32, i32, i32
  }
  func.func @transform_13(%arg0: i32, %arg1: i32) -> (i32, i32, i32, i32) {
    %c0_i32 = arith.constant 0 : i32
    %c0_i32_0 = arith.constant 0 : i32
    %c0_i32_1 = arith.constant 0 : i32
    return %arg0, %arg1, %c0_i32, %c0_i32_0 : i32, i32, i32, i32
  }
  func.func @transform_14(%arg0: i32, %arg1: i32) -> (i32, i32, i32, i32) {
    %c0_i32 = arith.constant 0 : i32
    %c0_i32_0 = arith.constant 0 : i32
    %c0_i32_1 = arith.constant 0 : i32
    return %arg0, %arg1, %c0_i32, %c0_i32_0 : i32, i32, i32, i32
  }
  func.func @transform_15(%arg0: i32, %arg1: i32) -> (i32, i32, i32, i32) {
    %c0_i32 = arith.constant 0 : i32
    %c0_i32_0 = arith.constant 0 : i32
    %c0_i32_1 = arith.constant 0 : i32
    return %arg0, %arg1, %c0_i32, %c0_i32_0 : i32, i32, i32, i32
  }
  func.func @transform_16(%arg0: i32, %arg1: i32) -> (i32, i32, i32, i32) {
    %c0_i32 = arith.constant 0 : i32
    %c0_i32_0 = arith.constant 0 : i32
    %c0_i32_1 = arith.constant 0 : i32
    return %arg0, %arg1, %c0_i32, %c0_i32_0 : i32, i32, i32, i32
  }
  func.func @transform_17(%arg0: i32, %arg1: i32) -> (i32, i32, i32, i32) {
    %c0_i32 = arith.constant 0 : i32
    %c0_i32_0 = arith.constant 0 : i32
    %c0_i32_1 = arith.constant 0 : i32
    return %arg0, %arg1, %c0_i32, %c0_i32_0 : i32, i32, i32, i32
  }
  func.func @transform_18(%arg0: i32, %arg1: i32) -> (i32, i32, i32, i32) {
    %c0_i32 = arith.constant 0 : i32
    %c0_i32_0 = arith.constant 0 : i32
    %c0_i32_1 = arith.constant 0 : i32
    return %arg0, %arg1, %c0_i32, %c0_i32_0 : i32, i32, i32, i32
  }
  func.func @transform_19(%arg0: i32, %arg1: i32) -> (i32, i32, i32, i32) {
    %c0_i32 = arith.constant 0 : i32
    %c0_i32_0 = arith.constant 0 : i32
    %c0_i32_1 = arith.constant 0 : i32
    return %arg0, %arg1, %c0_i32, %c0_i32_0 : i32, i32, i32, i32
  }
  func.func @transform_20(%arg0: i32, %arg1: i32) -> (i32, i32) {
    %c0_i32 = arith.constant 0 : i32
    %c0_i32_0 = arith.constant 0 : i32
    %c0_i32_1 = arith.constant 0 : i32
    return %c0_i32, %c0_i32_0 : i32, i32
  }
  func.func @transform_21(%arg0: i32, %arg1: i32) -> (i32, i32) {
    %c0_i32 = arith.constant 0 : i32
    %c0_i32_0 = arith.constant 0 : i32
    %c0_i32_1 = arith.constant 0 : i32
    return %c0_i32, %c0_i32_0 : i32, i32
  }
  func.func @transform_22(%arg0: i32, %arg1: i32) -> (i32, i32) {
    %c0_i32 = arith.constant 0 : i32
    %c0_i32_0 = arith.constant 0 : i32
    %c0_i32_1 = arith.constant 0 : i32
    return %c0_i32, %c0_i32_0 : i32, i32
  }
}

</mosaic_0001>

<llo_original>
// kernel: tpu_custom_call.1
$region0: #{tpu_custom_call.1}
  #allocation0 [shape = 'u32[]', space=smem, size = 0x4, offset = 0x4, fixed_abs, tag = 'smem constant byte address 0x4 - core index']
  #allocation1 [shape = 'u32[144,128]{1,0:T(1,128)}', space=vmem, size = 0x12000, scoped, tag = 'internal scratch']
  #allocation2 [shape = 'f32[32,32]{1,0:T(8,128)}', space=vmem, size = 0x4000, scoped, tag = 'scratch operand']
  %s0 = inlined_call_operand.vmem [shape: f32[32,32], index: 0, kind: input, shape index: {}]
  %s1 = inlined_call_operand.vmem [shape: f32[32,32], index: 1, kind: input, shape index: {}]
  %s2 = inlined_call_operand.vmem [shape: f32[4,8], index: 2, kind: input, shape index: {}]
  %s3 = inlined_call_operand.vmem [shape: f32[4,8], index: 3, kind: input, shape index: {}]
  %s4 = inlined_call_operand.vmem [shape: bf16[2,2,4,32,8], index: 4, kind: input, shape index: {}]
  %s5 = inlined_call_operand.vmem [shape: f32[2,2,4,1,8], index: 5, kind: input, shape index: {}]
  %s6 = inlined_call_operand.vmem [shape: bf16[2,2,4,32,8], index: 6, kind: input, shape index: {}]
  %s7 = inlined_call_operand.vmem [shape: f32[2,2,4,1,8], index: 7, kind: input, shape index: {}]
  %s8 = inlined_call_operand.vmem [shape: bf16[2,2,4,32,8], index: 8, kind: input, shape index: {}]
  %s9 = inlined_call_operand.vmem [shape: f32[2,2,4,1,8], index: 9, kind: input, shape index: {}]
  %s10 = inlined_call_operand.vmem [shape: bf16[2,2,4,8,32], index: 10, kind: input, shape index: {}]
  %s11 = inlined_call_operand.vmem [shape: f32[2,2,1,32], index: 11, kind: input, shape index: {}]
  %s12 = inlined_call_operand.vmem [shape: f32[2,2,1,32], index: 12, kind: input, shape index: {}]
  %s13 = inlined_call_operand.vmem [shape: f32[2,2,1,32], index: 13, kind: input, shape index: {}]
  %s14 = inlined_call_operand.vmem [shape: bf16[2,2,32,64], index: 14, kind: input, shape index: {}]
  %s15 = inlined_call_operand.vmem [shape: f32[2,2,1,64], index: 15, kind: input, shape index: {}]
  %s16 = inlined_call_operand.vmem [shape: bf16[2,2,64,32], index: 16, kind: input, shape index: {}]
  %s17 = inlined_call_operand.vmem [shape: f32[2,2,1,32], index: 17, kind: input, shape index: {}]
  %s18 = inlined_call_operand.vmem [shape: f32[2,2,1,32], index: 18, kind: input, shape index: {}]
  %s19 = inlined_call_operand.vmem [shape: f32[2,2,1,32], index: 19, kind: input, shape index: {}]
  %s20 = inlined_call_operand.vmem [shape: f32[4,32], index: 20, kind: input, shape index: {}]
  %s21 = inlined_call_operand.hbm [shape: f32[32,32], index: 21, kind: output, shape index: {0}]
  %s22 = inlined_call_operand.hbm [shape: f32[32,32], index: 22, kind: output, shape index: {1}]
  %23 = xla_tuple %s21, %s22
  %s24 = sld [smem:[#allocation0]]
  $region141: #{tpu_custom_call.1} parent=0
    _
  %s26 = ssub.s32 1, %s24
  %s27 = scalar_select 0, %s26, %s24
  $region1: #{tpu_custom_call.1} parent=0
    #allocation3 [shape = 'u8[16384]{0}', space=vmem, size = 0x4000, scoped, tag = 'output window, operand 0, single buffered']
    #allocation4 [shape = 's32[2]{0}', space=sflag, size = 0x8, scoped, tag = 'scoped memory for tpu_custom_call.1']
    #allocation5 [shape = 'u8[16384]{0}', space=vmem, size = 0x4000, scoped, tag = 'output window, operand 1, single buffered']
    #allocation6 [shape = 's32[1]{0}', space=sflag, size = 0x4, scoped, tag = 'scoped memory for tpu_custom_call.1']
    %28 = vsyncpa [#allocation4], 0
    %29 = vsyncpa [#allocation6], 0
    loop: start=0, step=1, limit=6
    $region2: #{tpu_custom_call.1} parent=1 // loop_pre_header
      _
    $region3: #{tpu_custom_call.1} parent=1 // loop_header
      %s31 = sphi 0, %s35
      %p32 = scmp.ge.s32.totalorder %s31, 6
      %s38 = sphi 0, %s50
      %s39 = sphi 0, %s46
      %s40 = sphi 0, %s38
      %s41 = sphi 0, %s39
      %s42 = sphi 0, %s40
      %s43 = sphi 0, %s41
      %s51 = sphi 0, %s51
      %s53 = sphi 0, %s51
      %s54 = sphi 0, %s53
      %s68 = sphi 0, %s54
      %s72 = sphi 0, %s72
      %s74 = sphi 0, %s72
      %s75 = sphi 0, %s74
      %s89 = sphi 0, %s75
      %s93 = sphi 0, %s93
      %s95 = sphi 0, %s93
      %s96 = sphi 0, %s95
      %s110 = sphi 0, %s96
      %s114 = sphi 0, %s114
      %s116 = sphi 0, %s114
      %s117 = sphi 0, %s116
      %s131 = sphi 0, %s117
      %s139 = sphi 0, %s141
      %s142 = sphi 0, %s139
      %s143 = sphi 0, %s142
      %s159 = sphi 0, %s143
      %s167 = sphi 0, %s169
      %s170 = sphi 0, %s167
      %s171 = sphi 0, %s170
      %s187 = sphi 0, %s171
      %s195 = sphi 0, %s197
      %s198 = sphi 0, %s195
      %s199 = sphi 0, %s198
      %s215 = sphi 0, %s199
      %s223 = sphi 0, %s225
      %s226 = sphi 0, %s223
      %s227 = sphi 0, %s226
      %s243 = sphi 0, %s227
      %s251 = sphi 0, %s253
      %s254 = sphi 0, %s251
      %s255 = sphi 0, %s254
      %s271 = sphi 0, %s255
      %s279 = sphi 0, %s281
      %s282 = sphi 0, %s279
      %s283 = sphi 0, %s282
      %s299 = sphi 0, %s283
      %s307 = sphi 0, %s309
      %s310 = sphi 0, %s307
      %s311 = sphi 0, %s310
      %s327 = sphi 0, %s311
      %s335 = sphi 0, %s337
      %s338 = sphi 0, %s335
      %s339 = sphi 0, %s338
      %s355 = sphi 0, %s339
      %s363 = sphi 0, %s365
      %s366 = sphi 0, %s363
      %s367 = sphi 0, %s366
      %s383 = sphi 0, %s367
      %s391 = sphi 0, %s393
      %s394 = sphi 0, %s391
      %s395 = sphi 0, %s394
      %s411 = sphi 0, %s395
      %s419 = sphi 0, %s421
      %s422 = sphi 0, %s419
      %s423 = sphi 0, %s422
      %s439 = sphi 0, %s423
      %s447 = sphi 0, %s449
      %s450 = sphi 0, %s447
      %s451 = sphi 0, %s450
      %s467 = sphi 0, %s451
      %s475 = sphi 0, %s477
      %s478 = sphi 0, %s475
      %s479 = sphi 0, %s478
      %s495 = sphi 0, %s479
      %s503 = sphi 0, %s505
      %s506 = sphi 0, %s503
      %s507 = sphi 0, %s506
      %s523 = sphi 0, %s507
      %s531 = sphi 0, %s533
      %s534 = sphi 0, %s531
      %s535 = sphi 0, %s534
      %s551 = sphi 0, %s535
      %s559 = sphi 0, %s561
      %s562 = sphi 0, %s559
      %s563 = sphi 0, %s562
      %s579 = sphi 0, %s563
      %s583 = sphi 0, %s583
      %s585 = sphi 0, %s583
      %s586 = sphi 0, %s585
      %s600 = sphi 0, %s586
      %s604 = sphi 0, %s604
      %s606 = sphi 0, %s604
      %s607 = sphi 0, %s606
      %s621 = sphi 0, %s607
      %s625 = sphi 0, %s625
      %s627 = sphi 0, %s625
      %s628 = sphi 0, %s627
      %s642 = sphi 0, %s628
    $region4: #{tpu_custom_call.1} parent=1 // loop_header_branch
      %34 = sbr.rel (%p32) target = $region8
    $region5: #{tpu_custom_call.1} parent=1 // loop_body
      %s36 = ssub.s32 %s31, 1
      %s37 = ssub.s32 %s31, 2
      %s44 = sadd.s32 1, %s39
      %p45 = scmp.ge.s32.totalorder %s44, 2
      %s46 = scalar_select %p45, 0, %s44
      %s47 = sadd.s32 1, %s38
      %s48 = scalar_select %p45, %s47, %s38
      %p49 = scmp.ge.s32.totalorder %s48, 2
      %s50 = scalar_select %p49, 0, %s48
      %s52 = sadd.s32 %s51, 1
      %p55 = scmp.eq.s32.totalorder %s31, 3
      %p56 = scmp.ne.s32.totalorder %s51, %s53
      %p57 = scmp.eq.s32.totalorder %s31, 0
      %p58 = por %p56, %p57
      %p59 = scmp.ne.s32.totalorder %s51, %s53
      %p60 = scmp.eq.s32.totalorder %s36, 3
      %p61 = por %p59, %p60
      %p62 = scmp.ne.s32.totalorder %s53, %s54
      %p63 = scmp.eq.s32.totalorder %s36, 0
      %p64 = por %p62, %p63
      %p65 = scmp.ne.s32.totalorder %s53, %s54
      %p66 = scmp.eq.s32.totalorder %s37, 3
      %p67 = por %p65, %p66
      %p69 = scmp.ne.s32.totalorder %s54, %s68
      %p70 = scmp.eq.s32.totalorder %s37, 0
      %p71 = por %p69, %p70
      %s73 = sadd.s32 %s72, 1
      %p76 = scmp.eq.s32.totalorder %s31, 3
      %p77 = scmp.ne.s32.totalorder %s72, %s74
      %p78 = scmp.eq.s32.totalorder %s31, 0
      %p79 = por %p77, %p78
      %p80 = scmp.ne.s32.totalorder %s72, %s74
      %p81 = scmp.eq.s32.totalorder %s36, 3
      %p82 = por %p80, %p81
      %p83 = scmp.ne.s32.totalorder %s74, %s75
      %p84 = scmp.eq.s32.totalorder %s36, 0
      %p85 = por %p83, %p84
      %p86 = scmp.ne.s32.totalorder %s74, %s75
      %p87 = scmp.eq.s32.totalorder %s37, 3
      %p88 = por %p86, %p87
      %p90 = scmp.ne.s32.totalorder %s75, %s89
      %p91 = scmp.eq.s32.totalorder %s37, 0
      %p92 = por %p90, %p91
      %s94 = sadd.s32 %s93, 1
      %p97 = scmp.eq.s32.totalorder %s31, 3
      %p98 = scmp.ne.s32.totalorder %s93, %s95
      %p99 = scmp.eq.s32.totalorder %s31, 0
      %p100 = por %p98, %p99
      %p101 = scmp.ne.s32.totalorder %s93, %s95
      %p102 = scmp.eq.s32.totalorder %s36, 3
      %p103 = por %p101, %p102
      %p104 = scmp.ne.s32.totalorder %s95, %s96
      %p105 = scmp.eq.s32.totalorder %s36, 0
      %p106 = por %p104, %p105
      %p107 = scmp.ne.s32.totalorder %s95, %s96
      %p108 = scmp.eq.s32.totalorder %s37, 3
      %p109 = por %p107, %p108
      %p111 = scmp.ne.s32.totalorder %s96, %s110
      %p112 = scmp.eq.s32.totalorder %s37, 0
      %p113 = por %p111, %p112
      %s115 = sadd.s32 %s114, 1
      %p118 = scmp.eq.s32.totalorder %s31, 3
      %p119 = scmp.ne.s32.totalorder %s114, %s116
      %p120 = scmp.eq.s32.totalorder %s31, 0
      %p121 = por %p119, %p120
      %p122 = scmp.ne.s32.totalorder %s114, %s116
      %p123 = scmp.eq.s32.totalorder %s36, 3
      %p124 = por %p122, %p123
      %p125 = scmp.ne.s32.totalorder %s116, %s117
      %p126 = scmp.eq.s32.totalorder %s36, 0
      %p127 = por %p125, %p126
      %p128 = scmp.ne.s32.totalorder %s116, %s117
      %p129 = scmp.eq.s32.totalorder %s37, 3
      %p130 = por %p128, %p129
      %p132 = scmp.ne.s32.totalorder %s117, %s131
      %p133 = scmp.eq.s32.totalorder %s37, 0
      %p134 = por %p132, %p133
      %s135 = ssub.s32 %s38, %s50
      %s136 = ssub.s32 %s39, %s46
      %s137 = sor.u32 %s135, %s136
      %p138 = scmp.eq.s32.totalorder %s137, 0
      %s140 = sadd.s32 %s139, 1
      %s141 = scalar_select %p138, %s139, %s140
      %p144 = pneg %p138
      %p145 = scmp.eq.s32.totalorder %s31, 3
      %p146 = por %p144, %p145
      %p147 = scmp.ne.s32.totalorder %s139, %s142
      %p148 = scmp.eq.s32.totalorder %s31, 0
      %p149 = por %p147, %p148
      %p150 = scmp.ne.s32.totalorder %s139, %s142
      %p151 = scmp.eq.s32.totalorder %s36, 3
      %p152 = por %p150, %p151
      %p153 = scmp.ne.s32.totalorder %s142, %s143
      %p154 = scmp.eq.s32.totalorder %s36, 0
      %p155 = por %p153, %p154
      %p156 = scmp.ne.s32.totalorder %s142, %s143
      %p157 = scmp.eq.s32.totalorder %s37, 3
      %p158 = por %p156, %p157
      %p160 = scmp.ne.s32.totalorder %s143, %s159
      %p161 = scmp.eq.s32.totalorder %s37, 0
      %p162 = por %p160, %p161
      %s163 = ssub.s32 %s38, %s50
      %s164 = ssub.s32 %s39, %s46
      %s165 = sor.u32 %s163, %s164
      %p166 = scmp.eq.s32.totalorder %s165, 0
      %s168 = sadd.s32 %s167, 1
      %s169 = scalar_select %p166, %s167, %s168
      %p172 = pneg %p166
      %p173 = scmp.eq.s32.totalorder %s31, 3
      %p174 = por %p172, %p173
      %p175 = scmp.ne.s32.totalorder %s167, %s170
      %p176 = scmp.eq.s32.totalorder %s31, 0
      %p177 = por %p175, %p176
      %p178 = scmp.ne.s32.totalorder %s167, %s170
      %p179 = scmp.eq.s32.totalorder %s36, 3
      %p180 = por %p178, %p179
      %p181 = scmp.ne.s32.totalorder %s170, %s171
      %p182 = scmp.eq.s32.totalorder %s36, 0
      %p183 = por %p181, %p182
      %p184 = scmp.ne.s32.totalorder %s170, %s171
      %p185 = scmp.eq.s32.totalorder %s37, 3
      %p186 = por %p184, %p185
      %p188 = scmp.ne.s32.totalorder %s171, %s187
      %p189 = scmp.eq.s32.totalorder %s37, 0
      %p190 = por %p188, %p189
      %s191 = ssub.s32 %s38, %s50
      %s192 = ssub.s32 %s39, %s46
      %s193 = sor.u32 %s191, %s192
      %p194 = scmp.eq.s32.totalorder %s193, 0
      %s196 = sadd.s32 %s195, 1
      %s197 = scalar_select %p194, %s195, %s196
      %p200 = pneg %p194
      %p201 = scmp.eq.s32.totalorder %s31, 3
      %p202 = por %p200, %p201
      %p203 = scmp.ne.s32.totalorder %s195, %s198
      %p204 = scmp.eq.s32.totalorder %s31, 0
      %p205 = por %p203, %p204
      %p206 = scmp.ne.s32.totalorder %s195, %s198
      %p207 = scmp.eq.s32.totalorder %s36, 3
      %p208 = por %p206, %p207
      %p209 = scmp.ne.s32.totalorder %s198, %s199
      %p210 = scmp.eq.s32.totalorder %s36, 0
      %p211 = por %p209, %p210
      %p212 = scmp.ne.s32.totalorder %s198, %s199
      %p213 = scmp.eq.s32.totalorder %s37, 3
      %p214 = por %p212, %p213
      %p216 = scmp.ne.s32.totalorder %s199, %s215
      %p217 = scmp.eq.s32.totalorder %s37, 0
      %p218 = por %p216, %p217
      %s219 = ssub.s32 %s38, %s50
      %s220 = ssub.s32 %s39, %s46
      %s221 = sor.u32 %s219, %s220
      %p222 = scmp.eq.s32.totalorder %s221, 0
      %s224 = sadd.s32 %s223, 1
      %s225 = scalar_select %p222, %s223, %s224
      %p228 = pneg %p222
      %p229 = scmp.eq.s32.totalorder %s31, 3
      %p230 = por %p228, %p229
      %p231 = scmp.ne.s32.totalorder %s223, %s226
      %p232 = scmp.eq.s32.totalorder %s31, 0
      %p233 = por %p231, %p232
      %p234 = scmp.ne.s32.totalorder %s223, %s226
      %p235 = scmp.eq.s32.totalorder %s36, 3
      %p236 = por %p234, %p235
      %p237 = scmp.ne.s32.totalorder %s226, %s227
      %p238 = scmp.eq.s32.totalorder %s36, 0
      %p239 = por %p237, %p238
      %p240 = scmp.ne.s32.totalorder %s226, %s227
      %p241 = scmp.eq.s32.totalorder %s37, 3
      %p242 = por %p240, %p241
      %p244 = scmp.ne.s32.totalorder %s227, %s243
      %p245 = scmp.eq.s32.totalorder %s37, 0
      %p246 = por %p244, %p245
      %s247 = ssub.s32 %s38, %s50
      %s248 = ssub.s32 %s39, %s46
      %s249 = sor.u32 %s247, %s248
      %p250 = scmp.eq.s32.totalorder %s249, 0
      %s252 = sadd.s32 %s251, 1
      %s253 = scalar_select %p250, %s251, %s252
      %p256 = pneg %p250
      %p257 = scmp.eq.s32.totalorder %s31, 3
      %p258 = por %p256, %p257
      %p259 = scmp.ne.s32.totalorder %s251, %s254
      %p260 = scmp.eq.s32.totalorder %s31, 0
      %p261 = por %p259, %p260
      %p262 = scmp.ne.s32.totalorder %s251, %s254
      %p263 = scmp.eq.s32.totalorder %s36, 3
      %p264 = por %p262, %p263
      %p265 = scmp.ne.s32.totalorder %s254, %s255
      %p266 = scmp.eq.s32.totalorder %s36, 0
      %p267 = por %p265, %p266
      %p268 = scmp.ne.s32.totalorder %s254, %s255
      %p269 = scmp.eq.s32.totalorder %s37, 3
      %p270 = por %p268, %p269
      %p272 = scmp.ne.s32.totalorder %s255, %s271
      %p273 = scmp.eq.s32.totalorder %s37, 0
      %p274 = por %p272, %p273
      %s275 = ssub.s32 %s38, %s50
      %s276 = ssub.s32 %s39, %s46
      %s277 = sor.u32 %s275, %s276
      %p278 = scmp.eq.s32.totalorder %s277, 0
      %s280 = sadd.s32 %s279, 1
      %s281 = scalar_select %p278, %s279, %s280
      %p284 = pneg %p278
      %p285 = scmp.eq.s32.totalorder %s31, 3
      %p286 = por %p284, %p285
      %p287 = scmp.ne.s32.totalorder %s279, %s282
      %p288 = scmp.eq.s32.totalorder %s31, 0
      %p289 = por %p287, %p288
      %p290 = scmp.ne.s32.totalorder %s279, %s282
      %p291 = scmp.eq.s32.totalorder %s36, 3
      %p292 = por %p290, %p291
      %p293 = scmp.ne.s32.totalorder %s282, %s283
      %p294 = scmp.eq.s32.totalorder %s36, 0
      %p295 = por %p293, %p294
      %p296 = scmp.ne.s32.totalorder %s282, %s283
      %p297 = scmp.eq.s32.totalorder %s37, 3
      %p298 = por %p296, %p297
      %p300 = scmp.ne.s32.totalorder %s283, %s299
      %p301 = scmp.eq.s32.totalorder %s37, 0
      %p302 = por %p300, %p301
      %s303 = ssub.s32 %s38, %s50
      %s304 = ssub.s32 %s39, %s46
      %s305 = sor.u32 %s303, %s304
      %p306 = scmp.eq.s32.totalorder %s305, 0
      %s308 = sadd.s32 %s307, 1
      %s309 = scalar_select %p306, %s307, %s308
      %p312 = pneg %p306
      %p313 = scmp.eq.s32.totalorder %s31, 3
      %p314 = por %p312, %p313
      %p315 = scmp.ne.s32.totalorder %s307, %s310
      %p316 = scmp.eq.s32.totalorder %s31, 0
      %p317 = por %p315, %p316
      %p318 = scmp.ne.s32.totalorder %s307, %s310
      %p319 = scmp.eq.s32.totalorder %s36, 3
      %p320 = por %p318, %p319
      %p321 = scmp.ne.s32.totalorder %s310, %s311
      %p322 = scmp.eq.s32.totalorder %s36, 0
      %p323 = por %p321, %p322
      %p324 = scmp.ne.s32.totalorder %s310, %s311
      %p325 = scmp.eq.s32.totalorder %s37, 3
      %p326 = por %p324, %p325
      %p328 = scmp.ne.s32.totalorder %s311, %s327
      %p329 = scmp.eq.s32.totalorder %s37, 0
      %p330 = por %p328, %p329
      %s331 = ssub.s32 %s38, %s50
      %s332 = ssub.s32 %s39, %s46
      %s333 = sor.u32 %s331, %s332
      %p334 = scmp.eq.s32.totalorder %s333, 0
      %s336 = sadd.s32 %s335, 1
      %s337 = scalar_select %p334, %s335, %s336
      %p340 = pneg %p334
      %p341 = scmp.eq.s32.totalorder %s31, 3
      %p342 = por %p340, %p341
      %p343 = scmp.ne.s32.totalorder %s335, %s338
      %p344 = scmp.eq.s32.totalorder %s31, 0
      %p345 = por %p343, %p344
      %p346 = scmp.ne.s32.totalorder %s335, %s338
      %p347 = scmp.eq.s32.totalorder %s36, 3
      %p348 = por %p346, %p347
      %p349 = scmp.ne.s32.totalorder %s338, %s339
      %p350 = scmp.eq.s32.totalorder %s36, 0
      %p351 = por %p349, %p350
      %p352 = scmp.ne.s32.totalorder %s338, %s339
      %p353 = scmp.eq.s32.totalorder %s37, 3
      %p354 = por %p352, %p353
      %p356 = scmp.ne.s32.totalorder %s339, %s355
      %p357 = scmp.eq.s32.totalorder %s37, 0
      %p358 = por %p356, %p357
      %s359 = ssub.s32 %s38, %s50
      %s360 = ssub.s32 %s39, %s46
      %s361 = sor.u32 %s359, %s360
      %p362 = scmp.eq.s32.totalorder %s361, 0
      %s364 = sadd.s32 %s363, 1
      %s365 = scalar_select %p362, %s363, %s364
      %p368 = pneg %p362
      %p369 = scmp.eq.s32.totalorder %s31, 3
      %p370 = por %p368, %p369
      %p371 = scmp.ne.s32.totalorder %s363, %s366
      %p372 = scmp.eq.s32.totalorder %s31, 0
      %p373 = por %p371, %p372
      %p374 = scmp.ne.s32.totalorder %s363, %s366
      %p375 = scmp.eq.s32.totalorder %s36, 3
      %p376 = por %p374, %p375
      %p377 = scmp.ne.s32.totalorder %s366, %s367
      %p378 = scmp.eq.s32.totalorder %s36, 0
      %p379 = por %p377, %p378
      %p380 = scmp.ne.s32.totalorder %s366, %s367
      %p381 = scmp.eq.s32.totalorder %s37, 3
      %p382 = por %p380, %p381
      %p384 = scmp.ne.s32.totalorder %s367, %s383
      %p385 = scmp.eq.s32.totalorder %s37, 0
      %p386 = por %p384, %p385
      %s387 = ssub.s32 %s38, %s50
      %s388 = ssub.s32 %s39, %s46
      %s389 = sor.u32 %s387, %s388
      %p390 = scmp.eq.s32.totalorder %s389, 0
      %s392 = sadd.s32 %s391, 1
      %s393 = scalar_select %p390, %s391, %s392
      %p396 = pneg %p390
      %p397 = scmp.eq.s32.totalorder %s31, 3
      %p398 = por %p396, %p397
      %p399 = scmp.ne.s32.totalorder %s391, %s394
      %p400 = scmp.eq.s32.totalorder %s31, 0
      %p401 = por %p399, %p400
      %p402 = scmp.ne.s32.totalorder %s391, %s394
      %p403 = scmp.eq.s32.totalorder %s36, 3
      %p404 = por %p402, %p403
      %p405 = scmp.ne.s32.totalorder %s394, %s395
      %p406 = scmp.eq.s32.totalorder %s36, 0
      %p407 = por %p405, %p406
      %p408 = scmp.ne.s32.totalorder %s394, %s395
      %p409 = scmp.eq.s32.totalorder %s37, 3
      %p410 = por %p408, %p409
      %p412 = scmp.ne.s32.totalorder %s395, %s411
      %p413 = scmp.eq.s32.totalorder %s37, 0
      %p414 = por %p412, %p413
      %s415 = ssub.s32 %s38, %s50
      %s416 = ssub.s32 %s39, %s46
      %s417 = sor.u32 %s415, %s416
      %p418 = scmp.eq.s32.totalorder %s417, 0
      %s420 = sadd.s32 %s419, 1
      %s421 = scalar_select %p418, %s419, %s420
      %p424 = pneg %p418
      %p425 = scmp.eq.s32.totalorder %s31, 3
      %p426 = por %p424, %p425
      %p427 = scmp.ne.s32.totalorder %s419, %s422
      %p428 = scmp.eq.s32.totalorder %s31, 0
      %p429 = por %p427, %p428
      %p430 = scmp.ne.s32.totalorder %s419, %s422
      %p431 = scmp.eq.s32.totalorder %s36, 3
      %p432 = por %p430, %p431
      %p433 = scmp.ne.s32.totalorder %s422, %s423
      %p434 = scmp.eq.s32.totalorder %s36, 0
      %p435 = por %p433, %p434
      %p436 = scmp.ne.s32.totalorder %s422, %s423
      %p437 = scmp.eq.s32.totalorder %s37, 3
      %p438 = por %p436, %p437
      %p440 = scmp.ne.s32.totalorder %s423, %s439
      %p441 = scmp.eq.s32.totalorder %s37, 0
      %p442 = por %p440, %p441
      %s443 = ssub.s32 %s38, %s50
      %s444 = ssub.s32 %s39, %s46
      %s445 = sor.u32 %s443, %s444
      %p446 = scmp.eq.s32.totalorder %s445, 0
      %s448 = sadd.s32 %s447, 1
      %s449 = scalar_select %p446, %s447, %s448
      %p452 = pneg %p446
      %p453 = scmp.eq.s32.totalorder %s31, 3
      %p454 = por %p452, %p453
      %p455 = scmp.ne.s32.totalorder %s447, %s450
      %p456 = scmp.eq.s32.totalorder %s31, 0
      %p457 = por %p455, %p456
      %p458 = scmp.ne.s32.totalorder %s447, %s450
      %p459 = scmp.eq.s32.totalorder %s36, 3
      %p460 = por %p458, %p459
      %p461 = scmp.ne.s32.totalorder %s450, %s451
      %p462 = scmp.eq.s32.totalorder %s36, 0
      %p463 = por %p461, %p462
      %p464 = scmp.ne.s32.totalorder %s450, %s451
      %p465 = scmp.eq.s32.totalorder %s37, 3
      %p466 = por %p464, %p465
      %p468 = scmp.ne.s32.totalorder %s451, %s467
      %p469 = scmp.eq.s32.totalorder %s37, 0
      %p470 = por %p468, %p469
      %s471 = ssub.s32 %s38, %s50
      %s472 = ssub.s32 %s39, %s46
      %s473 = sor.u32 %s471, %s472
      %p474 = scmp.eq.s32.totalorder %s473, 0
      %s476 = sadd.s32 %s475, 1
      %s477 = scalar_select %p474, %s475, %s476
      %p480 = pneg %p474
      %p481 = scmp.eq.s32.totalorder %s31, 3
      %p482 = por %p480, %p481
      %p483 = scmp.ne.s32.totalorder %s475, %s478
      %p484 = scmp.eq.s32.totalorder %s31, 0
      %p485 = por %p483, %p484
      %p486 = scmp.ne.s32.totalorder %s475, %s478
      %p487 = scmp.eq.s32.totalorder %s36, 3
      %p488 = por %p486, %p487
      %p489 = scmp.ne.s32.totalorder %s478, %s479
      %p490 = scmp.eq.s32.totalorder %s36, 0
      %p491 = por %p489, %p490
      %p492 = scmp.ne.s32.totalorder %s478, %s479
      %p493 = scmp.eq.s32.totalorder %s37, 3
      %p494 = por %p492, %p493
      %p496 = scmp.ne.s32.totalorder %s479, %s495
      %p497 = scmp.eq.s32.totalorder %s37, 0
      %p498 = por %p496, %p497
      %s499 = ssub.s32 %s38, %s50
      %s500 = ssub.s32 %s39, %s46
      %s501 = sor.u32 %s499, %s500
      %p502 = scmp.eq.s32.totalorder %s501, 0
      %s504 = sadd.s32 %s503, 1
      %s505 = scalar_select %p502, %s503, %s504
      %p508 = pneg %p502
      %p509 = scmp.eq.s32.totalorder %s31, 3
      %p510 = por %p508, %p509
      %p511 = scmp.ne.s32.totalorder %s503, %s506
      %p512 = scmp.eq.s32.totalorder %s31, 0
      %p513 = por %p511, %p512
      %p514 = scmp.ne.s32.totalorder %s503, %s506
      %p515 = scmp.eq.s32.totalorder %s36, 3
      %p516 = por %p514, %p515
      %p517 = scmp.ne.s32.totalorder %s506, %s507
      %p518 = scmp.eq.s32.totalorder %s36, 0
      %p519 = por %p517, %p518
      %p520 = scmp.ne.s32.totalorder %s506, %s507
      %p521 = scmp.eq.s32.totalorder %s37, 3
      %p522 = por %p520, %p521
      %p524 = scmp.ne.s32.totalorder %s507, %s523
      %p525 = scmp.eq.s32.totalorder %s37, 0
      %p526 = por %p524, %p525
      %s527 = ssub.s32 %s38, %s50
      %s528 = ssub.s32 %s39, %s46
      %s529 = sor.u32 %s527, %s528
      %p530 = scmp.eq.s32.totalorder %s529, 0
      %s532 = sadd.s32 %s531, 1
      %s533 = scalar_select %p530, %s531, %s532
      %p536 = pneg %p530
      %p537 = scmp.eq.s32.totalorder %s31, 3
      %p538 = por %p536, %p537
      %p539 = scmp.ne.s32.totalorder %s531, %s534
      %p540 = scmp.eq.s32.totalorder %s31, 0
      %p541 = por %p539, %p540
      %p542 = scmp.ne.s32.totalorder %s531, %s534
      %p543 = scmp.eq.s32.totalorder %s36, 3
      %p544 = por %p542, %p543
      %p545 = scmp.ne.s32.totalorder %s534, %s535
      %p546 = scmp.eq.s32.totalorder %s36, 0
      %p547 = por %p545, %p546
      %p548 = scmp.ne.s32.totalorder %s534, %s535
      %p549 = scmp.eq.s32.totalorder %s37, 3
      %p550 = por %p548, %p549
      %p552 = scmp.ne.s32.totalorder %s535, %s551
      %p553 = scmp.eq.s32.totalorder %s37, 0
      %p554 = por %p552, %p553
      %s555 = ssub.s32 %s38, %s50
      %s556 = ssub.s32 %s39, %s46
      %s557 = sor.u32 %s555, %s556
      %p558 = scmp.eq.s32.totalorder %s557, 0
      %s560 = sadd.s32 %s559, 1
      %s561 = scalar_select %p558, %s559, %s560
      %p564 = pneg %p558
      %p565 = scmp.eq.s32.totalorder %s31, 3
      %p566 = por %p564, %p565
      %p567 = scmp.ne.s32.totalorder %s559, %s562
      %p568 = scmp.eq.s32.totalorder %s31, 0
      %p569 = por %p567, %p568
      %p570 = scmp.ne.s32.totalorder %s559, %s562
      %p571 = scmp.eq.s32.totalorder %s36, 3
      %p572 = por %p570, %p571
      %p573 = scmp.ne.s32.totalorder %s562, %s563
      %p574 = scmp.eq.s32.totalorder %s36, 0
      %p575 = por %p573, %p574
      %p576 = scmp.ne.s32.totalorder %s562, %s563
      %p577 = scmp.eq.s32.totalorder %s37, 3
      %p578 = por %p576, %p577
      %p580 = scmp.ne.s32.totalorder %s563, %s579
      %p581 = scmp.eq.s32.totalorder %s37, 0
      %p582 = por %p580, %p581
      %s584 = sadd.s32 %s583, 1
      %p587 = scmp.eq.s32.totalorder %s31, 3
      %p588 = scmp.ne.s32.totalorder %s583, %s585
      %p589 = scmp.eq.s32.totalorder %s31, 0
      %p590 = por %p588, %p589
      %p591 = scmp.ne.s32.totalorder %s583, %s585
      %p592 = scmp.eq.s32.totalorder %s36, 3
      %p593 = por %p591, %p592
      %p594 = scmp.ne.s32.totalorder %s585, %s586
      %p595 = scmp.eq.s32.totalorder %s36, 0
      %p596 = por %p594, %p595
      %p597 = scmp.ne.s32.totalorder %s585, %s586
      %p598 = scmp.eq.s32.totalorder %s37, 3
      %p599 = por %p597, %p598
      %p601 = scmp.ne.s32.totalorder %s586, %s600
      %p602 = scmp.eq.s32.totalorder %s37, 0
      %p603 = por %p601, %p602
      %s605 = sadd.s32 %s604, 1
      %p608 = scmp.eq.s32.totalorder %s31, 3
      %p609 = scmp.ne.s32.totalorder %s604, %s606
      %p610 = scmp.eq.s32.totalorder %s31, 0
      %p611 = por %p609, %p610
      %p612 = scmp.ne.s32.totalorder %s604, %s606
      %p613 = scmp.eq.s32.totalorder %s36, 3
      %p614 = por %p612, %p613
      %p615 = scmp.ne.s32.totalorder %s606, %s607
      %p616 = scmp.eq.s32.totalorder %s36, 0
      %p617 = por %p615, %p616
      %p618 = scmp.ne.s32.totalorder %s606, %s607
      %p619 = scmp.eq.s32.totalorder %s37, 3
      %p620 = por %p618, %p619
      %p622 = scmp.ne.s32.totalorder %s607, %s621
      %p623 = scmp.eq.s32.totalorder %s37, 0
      %p624 = por %p622, %p623
      %s626 = sadd.s32 %s625, 1
      %p629 = scmp.eq.s32.totalorder %s31, 3
      %p630 = scmp.ne.s32.totalorder %s625, %s627
      %p631 = scmp.eq.s32.totalorder %s31, 0
      %p632 = por %p630, %p631
      %p633 = scmp.ne.s32.totalorder %s625, %s627
      %p634 = scmp.eq.s32.totalorder %s36, 3
      %p635 = por %p633, %p634
      %p636 = scmp.ne.s32.totalorder %s627, %s628
      %p637 = scmp.eq.s32.totalorder %s36, 0
      %p638 = por %p636, %p637
      %p639 = scmp.ne.s32.totalorder %s627, %s628
      %p640 = scmp.eq.s32.totalorder %s37, 3
      %p641 = por %p639, %p640
      %p643 = scmp.ne.s32.totalorder %s628, %s642
      %p644 = scmp.eq.s32.totalorder %s37, 0
      %p645 = por %p643, %p644
      %p646 = scmp.le.s32.totalorder 1, %s31
      %p647 = scmp.lt.s32.totalorder %s31, 5
      %p648 = pnand %p646, %p647
      %p649 = pneg %p648
      // Predicated region
      $region9: #{tpu_custom_call.1} parent=5 // pred_check
        _
      $region10: #{tpu_custom_call.1} parent=5 // pred_check_branch
        %651 = sbr.rel (%p648) target = $region12
      $region11: #{tpu_custom_call.1} parent=5 // pred_region
        %s652 = ssub.s32 %s31, 1
        // Predicated region
        $region13: #{tpu_custom_call.1} parent=11 // pred_check
          %p653 = pneg %p64
        $region14: #{tpu_custom_call.1} parent=11 // pred_check_branch
          %655 = sbr.rel (%p653) target = $region16
        $region15: #{tpu_custom_call.1} parent=11 // pred_region
          _
        $region16: #{tpu_custom_call.1} parent=11 // pred_fallthru
          _
        // Predicated region
        $region17: #{tpu_custom_call.1} parent=11 // pred_check
          %p656 = pneg %p85
        $region18: #{tpu_custom_call.1} parent=11 // pred_check_branch
          %658 = sbr.rel (%p656) target = $region20
        $region19: #{tpu_custom_call.1} parent=11 // pred_region
          _
        $region20: #{tpu_custom_call.1} parent=11 // pred_fallthru
          _
        // Predicated region
        $region21: #{tpu_custom_call.1} parent=11 // pred_check
          %p659 = pneg %p106
        $region22: #{tpu_custom_call.1} parent=11 // pred_check_branch
          %661 = sbr.rel (%p659) target = $region24
        $region23: #{tpu_custom_call.1} parent=11 // pred_region
          _
        $region24: #{tpu_custom_call.1} parent=11 // pred_fallthru
          _
        // Predicated region
        $region25: #{tpu_custom_call.1} parent=11 // pred_check
          %p662 = pneg %p127
        $region26: #{tpu_custom_call.1} parent=11 // pred_check_branch
          %664 = sbr.rel (%p662) target = $region28
        $region27: #{tpu_custom_call.1} parent=11 // pred_region
          _
        $region28: #{tpu_custom_call.1} parent=11 // pred_fallthru
          _
        // Predicated region
        $region29: #{tpu_custom_call.1} parent=11 // pred_check
          %p665 = pneg %p596
        $region30: #{tpu_custom_call.1} parent=11 // pred_check_branch
          %667 = sbr.rel (%p665) target = $region32
        $region31: #{tpu_custom_call.1} parent=11 // pred_region
          _
        $region32: #{tpu_custom_call.1} parent=11 // pred_fallthru
          _
      $region12: #{tpu_custom_call.1} parent=5 // pred_fallthru
        _
      %p668 = scmp.lt.s32.totalorder %s31, 4
      // Predicated region
      $region33: #{tpu_custom_call.1} parent=5 // pred_check
        %p669 = pneg %p668
      $region34: #{tpu_custom_call.1} parent=5 // pred_check_branch
        %671 = sbr.rel (%p669) target = $region36
      $region35: #{tpu_custom_call.1} parent=5 // pred_region
        // Predicated region
        $region37: #{tpu_custom_call.1} parent=35 // pred_check
          %p672 = pneg %p149
        $region38: #{tpu_custom_call.1} parent=35 // pred_check_branch
          %674 = sbr.rel (%p672) target = $region40
        $region39: #{tpu_custom_call.1} parent=35 // pred_region
          %p675 = scmp.lt.s32.totalorder %s38, 1
          %s676 = scalar_select %p675, %s38, 1
          %p677 = scmp.lt.s32.totalorder %s39, 1
          %s678 = scalar_select %p677, %s39, 1
          %s679 = smul.addr %s678, 16
          %s680 = smul.addr %s676, 32
          %s681 = sadd.s32 %s679, %s680
          %s682 = smul.addr %s681, 4
          %s683 = scalar_lea.vmem %s4, %s682
        $region40: #{tpu_custom_call.1} parent=35 // pred_fallthru
          _
        // Predicated region
        $region41: #{tpu_custom_call.1} parent=35 // pred_check
          %p684 = pneg %p177
        $region42: #{tpu_custom_call.1} parent=35 // pred_check_branch
          %686 = sbr.rel (%p684) target = $region44
        $region43: #{tpu_custom_call.1} parent=35 // pred_region
          %p687 = scmp.lt.s32.totalorder %s38, 1
          %s688 = scalar_select %p687, %s38, 1
          %p689 = scmp.lt.s32.totalorder %s39, 1
          %s690 = scalar_select %p689, %s39, 1
          %s691 = smul.addr %s690, 4
          %s692 = smul.addr %s688, 8
          %s693 = sadd.s32 %s691, %s692
          %s694 = scalar_lea.vmem %s5, %s693
        $region44: #{tpu_custom_call.1} parent=35 // pred_fallthru
          _
        // Predicated region
        $region45: #{tpu_custom_call.1} parent=35 // pred_check
          %p695 = pneg %p205
        $region46: #{tpu_custom_call.1} parent=35 // pred_check_branch
          %697 = sbr.rel (%p695) target = $region48
        $region47: #{tpu_custom_call.1} parent=35 // pred_region
          %p698 = scmp.lt.s32.totalorder %s38, 1
          %s699 = scalar_select %p698, %s38, 1
          %p700 = scmp.lt.s32.totalorder %s39, 1
          %s701 = scalar_select %p700, %s39, 1
          %s702 = smul.addr %s701, 16
          %s703 = smul.addr %s699, 32
          %s704 = sadd.s32 %s702, %s703
          %s705 = smul.addr %s704, 4
          %s706 = scalar_lea.vmem %s6, %s705
        $region48: #{tpu_custom_call.1} parent=35 // pred_fallthru
          _
        // Predicated region
        $region49: #{tpu_custom_call.1} parent=35 // pred_check
          %p707 = pneg %p233
        $region50: #{tpu_custom_call.1} parent=35 // pred_check_branch
          %709 = sbr.rel (%p707) target = $region52
        $region51: #{tpu_custom_call.1} parent=35 // pred_region
          %p710 = scmp.lt.s32.totalorder %s38, 1
          %s711 = scalar_select %p710, %s38, 1
          %p712 = scmp.lt.s32.totalorder %s39, 1
          %s713 = scalar_select %p712, %s39, 1
          %s714 = smul.addr %s713, 4
          %s715 = smul.addr %s711, 8
          %s716 = sadd.s32 %s714, %s715
          %s717 = scalar_lea.vmem %s7, %s716
        $region52: #{tpu_custom_call.1} parent=35 // pred_fallthru
          _
        // Predicated region
        $region53: #{tpu_custom_call.1} parent=35 // pred_check
          %p718 = pneg %p261
        $region54: #{tpu_custom_call.1} parent=35 // pred_check_branch
          %720 = sbr.rel (%p718) target = $region56
        $region55: #{tpu_custom_call.1} parent=35 // pred_region
          %p721 = scmp.lt.s32.totalorder %s38, 1
          %s722 = scalar_select %p721, %s38, 1
          %p723 = scmp.lt.s32.totalorder %s39, 1
          %s724 = scalar_select %p723, %s39, 1
          %s725 = smul.addr %s724, 16
          %s726 = smul.addr %s722, 32
          %s727 = sadd.s32 %s725, %s726
          %s728 = smul.addr %s727, 4
          %s729 = scalar_lea.vmem %s8, %s728
        $region56: #{tpu_custom_call.1} parent=35 // pred_fallthru
          _
        // Predicated region
        $region57: #{tpu_custom_call.1} parent=35 // pred_check
          %p730 = pneg %p289
        $region58: #{tpu_custom_call.1} parent=35 // pred_check_branch
          %732 = sbr.rel (%p730) target = $region60
        $region59: #{tpu_custom_call.1} parent=35 // pred_region
          %p733 = scmp.lt.s32.totalorder %s38, 1
          %s734 = scalar_select %p733, %s38, 1
          %p735 = scmp.lt.s32.totalorder %s39, 1
          %s736 = scalar_select %p735, %s39, 1
          %s737 = smul.addr %s736, 4
          %s738 = smul.addr %s734, 8
          %s739 = sadd.s32 %s737, %s738
          %s740 = scalar_lea.vmem %s9, %s739
        $region60: #{tpu_custom_call.1} parent=35 // pred_fallthru
          _
        // Predicated region
        $region61: #{tpu_custom_call.1} parent=35 // pred_check
          %p741 = pneg %p317
        $region62: #{tpu_custom_call.1} parent=35 // pred_check_branch
          %743 = sbr.rel (%p741) target = $region64
        $region63: #{tpu_custom_call.1} parent=35 // pred_region
          %p744 = scmp.lt.s32.totalorder %s38, 1
          %s745 = scalar_select %p744, %s38, 1
          %p746 = scmp.lt.s32.totalorder %s39, 1
          %s747 = scalar_select %p746, %s39, 1
          %s748 = smul.addr %s747, 4
          %s749 = smul.addr %s745, 8
          %s750 = sadd.s32 %s748, %s749
          %s751 = smul.addr %s750, 4
          %s752 = scalar_lea.vmem %s10, %s751
        $region64: #{tpu_custom_call.1} parent=35 // pred_fallthru
          _
        // Predicated region
        $region65: #{tpu_custom_call.1} parent=35 // pred_check
          %p753 = pneg %p345
        $region66: #{tpu_custom_call.1} parent=35 // pred_check_branch
          %755 = sbr.rel (%p753) target = $region68
        $region67: #{tpu_custom_call.1} parent=35 // pred_region
          %p756 = scmp.lt.s32.totalorder %s38, 1
          %s757 = scalar_select %p756, %s38, 1
          %p758 = scmp.lt.s32.totalorder %s39, 1
          %s759 = scalar_select %p758, %s39, 1
          %s760 = smul.addr %s757, 2
          %s761 = sadd.s32 %s759, %s760
          %s762 = scalar_lea.vmem %s11, %s761
        $region68: #{tpu_custom_call.1} parent=35 // pred_fallthru
          _
        // Predicated region
        $region69: #{tpu_custom_call.1} parent=35 // pred_check
          %p763 = pneg %p373
        $region70: #{tpu_custom_call.1} parent=35 // pred_check_branch
          %765 = sbr.rel (%p763) target = $region72
        $region71: #{tpu_custom_call.1} parent=35 // pred_region
          %p766 = scmp.lt.s32.totalorder %s38, 1
          %s767 = scalar_select %p766, %s38, 1
          %p768 = scmp.lt.s32.totalorder %s39, 1
          %s769 = scalar_select %p768, %s39, 1
          %s770 = smul.addr %s767, 2
          %s771 = sadd.s32 %s769, %s770
          %s772 = scalar_lea.vmem %s12, %s771
        $region72: #{tpu_custom_call.1} parent=35 // pred_fallthru
          _
        // Predicated region
        $region73: #{tpu_custom_call.1} parent=35 // pred_check
          %p773 = pneg %p401
        $region74: #{tpu_custom_call.1} parent=35 // pred_check_branch
          %775 = sbr.rel (%p773) target = $region76
        $region75: #{tpu_custom_call.1} parent=35 // pred_region
          %p776 = scmp.lt.s32.totalorder %s38, 1
          %s777 = scalar_select %p776, %s38, 1
          %p778 = scmp.lt.s32.totalorder %s39, 1
          %s779 = scalar_select %p778, %s39, 1
          %s780 = smul.addr %s777, 2
          %s781 = sadd.s32 %s779, %s780
          %s782 = scalar_lea.vmem %s13, %s781
        $region76: #{tpu_custom_call.1} parent=35 // pred_fallthru
          _
        // Predicated region
        $region77: #{tpu_custom_call.1} parent=35 // pred_check
          %p783 = pneg %p429
        $region78: #{tpu_custom_call.1} parent=35 // pred_check_branch
          %785 = sbr.rel (%p783) target = $region80
        $region79: #{tpu_custom_call.1} parent=35 // pred_region
          %p786 = scmp.lt.s32.totalorder %s38, 1
          %s787 = scalar_select %p786, %s38, 1
          %p788 = scmp.lt.s32.totalorder %s39, 1
          %s789 = scalar_select %p788, %s39, 1
          %s790 = smul.addr %s789, 4
          %s791 = smul.addr %s787, 8
          %s792 = sadd.s32 %s790, %s791
          %s793 = smul.addr %s792, 4
          %s794 = scalar_lea.vmem %s14, %s793
        $region80: #{tpu_custom_call.1} parent=35 // pred_fallthru
          _
        // Predicated region
        $region81: #{tpu_custom_call.1} parent=35 // pred_check
          %p795 = pneg %p457
        $region82: #{tpu_custom_call.1} parent=35 // pred_check_branch
          %797 = sbr.rel (%p795) target = $region84
        $region83: #{tpu_custom_call.1} parent=35 // pred_region
          %p798 = scmp.lt.s32.totalorder %s38, 1
          %s799 = scalar_select %p798, %s38, 1
          %p800 = scmp.lt.s32.totalorder %s39, 1
          %s801 = scalar_select %p800, %s39, 1
          %s802 = smul.addr %s799, 2
          %s803 = sadd.s32 %s801, %s802
          %s804 = scalar_lea.vmem %s15, %s803
        $region84: #{tpu_custom_call.1} parent=35 // pred_fallthru
          _
        // Predicated region
        $region85: #{tpu_custom_call.1} parent=35 // pred_check
          %p805 = pneg %p485
        $region86: #{tpu_custom_call.1} parent=35 // pred_check_branch
          %807 = sbr.rel (%p805) target = $region88
        $region87: #{tpu_custom_call.1} parent=35 // pred_region
          %p808 = scmp.lt.s32.totalorder %s38, 1
          %s809 = scalar_select %p808, %s38, 1
          %p810 = scmp.lt.s32.totalorder %s39, 1
          %s811 = scalar_select %p810, %s39, 1
          %s812 = smul.addr %s811, 8
          %s813 = smul.addr %s809, 16
          %s814 = sadd.s32 %s812, %s813
          %s815 = smul.addr %s814, 4
          %s816 = scalar_lea.vmem %s16, %s815
        $region88: #{tpu_custom_call.1} parent=35 // pred_fallthru
          _
        // Predicated region
        $region89: #{tpu_custom_call.1} parent=35 // pred_check
          %p817 = pneg %p513
        $region90: #{tpu_custom_call.1} parent=35 // pred_check_branch
          %819 = sbr.rel (%p817) target = $region92
        $region91: #{tpu_custom_call.1} parent=35 // pred_region
          %p820 = scmp.lt.s32.totalorder %s38, 1
          %s821 = scalar_select %p820, %s38, 1
          %p822 = scmp.lt.s32.totalorder %s39, 1
          %s823 = scalar_select %p822, %s39, 1
          %s824 = smul.addr %s821, 2
          %s825 = sadd.s32 %s823, %s824
          %s826 = scalar_lea.vmem %s17, %s825
        $region92: #{tpu_custom_call.1} parent=35 // pred_fallthru
          _
        // Predicated region
        $region93: #{tpu_custom_call.1} parent=35 // pred_check
          %p827 = pneg %p541
        $region94: #{tpu_custom_call.1} parent=35 // pred_check_branch
          %829 = sbr.rel (%p827) target = $region96
        $region95: #{tpu_custom_call.1} parent=35 // pred_region
          %p830 = scmp.lt.s32.totalorder %s38, 1
          %s831 = scalar_select %p830, %s38, 1
          %p832 = scmp.lt.s32.totalorder %s39, 1
          %s833 = scalar_select %p832, %s39, 1
          %s834 = smul.addr %s831, 2
          %s835 = sadd.s32 %s833, %s834
          %s836 = scalar_lea.vmem %s18, %s835
        $region96: #{tpu_custom_call.1} parent=35 // pred_fallthru
          _
        // Predicated region
        $region97: #{tpu_custom_call.1} parent=35 // pred_check
          %p837 = pneg %p569
        $region98: #{tpu_custom_call.1} parent=35 // pred_check_branch
          %839 = sbr.rel (%p837) target = $region100
        $region99: #{tpu_custom_call.1} parent=35 // pred_region
          %p840 = scmp.lt.s32.totalorder %s38, 1
          %s841 = scalar_select %p840, %s38, 1
          %p842 = scmp.lt.s32.totalorder %s39, 1
          %s843 = scalar_select %p842, %s39, 1
          %s844 = smul.addr %s841, 2
          %s845 = sadd.s32 %s843, %s844
          %s846 = scalar_lea.vmem %s19, %s845
        $region100: #{tpu_custom_call.1} parent=35 // pred_fallthru
          _
      $region36: #{tpu_custom_call.1} parent=5 // pred_fallthru
        _
      %p847 = scmp.le.s32.totalorder 1, %s31
      %p848 = scmp.lt.s32.totalorder %s31, 5
      %p849 = pnand %p847, %p848
      %p850 = pneg %p849
      // Predicated region
      $region101: #{tpu_custom_call.1} parent=5 // pred_check
        _
      $region102: #{tpu_custom_call.1} parent=5 // pred_check_branch
        %852 = sbr.rel (%p849) target = $region104
      $region103: #{tpu_custom_call.1} parent=5 // pred_region
        %s853 = ssub.s32 %s31, 1
        %p854 = pneg %p64
        %p855 = pneg %p61
        %p856 = pneg %p85
        %p857 = pneg %p82
        %p858 = pneg %p106
        %p859 = pneg %p103
        %p860 = pneg %p127
        %p861 = pneg %p124
        %p862 = scmp.lt.s32.totalorder %s40, 1
        %s863 = scalar_select %p862, %s40, 1
        %p864 = scmp.lt.s32.totalorder %s41, 1
        %s865 = scalar_select %p864, %s41, 1
        %s866 = smul.addr %s865, 16
        %s867 = smul.addr %s863, 32
        %s868 = sadd.s32 %s866, %s867
        %s869 = smul.addr %s868, 4
        %s870 = scalar_lea.vmem %s4, %s869
        %p871 = pneg %p155
        %p872 = pneg %p152
        %p873 = scmp.lt.s32.totalorder %s40, 1
        %s874 = scalar_select %p873, %s40, 1
        %p875 = scmp.lt.s32.totalorder %s41, 1
        %s876 = scalar_select %p875, %s41, 1
        %s877 = smul.addr %s876, 4
        %s878 = smul.addr %s874, 8
        %s879 = sadd.s32 %s877, %s878
        %s880 = scalar_lea.vmem %s5, %s879
        %p881 = pneg %p183
        %p882 = pneg %p180
        %p883 = scmp.lt.s32.totalorder %s40, 1
        %s884 = scalar_select %p883, %s40, 1
        %p885 = scmp.lt.s32.totalorder %s41, 1
        %s886 = scalar_select %p885, %s41, 1
        %s887 = smul.addr %s886, 16
        %s888 = smul.addr %s884, 32
        %s889 = sadd.s32 %s887, %s888
        %s890 = smul.addr %s889, 4
        %s891 = scalar_lea.vmem %s6, %s890
        %p892 = pneg %p211
        %p893 = pneg %p208
        %p894 = scmp.lt.s32.totalorder %s40, 1
        %s895 = scalar_select %p894, %s40, 1
        %p896 = scmp.lt.s32.totalorder %s41, 1
        %s897 = scalar_select %p896, %s41, 1
        %s898 = smul.addr %s897, 4
        %s899 = smul.addr %s895, 8
        %s900 = sadd.s32 %s898, %s899
        %s901 = scalar_lea.vmem %s7, %s900
        %p902 = pneg %p239
        %p903 = pneg %p236
        %p904 = scmp.lt.s32.totalorder %s40, 1
        %s905 = scalar_select %p904, %s40, 1
        %p906 = scmp.lt.s32.totalorder %s41, 1
        %s907 = scalar_select %p906, %s41, 1
        %s908 = smul.addr %s907, 16
        %s909 = smul.addr %s905, 32
        %s910 = sadd.s32 %s908, %s909
        %s911 = smul.addr %s910, 4
        %s912 = scalar_lea.vmem %s8, %s911
        %p913 = pneg %p267
        %p914 = pneg %p264
        %p915 = scmp.lt.s32.totalorder %s40, 1
        %s916 = scalar_select %p915, %s40, 1
        %p917 = scmp.lt.s32.totalorder %s41, 1
        %s918 = scalar_select %p917, %s41, 1
        %s919 = smul.addr %s918, 4
        %s920 = smul.addr %s916, 8
        %s921 = sadd.s32 %s919, %s920
        %s922 = scalar_lea.vmem %s9, %s921
        %p923 = pneg %p295
        %p924 = pneg %p292
        %p925 = scmp.lt.s32.totalorder %s40, 1
        %s926 = scalar_select %p925, %s40, 1
        %p927 = scmp.lt.s32.totalorder %s41, 1
        %s928 = scalar_select %p927, %s41, 1
        %s929 = smul.addr %s928, 4
        %s930 = smul.addr %s926, 8
        %s931 = sadd.s32 %s929, %s930
        %s932 = smul.addr %s931, 4
        %s933 = scalar_lea.vmem %s10, %s932
        %p934 = pneg %p323
        %p935 = pneg %p320
        %p936 = scmp.lt.s32.totalorder %s40, 1
        %s937 = scalar_select %p936, %s40, 1
        %p938 = scmp.lt.s32.totalorder %s41, 1
        %s939 = scalar_select %p938, %s41, 1
        %s940 = smul.addr %s937, 2
        %s941 = sadd.s32 %s939, %s940
        %s942 = scalar_lea.vmem %s11, %s941
        %p943 = pneg %p351
        %p944 = pneg %p348
        %p945 = scmp.lt.s32.totalorder %s40, 1
        %s946 = scalar_select %p945, %s40, 1
        %p947 = scmp.lt.s32.totalorder %s41, 1
        %s948 = scalar_select %p947, %s41, 1
        %s949 = smul.addr %s946, 2
        %s950 = sadd.s32 %s948, %s949
        %s951 = scalar_lea.vmem %s12, %s950
        %p952 = pneg %p379
        %p953 = pneg %p376
        %p954 = scmp.lt.s32.totalorder %s40, 1
        %s955 = scalar_select %p954, %s40, 1
        %p956 = scmp.lt.s32.totalorder %s41, 1
        %s957 = scalar_select %p956, %s41, 1
        %s958 = smul.addr %s955, 2
        %s959 = sadd.s32 %s957, %s958
        %s960 = scalar_lea.vmem %s13, %s959
        %p961 = pneg %p407
        %p962 = pneg %p404
        %p963 = scmp.lt.s32.totalorder %s40, 1
        %s964 = scalar_select %p963, %s40, 1
        %p965 = scmp.lt.s32.totalorder %s41, 1
        %s966 = scalar_select %p965, %s41, 1
        %s967 = smul.addr %s966, 4
        %s968 = smul.addr %s964, 8
        %s969 = sadd.s32 %s967, %s968
        %s970 = smul.addr %s969, 4
        %s971 = scalar_lea.vmem %s14, %s970
        %p972 = pneg %p435
        %p973 = pneg %p432
        %p974 = scmp.lt.s32.totalorder %s40, 1
        %s975 = scalar_select %p974, %s40, 1
        %p976 = scmp.lt.s32.totalorder %s41, 1
        %s977 = scalar_select %p976, %s41, 1
        %s978 = smul.addr %s975, 2
        %s979 = sadd.s32 %s977, %s978
        %s980 = scalar_lea.vmem %s15, %s979
        %p981 = pneg %p463
        %p982 = pneg %p460
        %p983 = scmp.lt.s32.totalorder %s40, 1
        %s984 = scalar_select %p983, %s40, 1
        %p985 = scmp.lt.s32.totalorder %s41, 1
        %s986 = scalar_select %p985, %s41, 1
        %s987 = smul.addr %s986, 8
        %s988 = smul.addr %s984, 16
        %s989 = sadd.s32 %s987, %s988
        %s990 = smul.addr %s989, 4
        %s991 = scalar_lea.vmem %s16, %s990
        %p992 = pneg %p491
        %p993 = pneg %p488
        %p994 = scmp.lt.s32.totalorder %s40, 1
        %s995 = scalar_select %p994, %s40, 1
        %p996 = scmp.lt.s32.totalorder %s41, 1
        %s997 = scalar_select %p996, %s41, 1
        %s998 = smul.addr %s995, 2
        %s999 = sadd.s32 %s997, %s998
        %s1000 = scalar_lea.vmem %s17, %s999
        %p1001 = pneg %p519
        %p1002 = pneg %p516
        %p1003 = scmp.lt.s32.totalorder %s40, 1
        %s1004 = scalar_select %p1003, %s40, 1
        %p1005 = scmp.lt.s32.totalorder %s41, 1
        %s1006 = scalar_select %p1005, %s41, 1
        %s1007 = smul.addr %s1004, 2
        %s1008 = sadd.s32 %s1006, %s1007
        %s1009 = scalar_lea.vmem %s18, %s1008
        %p1010 = pneg %p547
        %p1011 = pneg %p544
        %p1012 = scmp.lt.s32.totalorder %s40, 1
        %s1013 = scalar_select %p1012, %s40, 1
        %p1014 = scmp.lt.s32.totalorder %s41, 1
        %s1015 = scalar_select %p1014, %s41, 1
        %s1016 = smul.addr %s1013, 2
        %s1017 = sadd.s32 %s1015, %s1016
        %s1018 = scalar_lea.vmem %s19, %s1017
        %p1019 = pneg %p575
        %p1020 = pneg %p572
        %p1021 = pneg %p596
        %p1022 = pneg %p593
        %p1023 = pneg %p617
        %p1024 = pneg %p614
        %p1025 = pneg %p638
        %p1026 = pneg %p635
        %p1027 = scmp.lt.s32.totalorder %s40, 1
        %s1028 = scalar_select %p1027, %s40, 1
        %p1029 = scmp.lt.s32.totalorder %s41, 1
        %s1030 = scalar_select %p1029, %s41, 1
        %s1031 = smul.addr %s1030, 16
        %s1032 = smul.addr %s1028, 32
        %s1033 = sadd.s32 %s1031, %s1032
        %s1034 = smul.addr %s1033, 4
        %s1035 = scalar_lea.vmem %s4, %s1034
        %p1036 = scmp.lt.s32.totalorder %s40, 1
        %s1037 = scalar_select %p1036, %s40, 1
        %p1038 = scmp.lt.s32.totalorder %s41, 1
        %s1039 = scalar_select %p1038, %s41, 1
        %s1040 = smul.addr %s1039, 4
        %s1041 = smul.addr %s1037, 8
        %s1042 = sadd.s32 %s1040, %s1041
        %s1043 = scalar_lea.vmem %s5, %s1042
        %p1044 = scmp.lt.s32.totalorder %s40, 1
        %s1045 = scalar_select %p1044, %s40, 1
        %p1046 = scmp.lt.s32.totalorder %s41, 1
        %s1047 = scalar_select %p1046, %s41, 1
        %s1048 = smul.addr %s1047, 16
        %s1049 = smul.addr %s1045, 32
        %s1050 = sadd.s32 %s1048, %s1049
        %s1051 = smul.addr %s1050, 4
        %s1052 = scalar_lea.vmem %s6, %s1051
        %p1053 = scmp.lt.s32.totalorder %s40, 1
        %s1054 = scalar_select %p1053, %s40, 1
        %p1055 = scmp.lt.s32.totalorder %s41, 1
        %s1056 = scalar_select %p1055, %s41, 1
        %s1057 = smul.addr %s1056, 4
        %s1058 = smul.addr %s1054, 8
        %s1059 = sadd.s32 %s1057, %s1058
        %s1060 = scalar_lea.vmem %s7, %s1059
        %p1061 = scmp.lt.s32.totalorder %s40, 1
        %s1062 = scalar_select %p1061, %s40, 1
        %p1063 = scmp.lt.s32.totalorder %s41, 1
        %s1064 = scalar_select %p1063, %s41, 1
        %s1065 = smul.addr %s1064, 16
        %s1066 = smul.addr %s1062, 32
        %s1067 = sadd.s32 %s1065, %s1066
        %s1068 = smul.addr %s1067, 4
        %s1069 = scalar_lea.vmem %s8, %s1068
        %p1070 = scmp.lt.s32.totalorder %s40, 1
        %s1071 = scalar_select %p1070, %s40, 1
        %p1072 = scmp.lt.s32.totalorder %s41, 1
        %s1073 = scalar_select %p1072, %s41, 1
        %s1074 = smul.addr %s1073, 4
        %s1075 = smul.addr %s1071, 8
        %s1076 = sadd.s32 %s1074, %s1075
        %s1077 = scalar_lea.vmem %s9, %s1076
        %p1078 = scmp.lt.s32.totalorder %s40, 1
        %s1079 = scalar_select %p1078, %s40, 1
        %p1080 = scmp.lt.s32.totalorder %s41, 1
        %s1081 = scalar_select %p1080, %s41, 1
        %s1082 = smul.addr %s1081, 4
        %s1083 = smul.addr %s1079, 8
        %s1084 = sadd.s32 %s1082, %s1083
        %s1085 = smul.addr %s1084, 4
        %s1086 = scalar_lea.vmem %s10, %s1085
        %p1087 = scmp.lt.s32.totalorder %s40, 1
        %s1088 = scalar_select %p1087, %s40, 1
        %p1089 = scmp.lt.s32.totalorder %s41, 1
        %s1090 = scalar_select %p1089, %s41, 1
        %s1091 = smul.addr %s1088, 2
        %s1092 = sadd.s32 %s1090, %s1091
        %s1093 = scalar_lea.vmem %s11, %s1092
        %p1094 = scmp.lt.s32.totalorder %s40, 1
        %s1095 = scalar_select %p1094, %s40, 1
        %p1096 = scmp.lt.s32.totalorder %s41, 1
        %s1097 = scalar_select %p1096, %s41, 1
        %s1098 = smul.addr %s1095, 2
        %s1099 = sadd.s32 %s1097, %s1098
        %s1100 = scalar_lea.vmem %s12, %s1099
        %p1101 = scmp.lt.s32.totalorder %s40, 1
        %s1102 = scalar_select %p1101, %s40, 1
        %p1103 = scmp.lt.s32.totalorder %s41, 1
        %s1104 = scalar_select %p1103, %s41, 1
        %s1105 = smul.addr %s1102, 2
        %s1106 = sadd.s32 %s1104, %s1105
        %s1107 = scalar_lea.vmem %s13, %s1106
        %p1108 = scmp.lt.s32.totalorder %s40, 1
        %s1109 = scalar_select %p1108, %s40, 1
        %p1110 = scmp.lt.s32.totalorder %s41, 1
        %s1111 = scalar_select %p1110, %s41, 1
        %s1112 = smul.addr %s1111, 4
        %s1113 = smul.addr %s1109, 8
        %s1114 = sadd.s32 %s1112, %s1113
        %s1115 = smul.addr %s1114, 4
        %s1116 = scalar_lea.vmem %s14, %s1115
        %p1117 = scmp.lt.s32.totalorder %s40, 1
        %s1118 = scalar_select %p1117, %s40, 1
        %p1119 = scmp.lt.s32.totalorder %s41, 1
        %s1120 = scalar_select %p1119, %s41, 1
        %s1121 = smul.addr %s1118, 2
        %s1122 = sadd.s32 %s1120, %s1121
        %s1123 = scalar_lea.vmem %s15, %s1122
        %p1124 = scmp.lt.s32.totalorder %s40, 1
        %s1125 = scalar_select %p1124, %s40, 1
        %p1126 = scmp.lt.s32.totalorder %s41, 1
        %s1127 = scalar_select %p1126, %s41, 1
        %s1128 = smul.addr %s1127, 8
        %s1129 = smul.addr %s1125, 16
        %s1130 = sadd.s32 %s1128, %s1129
        %s1131 = smul.addr %s1130, 4
        %s1132 = scalar_lea.vmem %s16, %s1131
        %p1133 = scmp.lt.s32.totalorder %s40, 1
        %s1134 = scalar_select %p1133, %s40, 1
        %p1135 = scmp.lt.s32.totalorder %s41, 1
        %s1136 = scalar_select %p1135, %s41, 1
        %s1137 = smul.addr %s1134, 2
        %s1138 = sadd.s32 %s1136, %s1137
        %s1139 = scalar_lea.vmem %s17, %s1138
        %p1140 = scmp.lt.s32.totalorder %s40, 1
        %s1141 = scalar_select %p1140, %s40, 1
        %p1142 = scmp.lt.s32.totalorder %s41, 1
        %s1143 = scalar_select %p1142, %s41, 1
        %s1144 = smul.addr %s1141, 2
        %s1145 = sadd.s32 %s1143, %s1144
        %s1146 = scalar_lea.vmem %s18, %s1145
        %p1147 = scmp.lt.s32.totalorder %s40, 1
        %s1148 = scalar_select %p1147, %s40, 1
        %p1149 = scmp.lt.s32.totalorder %s41, 1
        %s1150 = scalar_select %p1149, %s41, 1
        %s1151 = smul.addr %s1148, 2
        %s1152 = sadd.s32 %s1150, %s1151
        %s1153 = scalar_lea.vmem %s19, %s1152
        %p1155 = scmp.eq.s32.totalorder %s40, 0
        %p1156 = scmp.eq.s32.totalorder %s41, 0
        %p1157 = pnand %p1155, %p1156
        %p1158 = pneg %p1157
        // Predicated region
        $region105: #{tpu_custom_call.1} parent=103 // pred_check
          _
        $region106: #{tpu_custom_call.1} parent=103 // pred_check_branch
          %1160 = sbr.rel (%p1157) target = $region108
        $region107: #{tpu_custom_call.1} parent=103 // pred_region
          %v1161 = vld [vmem:[%s0] sm:$0xff]
          %v1162 = vld [vmem:[%s0 + $0x8] sm:$0xff]
          %v1163 = vld [vmem:[%s0 + $0x10] sm:$0xff]
          %v1164 = vld [vmem:[%s0 + $0x18] sm:$0xff]
          %vm1165 = vcmask 261120
          %1166 = vst.msk [vmem:[#allocation3] sm:$0xff] %vm1165, %v1161
          %1167 = vst.msk [vmem:[#allocation3 + $0x8] sm:$0xff] %vm1165, %v1162
          %1168 = vst.msk [vmem:[#allocation3 + $0x10] sm:$0xff] %vm1165, %v1163
          %1169 = vst.msk [vmem:[#allocation3 + $0x18] sm:$0xff] %vm1165, %v1164
          %v1170 = vld [vmem:[%s1] sm:$0xff]
          %v1171 = vld [vmem:[%s1 + $0x8] sm:$0xff]
          %v1172 = vld [vmem:[%s1 + $0x10] sm:$0xff]
          %v1173 = vld [vmem:[%s1 + $0x18] sm:$0xff]
          %1174 = vst.msk [vmem:[#allocation5] sm:$0xff] %vm1165, %v1170
          %1175 = vst.msk [vmem:[#allocation5 + $0x8] sm:$0xff] %vm1165, %v1171
          %1176 = vst.msk [vmem:[#allocation5 + $0x10] sm:$0xff] %vm1165, %v1172
          %1177 = vst.msk [vmem:[#allocation5 + $0x18] sm:$0xff] %vm1165, %v1173
        $region108: #{tpu_custom_call.1} parent=103 // pred_fallthru
          _
        %v1178 = vld [vmem:[#allocation3] sm:$0xff]
        %v1179 = vld [vmem:[#allocation3 + $0x8] sm:$0xff]
        %v1180 = vld [vmem:[#allocation3 + $0x10] sm:$0xff]
        %v1181 = vld [vmem:[#allocation3 + $0x18] sm:$0xff]
        %v1182 = vld [vmem:[#allocation5] sm:$0xff]
        %v1183 = vld [vmem:[#allocation5 + $0x8] sm:$0xff]
        %v1184 = vld [vmem:[#allocation5 + $0x10] sm:$0xff]
        %v1185 = vld [vmem:[#allocation5 + $0x18] sm:$0xff]
        // Predicated region
        $region109: #{tpu_custom_call.1} parent=103 // pred_check
          %p1186 = pneg %p1156
        $region110: #{tpu_custom_call.1} parent=103 // pred_check_branch
          %1188 = sbr.rel (%p1186) target = $region112
        $region111: #{tpu_custom_call.1} parent=103 // pred_region
          %v1189 = vld [vmem:[%s2] sm:$0xf]
          %v1190 = vpack.c.bf16 %v1179, %v1178
          %v1191 = vpack.c.bf16 %v1181, %v1180
          %v1192 = vpack.c.bf16 %v1183, %v1182
          %v1193 = vpack.c.bf16 %v1185, %v1184
          %v1196 = vunpack.c.l.s4 1966171168
          %v1197 = vunpack.c.0.s8 %v1196
          %v1198 = vlaneseq
          %v1199 = vshrl.u32 %v1198, 7
          %v1200 = vsub.s32 %v1197, %v1199
          %v1201 = vrot.slane %v1189, %v1200
          %v1202 = vcombine.high %v1201, %v1201
          %v1204 = vunpack.c.l.s4 1966171168
          %v1205 = vunpack.c.0.s8 %v1204
          %v1206 = vlaneseq
          %v1207 = vshrl.u32 %v1206, 7
          %v1208 = vsub.s32 %v1205, %v1207
          %v1209 = vrot.slane %v1201, %v1208
          %v1211 = vunpack.c.l.s4 1966171168
          %v1212 = vunpack.c.0.s8 %v1211
          %v1213 = vlaneseq
          %v1214 = vshrl.u32 %v1213, 7
          %v1215 = vsub.s32 %v1212, %v1214
          %v1216 = vrot.slane %v1202, %v1215
          %v1217 = vcombine.high %v1209, %v1209
          %v1218 = vcombine.high %v1216, %v1216
          %v1219 = vlaneseq
          %v1220 = vshrl.u32 %v1219, 7
          %v1221 = vsub.s32 0, %v1220
          %v1222 = vrot.slane %v1209, %v1221
          %v1223 = vlaneseq
          %v1224 = vshrl.u32 %v1223, 7
          %v1225 = vsub.s32 0, %v1224
          %v1226 = vrot.slane %v1216, %v1225
          %v1227 = vlaneseq
          %v1228 = vshrl.u32 %v1227, 7
          %v1229 = vsub.s32 0, %v1228
          %v1230 = vrot.slane %v1217, %v1229
          %v1231 = vlaneseq
          %v1232 = vshrl.u32 %v1231, 7
          %v1233 = vsub.s32 0, %v1232
          %v1234 = vrot.slane %v1218, %v1233
          %v1239 = vld [vmem:[%s1035] sm:$0xf]
          %v1240 = vld [vmem:[%s1035 + $0x4] sm:$0xf]
          %v1241 = vld [vmem:[%s1035 + $0x8] sm:$0xf]
          %v1242 = vld [vmem:[%s1035 + $0xc] sm:$0xf]
          %v1243 = vld [vmem:[%s1043] sm:$0x1]
          %v1245 = vlaneseq
          %v1246 = vshrl.u32 %v1245, 7
          %v1247 = vsub.s32 0, %v1246
          %v1248 = vrot.slane %v1243, %v1247
          %v1254 = vunpack.c.l.b16 %v1239
          %v1255 = vunpack.c.l.b16 %v1240
          %v1256 = vunpack.c.l.b16 %v1241
          %v1257 = vunpack.c.l.b16 %v1242
          %v1258 = vpack.c.b16 %v1255, %v1254
          %v1259 = vpack.c.b16 %v1257, %v1256
          %vm1262 = vcmask 261120
          %v1264 = vsel %vm1262, %v1190, 0
          %v1267 = vsel %vm1262, %v1191, 0
          %1269 = vmatprep.subr.bf16.mxu0 0
          %1270 = vmatpush1.bf16.msra.mxu0 %v1258
          %1271 = vmatprep.subr.bf16.mxu0 0
          %1272 = vmatpush1.bf16.msra.mxu0 %v1259
          %1273 = vmatprep.subr.bf16.mxu0 0
          %1274 = vmatpush1.bf16.msra.mxu0 0
          %1275 = vmatprep.subr.bf16.mxu0 0
          %1276 = vmatpush1.bf16.msra.mxu0 0
          %1277 = vmatprep.subr.bf16.mxu0 0
          %1278 = vmatpush1.bf16.msra.mxu0 0
          %1279 = vmatprep.subr.bf16.mxu0 0
          %1280 = vmatpush1.bf16.msra.mxu0 0
          %1281 = vmatprep.subr.bf16.mxu0 0
          %1282 = vmatpush1.bf16.msra.mxu0 0
          %1283 = vmatprep.subr.bf16.mxu0 0
          %1284 = vmatpush1.bf16.msra.mxu0 0
          %1285 = vmatprep.subr.bf16.mxu0 0
          %1286 = vmatpush1.bf16.msra.mxu0 0
          %1287 = vmatprep.subr.bf16.mxu0 0
          %1288 = vmatpush1.bf16.msra.mxu0 0
          %1289 = vmatprep.subr.bf16.mxu0 0
          %1290 = vmatpush1.bf16.msra.mxu0 0
          %1291 = vmatprep.subr.bf16.mxu0 0
          %1292 = vmatpush1.bf16.msra.mxu0 0
          %1293 = vmatprep.subr.bf16.mxu0 0
          %1294 = vmatpush1.bf16.msra.mxu0 0
          %1295 = vmatprep.subr.bf16.mxu0 0
          %1296 = vmatpush1.bf16.msra.mxu0 0
          %1297 = vmatprep.subr.bf16.mxu0 0
          %1298 = vmatpush1.bf16.msra.mxu0 0
          %1299 = vmatprep.subr.bf16.mxu0 0
          %1300 = vmatpush1.bf16.msra.mxu0 0
          %1301 = vmatprep.mubr.bf16.mxu0 0
          %1302 = vmatmul.mubr.bf16.gmra.mrb[0].mxu0 %v1264
          %v1303 = vpop.f32.mrb[0].mxu0
          %v1304 = vadd.f32 %v1248, %v1303
          %v1305 = vpop.f32.mrb[0].mxu0
          %v1306 = vpop.f32.mrb[0].mxu0
          %v1307 = vadd.f32 %v1248, %v1306
          %v1308 = vpop.f32.mrb[0].mxu0
          %1309 = vmatprep.mubr.bf16.mxu0 0
          %1310 = vmatmul.mubr.bf16.gmra.mrb[0].mxu0 %v1267
          %v1311 = vpop.f32.mrb[0].mxu0
          %v1312 = vadd.f32 %v1248, %v1311
          %v1313 = vpop.f32.mrb[0].mxu0
          %v1314 = vpop.f32.mrb[0].mxu0
          %v1315 = vadd.f32 %v1248, %v1314
          %v1316 = vpop.f32.mrb[0].mxu0
          %1317 = vdwg.mxu0
          %v1318 = vld [vmem:[%s1052] sm:$0xf]
          %v1319 = vld [vmem:[%s1052 + $0x4] sm:$0xf]
          %v1320 = vld [vmem:[%s1052 + $0x8] sm:$0xf]
          %v1321 = vld [vmem:[%s1052 + $0xc] sm:$0xf]
          %v1322 = vld [vmem:[%s1060] sm:$0x1]
          %v1324 = vlaneseq
          %v1325 = vshrl.u32 %v1324, 7
          %v1326 = vsub.s32 0, %v1325
          %v1327 = vrot.slane %v1322, %v1326
          %v1333 = vunpack.c.l.b16 %v1318
          %v1334 = vunpack.c.l.b16 %v1319
          %v1335 = vunpack.c.l.b16 %v1320
          %v1336 = vunpack.c.l.b16 %v1321
          %v1337 = vpack.c.b16 %v1334, %v1333
          %v1338 = vpack.c.b16 %v1336, %v1335
          %v1342 = vsel %vm1262, %v1192, 0
          %v1345 = vsel %vm1262, %v1193, 0
          %1347 = vmatprep.subr.bf16.mxu0 0
          %1348 = vmatpush1.bf16.msra.mxu0 %v1337
          %1349 = vmatprep.subr.bf16.mxu0 0
          %1350 = vmatpush1.bf16.msra.mxu0 %v1338
          %1351 = vmatprep.subr.bf16.mxu0 0
          %1352 = vmatpush1.bf16.msra.mxu0 0
          %1353 = vmatprep.subr.bf16.mxu0 0
          %1354 = vmatpush1.bf16.msra.mxu0 0
          %1355 = vmatprep.subr.bf16.mxu0 0
          %1356 = vmatpush1.bf16.msra.mxu0 0
          %1357 = vmatprep.subr.bf16.mxu0 0
          %1358 = vmatpush1.bf16.msra.mxu0 0
          %1359 = vmatprep.subr.bf16.mxu0 0
          %1360 = vmatpush1.bf16.msra.mxu0 0
          %1361 = vmatprep.subr.bf16.mxu0 0
          %1362 = vmatpush1.bf16.msra.mxu0 0
          %1363 = vmatprep.subr.bf16.mxu0 0
          %1364 = vmatpush1.bf16.msra.mxu0 0
          %1365 = vmatprep.subr.bf16.mxu0 0
          %1366 = vmatpush1.bf16.msra.mxu0 0
          %1367 = vmatprep.subr.bf16.mxu0 0
          %1368 = vmatpush1.bf16.msra.mxu0 0
          %1369 = vmatprep.subr.bf16.mxu0 0
          %1370 = vmatpush1.bf16.msra.mxu0 0
          %1371 = vmatprep.subr.bf16.mxu0 0
          %1372 = vmatpush1.bf16.msra.mxu0 0
          %1373 = vmatprep.subr.bf16.mxu0 0
          %1374 = vmatpush1.bf16.msra.mxu0 0
          %1375 = vmatprep.subr.bf16.mxu0 0
          %1376 = vmatpush1.bf16.msra.mxu0 0
          %1377 = vmatprep.subr.bf16.mxu0 0
          %1378 = vmatpush1.bf16.msra.mxu0 0
          %1379 = vmatprep.mubr.bf16.mxu0 0
          %1380 = vmatmul.mubr.bf16.gmra.mrb[0].mxu0 %v1342
          %v1381 = vpop.f32.mrb[0].mxu0
          %v1382 = vadd.f32 %v1327, %v1381
          %v1383 = vpop.f32.mrb[0].mxu0
          %v1384 = vpop.f32.mrb[0].mxu0
          %v1385 = vadd.f32 %v1327, %v1384
          %v1386 = vpop.f32.mrb[0].mxu0
          %1387 = vmatprep.mubr.bf16.mxu0 0
          %1388 = vmatmul.mubr.bf16.gmra.mrb[0].mxu0 %v1345
          %v1389 = vpop.f32.mrb[0].mxu0
          %v1390 = vadd.f32 %v1327, %v1389
          %v1391 = vpop.f32.mrb[0].mxu0
          %v1392 = vpop.f32.mrb[0].mxu0
          %v1393 = vadd.f32 %v1327, %v1392
          %v1394 = vpop.f32.mrb[0].mxu0
          %1395 = vdwg.mxu0
          %v1396 = vld [vmem:[%s1069] sm:$0xf]
          %v1397 = vld [vmem:[%s1069 + $0x4] sm:$0xf]
          %v1398 = vld [vmem:[%s1069 + $0x8] sm:$0xf]
          %v1399 = vld [vmem:[%s1069 + $0xc] sm:$0xf]
          %v1400 = vld [vmem:[%s1077] sm:$0x1]
          %v1402 = vlaneseq
          %v1403 = vshrl.u32 %v1402, 7
          %v1404 = vsub.s32 0, %v1403
          %v1405 = vrot.slane %v1400, %v1404
          %v1411 = vunpack.c.l.b16 %v1396
          %v1412 = vunpack.c.l.b16 %v1397
          %v1413 = vunpack.c.l.b16 %v1398
          %v1414 = vunpack.c.l.b16 %v1399
          %v1415 = vpack.c.b16 %v1412, %v1411
          %v1416 = vpack.c.b16 %v1414, %v1413
          %1419 = vmatprep.subr.bf16.mxu0 0
          %1420 = vmatpush1.bf16.msra.mxu0 %v1415
          %1421 = vmatprep.subr.bf16.mxu0 0
          %1422 = vmatpush1.bf16.msra.mxu0 %v1416
          %1423 = vmatprep.subr.bf16.mxu0 0
          %1424 = vmatpush1.bf16.msra.mxu0 0
          %1425 = vmatprep.subr.bf16.mxu0 0
          %1426 = vmatpush1.bf16.msra.mxu0 0
          %1427 = vmatprep.subr.bf16.mxu0 0
          %1428 = vmatpush1.bf16.msra.mxu0 0
          %1429 = vmatprep.subr.bf16.mxu0 0
          %1430 = vmatpush1.bf16.msra.mxu0 0
          %1431 = vmatprep.subr.bf16.mxu0 0
          %1432 = vmatpush1.bf16.msra.mxu0 0
          %1433 = vmatprep.subr.bf16.mxu0 0
          %1434 = vmatpush1.bf16.msra.mxu0 0
          %1435 = vmatprep.subr.bf16.mxu0 0
          %1436 = vmatpush1.bf16.msra.mxu0 0
          %1437 = vmatprep.subr.bf16.mxu0 0
          %1438 = vmatpush1.bf16.msra.mxu0 0
          %1439 = vmatprep.subr.bf16.mxu0 0
          %1440 = vmatpush1.bf16.msra.mxu0 0
          %1441 = vmatprep.subr.bf16.mxu0 0
          %1442 = vmatpush1.bf16.msra.mxu0 0
          %1443 = vmatprep.subr.bf16.mxu0 0
          %1444 = vmatpush1.bf16.msra.mxu0 0
          %1445 = vmatprep.subr.bf16.mxu0 0
          %1446 = vmatpush1.bf16.msra.mxu0 0
          %1447 = vmatprep.subr.bf16.mxu0 0
          %1448 = vmatpush1.bf16.msra.mxu0 0
          %1449 = vmatprep.subr.bf16.mxu0 0
          %1450 = vmatpush1.bf16.msra.mxu0 0
          %1451 = vmatprep.mubr.bf16.mxu0 0
          %1452 = vmatmul.mubr.bf16.gmra.mrb[0].mxu0 %v1342
          %v1453 = vpop.f32.mrb[0].mxu0
          %v1454 = vadd.f32 %v1405, %v1453
          %v1455 = vpop.f32.mrb[0].mxu0
          %v1456 = vpop.f32.mrb[0].mxu0
          %v1457 = vadd.f32 %v1405, %v1456
          %v1458 = vpop.f32.mrb[0].mxu0
          %1459 = vmatprep.mubr.bf16.mxu0 0
          %1460 = vmatmul.mubr.bf16.gmra.mrb[0].mxu0 %v1345
          %v1461 = vpop.f32.mrb[0].mxu0
          %v1462 = vadd.f32 %v1405, %v1461
          %v1463 = vpop.f32.mrb[0].mxu0
          %v1464 = vpop.f32.mrb[0].mxu0
          %v1465 = vadd.f32 %v1405, %v1464
          %v1466 = vpop.f32.mrb[0].mxu0
          %1467 = vdwg.mxu0
          %v1468 = vpack.c.bf16 %v1304, %v1304
          %v1469 = vpack.c.bf16 %v1307, %v1307
          %v1470 = vpack.c.bf16 %v1312, %v1312
          %v1471 = vpack.c.bf16 %v1315, %v1315
          %v1472 = vpack.c.bf16 %v1382, %v1382
          %v1473 = vpack.c.bf16 %v1385, %v1385
          %v1474 = vpack.c.bf16 %v1390, %v1390
          %v1475 = vpack.c.bf16 %v1393, %v1393
          %v1476 = vpack.c.bf16 %v1454, %v1454
          %v1477 = vpack.c.bf16 %v1457, %v1457
          %v1478 = vpack.c.bf16 %v1462, %v1462
          %v1479 = vpack.c.bf16 %v1465, %v1465
          %vm1480 = vcmask 64512
          %v1482 = vsel %vm1480, %v1468, 0
          %v1485 = vsel %vm1480, %v1472, 0
          %1487 = vmatprep.subr.bf16.mxu0 0
          %1488 = vmatpush1.bf16.xpose.msra.mxu0 %v1485
          %1489 = vmatprep.subr.bf16.mxu0 0
          %1490 = vmatpush1.bf16.xpose.msra.mxu0 0
          %1491 = vmatprep.subr.bf16.mxu0 0
          %1492 = vmatpush1.bf16.xpose.msra.mxu0 0
          %1493 = vmatprep.subr.bf16.mxu0 0
          %1494 = vmatpush1.bf16.xpose.msra.mxu0 0
          %1495 = vmatprep.subr.bf16.mxu0 0
          %1496 = vmatpush1.bf16.xpose.msra.mxu0 0
          %1497 = vmatprep.subr.bf16.mxu0 0
          %1498 = vmatpush1.bf16.xpose.msra.mxu0 0
          %1499 = vmatprep.subr.bf16.mxu0 0
          %1500 = vmatpush1.bf16.xpose.msra.mxu0 0
          %1501 = vmatprep.subr.bf16.mxu0 0
          %1502 = vmatpush1.bf16.xpose.msra.mxu0 0
          %1503 = vmatprep.subr.bf16.mxu0 0
          %1504 = vmatpush1.bf16.xpose.msra.mxu0 0
          %1505 = vmatprep.subr.bf16.mxu0 0
          %1506 = vmatpush1.bf16.xpose.msra.mxu0 0
          %1507 = vmatprep.subr.bf16.mxu0 0
          %1508 = vmatpush1.bf16.xpose.msra.mxu0 0
          %1509 = vmatprep.subr.bf16.mxu0 0
          %1510 = vmatpush1.bf16.xpose.msra.mxu0 0
          %1511 = vmatprep.subr.bf16.mxu0 0
          %1512 = vmatpush1.bf16.xpose.msra.mxu0 0
          %1513 = vmatprep.subr.bf16.mxu0 0
          %1514 = vmatpush1.bf16.xpose.msra.mxu0 0
          %1515 = vmatprep.subr.bf16.mxu0 0
          %1516 = vmatpush1.bf16.xpose.msra.mxu0 0
          %1517 = vmatprep.subr.bf16.mxu0 0
          %1518 = vmatpush1.bf16.xpose.msra.mxu0 0
          %1519 = vmatprep.mubr.bf16.mxu0 0
          %1520 = vmatmul.mubr.bf16.gmra.mrb[0].mxu0 %v1482
          %v1521 = vpop.f32.mrb[0].mxu0
          %v1522 = vadd.f32 %v1222, %v1521
          %v1523 = vpop.f32.mrb[0].mxu0
          %v1524 = vpop.f32.mrb[0].mxu0
          %v1525 = vpop.f32.mrb[0].mxu0
          %1526 = vdwg.mxu0
          %v1528 = vsel %vm1480, %v1469, 0
          %v1531 = vsel %vm1480, %v1473, 0
          %1533 = vmatprep.subr.bf16.mxu0 0
          %1534 = vmatpush1.bf16.xpose.msra.mxu0 %v1531
          %1535 = vmatprep.subr.bf16.mxu0 0
          %1536 = vmatpush1.bf16.xpose.msra.mxu0 0
          %1537 = vmatprep.subr.bf16.mxu0 0
          %1538 = vmatpush1.bf16.xpose.msra.mxu0 0
          %1539 = vmatprep.subr.bf16.mxu0 0
          %1540 = vmatpush1.bf16.xpose.msra.mxu0 0
          %1541 = vmatprep.subr.bf16.mxu0 0
          %1542 = vmatpush1.bf16.xpose.msra.mxu0 0
          %1543 = vmatprep.subr.bf16.mxu0 0
          %1544 = vmatpush1.bf16.xpose.msra.mxu0 0
          %1545 = vmatprep.subr.bf16.mxu0 0
          %1546 = vmatpush1.bf16.xpose.msra.mxu0 0
          %1547 = vmatprep.subr.bf16.mxu0 0
          %1548 = vmatpush1.bf16.xpose.msra.mxu0 0
          %1549 = vmatprep.subr.bf16.mxu0 0
          %1550 = vmatpush1.bf16.xpose.msra.mxu0 0
          %1551 = vmatprep.subr.bf16.mxu0 0
          %1552 = vmatpush1.bf16.xpose.msra.mxu0 0
          %1553 = vmatprep.subr.bf16.mxu0 0
          %1554 = vmatpush1.bf16.xpose.msra.mxu0 0
          %1555 = vmatprep.subr.bf16.mxu0 0
          %1556 = vmatpush1.bf16.xpose.msra.mxu0 0
          %1557 = vmatprep.subr.bf16.mxu0 0
          %1558 = vmatpush1.bf16.xpose.msra.mxu0 0
          %1559 = vmatprep.subr.bf16.mxu0 0
          %1560 = vmatpush1.bf16.xpose.msra.mxu0 0
          %1561 = vmatprep.subr.bf16.mxu0 0
          %1562 = vmatpush1.bf16.xpose.msra.mxu0 0
          %1563 = vmatprep.subr.bf16.mxu0 0
          %1564 = vmatpush1.bf16.xpose.msra.mxu0 0
          %1565 = vmatprep.mubr.bf16.mxu0 0
          %1566 = vmatmul.mubr.bf16.gmra.mrb[0].mxu0 %v1528
          %v1567 = vpop.f32.mrb[0].mxu0
          %v1568 = vadd.f32 %v1226, %v1567
          %v1569 = vpop.f32.mrb[0].mxu0
          %v1570 = vpop.f32.mrb[0].mxu0
          %v1571 = vpop.f32.mrb[0].mxu0
          %1572 = vdwg.mxu0
          %v1574 = vsel %vm1480, %v1470, 0
          %v1577 = vsel %vm1480, %v1474, 0
          %1579 = vmatprep.subr.bf16.mxu0 0
          %1580 = vmatpush1.bf16.xpose.msra.mxu0 %v1577
          %1581 = vmatprep.subr.bf16.mxu0 0
          %1582 = vmatpush1.bf16.xpose.msra.mxu0 0
          %1583 = vmatprep.subr.bf16.mxu0 0
          %1584 = vmatpush1.bf16.xpose.msra.mxu0 0
          %1585 = vmatprep.subr.bf16.mxu0 0
          %1586 = vmatpush1.bf16.xpose.msra.mxu0 0
          %1587 = vmatprep.subr.bf16.mxu0 0
          %1588 = vmatpush1.bf16.xpose.msra.mxu0 0
          %1589 = vmatprep.subr.bf16.mxu0 0
          %1590 = vmatpush1.bf16.xpose.msra.mxu0 0
          %1591 = vmatprep.subr.bf16.mxu0 0
          %1592 = vmatpush1.bf16.xpose.msra.mxu0 0
          %1593 = vmatprep.subr.bf16.mxu0 0
          %1594 = vmatpush1.bf16.xpose.msra.mxu0 0
          %1595 = vmatprep.subr.bf16.mxu0 0
          %1596 = vmatpush1.bf16.xpose.msra.mxu0 0
          %1597 = vmatprep.subr.bf16.mxu0 0
          %1598 = vmatpush1.bf16.xpose.msra.mxu0 0
          %1599 = vmatprep.subr.bf16.mxu0 0
          %1600 = vmatpush1.bf16.xpose.msra.mxu0 0
          %1601 = vmatprep.subr.bf16.mxu0 0
          %1602 = vmatpush1.bf16.xpose.msra.mxu0 0
          %1603 = vmatprep.subr.bf16.mxu0 0
          %1604 = vmatpush1.bf16.xpose.msra.mxu0 0
          %1605 = vmatprep.subr.bf16.mxu0 0
          %1606 = vmatpush1.bf16.xpose.msra.mxu0 0
          %1607 = vmatprep.subr.bf16.mxu0 0
          %1608 = vmatpush1.bf16.xpose.msra.mxu0 0
          %1609 = vmatprep.subr.bf16.mxu0 0
          %1610 = vmatpush1.bf16.xpose.msra.mxu0 0
          %1611 = vmatprep.mubr.bf16.mxu0 0
          %1612 = vmatmul.mubr.bf16.gmra.mrb[0].mxu0 %v1574
          %v1613 = vpop.f32.mrb[0].mxu0
          %v1614 = vadd.f32 %v1230, %v1613
          %v1615 = vpop.f32.mrb[0].mxu0
          %v1616 = vpop.f32.mrb[0].mxu0
          %v1617 = vpop.f32.mrb[0].mxu0
          %1618 = vdwg.mxu0
          %v1620 = vsel %vm1480, %v1471, 0
          %v1623 = vsel %vm1480, %v1475, 0
          %1625 = vmatprep.subr.bf16.mxu0 0
          %1626 = vmatpush1.bf16.xpose.msra.mxu0 %v1623
          %1627 = vmatprep.subr.bf16.mxu0 0
          %1628 = vmatpush1.bf16.xpose.msra.mxu0 0
          %1629 = vmatprep.subr.bf16.mxu0 0
          %1630 = vmatpush1.bf16.xpose.msra.mxu0 0
          %1631 = vmatprep.subr.bf16.mxu0 0
          %1632 = vmatpush1.bf16.xpose.msra.mxu0 0
          %1633 = vmatprep.subr.bf16.mxu0 0
          %1634 = vmatpush1.bf16.xpose.msra.mxu0 0
          %1635 = vmatprep.subr.bf16.mxu0 0
          %1636 = vmatpush1.bf16.xpose.msra.mxu0 0
          %1637 = vmatprep.subr.bf16.mxu0 0
          %1638 = vmatpush1.bf16.xpose.msra.mxu0 0
          %1639 = vmatprep.subr.bf16.mxu0 0
          %1640 = vmatpush1.bf16.xpose.msra.mxu0 0
          %1641 = vmatprep.subr.bf16.mxu0 0
          %1642 = vmatpush1.bf16.xpose.msra.mxu0 0
          %1643 = vmatprep.subr.bf16.mxu0 0
          %1644 = vmatpush1.bf16.xpose.msra.mxu0 0
          %1645 = vmatprep.subr.bf16.mxu0 0
          %1646 = vmatpush1.bf16.xpose.msra.mxu0 0
          %1647 = vmatprep.subr.bf16.mxu0 0
          %1648 = vmatpush1.bf16.xpose.msra.mxu0 0
          %1649 = vmatprep.subr.bf16.mxu0 0
          %1650 = vmatpush1.bf16.xpose.msra.mxu0 0
          %1651 = vmatprep.subr.bf16.mxu0 0
          %1652 = vmatpush1.bf16.xpose.msra.mxu0 0
          %1653 = vmatprep.subr.bf16.mxu0 0
          %1654 = vmatpush1.bf16.xpose.msra.mxu0 0
          %1655 = vmatprep.subr.bf16.mxu0 0
          %1656 = vmatpush1.bf16.xpose.msra.mxu0 0
          %1657 = vmatprep.mubr.bf16.mxu0 0
          %1658 = vmatmul.mubr.bf16.gmra.mrb[0].mxu0 %v1620
          %v1659 = vpop.f32.mrb[0].mxu0
          %v1660 = vadd.f32 %v1234, %v1659
          %v1661 = vpop.f32.mrb[0].mxu0
          %v1662 = vpop.f32.mrb[0].mxu0
          %v1663 = vpop.f32.mrb[0].mxu0
          %1664 = vdwg.mxu0
          %v1665 = vsel %vm1480, %v1522, -inf
          %1666 = vmax.xlane.f32.xlu0 %v1665
          %v1667 = vpop.xlane.xlu0 %1666
          %v1668 = vsel %vm1480, %v1568, -inf
          %1669 = vmax.xlane.f32.xlu0 %v1668
          %v1670 = vpop.xlane.xlu0 %1669
          %v1671 = vsel %vm1480, %v1614, -inf
          %1672 = vmax.xlane.f32.xlu0 %v1671
          %v1673 = vpop.xlane.xlu0 %1672
          %v1674 = vsel %vm1480, %v1660, -inf
          %1675 = vmax.xlane.f32.xlu0 %v1674
          %v1676 = vpop.xlane.xlu0 %1675
          %v1677 = vsub.f32 %v1522, %v1667
          %v1678 = vsub.f32 %v1568, %v1670
          %v1679 = vsub.f32 %v1614, %v1673
          %v1680 = vsub.f32 %v1660, %v1676
          %v1681 = vmul.f32 %v1677, 1.442695
          %v1682 = vpow.pop %v1681
          %v1683 = vmul.f32 %v1678, 1.442695
          %v1684 = vpow.pop %v1683
          %v1685 = vmul.f32 %v1679, 1.442695
          %v1686 = vpow.pop %v1685
          %v1687 = vmul.f32 %v1680, 1.442695
          %v1688 = vpow.pop %v1687
          %v1689 = vsel %vm1480, %v1682, 0.0
          %1690 = vadd.xlane.f32.xlu0 %v1689
          %v1691 = vpop.xlane.xlu0 %1690
          %v1692 = vsel %vm1480, %v1684, 0.0
          %1693 = vadd.xlane.f32.xlu0 %v1692
          %v1694 = vpop.xlane.xlu0 %1693
          %v1695 = vsel %vm1480, %v1686, 0.0
          %1696 = vadd.xlane.f32.xlu0 %v1695
          %v1697 = vpop.xlane.xlu0 %1696
          %v1698 = vsel %vm1480, %v1688, 0.0
          %1699 = vadd.xlane.f32.xlu0 %v1698
          %v1700 = vpop.xlane.xlu0 %1699
          %v1701 = vpack.c.bf16 %v1682, %v1682
          %v1702 = vpack.c.bf16 %v1684, %v1684
          %v1703 = vpack.c.bf16 %v1686, %v1686
          %v1704 = vpack.c.bf16 %v1688, %v1688
          %v1706 = vsel %vm1480, %v1701, 0
          %vm1708 = vcmask 1043456
          %v1710 = vsel %vm1708, %v1476, 0
          %1712 = vmatprep.subr.bf16.mxu0 0
          %1713 = vmatpush1.bf16.msra.mxu0 %v1710
          %1714 = vmatprep.subr.bf16.mxu0 0
          %1715 = vmatpush1.bf16.msra.mxu0 0
          %1716 = vmatprep.subr.bf16.mxu0 0
          %1717 = vmatpush1.bf16.msra.mxu0 0
          %1718 = vmatprep.subr.bf16.mxu0 0
          %1719 = vmatpush1.bf16.msra.mxu0 0
          %1720 = vmatprep.subr.bf16.mxu0 0
          %1721 = vmatpush1.bf16.msra.mxu0 0
          %1722 = vmatprep.subr.bf16.mxu0 0
          %1723 = vmatpush1.bf16.msra.mxu0 0
          %1724 = vmatprep.subr.bf16.mxu0 0
          %1725 = vmatpush1.bf16.msra.mxu0 0
          %1726 = vmatprep.subr.bf16.mxu0 0
          %1727 = vmatpush1.bf16.msra.mxu0 0
          %1728 = vmatprep.subr.bf16.mxu0 0
          %1729 = vmatpush1.bf16.msra.mxu0 0
          %1730 = vmatprep.subr.bf16.mxu0 0
          %1731 = vmatpush1.bf16.msra.mxu0 0
          %1732 = vmatprep.subr.bf16.mxu0 0
          %1733 = vmatpush1.bf16.msra.mxu0 0
          %1734 = vmatprep.subr.bf16.mxu0 0
          %1735 = vmatpush1.bf16.msra.mxu0 0
          %1736 = vmatprep.subr.bf16.mxu0 0
          %1737 = vmatpush1.bf16.msra.mxu0 0
          %1738 = vmatprep.subr.bf16.mxu0 0
          %1739 = vmatpush1.bf16.msra.mxu0 0
          %1740 = vmatprep.subr.bf16.mxu0 0
          %1741 = vmatpush1.bf16.msra.mxu0 0
          %1742 = vmatprep.subr.bf16.mxu0 0
          %1743 = vmatpush1.bf16.msra.mxu0 0
          %1744 = vmatprep.mubr.bf16.mxu0 0
          %1745 = vmatmul.mubr.bf16.gmra.mrb[0].mxu0 %v1706
          %v1746 = vpop.f32.mrb[0].mxu0
          %v1747 = vadd.f32 0.0, %v1746
          %v1748 = vpop.f32.mrb[0].mxu0
          %v1749 = vpop.f32.mrb[0].mxu0
          %v1750 = vpop.f32.mrb[0].mxu0
          %1751 = vdwg.mxu0
          %v1753 = vsel %vm1480, %v1702, 0
          %v1756 = vsel %vm1708, %v1477, 0
          %1758 = vmatprep.subr.bf16.mxu0 0
          %1759 = vmatpush1.bf16.msra.mxu0 %v1756
          %1760 = vmatprep.subr.bf16.mxu0 0
          %1761 = vmatpush1.bf16.msra.mxu0 0
          %1762 = vmatprep.subr.bf16.mxu0 0
          %1763 = vmatpush1.bf16.msra.mxu0 0
          %1764 = vmatprep.subr.bf16.mxu0 0
          %1765 = vmatpush1.bf16.msra.mxu0 0
          %1766 = vmatprep.subr.bf16.mxu0 0
          %1767 = vmatpush1.bf16.msra.mxu0 0
          %1768 = vmatprep.subr.bf16.mxu0 0
          %1769 = vmatpush1.bf16.msra.mxu0 0
          %1770 = vmatprep.subr.bf16.mxu0 0
          %1771 = vmatpush1.bf16.msra.mxu0 0
          %1772 = vmatprep.subr.bf16.mxu0 0
          %1773 = vmatpush1.bf16.msra.mxu0 0
          %1774 = vmatprep.subr.bf16.mxu0 0
          %1775 = vmatpush1.bf16.msra.mxu0 0
          %1776 = vmatprep.subr.bf16.mxu0 0
          %1777 = vmatpush1.bf16.msra.mxu0 0
          %1778 = vmatprep.subr.bf16.mxu0 0
          %1779 = vmatpush1.bf16.msra.mxu0 0
          %1780 = vmatprep.subr.bf16.mxu0 0
          %1781 = vmatpush1.bf16.msra.mxu0 0
          %1782 = vmatprep.subr.bf16.mxu0 0
          %1783 = vmatpush1.bf16.msra.mxu0 0
          %1784 = vmatprep.subr.bf16.mxu0 0
          %1785 = vmatpush1.bf16.msra.mxu0 0
          %1786 = vmatprep.subr.bf16.mxu0 0
          %1787 = vmatpush1.bf16.msra.mxu0 0
          %1788 = vmatprep.subr.bf16.mxu0 0
          %1789 = vmatpush1.bf16.msra.mxu0 0
          %1790 = vmatprep.mubr.bf16.mxu0 0
          %1791 = vmatmul.mubr.bf16.gmra.mrb[0].mxu0 %v1753
          %v1792 = vpop.f32.mrb[0].mxu0
          %v1793 = vadd.f32 0.0, %v1792
          %v1794 = vpop.f32.mrb[0].mxu0
          %v1795 = vpop.f32.mrb[0].mxu0
          %v1796 = vpop.f32.mrb[0].mxu0
          %1797 = vdwg.mxu0
          %v1799 = vsel %vm1480, %v1703, 0
          %v1802 = vsel %vm1708, %v1478, 0
          %1804 = vmatprep.subr.bf16.mxu0 0
          %1805 = vmatpush1.bf16.msra.mxu0 %v1802
          %1806 = vmatprep.subr.bf16.mxu0 0
          %1807 = vmatpush1.bf16.msra.mxu0 0
          %1808 = vmatprep.subr.bf16.mxu0 0
          %1809 = vmatpush1.bf16.msra.mxu0 0
          %1810 = vmatprep.subr.bf16.mxu0 0
          %1811 = vmatpush1.bf16.msra.mxu0 0
          %1812 = vmatprep.subr.bf16.mxu0 0
          %1813 = vmatpush1.bf16.msra.mxu0 0
          %1814 = vmatprep.subr.bf16.mxu0 0
          %1815 = vmatpush1.bf16.msra.mxu0 0
          %1816 = vmatprep.subr.bf16.mxu0 0
          %1817 = vmatpush1.bf16.msra.mxu0 0
          %1818 = vmatprep.subr.bf16.mxu0 0
          %1819 = vmatpush1.bf16.msra.mxu0 0
          %1820 = vmatprep.subr.bf16.mxu0 0
          %1821 = vmatpush1.bf16.msra.mxu0 0
          %1822 = vmatprep.subr.bf16.mxu0 0
          %1823 = vmatpush1.bf16.msra.mxu0 0
          %1824 = vmatprep.subr.bf16.mxu0 0
          %1825 = vmatpush1.bf16.msra.mxu0 0
          %1826 = vmatprep.subr.bf16.mxu0 0
          %1827 = vmatpush1.bf16.msra.mxu0 0
          %1828 = vmatprep.subr.bf16.mxu0 0
          %1829 = vmatpush1.bf16.msra.mxu0 0
          %1830 = vmatprep.subr.bf16.mxu0 0
          %1831 = vmatpush1.bf16.msra.mxu0 0
          %1832 = vmatprep.subr.bf16.mxu0 0
          %1833 = vmatpush1.bf16.msra.mxu0 0
          %1834 = vmatprep.subr.bf16.mxu0 0
          %1835 = vmatpush1.bf16.msra.mxu0 0
          %1836 = vmatprep.mubr.bf16.mxu0 0
          %1837 = vmatmul.mubr.bf16.gmra.mrb[0].mxu0 %v1799
          %v1838 = vpop.f32.mrb[0].mxu0
          %v1839 = vadd.f32 0.0, %v1838
          %v1840 = vpop.f32.mrb[0].mxu0
          %v1841 = vpop.f32.mrb[0].mxu0
          %v1842 = vpop.f32.mrb[0].mxu0
          %1843 = vdwg.mxu0
          %v1845 = vsel %vm1480, %v1704, 0
          %v1848 = vsel %vm1708, %v1479, 0
          %1850 = vmatprep.subr.bf16.mxu0 0
          %1851 = vmatpush1.bf16.msra.mxu0 %v1848
          %1852 = vmatprep.subr.bf16.mxu0 0
          %1853 = vmatpush1.bf16.msra.mxu0 0
          %1854 = vmatprep.subr.bf16.mxu0 0
          %1855 = vmatpush1.bf16.msra.mxu0 0
          %1856 = vmatprep.subr.bf16.mxu0 0
          %1857 = vmatpush1.bf16.msra.mxu0 0
          %1858 = vmatprep.subr.bf16.mxu0 0
          %1859 = vmatpush1.bf16.msra.mxu0 0
          %1860 = vmatprep.subr.bf16.mxu0 0
          %1861 = vmatpush1.bf16.msra.mxu0 0
          %1862 = vmatprep.subr.bf16.mxu0 0
          %1863 = vmatpush1.bf16.msra.mxu0 0
          %1864 = vmatprep.subr.bf16.mxu0 0
          %1865 = vmatpush1.bf16.msra.mxu0 0
          %1866 = vmatprep.subr.bf16.mxu0 0
          %1867 = vmatpush1.bf16.msra.mxu0 0
          %1868 = vmatprep.subr.bf16.mxu0 0
          %1869 = vmatpush1.bf16.msra.mxu0 0
          %1870 = vmatprep.subr.bf16.mxu0 0
          %1871 = vmatpush1.bf16.msra.mxu0 0
          %1872 = vmatprep.subr.bf16.mxu0 0
          %1873 = vmatpush1.bf16.msra.mxu0 0
          %1874 = vmatprep.subr.bf16.mxu0 0
          %1875 = vmatpush1.bf16.msra.mxu0 0
          %1876 = vmatprep.subr.bf16.mxu0 0
          %1877 = vmatpush1.bf16.msra.mxu0 0
          %1878 = vmatprep.subr.bf16.mxu0 0
          %1879 = vmatpush1.bf16.msra.mxu0 0
          %1880 = vmatprep.subr.bf16.mxu0 0
          %1881 = vmatpush1.bf16.msra.mxu0 0
          %1882 = vmatprep.mubr.bf16.mxu0 0
          %1883 = vmatmul.mubr.bf16.gmra.mrb[0].mxu0 %v1845
          %v1884 = vpop.f32.mrb[0].mxu0
          %v1885 = vadd.f32 0.0, %v1884
          %v1886 = vpop.f32.mrb[0].mxu0
          %v1887 = vpop.f32.mrb[0].mxu0
          %v1888 = vpop.f32.mrb[0].mxu0
          %1889 = vdwg.mxu0
          %v1890 = vrcp.pop %v1691
          %v1891 = vrcp.pop %v1694
          %v1892 = vrcp.pop %v1697
          %v1893 = vrcp.pop %v1700
          %v1894 = vmul.f32 %v1747, %v1890
          %v1895 = vmul.f32 %v1793, %v1891
          %v1896 = vmul.f32 %v1839, %v1892
          %v1897 = vmul.f32 %v1885, %v1893
          %v1898 = vpack.c.bf16 %v1895, %v1894
          %v1899 = vpack.c.bf16 %v1897, %v1896
          %v1900 = vld [vmem:[%s1086] sm:$0xf]
          %s1901 = scalar_lea.vmem %s1035, 16
          %v1902 = vld [vmem:[%s1901] sm:$0xf]
          %v1903 = vld [vmem:[%s1901 + $0x4] sm:$0xf]
          %v1904 = vld [vmem:[%s1901 + $0x8] sm:$0xf]
          %v1905 = vld [vmem:[%s1901 + $0xc] sm:$0xf]
          %s1906 = scalar_lea.vmem %s1043, 1
          %v1907 = vld [vmem:[%s1906] sm:$0x1]
          %v1909 = vlaneseq
          %v1910 = vshrl.u32 %v1909, 7
          %v1911 = vsub.s32 0, %v1910
          %v1912 = vrot.slane %v1907, %v1911
          %v1918 = vunpack.c.l.b16 %v1902
          %v1919 = vunpack.c.l.b16 %v1903
          %v1920 = vunpack.c.l.b16 %v1904
          %v1921 = vunpack.c.l.b16 %v1905
          %v1922 = vpack.c.b16 %v1919, %v1918
          %v1923 = vpack.c.b16 %v1921, %v1920
          %1926 = vmatprep.subr.bf16.mxu0 0
          %1927 = vmatpush1.bf16.msra.mxu0 %v1922
          %1928 = vmatprep.subr.bf16.mxu0 0
          %1929 = vmatpush1.bf16.msra.mxu0 %v1923
          %1930 = vmatprep.subr.bf16.mxu0 0
          %1931 = vmatpush1.bf16.msra.mxu0 0
          %1932 = vmatprep.subr.bf16.mxu0 0
          %1933 = vmatpush1.bf16.msra.mxu0 0
          %1934 = vmatprep.subr.bf16.mxu0 0
          %1935 = vmatpush1.bf16.msra.mxu0 0
          %1936 = vmatprep.subr.bf16.mxu0 0
          %1937 = vmatpush1.bf16.msra.mxu0 0
          %1938 = vmatprep.subr.bf16.mxu0 0
          %1939 = vmatpush1.bf16.msra.mxu0 0
          %1940 = vmatprep.subr.bf16.mxu0 0
          %1941 = vmatpush1.bf16.msra.mxu0 0
          %1942 = vmatprep.subr.bf16.mxu0 0
          %1943 = vmatpush1.bf16.msra.mxu0 0
          %1944 = vmatprep.subr.bf16.mxu0 0
          %1945 = vmatpush1.bf16.msra.mxu0 0
          %1946 = vmatprep.subr.bf16.mxu0 0
          %1947 = vmatpush1.bf16.msra.mxu0 0
          %1948 = vmatprep.subr.bf16.mxu0 0
          %1949 = vmatpush1.bf16.msra.mxu0 0
          %1950 = vmatprep.subr.bf16.mxu0 0
          %1951 = vmatpush1.bf16.msra.mxu0 0
          %1952 = vmatprep.subr.bf16.mxu0 0
          %1953 = vmatpush1.bf16.msra.mxu0 0
          %1954 = vmatprep.subr.bf16.mxu0 0
          %1955 = vmatpush1.bf16.msra.mxu0 0
          %1956 = vmatprep.subr.bf16.mxu0 0
          %1957 = vmatpush1.bf16.msra.mxu0 0
          %1958 = vmatprep.mubr.bf16.mxu0 0
          %1959 = vmatmul.mubr.bf16.gmra.mrb[0].mxu0 %v1264
          %v1960 = vpop.f32.mrb[0].mxu0
          %v1961 = vadd.f32 %v1912, %v1960
          %v1962 = vpop.f32.mrb[0].mxu0
          %v1963 = vpop.f32.mrb[0].mxu0
          %v1964 = vadd.f32 %v1912, %v1963
          %v1965 = vpop.f32.mrb[0].mxu0
          %1966 = vmatprep.mubr.bf16.mxu0 0
          %1967 = vmatmul.mubr.bf16.gmra.mrb[0].mxu0 %v1267
          %v1968 = vpop.f32.mrb[0].mxu0
          %v1969 = vadd.f32 %v1912, %v1968
          %v1970 = vpop.f32.mrb[0].mxu0
          %v1971 = vpop.f32.mrb[0].mxu0
          %v1972 = vadd.f32 %v1912, %v1971
          %v1973 = vpop.f32.mrb[0].mxu0
          %1974 = vdwg.mxu0
          %s1975 = scalar_lea.vmem %s1052, 16
          %v1976 = vld [vmem:[%s1975] sm:$0xf]
          %v1977 = vld [vmem:[%s1975 + $0x4] sm:$0xf]
          %v1978 = vld [vmem:[%s1975 + $0x8] sm:$0xf]
          %v1979 = vld [vmem:[%s1975 + $0xc] sm:$0xf]
          %s1980 = scalar_lea.vmem %s1060, 1
          %v1981 = vld [vmem:[%s1980] sm:$0x1]
          %v1983 = vlaneseq
          %v1984 = vshrl.u32 %v1983, 7
          %v1985 = vsub.s32 0, %v1984
          %v1986 = vrot.slane %v1981, %v1985
          %v1992 = vunpack.c.l.b16 %v1976
          %v1993 = vunpack.c.l.b16 %v1977
          %v1994 = vunpack.c.l.b16 %v1978
          %v1995 = vunpack.c.l.b16 %v1979
          %v1996 = vpack.c.b16 %v1993, %v1992
          %v1997 = vpack.c.b16 %v1995, %v1994
          %2000 = vmatprep.subr.bf16.mxu0 0
          %2001 = vmatpush1.bf16.msra.mxu0 %v1996
          %2002 = vmatprep.subr.bf16.mxu0 0
          %2003 = vmatpush1.bf16.msra.mxu0 %v1997
          %2004 = vmatprep.subr.bf16.mxu0 0
          %2005 = vmatpush1.bf16.msra.mxu0 0
          %2006 = vmatprep.subr.bf16.mxu0 0
          %2007 = vmatpush1.bf16.msra.mxu0 0
          %2008 = vmatprep.subr.bf16.mxu0 0
          %2009 = vmatpush1.bf16.msra.mxu0 0
          %2010 = vmatprep.subr.bf16.mxu0 0
          %2011 = vmatpush1.bf16.msra.mxu0 0
          %2012 = vmatprep.subr.bf16.mxu0 0
          %2013 = vmatpush1.bf16.msra.mxu0 0
          %2014 = vmatprep.subr.bf16.mxu0 0
          %2015 = vmatpush1.bf16.msra.mxu0 0
          %2016 = vmatprep.subr.bf16.mxu0 0
          %2017 = vmatpush1.bf16.msra.mxu0 0
          %2018 = vmatprep.subr.bf16.mxu0 0
          %2019 = vmatpush1.bf16.msra.mxu0 0
          %2020 = vmatprep.subr.bf16.mxu0 0
          %2021 = vmatpush1.bf16.msra.mxu0 0
          %2022 = vmatprep.subr.bf16.mxu0 0
          %2023 = vmatpush1.bf16.msra.mxu0 0
          %2024 = vmatprep.subr.bf16.mxu0 0
          %2025 = vmatpush1.bf16.msra.mxu0 0
          %2026 = vmatprep.subr.bf16.mxu0 0
          %2027 = vmatpush1.bf16.msra.mxu0 0
          %2028 = vmatprep.subr.bf16.mxu0 0
          %2029 = vmatpush1.bf16.msra.mxu0 0
          %2030 = vmatprep.subr.bf16.mxu0 0
          %2031 = vmatpush1.bf16.msra.mxu0 0
          %2032 = vmatprep.mubr.bf16.mxu0 0
          %2033 = vmatmul.mubr.bf16.gmra.mrb[0].mxu0 %v1342
          %v2034 = vpop.f32.mrb[0].mxu0
          %v2035 = vadd.f32 %v1986, %v2034
          %v2036 = vpop.f32.mrb[0].mxu0
          %v2037 = vpop.f32.mrb[0].mxu0
          %v2038 = vadd.f32 %v1986, %v2037
          %v2039 = vpop.f32.mrb[0].mxu0
          %2040 = vmatprep.mubr.bf16.mxu0 0
          %2041 = vmatmul.mubr.bf16.gmra.mrb[0].mxu0 %v1345
          %v2042 = vpop.f32.mrb[0].mxu0
          %v2043 = vadd.f32 %v1986, %v2042
          %v2044 = vpop.f32.mrb[0].mxu0
          %v2045 = vpop.f32.mrb[0].mxu0
          %v2046 = vadd.f32 %v1986, %v2045
          %v2047 = vpop.f32.mrb[0].mxu0
          %2048 = vdwg.mxu0
          %s2049 = scalar_lea.vmem %s1069, 16
          %v2050 = vld [vmem:[%s2049] sm:$0xf]
          %v2051 = vld [vmem:[%s2049 + $0x4] sm:$0xf]
          %v2052 = vld [vmem:[%s2049 + $0x8] sm:$0xf]
          %v2053 = vld [vmem:[%s2049 + $0xc] sm:$0xf]
          %s2054 = scalar_lea.vmem %s1077, 1
          %v2055 = vld [vmem:[%s2054] sm:$0x1]
          %v2057 = vlaneseq
          %v2058 = vshrl.u32 %v2057, 7
          %v2059 = vsub.s32 0, %v2058
          %v2060 = vrot.slane %v2055, %v2059
          %v2066 = vunpack.c.l.b16 %v2050
          %v2067 = vunpack.c.l.b16 %v2051
          %v2068 = vunpack.c.l.b16 %v2052
          %v2069 = vunpack.c.l.b16 %v2053
          %v2070 = vpack.c.b16 %v2067, %v2066
          %v2071 = vpack.c.b16 %v2069, %v2068
          %2074 = vmatprep.subr.bf16.mxu0 0
          %2075 = vmatpush1.bf16.msra.mxu0 %v2070
          %2076 = vmatprep.subr.bf16.mxu0 0
          %2077 = vmatpush1.bf16.msra.mxu0 %v2071
          %2078 = vmatprep.subr.bf16.mxu0 0
          %2079 = vmatpush1.bf16.msra.mxu0 0
          %2080 = vmatprep.subr.bf16.mxu0 0
          %2081 = vmatpush1.bf16.msra.mxu0 0
          %2082 = vmatprep.subr.bf16.mxu0 0
          %2083 = vmatpush1.bf16.msra.mxu0 0
          %2084 = vmatprep.subr.bf16.mxu0 0
          %2085 = vmatpush1.bf16.msra.mxu0 0
          %2086 = vmatprep.subr.bf16.mxu0 0
          %2087 = vmatpush1.bf16.msra.mxu0 0
          %2088 = vmatprep.subr.bf16.mxu0 0
          %2089 = vmatpush1.bf16.msra.mxu0 0
          %2090 = vmatprep.subr.bf16.mxu0 0
          %2091 = vmatpush1.bf16.msra.mxu0 0
          %2092 = vmatprep.subr.bf16.mxu0 0
          %2093 = vmatpush1.bf16.msra.mxu0 0
          %2094 = vmatprep.subr.bf16.mxu0 0
          %2095 = vmatpush1.bf16.msra.mxu0 0
          %2096 = vmatprep.subr.bf16.mxu0 0
          %2097 = vmatpush1.bf16.msra.mxu0 0
          %2098 = vmatprep.subr.bf16.mxu0 0
          %2099 = vmatpush1.bf16.msra.mxu0 0
          %2100 = vmatprep.subr.bf16.mxu0 0
          %2101 = vmatpush1.bf16.msra.mxu0 0
          %2102 = vmatprep.subr.bf16.mxu0 0
          %2103 = vmatpush1.bf16.msra.mxu0 0
          %2104 = vmatprep.subr.bf16.mxu0 0
          %2105 = vmatpush1.bf16.msra.mxu0 0
          %2106 = vmatprep.mubr.bf16.mxu0 0
          %2107 = vmatmul.mubr.bf16.gmra.mrb[0].mxu0 %v1342
          %v2108 = vpop.f32.mrb[0].mxu0
          %v2109 = vadd.f32 %v2060, %v2108
          %v2110 = vpop.f32.mrb[0].mxu0
          %v2111 = vpop.f32.mrb[0].mxu0
          %v2112 = vadd.f32 %v2060, %v2111
          %v2113 = vpop.f32.mrb[0].mxu0
          %2114 = vmatprep.mubr.bf16.mxu0 0
          %2115 = vmatmul.mubr.bf16.gmra.mrb[0].mxu0 %v1345
          %v2116 = vpop.f32.mrb[0].mxu0
          %v2117 = vadd.f32 %v2060, %v2116
          %v2118 = vpop.f32.mrb[0].mxu0
          %v2119 = vpop.f32.mrb[0].mxu0
          %v2120 = vadd.f32 %v2060, %v2119
          %v2121 = vpop.f32.mrb[0].mxu0
          %2122 = vdwg.mxu0
          %v2123 = vpack.c.bf16 %v1961, %v1961
          %v2124 = vpack.c.bf16 %v1964, %v1964
          %v2125 = vpack.c.bf16 %v1969, %v1969
          %v2126 = vpack.c.bf16 %v1972, %v1972
          %v2127 = vpack.c.bf16 %v2035, %v2035
          %v2128 = vpack.c.bf16 %v2038, %v2038
          %v2129 = vpack.c.bf16 %v2043, %v2043
          %v2130 = vpack.c.bf16 %v2046, %v2046
          %v2131 = vpack.c.bf16 %v2109, %v2109
          %v2132 = vpack.c.bf16 %v2112, %v2112
          %v2133 = vpack.c.bf16 %v2117, %v2117
          %v2134 = vpack.c.bf16 %v2120, %v2120
          %v2136 = vsel %vm1480, %v2123, 0
          %v2139 = vsel %vm1480, %v2127, 0
          %2141 = vmatprep.subr.bf16.mxu0 0
          %2142 = vmatpush1.bf16.xpose.msra.mxu0 %v2139
          %2143 = vmatprep.subr.bf16.mxu0 0
          %2144 = vmatpush1.bf16.xpose.msra.mxu0 0
          %2145 = vmatprep.subr.bf16.mxu0 0
          %2146 = vmatpush1.bf16.xpose.msra.mxu0 0
          %2147 = vmatprep.subr.bf16.mxu0 0
          %2148 = vmatpush1.bf16.xpose.msra.mxu0 0
          %2149 = vmatprep.subr.bf16.mxu0 0
          %2150 = vmatpush1.bf16.xpose.msra.mxu0 0
          %2151 = vmatprep.subr.bf16.mxu0 0
          %2152 = vmatpush1.bf16.xpose.msra.mxu0 0
          %2153 = vmatprep.subr.bf16.mxu0 0
          %2154 = vmatpush1.bf16.xpose.msra.mxu0 0
          %2155 = vmatprep.subr.bf16.mxu0 0
          %2156 = vmatpush1.bf16.xpose.msra.mxu0 0
          %2157 = vmatprep.subr.bf16.mxu0 0
          %2158 = vmatpush1.bf16.xpose.msra.mxu0 0
          %2159 = vmatprep.subr.bf16.mxu0 0
          %2160 = vmatpush1.bf16.xpose.msra.mxu0 0
          %2161 = vmatprep.subr.bf16.mxu0 0
          %2162 = vmatpush1.bf16.xpose.msra.mxu0 0
          %2163 = vmatprep.subr.bf16.mxu0 0
          %2164 = vmatpush1.bf16.xpose.msra.mxu0 0
          %2165 = vmatprep.subr.bf16.mxu0 0
          %2166 = vmatpush1.bf16.xpose.msra.mxu0 0
          %2167 = vmatprep.subr.bf16.mxu0 0
          %2168 = vmatpush1.bf16.xpose.msra.mxu0 0
          %2169 = vmatprep.subr.bf16.mxu0 0
          %2170 = vmatpush1.bf16.xpose.msra.mxu0 0
          %2171 = vmatprep.subr.bf16.mxu0 0
          %2172 = vmatpush1.bf16.xpose.msra.mxu0 0
          %2173 = vmatprep.mubr.bf16.mxu0 0
          %2174 = vmatmul.mubr.bf16.gmra.mrb[0].mxu0 %v2136
          %v2175 = vpop.f32.mrb[0].mxu0
          %v2176 = vadd.f32 %v1222, %v2175
          %v2177 = vpop.f32.mrb[0].mxu0
          %v2178 = vpop.f32.mrb[0].mxu0
          %v2179 = vpop.f32.mrb[0].mxu0
          %2180 = vdwg.mxu0
          %v2182 = vsel %vm1480, %v2124, 0
          %v2185 = vsel %vm1480, %v2128, 0
          %2187 = vmatprep.subr.bf16.mxu0 0
          %2188 = vmatpush1.bf16.xpose.msra.mxu0 %v2185
          %2189 = vmatprep.subr.bf16.mxu0 0
          %2190 = vmatpush1.bf16.xpose.msra.mxu0 0
          %2191 = vmatprep.subr.bf16.mxu0 0
          %2192 = vmatpush1.bf16.xpose.msra.mxu0 0
          %2193 = vmatprep.subr.bf16.mxu0 0
          %2194 = vmatpush1.bf16.xpose.msra.mxu0 0
          %2195 = vmatprep.subr.bf16.mxu0 0
          %2196 = vmatpush1.bf16.xpose.msra.mxu0 0
          %2197 = vmatprep.subr.bf16.mxu0 0
          %2198 = vmatpush1.bf16.xpose.msra.mxu0 0
          %2199 = vmatprep.subr.bf16.mxu0 0
          %2200 = vmatpush1.bf16.xpose.msra.mxu0 0
          %2201 = vmatprep.subr.bf16.mxu0 0
          %2202 = vmatpush1.bf16.xpose.msra.mxu0 0
          %2203 = vmatprep.subr.bf16.mxu0 0
          %2204 = vmatpush1.bf16.xpose.msra.mxu0 0
          %2205 = vmatprep.subr.bf16.mxu0 0
          %2206 = vmatpush1.bf16.xpose.msra.mxu0 0
          %2207 = vmatprep.subr.bf16.mxu0 0
          %2208 = vmatpush1.bf16.xpose.msra.mxu0 0
          %2209 = vmatprep.subr.bf16.mxu0 0
          %2210 = vmatpush1.bf16.xpose.msra.mxu0 0
          %2211 = vmatprep.subr.bf16.mxu0 0
          %2212 = vmatpush1.bf16.xpose.msra.mxu0 0
          %2213 = vmatprep.subr.bf16.mxu0 0
          %2214 = vmatpush1.bf16.xpose.msra.mxu0 0
          %2215 = vmatprep.subr.bf16.mxu0 0
          %2216 = vmatpush1.bf16.xpose.msra.mxu0 0
          %2217 = vmatprep.subr.bf16.mxu0 0
          %2218 = vmatpush1.bf16.xpose.msra.mxu0 0
          %2219 = vmatprep.mubr.bf16.mxu0 0
          %2220 = vmatmul.mubr.bf16.gmra.mrb[0].mxu0 %v2182
          %v2221 = vpop.f32.mrb[0].mxu0
          %v2222 = vadd.f32 %v1226, %v2221
          %v2223 = vpop.f32.mrb[0].mxu0
          %v2224 = vpop.f32.mrb[0].mxu0
          %v2225 = vpop.f32.mrb[0].mxu0
          %2226 = vdwg.mxu0
          %v2228 = vsel %vm1480, %v2125, 0
          %v2231 = vsel %vm1480, %v2129, 0
          %2233 = vmatprep.subr.bf16.mxu0 0
          %2234 = vmatpush1.bf16.xpose.msra.mxu0 %v2231
          %2235 = vmatprep.subr.bf16.mxu0 0
          %2236 = vmatpush1.bf16.xpose.msra.mxu0 0
          %2237 = vmatprep.subr.bf16.mxu0 0
          %2238 = vmatpush1.bf16.xpose.msra.mxu0 0
          %2239 = vmatprep.subr.bf16.mxu0 0
          %2240 = vmatpush1.bf16.xpose.msra.mxu0 0
          %2241 = vmatprep.subr.bf16.mxu0 0
          %2242 = vmatpush1.bf16.xpose.msra.mxu0 0
          %2243 = vmatprep.subr.bf16.mxu0 0
          %2244 = vmatpush1.bf16.xpose.msra.mxu0 0
          %2245 = vmatprep.subr.bf16.mxu0 0
          %2246 = vmatpush1.bf16.xpose.msra.mxu0 0
          %2247 = vmatprep.subr.bf16.mxu0 0
          %2248 = vmatpush1.bf16.xpose.msra.mxu0 0
          %2249 = vmatprep.subr.bf16.mxu0 0
          %2250 = vmatpush1.bf16.xpose.msra.mxu0 0
          %2251 = vmatprep.subr.bf16.mxu0 0
          %2252 = vmatpush1.bf16.xpose.msra.mxu0 0
          %2253 = vmatprep.subr.bf16.mxu0 0
          %2254 = vmatpush1.bf16.xpose.msra.mxu0 0
          %2255 = vmatprep.subr.bf16.mxu0 0
          %2256 = vmatpush1.bf16.xpose.msra.mxu0 0
          %2257 = vmatprep.subr.bf16.mxu0 0
          %2258 = vmatpush1.bf16.xpose.msra.mxu0 0
          %2259 = vmatprep.subr.bf16.mxu0 0
          %2260 = vmatpush1.bf16.xpose.msra.mxu0 0
          %2261 = vmatprep.subr.bf16.mxu0 0
          %2262 = vmatpush1.bf16.xpose.msra.mxu0 0
          %2263 = vmatprep.subr.bf16.mxu0 0
          %2264 = vmatpush1.bf16.xpose.msra.mxu0 0
          %2265 = vmatprep.mubr.bf16.mxu0 0
          %2266 = vmatmul.mubr.bf16.gmra.mrb[0].mxu0 %v2228
          %v2267 = vpop.f32.mrb[0].mxu0
          %v2268 = vadd.f32 %v1230, %v2267
          %v2269 = vpop.f32.mrb[0].mxu0
          %v2270 = vpop.f32.mrb[0].mxu0
          %v2271 = vpop.f32.mrb[0].mxu0
          %2272 = vdwg.mxu0
          %v2274 = vsel %vm1480, %v2126, 0
          %v2277 = vsel %vm1480, %v2130, 0
          %2279 = vmatprep.subr.bf16.mxu0 0
          %2280 = vmatpush1.bf16.xpose.msra.mxu0 %v2277
          %2281 = vmatprep.subr.bf16.mxu0 0
          %2282 = vmatpush1.bf16.xpose.msra.mxu0 0
          %2283 = vmatprep.subr.bf16.mxu0 0
          %2284 = vmatpush1.bf16.xpose.msra.mxu0 0
          %2285 = vmatprep.subr.bf16.mxu0 0
          %2286 = vmatpush1.bf16.xpose.msra.mxu0 0
          %2287 = vmatprep.subr.bf16.mxu0 0
          %2288 = vmatpush1.bf16.xpose.msra.mxu0 0
          %2289 = vmatprep.subr.bf16.mxu0 0
          %2290 = vmatpush1.bf16.xpose.msra.mxu0 0
          %2291 = vmatprep.subr.bf16.mxu0 0
          %2292 = vmatpush1.bf16.xpose.msra.mxu0 0
          %2293 = vmatprep.subr.bf16.mxu0 0
          %2294 = vmatpush1.bf16.xpose.msra.mxu0 0
          %2295 = vmatprep.subr.bf16.mxu0 0
          %2296 = vmatpush1.bf16.xpose.msra.mxu0 0
          %2297 = vmatprep.subr.bf16.mxu0 0
          %2298 = vmatpush1.bf16.xpose.msra.mxu0 0
          %2299 = vmatprep.subr.bf16.mxu0 0
          %2300 = vmatpush1.bf16.xpose.msra.mxu0 0
          %2301 = vmatprep.subr.bf16.mxu0 0
          %2302 = vmatpush1.bf16.xpose.msra.mxu0 0
          %2303 = vmatprep.subr.bf16.mxu0 0
          %2304 = vmatpush1.bf16.xpose.msra.mxu0 0
          %2305 = vmatprep.subr.bf16.mxu0 0
          %2306 = vmatpush1.bf16.xpose.msra.mxu0 0
          %2307 = vmatprep.subr.bf16.mxu0 0
          %2308 = vmatpush1.bf16.xpose.msra.mxu0 0
          %2309 = vmatprep.subr.bf16.mxu0 0
          %2310 = vmatpush1.bf16.xpose.msra.mxu0 0
          %2311 = vmatprep.mubr.bf16.mxu0 0
          %2312 = vmatmul.mubr.bf16.gmra.mrb[0].mxu0 %v2274
          %v2313 = vpop.f32.mrb[0].mxu0
          %v2314 = vadd.f32 %v1234, %v2313
          %v2315 = vpop.f32.mrb[0].mxu0
          %v2316 = vpop.f32.mrb[0].mxu0
          %v2317 = vpop.f32.mrb[0].mxu0
          %2318 = vdwg.mxu0
          %v2319 = vsel %vm1480, %v2176, -inf
          %2320 = vmax.xlane.f32.xlu0 %v2319
          %v2321 = vpop.xlane.xlu0 %2320
          %v2322 = vsel %vm1480, %v2222, -inf
          %2323 = vmax.xlane.f32.xlu0 %v2322
          %v2324 = vpop.xlane.xlu0 %2323
          %v2325 = vsel %vm1480, %v2268, -inf
          %2326 = vmax.xlane.f32.xlu0 %v2325
          %v2327 = vpop.xlane.xlu0 %2326
          %v2328 = vsel %vm1480, %v2314, -inf
          %2329 = vmax.xlane.f32.xlu0 %v2328
          %v2330 = vpop.xlane.xlu0 %2329
          %v2331 = vsub.f32 %v2176, %v2321
          %v2332 = vsub.f32 %v2222, %v2324
          %v2333 = vsub.f32 %v2268, %v2327
          %v2334 = vsub.f32 %v2314, %v2330
          %v2335 = vmul.f32 %v2331, 1.442695
          %v2336 = vpow.pop %v2335
          %v2337 = vmul.f32 %v2332, 1.442695
          %v2338 = vpow.pop %v2337
          %v2339 = vmul.f32 %v2333, 1.442695
          %v2340 = vpow.pop %v2339
          %v2341 = vmul.f32 %v2334, 1.442695
          %v2342 = vpow.pop %v2341
          %v2343 = vsel %vm1480, %v2336, 0.0
          %2344 = vadd.xlane.f32.xlu0 %v2343
          %v2345 = vpop.xlane.xlu0 %2344
          %v2346 = vsel %vm1480, %v2338, 0.0
          %2347 = vadd.xlane.f32.xlu0 %v2346
          %v2348 = vpop.xlane.xlu0 %2347
          %v2349 = vsel %vm1480, %v2340, 0.0
          %2350 = vadd.xlane.f32.xlu0 %v2349
          %v2351 = vpop.xlane.xlu0 %2350
          %v2352 = vsel %vm1480, %v2342, 0.0
          %2353 = vadd.xlane.f32.xlu0 %v2352
          %v2354 = vpop.xlane.xlu0 %2353
          %v2355 = vpack.c.bf16 %v2336, %v2336
          %v2356 = vpack.c.bf16 %v2338, %v2338
          %v2357 = vpack.c.bf16 %v2340, %v2340
          %v2358 = vpack.c.bf16 %v2342, %v2342
          %v2360 = vsel %vm1480, %v2355, 0
          %v2363 = vsel %vm1708, %v2131, 0
          %2365 = vmatprep.subr.bf16.mxu0 0
          %2366 = vmatpush1.bf16.msra.mxu0 %v2363
          %2367 = vmatprep.subr.bf16.mxu0 0
          %2368 = vmatpush1.bf16.msra.mxu0 0
          %2369 = vmatprep.subr.bf16.mxu0 0
          %2370 = vmatpush1.bf16.msra.mxu0 0
          %2371 = vmatprep.subr.bf16.mxu0 0
          %2372 = vmatpush1.bf16.msra.mxu0 0
          %2373 = vmatprep.subr.bf16.mxu0 0
          %2374 = vmatpush1.bf16.msra.mxu0 0
          %2375 = vmatprep.subr.bf16.mxu0 0
          %2376 = vmatpush1.bf16.msra.mxu0 0
          %2377 = vmatprep.subr.bf16.mxu0 0
          %2378 = vmatpush1.bf16.msra.mxu0 0
          %2379 = vmatprep.subr.bf16.mxu0 0
          %2380 = vmatpush1.bf16.msra.mxu0 0
          %2381 = vmatprep.subr.bf16.mxu0 0
          %2382 = vmatpush1.bf16.msra.mxu0 0
          %2383 = vmatprep.subr.bf16.mxu0 0
          %2384 = vmatpush1.bf16.msra.mxu0 0
          %2385 = vmatprep.subr.bf16.mxu0 0
          %2386 = vmatpush1.bf16.msra.mxu0 0
          %2387 = vmatprep.subr.bf16.mxu0 0
          %2388 = vmatpush1.bf16.msra.mxu0 0
          %2389 = vmatprep.subr.bf16.mxu0 0
          %2390 = vmatpush1.bf16.msra.mxu0 0
          %2391 = vmatprep.subr.bf16.mxu0 0
          %2392 = vmatpush1.bf16.msra.mxu0 0
          %2393 = vmatprep.subr.bf16.mxu0 0
          %2394 = vmatpush1.bf16.msra.mxu0 0
          %2395 = vmatprep.subr.bf16.mxu0 0
          %2396 = vmatpush1.bf16.msra.mxu0 0
          %2397 = vmatprep.mubr.bf16.mxu0 0
          %2398 = vmatmul.mubr.bf16.gmra.mrb[0].mxu0 %v2360
          %v2399 = vpop.f32.mrb[0].mxu0
          %v2400 = vadd.f32 0.0, %v2399
          %v2401 = vpop.f32.mrb[0].mxu0
          %v2402 = vpop.f32.mrb[0].mxu0
          %v2403 = vpop.f32.mrb[0].mxu0
          %2404 = vdwg.mxu0
          %v2406 = vsel %vm1480, %v2356, 0
          %v2409 = vsel %vm1708, %v2132, 0
          %2411 = vmatprep.subr.bf16.mxu0 0
          %2412 = vmatpush1.bf16.msra.mxu0 %v2409
          %2413 = vmatprep.subr.bf16.mxu0 0
          %2414 = vmatpush1.bf16.msra.mxu0 0
          %2415 = vmatprep.subr.bf16.mxu0 0
          %2416 = vmatpush1.bf16.msra.mxu0 0
          %2417 = vmatprep.subr.bf16.mxu0 0
          %2418 = vmatpush1.bf16.msra.mxu0 0
          %2419 = vmatprep.subr.bf16.mxu0 0
          %2420 = vmatpush1.bf16.msra.mxu0 0
          %2421 = vmatprep.subr.bf16.mxu0 0
          %2422 = vmatpush1.bf16.msra.mxu0 0
          %2423 = vmatprep.subr.bf16.mxu0 0
          %2424 = vmatpush1.bf16.msra.mxu0 0
          %2425 = vmatprep.subr.bf16.mxu0 0
          %2426 = vmatpush1.bf16.msra.mxu0 0
          %2427 = vmatprep.subr.bf16.mxu0 0
          %2428 = vmatpush1.bf16.msra.mxu0 0
          %2429 = vmatprep.subr.bf16.mxu0 0
          %2430 = vmatpush1.bf16.msra.mxu0 0
          %2431 = vmatprep.subr.bf16.mxu0 0
          %2432 = vmatpush1.bf16.msra.mxu0 0
          %2433 = vmatprep.subr.bf16.mxu0 0
          %2434 = vmatpush1.bf16.msra.mxu0 0
          %2435 = vmatprep.subr.bf16.mxu0 0
          %2436 = vmatpush1.bf16.msra.mxu0 0
          %2437 = vmatprep.subr.bf16.mxu0 0
          %2438 = vmatpush1.bf16.msra.mxu0 0
          %2439 = vmatprep.subr.bf16.mxu0 0
          %2440 = vmatpush1.bf16.msra.mxu0 0
          %2441 = vmatprep.subr.bf16.mxu0 0
          %2442 = vmatpush1.bf16.msra.mxu0 0
          %2443 = vmatprep.mubr.bf16.mxu0 0
          %2444 = vmatmul.mubr.bf16.gmra.mrb[0].mxu0 %v2406
          %v2445 = vpop.f32.mrb[0].mxu0
          %v2446 = vadd.f32 0.0, %v2445
          %v2447 = vpop.f32.mrb[0].mxu0
          %v2448 = vpop.f32.mrb[0].mxu0
          %v2449 = vpop.f32.mrb[0].mxu0
          %2450 = vdwg.mxu0
          %v2452 = vsel %vm1480, %v2357, 0
          %v2455 = vsel %vm1708, %v2133, 0
          %2457 = vmatprep.subr.bf16.mxu0 0
          %2458 = vmatpush1.bf16.msra.mxu0 %v2455
          %2459 = vmatprep.subr.bf16.mxu0 0
          %2460 = vmatpush1.bf16.msra.mxu0 0
          %2461 = vmatprep.subr.bf16.mxu0 0
          %2462 = vmatpush1.bf16.msra.mxu0 0
          %2463 = vmatprep.subr.bf16.mxu0 0
          %2464 = vmatpush1.bf16.msra.mxu0 0
          %2465 = vmatprep.subr.bf16.mxu0 0
          %2466 = vmatpush1.bf16.msra.mxu0 0
          %2467 = vmatprep.subr.bf16.mxu0 0
          %2468 = vmatpush1.bf16.msra.mxu0 0
          %2469 = vmatprep.subr.bf16.mxu0 0
          %2470 = vmatpush1.bf16.msra.mxu0 0
          %2471 = vmatprep.subr.bf16.mxu0 0
          %2472 = vmatpush1.bf16.msra.mxu0 0
          %2473 = vmatprep.subr.bf16.mxu0 0
          %2474 = vmatpush1.bf16.msra.mxu0 0
          %2475 = vmatprep.subr.bf16.mxu0 0
          %2476 = vmatpush1.bf16.msra.mxu0 0
          %2477 = vmatprep.subr.bf16.mxu0 0
          %2478 = vmatpush1.bf16.msra.mxu0 0
          %2479 = vmatprep.subr.bf16.mxu0 0
          %2480 = vmatpush1.bf16.msra.mxu0 0
          %2481 = vmatprep.subr.bf16.mxu0 0
          %2482 = vmatpush1.bf16.msra.mxu0 0
          %2483 = vmatprep.subr.bf16.mxu0 0
          %2484 = vmatpush1.bf16.msra.mxu0 0
          %2485 = vmatprep.subr.bf16.mxu0 0
          %2486 = vmatpush1.bf16.msra.mxu0 0
          %2487 = vmatprep.subr.bf16.mxu0 0
          %2488 = vmatpush1.bf16.msra.mxu0 0
          %2489 = vmatprep.mubr.bf16.mxu0 0
          %2490 = vmatmul.mubr.bf16.gmra.mrb[0].mxu0 %v2452
          %v2491 = vpop.f32.mrb[0].mxu0
          %v2492 = vadd.f32 0.0, %v2491
          %v2493 = vpop.f32.mrb[0].mxu0
          %v2494 = vpop.f32.mrb[0].mxu0
          %v2495 = vpop.f32.mrb[0].mxu0
          %2496 = vdwg.mxu0
          %v2498 = vsel %vm1480, %v2358, 0
          %v2501 = vsel %vm1708, %v2134, 0
          %2503 = vmatprep.subr.bf16.mxu0 0
          %2504 = vmatpush1.bf16.msra.mxu0 %v2501
          %2505 = vmatprep.subr.bf16.mxu0 0
          %2506 = vmatpush1.bf16.msra.mxu0 0
          %2507 = vmatprep.subr.bf16.mxu0 0
          %2508 = vmatpush1.bf16.msra.mxu0 0
          %2509 = vmatprep.subr.bf16.mxu0 0
          %2510 = vmatpush1.bf16.msra.mxu0 0
          %2511 = vmatprep.subr.bf16.mxu0 0
          %2512 = vmatpush1.bf16.msra.mxu0 0
          %2513 = vmatprep.subr.bf16.mxu0 0
          %2514 = vmatpush1.bf16.msra.mxu0 0
          %2515 = vmatprep.subr.bf16.mxu0 0
          %2516 = vmatpush1.bf16.msra.mxu0 0
          %2517 = vmatprep.subr.bf16.mxu0 0
          %2518 = vmatpush1.bf16.msra.mxu0 0
          %2519 = vmatprep.subr.bf16.mxu0 0
          %2520 = vmatpush1.bf16.msra.mxu0 0
          %2521 = vmatprep.subr.bf16.mxu0 0
          %2522 = vmatpush1.bf16.msra.mxu0 0
          %2523 = vmatprep.subr.bf16.mxu0 0
          %2524 = vmatpush1.bf16.msra.mxu0 0
          %2525 = vmatprep.subr.bf16.mxu0 0
          %2526 = vmatpush1.bf16.msra.mxu0 0
          %2527 = vmatprep.subr.bf16.mxu0 0
          %2528 = vmatpush1.bf16.msra.mxu0 0
          %2529 = vmatprep.subr.bf16.mxu0 0
          %2530 = vmatpush1.bf16.msra.mxu0 0
          %2531 = vmatprep.subr.bf16.mxu0 0
          %2532 = vmatpush1.bf16.msra.mxu0 0
          %2533 = vmatprep.subr.bf16.mxu0 0
          %2534 = vmatpush1.bf16.msra.mxu0 0
          %2535 = vmatprep.mubr.bf16.mxu0 0
          %2536 = vmatmul.mubr.bf16.gmra.mrb[0].mxu0 %v2498
          %v2537 = vpop.f32.mrb[0].mxu0
          %v2538 = vadd.f32 0.0, %v2537
          %v2539 = vpop.f32.mrb[0].mxu0
          %v2540 = vpop.f32.mrb[0].mxu0
          %v2541 = vpop.f32.mrb[0].mxu0
          %2542 = vdwg.mxu0
          %v2543 = vrcp.pop %v2345
          %v2544 = vrcp.pop %v2348
          %v2545 = vrcp.pop %v2351
          %v2546 = vrcp.pop %v2354
          %v2547 = vmul.f32 %v2400, %v2543
          %v2548 = vmul.f32 %v2446, %v2544
          %v2549 = vmul.f32 %v2492, %v2545
          %v2550 = vmul.f32 %v2538, %v2546
          %v2551 = vpack.c.bf16 %v2548, %v2547
          %v2552 = vpack.c.bf16 %v2550, %v2549
          %s2553 = scalar_lea.vmem %s1086, 4
          %v2554 = vld [vmem:[%s2553] sm:$0xf]
          %v2556 = vsel %vm1480, %v2551, 0
          %v2559 = vsel %vm1480, %v2552, 0
          %v2562 = vsel %vm1708, %v2554, 0
          %2564 = vmatprep.subr.bf16.mxu0 0
          %2565 = vmatpush1.bf16.msra.mxu0 %v2562
          %2566 = vmatprep.subr.bf16.mxu0 0
          %2567 = vmatpush1.bf16.msra.mxu0 0
          %2568 = vmatprep.subr.bf16.mxu0 0
          %2569 = vmatpush1.bf16.msra.mxu0 0
          %2570 = vmatprep.subr.bf16.mxu0 0
          %2571 = vmatpush1.bf16.msra.mxu0 0
          %2572 = vmatprep.subr.bf16.mxu0 0
          %2573 = vmatpush1.bf16.msra.mxu0 0
          %2574 = vmatprep.subr.bf16.mxu0 0
          %2575 = vmatpush1.bf16.msra.mxu0 0
          %2576 = vmatprep.subr.bf16.mxu0 0
          %2577 = vmatpush1.bf16.msra.mxu0 0
          %2578 = vmatprep.subr.bf16.mxu0 0
          %2579 = vmatpush1.bf16.msra.mxu0 0
          %2580 = vmatprep.subr.bf16.mxu0 0
          %2581 = vmatpush1.bf16.msra.mxu0 0
          %2582 = vmatprep.subr.bf16.mxu0 0
          %2583 = vmatpush1.bf16.msra.mxu0 0
          %2584 = vmatprep.subr.bf16.mxu0 0
          %2585 = vmatpush1.bf16.msra.mxu0 0
          %2586 = vmatprep.subr.bf16.mxu0 0
          %2587 = vmatpush1.bf16.msra.mxu0 0
          %2588 = vmatprep.subr.bf16.mxu0 0
          %2589 = vmatpush1.bf16.msra.mxu0 0
          %2590 = vmatprep.subr.bf16.mxu0 0
          %2591 = vmatpush1.bf16.msra.mxu0 0
          %2592 = vmatprep.subr.bf16.mxu0 0
          %2593 = vmatpush1.bf16.msra.mxu0 0
          %2594 = vmatprep.subr.bf16.mxu0 0
          %2595 = vmatpush1.bf16.msra.mxu0 0
          %2596 = vmatprep.mubr.bf16.mxu0 0
          %2597 = vmatmul.mubr.bf16.gmra.mrb[0].mxu0 %v2556
          %v2598 = vpop.f32.mrb[0].mxu0
          %v2599 = vadd.f32 0.0, %v2598
          %v2600 = vpop.f32.mrb[0].mxu0
          %v2601 = vpop.f32.mrb[0].mxu0
          %v2602 = vadd.f32 0.0, %v2601
          %v2603 = vpop.f32.mrb[0].mxu0
          %2604 = vmatprep.mubr.bf16.mxu0 0
          %2605 = vmatmul.mubr.bf16.gmra.mrb[0].mxu0 %v2559
          %v2606 = vpop.f32.mrb[0].mxu0
          %v2607 = vadd.f32 0.0, %v2606
          %v2608 = vpop.f32.mrb[0].mxu0
          %v2609 = vpop.f32.mrb[0].mxu0
          %v2610 = vadd.f32 0.0, %v2609
          %v2611 = vpop.f32.mrb[0].mxu0
          %2612 = vdwg.mxu0
          %v2614 = vsel %vm1480, %v1898, 0
          %v2617 = vsel %vm1480, %v1899, 0
          %v2620 = vsel %vm1708, %v1900, 0
          %2622 = vmatprep.subr.bf16.mxu0 0
          %2623 = vmatpush1.bf16.msra.mxu0 %v2620
          %2624 = vmatprep.subr.bf16.mxu0 0
          %2625 = vmatpush1.bf16.msra.mxu0 0
          %2626 = vmatprep.subr.bf16.mxu0 0
          %2627 = vmatpush1.bf16.msra.mxu0 0
          %2628 = vmatprep.subr.bf16.mxu0 0
          %2629 = vmatpush1.bf16.msra.mxu0 0
          %2630 = vmatprep.subr.bf16.mxu0 0
          %2631 = vmatpush1.bf16.msra.mxu0 0
          %2632 = vmatprep.subr.bf16.mxu0 0
          %2633 = vmatpush1.bf16.msra.mxu0 0
          %2634 = vmatprep.subr.bf16.mxu0 0
          %2635 = vmatpush1.bf16.msra.mxu0 0
          %2636 = vmatprep.subr.bf16.mxu0 0
          %2637 = vmatpush1.bf16.msra.mxu0 0
          %2638 = vmatprep.subr.bf16.mxu0 0
          %2639 = vmatpush1.bf16.msra.mxu0 0
          %2640 = vmatprep.subr.bf16.mxu0 0
          %2641 = vmatpush1.bf16.msra.mxu0 0
          %2642 = vmatprep.subr.bf16.mxu0 0
          %2643 = vmatpush1.bf16.msra.mxu0 0
          %2644 = vmatprep.subr.bf16.mxu0 0
          %2645 = vmatpush1.bf16.msra.mxu0 0
          %2646 = vmatprep.subr.bf16.mxu0 0
          %2647 = vmatpush1.bf16.msra.mxu0 0
          %2648 = vmatprep.subr.bf16.mxu0 0
          %2649 = vmatpush1.bf16.msra.mxu0 0
          %2650 = vmatprep.subr.bf16.mxu0 0
          %2651 = vmatpush1.bf16.msra.mxu0 0
          %2652 = vmatprep.subr.bf16.mxu0 0
          %2653 = vmatpush1.bf16.msra.mxu0 0
          %2654 = vmatprep.mubr.bf16.mxu0 0
          %2655 = vmatmul.mubr.bf16.gmra.mrb[0].mxu0 %v2614
          %v2656 = vpop.f32.mrb[0].mxu0
          %v2657 = vadd.f32 %v2599, %v2656
          %v2658 = vpop.f32.mrb[0].mxu0
          %v2659 = vpop.f32.mrb[0].mxu0
          %v2660 = vadd.f32 %v2602, %v2659
          %v2661 = vpop.f32.mrb[0].mxu0
          %2662 = vmatprep.mubr.bf16.mxu0 0
          %2663 = vmatmul.mubr.bf16.gmra.mrb[0].mxu0 %v2617
          %v2664 = vpop.f32.mrb[0].mxu0
          %v2665 = vadd.f32 %v2607, %v2664
          %v2666 = vpop.f32.mrb[0].mxu0
          %v2667 = vpop.f32.mrb[0].mxu0
          %v2668 = vadd.f32 %v2610, %v2667
          %v2669 = vpop.f32.mrb[0].mxu0
          %2670 = vdwg.mxu0
          %s2671 = scalar_lea.vmem %s1035, 32
          %v2672 = vld [vmem:[%s2671] sm:$0xf]
          %v2673 = vld [vmem:[%s2671 + $0x4] sm:$0xf]
          %v2674 = vld [vmem:[%s2671 + $0x8] sm:$0xf]
          %v2675 = vld [vmem:[%s2671 + $0xc] sm:$0xf]
          %s2676 = scalar_lea.vmem %s1043, 2
          %v2677 = vld [vmem:[%s2676] sm:$0x1]
          %v2679 = vlaneseq
          %v2680 = vshrl.u32 %v2679, 7
          %v2681 = vsub.s32 0, %v2680
          %v2682 = vrot.slane %v2677, %v2681
          %v2688 = vunpack.c.l.b16 %v2672
          %v2689 = vunpack.c.l.b16 %v2673
          %v2690 = vunpack.c.l.b16 %v2674
          %v2691 = vunpack.c.l.b16 %v2675
          %v2692 = vpack.c.b16 %v2689, %v2688
          %v2693 = vpack.c.b16 %v2691, %v2690
          %2696 = vmatprep.subr.bf16.mxu0 0
          %2697 = vmatpush1.bf16.msra.mxu0 %v2692
          %2698 = vmatprep.subr.bf16.mxu0 0
          %2699 = vmatpush1.bf16.msra.mxu0 %v2693
          %2700 = vmatprep.subr.bf16.mxu0 0
          %2701 = vmatpush1.bf16.msra.mxu0 0
          %2702 = vmatprep.subr.bf16.mxu0 0
          %2703 = vmatpush1.bf16.msra.mxu0 0
          %2704 = vmatprep.subr.bf16.mxu0 0
          %2705 = vmatpush1.bf16.msra.mxu0 0
          %2706 = vmatprep.subr.bf16.mxu0 0
          %2707 = vmatpush1.bf16.msra.mxu0 0
          %2708 = vmatprep.subr.bf16.mxu0 0
          %2709 = vmatpush1.bf16.msra.mxu0 0
          %2710 = vmatprep.subr.bf16.mxu0 0
          %2711 = vmatpush1.bf16.msra.mxu0 0
          %2712 = vmatprep.subr.bf16.mxu0 0
          %2713 = vmatpush1.bf16.msra.mxu0 0
          %2714 = vmatprep.subr.bf16.mxu0 0
          %2715 = vmatpush1.bf16.msra.mxu0 0
          %2716 = vmatprep.subr.bf16.mxu0 0
          %2717 = vmatpush1.bf16.msra.mxu0 0
          %2718 = vmatprep.subr.bf16.mxu0 0
          %2719 = vmatpush1.bf16.msra.mxu0 0
          %2720 = vmatprep.subr.bf16.mxu0 0
          %2721 = vmatpush1.bf16.msra.mxu0 0
          %2722 = vmatprep.subr.bf16.mxu0 0
          %2723 = vmatpush1.bf16.msra.mxu0 0
          %2724 = vmatprep.subr.bf16.mxu0 0
          %2725 = vmatpush1.bf16.msra.mxu0 0
          %2726 = vmatprep.subr.bf16.mxu0 0
          %2727 = vmatpush1.bf16.msra.mxu0 0
          %2728 = vmatprep.mubr.bf16.mxu0 0
          %2729 = vmatmul.mubr.bf16.gmra.mrb[0].mxu0 %v1264
          %v2730 = vpop.f32.mrb[0].mxu0
          %v2731 = vadd.f32 %v2682, %v2730
          %v2732 = vpop.f32.mrb[0].mxu0
          %v2733 = vpop.f32.mrb[0].mxu0
          %v2734 = vadd.f32 %v2682, %v2733
          %v2735 = vpop.f32.mrb[0].mxu0
          %2736 = vmatprep.mubr.bf16.mxu0 0
          %2737 = vmatmul.mubr.bf16.gmra.mrb[0].mxu0 %v1267
          %v2738 = vpop.f32.mrb[0].mxu0
          %v2739 = vadd.f32 %v2682, %v2738
          %v2740 = vpop.f32.mrb[0].mxu0
          %v2741 = vpop.f32.mrb[0].mxu0
          %v2742 = vadd.f32 %v2682, %v2741
          %v2743 = vpop.f32.mrb[0].mxu0
          %2744 = vdwg.mxu0
          %s2745 = scalar_lea.vmem %s1052, 32
          %v2746 = vld [vmem:[%s2745] sm:$0xf]
          %v2747 = vld [vmem:[%s2745 + $0x4] sm:$0xf]
          %v2748 = vld [vmem:[%s2745 + $0x8] sm:$0xf]
          %v2749 = vld [vmem:[%s2745 + $0xc] sm:$0xf]
          %s2750 = scalar_lea.vmem %s1060, 2
          %v2751 = vld [vmem:[%s2750] sm:$0x1]
          %v2753 = vlaneseq
          %v2754 = vshrl.u32 %v2753, 7
          %v2755 = vsub.s32 0, %v2754
          %v2756 = vrot.slane %v2751, %v2755
          %v2762 = vunpack.c.l.b16 %v2746
          %v2763 = vunpack.c.l.b16 %v2747
          %v2764 = vunpack.c.l.b16 %v2748
          %v2765 = vunpack.c.l.b16 %v2749
          %v2766 = vpack.c.b16 %v2763, %v2762
          %v2767 = vpack.c.b16 %v2765, %v2764
          %2770 = vmatprep.subr.bf16.mxu0 0
          %2771 = vmatpush1.bf16.msra.mxu0 %v2766
          %2772 = vmatprep.subr.bf16.mxu0 0
          %2773 = vmatpush1.bf16.msra.mxu0 %v2767
          %2774 = vmatprep.subr.bf16.mxu0 0
          %2775 = vmatpush1.bf16.msra.mxu0 0
          %2776 = vmatprep.subr.bf16.mxu0 0
          %2777 = vmatpush1.bf16.msra.mxu0 0
          %2778 = vmatprep.subr.bf16.mxu0 0
          %2779 = vmatpush1.bf16.msra.mxu0 0
          %2780 = vmatprep.subr.bf16.mxu0 0
          %2781 = vmatpush1.bf16.msra.mxu0 0
          %2782 = vmatprep.subr.bf16.mxu0 0
          %2783 = vmatpush1.bf16.msra.mxu0 0
          %2784 = vmatprep.subr.bf16.mxu0 0
          %2785 = vmatpush1.bf16.msra.mxu0 0
          %2786 = vmatprep.subr.bf16.mxu0 0
          %2787 = vmatpush1.bf16.msra.mxu0 0
          %2788 = vmatprep.subr.bf16.mxu0 0
          %2789 = vmatpush1.bf16.msra.mxu0 0
          %2790 = vmatprep.subr.bf16.mxu0 0
          %2791 = vmatpush1.bf16.msra.mxu0 0
          %2792 = vmatprep.subr.bf16.mxu0 0
          %2793 = vmatpush1.bf16.msra.mxu0 0
          %2794 = vmatprep.subr.bf16.mxu0 0
          %2795 = vmatpush1.bf16.msra.mxu0 0
          %2796 = vmatprep.subr.bf16.mxu0 0
          %2797 = vmatpush1.bf16.msra.mxu0 0
          %2798 = vmatprep.subr.bf16.mxu0 0
          %2799 = vmatpush1.bf16.msra.mxu0 0
          %2800 = vmatprep.subr.bf16.mxu0 0
          %2801 = vmatpush1.bf16.msra.mxu0 0
          %2802 = vmatprep.mubr.bf16.mxu0 0
          %2803 = vmatmul.mubr.bf16.gmra.mrb[0].mxu0 %v1342
          %v2804 = vpop.f32.mrb[0].mxu0
          %v2805 = vadd.f32 %v2756, %v2804
          %v2806 = vpop.f32.mrb[0].mxu0
          %v2807 = vpop.f32.mrb[0].mxu0
          %v2808 = vadd.f32 %v2756, %v2807
          %v2809 = vpop.f32.mrb[0].mxu0
          %2810 = vmatprep.mubr.bf16.mxu0 0
          %2811 = vmatmul.mubr.bf16.gmra.mrb[0].mxu0 %v1345
          %v2812 = vpop.f32.mrb[0].mxu0
          %v2813 = vadd.f32 %v2756, %v2812
          %v2814 = vpop.f32.mrb[0].mxu0
          %v2815 = vpop.f32.mrb[0].mxu0
          %v2816 = vadd.f32 %v2756, %v2815
          %v2817 = vpop.f32.mrb[0].mxu0
          %2818 = vdwg.mxu0
          %s2819 = scalar_lea.vmem %s1069, 32
          %v2820 = vld [vmem:[%s2819] sm:$0xf]
          %v2821 = vld [vmem:[%s2819 + $0x4] sm:$0xf]
          %v2822 = vld [vmem:[%s2819 + $0x8] sm:$0xf]
          %v2823 = vld [vmem:[%s2819 + $0xc] sm:$0xf]
          %s2824 = scalar_lea.vmem %s1077, 2
          %v2825 = vld [vmem:[%s2824] sm:$0x1]
          %v2827 = vlaneseq
          %v2828 = vshrl.u32 %v2827, 7
          %v2829 = vsub.s32 0, %v2828
          %v2830 = vrot.slane %v2825, %v2829
          %v2836 = vunpack.c.l.b16 %v2820
          %v2837 = vunpack.c.l.b16 %v2821
          %v2838 = vunpack.c.l.b16 %v2822
          %v2839 = vunpack.c.l.b16 %v2823
          %v2840 = vpack.c.b16 %v2837, %v2836
          %v2841 = vpack.c.b16 %v2839, %v2838
          %2844 = vmatprep.subr.bf16.mxu0 0
          %2845 = vmatpush1.bf16.msra.mxu0 %v2840
          %2846 = vmatprep.subr.bf16.mxu0 0
          %2847 = vmatpush1.bf16.msra.mxu0 %v2841
          %2848 = vmatprep.subr.bf16.mxu0 0
          %2849 = vmatpush1.bf16.msra.mxu0 0
          %2850 = vmatprep.subr.bf16.mxu0 0
          %2851 = vmatpush1.bf16.msra.mxu0 0
          %2852 = vmatprep.subr.bf16.mxu0 0
          %2853 = vmatpush1.bf16.msra.mxu0 0
          %2854 = vmatprep.subr.bf16.mxu0 0
          %2855 = vmatpush1.bf16.msra.mxu0 0
          %2856 = vmatprep.subr.bf16.mxu0 0
          %2857 = vmatpush1.bf16.msra.mxu0 0
          %2858 = vmatprep.subr.bf16.mxu0 0
          %2859 = vmatpush1.bf16.msra.mxu0 0
          %2860 = vmatprep.subr.bf16.mxu0 0
          %2861 = vmatpush1.bf16.msra.mxu0 0
          %2862 = vmatprep.subr.bf16.mxu0 0
          %2863 = vmatpush1.bf16.msra.mxu0 0
          %2864 = vmatprep.subr.bf16.mxu0 0
          %2865 = vmatpush1.bf16.msra.mxu0 0
          %2866 = vmatprep.subr.bf16.mxu0 0
          %2867 = vmatpush1.bf16.msra.mxu0 0
          %2868 = vmatprep.subr.bf16.mxu0 0
          %2869 = vmatpush1.bf16.msra.mxu0 0
          %2870 = vmatprep.subr.bf16.mxu0 0
          %2871 = vmatpush1.bf16.msra.mxu0 0
          %2872 = vmatprep.subr.bf16.mxu0 0
          %2873 = vmatpush1.bf16.msra.mxu0 0
          %2874 = vmatprep.subr.bf16.mxu0 0
          %2875 = vmatpush1.bf16.msra.mxu0 0
          %2876 = vmatprep.mubr.bf16.mxu0 0
          %2877 = vmatmul.mubr.bf16.gmra.mrb[0].mxu0 %v1342
          %v2878 = vpop.f32.mrb[0].mxu0
          %v2879 = vadd.f32 %v2830, %v2878
          %v2880 = vpop.f32.mrb[0].mxu0
          %v2881 = vpop.f32.mrb[0].mxu0
          %v2882 = vadd.f32 %v2830, %v2881
          %v2883 = vpop.f32.mrb[0].mxu0
          %2884 = vmatprep.mubr.bf16.mxu0 0
          %2885 = vmatmul.mubr.bf16.gmra.mrb[0].mxu0 %v1345
          %v2886 = vpop.f32.mrb[0].mxu0
          %v2887 = vadd.f32 %v2830, %v2886
          %v2888 = vpop.f32.mrb[0].mxu0
          %v2889 = vpop.f32.mrb[0].mxu0
          %v2890 = vadd.f32 %v2830, %v2889
          %v2891 = vpop.f32.mrb[0].mxu0
          %2892 = vdwg.mxu0
          %v2893 = vpack.c.bf16 %v2731, %v2731
          %v2894 = vpack.c.bf16 %v2734, %v2734
          %v2895 = vpack.c.bf16 %v2739, %v2739
          %v2896 = vpack.c.bf16 %v2742, %v2742
          %v2897 = vpack.c.bf16 %v2805, %v2805
          %v2898 = vpack.c.bf16 %v2808, %v2808
          %v2899 = vpack.c.bf16 %v2813, %v2813
          %v2900 = vpack.c.bf16 %v2816, %v2816
          %v2901 = vpack.c.bf16 %v2879, %v2879
          %v2902 = vpack.c.bf16 %v2882, %v2882
          %v2903 = vpack.c.bf16 %v2887, %v2887
          %v2904 = vpack.c.bf16 %v2890, %v2890
          %v2906 = vsel %vm1480, %v2893, 0
          %v2909 = vsel %vm1480, %v2897, 0
          %2911 = vmatprep.subr.bf16.mxu0 0
          %2912 = vmatpush1.bf16.xpose.msra.mxu0 %v2909
          %2913 = vmatprep.subr.bf16.mxu0 0
          %2914 = vmatpush1.bf16.xpose.msra.mxu0 0
          %2915 = vmatprep.subr.bf16.mxu0 0
          %2916 = vmatpush1.bf16.xpose.msra.mxu0 0
          %2917 = vmatprep.subr.bf16.mxu0 0
          %2918 = vmatpush1.bf16.xpose.msra.mxu0 0
          %2919 = vmatprep.subr.bf16.mxu0 0
          %2920 = vmatpush1.bf16.xpose.msra.mxu0 0
          %2921 = vmatprep.subr.bf16.mxu0 0
          %2922 = vmatpush1.bf16.xpose.msra.mxu0 0
          %2923 = vmatprep.subr.bf16.mxu0 0
          %2924 = vmatpush1.bf16.xpose.msra.mxu0 0
          %2925 = vmatprep.subr.bf16.mxu0 0
          %2926 = vmatpush1.bf16.xpose.msra.mxu0 0
          %2927 = vmatprep.subr.bf16.mxu0 0
          %2928 = vmatpush1.bf16.xpose.msra.mxu0 0
          %2929 = vmatprep.subr.bf16.mxu0 0
          %2930 = vmatpush1.bf16.xpose.msra.mxu0 0
          %2931 = vmatprep.subr.bf16.mxu0 0
          %2932 = vmatpush1.bf16.xpose.msra.mxu0 0
          %2933 = vmatprep.subr.bf16.mxu0 0
          %2934 = vmatpush1.bf16.xpose.msra.mxu0 0
          %2935 = vmatprep.subr.bf16.mxu0 0
          %2936 = vmatpush1.bf16.xpose.msra.mxu0 0
          %2937 = vmatprep.subr.bf16.mxu0 0
          %2938 = vmatpush1.bf16.xpose.msra.mxu0 0
          %2939 = vmatprep.subr.bf16.mxu0 0
          %2940 = vmatpush1.bf16.xpose.msra.mxu0 0
          %2941 = vmatprep.subr.bf16.mxu0 0
          %2942 = vmatpush1.bf16.xpose.msra.mxu0 0
          %2943 = vmatprep.mubr.bf16.mxu0 0
          %2944 = vmatmul.mubr.bf16.gmra.mrb[0].mxu0 %v2906
          %v2945 = vpop.f32.mrb[0].mxu0
          %v2946 = vadd.f32 %v1222, %v2945
          %v2947 = vpop.f32.mrb[0].mxu0
          %v2948 = vpop.f32.mrb[0].mxu0
          %v2949 = vpop.f32.mrb[0].mxu0
          %2950 = vdwg.mxu0
          %v2952 = vsel %vm1480, %v2894, 0
          %v2955 = vsel %vm1480, %v2898, 0
          %2957 = vmatprep.subr.bf16.mxu0 0
          %2958 = vmatpush1.bf16.xpose.msra.mxu0 %v2955
          %2959 = vmatprep.subr.bf16.mxu0 0
          %2960 = vmatpush1.bf16.xpose.msra.mxu0 0
          %2961 = vmatprep.subr.bf16.mxu0 0
          %2962 = vmatpush1.bf16.xpose.msra.mxu0 0
          %2963 = vmatprep.subr.bf16.mxu0 0
          %2964 = vmatpush1.bf16.xpose.msra.mxu0 0
          %2965 = vmatprep.subr.bf16.mxu0 0
          %2966 = vmatpush1.bf16.xpose.msra.mxu0 0
          %2967 = vmatprep.subr.bf16.mxu0 0
          %2968 = vmatpush1.bf16.xpose.msra.mxu0 0
          %2969 = vmatprep.subr.bf16.mxu0 0
          %2970 = vmatpush1.bf16.xpose.msra.mxu0 0
          %2971 = vmatprep.subr.bf16.mxu0 0
          %2972 = vmatpush1.bf16.xpose.msra.mxu0 0
          %2973 = vmatprep.subr.bf16.mxu0 0
          %2974 = vmatpush1.bf16.xpose.msra.mxu0 0
          %2975 = vmatprep.subr.bf16.mxu0 0
          %2976 = vmatpush1.bf16.xpose.msra.mxu0 0
          %2977 = vmatprep.subr.bf16.mxu0 0
          %2978 = vmatpush1.bf16.xpose.msra.mxu0 0
          %2979 = vmatprep.subr.bf16.mxu0 0
          %2980 = vmatpush1.bf16.xpose.msra.mxu0 0
          %2981 = vmatprep.subr.bf16.mxu0 0
          %2982 = vmatpush1.bf16.xpose.msra.mxu0 0
          %2983 = vmatprep.subr.bf16.mxu0 0
          %2984 = vmatpush1.bf16.xpose.msra.mxu0 0
          %2985 = vmatprep.subr.bf16.mxu0 0
          %2986 = vmatpush1.bf16.xpose.msra.mxu0 0
          %2987 = vmatprep.subr.bf16.mxu0 0
          %2988 = vmatpush1.bf16.xpose.msra.mxu0 0
          %2989 = vmatprep.mubr.bf16.mxu0 0
          %2990 = vmatmul.mubr.bf16.gmra.mrb[0].mxu0 %v2952
          %v2991 = vpop.f32.mrb[0].mxu0
          %v2992 = vadd.f32 %v1226, %v2991
          %v2993 = vpop.f32.mrb[0].mxu0
          %v2994 = vpop.f32.mrb[0].mxu0
          %v2995 = vpop.f32.mrb[0].mxu0
          %2996 = vdwg.mxu0
          %v2998 = vsel %vm1480, %v2895, 0
          %v3001 = vsel %vm1480, %v2899, 0
          %3003 = vmatprep.subr.bf16.mxu0 0
          %3004 = vmatpush1.bf16.xpose.msra.mxu0 %v3001
          %3005 = vmatprep.subr.bf16.mxu0 0
          %3006 = vmatpush1.bf16.xpose.msra.mxu0 0
          %3007 = vmatprep.subr.bf16.mxu0 0
          %3008 = vmatpush1.bf16.xpose.msra.mxu0 0
          %3009 = vmatprep.subr.bf16.mxu0 0
          %3010 = vmatpush1.bf16.xpose.msra.mxu0 0
          %3011 = vmatprep.subr.bf16.mxu0 0
          %3012 = vmatpush1.bf16.xpose.msra.mxu0 0
          %3013 = vmatprep.subr.bf16.mxu0 0
          %3014 = vmatpush1.bf16.xpose.msra.mxu0 0
          %3015 = vmatprep.subr.bf16.mxu0 0
          %3016 = vmatpush1.bf16.xpose.msra.mxu0 0
          %3017 = vmatprep.subr.bf16.mxu0 0
          %3018 = vmatpush1.bf16.xpose.msra.mxu0 0
          %3019 = vmatprep.subr.bf16.mxu0 0
          %3020 = vmatpush1.bf16.xpose.msra.mxu0 0
          %3021 = vmatprep.subr.bf16.mxu0 0
          %3022 = vmatpush1.bf16.xpose.msra.mxu0 0
          %3023 = vmatprep.subr.bf16.mxu0 0
          %3024 = vmatpush1.bf16.xpose.msra.mxu0 0
          %3025 = vmatprep.subr.bf16.mxu0 0
          %3026 = vmatpush1.bf16.xpose.msra.mxu0 0
          %3027 = vmatprep.subr.bf16.mxu0 0
          %3028 = vmatpush1.bf16.xpose.msra.mxu0 0
          %3029 = vmatprep.subr.bf16.mxu0 0
          %3030 = vmatpush1.bf16.xpose.msra.mxu0 0
          %3031 = vmatprep.subr.bf16.mxu0 0
          %3032 = vmatpush1.bf16.xpose.msra.mxu0 0
          %3033 = vmatprep.subr.bf16.mxu0 0
          %3034 = vmatpush1.bf16.xpose.msra.mxu0 0
          %3035 = vmatprep.mubr.bf16.mxu0 0
          %3036 = vmatmul.mubr.bf16.gmra.mrb[0].mxu0 %v2998
          %v3037 = vpop.f32.mrb[0].mxu0
          %v3038 = vadd.f32 %v1230, %v3037
          %v3039 = vpop.f32.mrb[0].mxu0
          %v3040 = vpop.f32.mrb[0].mxu0
          %v3041 = vpop.f32.mrb[0].mxu0
          %3042 = vdwg.mxu0
          %v3044 = vsel %vm1480, %v2896, 0
          %v3047 = vsel %vm1480, %v2900, 0
          %3049 = vmatprep.subr.bf16.mxu0 0
          %3050 = vmatpush1.bf16.xpose.msra.mxu0 %v3047
          %3051 = vmatprep.subr.bf16.mxu0 0
          %3052 = vmatpush1.bf16.xpose.msra.mxu0 0
          %3053 = vmatprep.subr.bf16.mxu0 0
          %3054 = vmatpush1.bf16.xpose.msra.mxu0 0
          %3055 = vmatprep.subr.bf16.mxu0 0
          %3056 = vmatpush1.bf16.xpose.msra.mxu0 0
          %3057 = vmatprep.subr.bf16.mxu0 0
          %3058 = vmatpush1.bf16.xpose.msra.mxu0 0
          %3059 = vmatprep.subr.bf16.mxu0 0
          %3060 = vmatpush1.bf16.xpose.msra.mxu0 0
          %3061 = vmatprep.subr.bf16.mxu0 0
          %3062 = vmatpush1.bf16.xpose.msra.mxu0 0
          %3063 = vmatprep.subr.bf16.mxu0 0
          %3064 = vmatpush1.bf16.xpose.msra.mxu0 0
          %3065 = vmatprep.subr.bf16.mxu0 0
          %3066 = vmatpush1.bf16.xpose.msra.mxu0 0
          %3067 = vmatprep.subr.bf16.mxu0 0
          %3068 = vmatpush1.bf16.xpose.msra.mxu0 0
          %3069 = vmatprep.subr.bf16.mxu0 0
          %3070 = vmatpush1.bf16.xpose.msra.mxu0 0
          %3071 = vmatprep.subr.bf16.mxu0 0
          %3072 = vmatpush1.bf16.xpose.msra.mxu0 0
          %3073 = vmatprep.subr.bf16.mxu0 0
          %3074 = vmatpush1.bf16.xpose.msra.mxu0 0
          %3075 = vmatprep.subr.bf16.mxu0 0
          %3076 = vmatpush1.bf16.xpose.msra.mxu0 0
          %3077 = vmatprep.subr.bf16.mxu0 0
          %3078 = vmatpush1.bf16.xpose.msra.mxu0 0
          %3079 = vmatprep.subr.bf16.mxu0 0
          %3080 = vmatpush1.bf16.xpose.msra.mxu0 0
          %3081 = vmatprep.mubr.bf16.mxu0 0
          %3082 = vmatmul.mubr.bf16.gmra.mrb[0].mxu0 %v3044
          %v3083 = vpop.f32.mrb[0].mxu0
          %v3084 = vadd.f32 %v1234, %v3083
          %v3085 = vpop.f32.mrb[0].mxu0
          %v3086 = vpop.f32.mrb[0].mxu0
          %v3087 = vpop.f32.mrb[0].mxu0
          %3088 = vdwg.mxu0
          %v3089 = vsel %vm1480, %v2946, -inf
          %3090 = vmax.xlane.f32.xlu0 %v3089
          %v3091 = vpop.xlane.xlu0 %3090
          %v3092 = vsel %vm1480, %v2992, -inf
          %3093 = vmax.xlane.f32.xlu0 %v3092
          %v3094 = vpop.xlane.xlu0 %3093
          %v3095 = vsel %vm1480, %v3038, -inf
          %3096 = vmax.xlane.f32.xlu0 %v3095
          %v3097 = vpop.xlane.xlu0 %3096
          %v3098 = vsel %vm1480, %v3084, -inf
          %3099 = vmax.xlane.f32.xlu0 %v3098
          %v3100 = vpop.xlane.xlu0 %3099
          %v3101 = vsub.f32 %v2946, %v3091
          %v3102 = vsub.f32 %v2992, %v3094
          %v3103 = vsub.f32 %v3038, %v3097
          %v3104 = vsub.f32 %v3084, %v3100
          %v3105 = vmul.f32 %v3101, 1.442695
          %v3106 = vpow.pop %v3105
          %v3107 = vmul.f32 %v3102, 1.442695
          %v3108 = vpow.pop %v3107
          %v3109 = vmul.f32 %v3103, 1.442695
          %v3110 = vpow.pop %v3109
          %v3111 = vmul.f32 %v3104, 1.442695
          %v3112 = vpow.pop %v3111
          %v3113 = vsel %vm1480, %v3106, 0.0
          %3114 = vadd.xlane.f32.xlu0 %v3113
          %v3115 = vpop.xlane.xlu0 %3114
          %v3116 = vsel %vm1480, %v3108, 0.0
          %3117 = vadd.xlane.f32.xlu0 %v3116
          %v3118 = vpop.xlane.xlu0 %3117
          %v3119 = vsel %vm1480, %v3110, 0.0
          %3120 = vadd.xlane.f32.xlu0 %v3119
          %v3121 = vpop.xlane.xlu0 %3120
          %v3122 = vsel %vm1480, %v3112, 0.0
          %3123 = vadd.xlane.f32.xlu0 %v3122
          %v3124 = vpop.xlane.xlu0 %3123
          %v3125 = vpack.c.bf16 %v3106, %v3106
          %v3126 = vpack.c.bf16 %v3108, %v3108
          %v3127 = vpack.c.bf16 %v3110, %v3110
          %v3128 = vpack.c.bf16 %v3112, %v3112
          %v3130 = vsel %vm1480, %v3125, 0
          %v3133 = vsel %vm1708, %v2901, 0
          %3135 = vmatprep.subr.bf16.mxu0 0
          %3136 = vmatpush1.bf16.msra.mxu0 %v3133
          %3137 = vmatprep.subr.bf16.mxu0 0
          %3138 = vmatpush1.bf16.msra.mxu0 0
          %3139 = vmatprep.subr.bf16.mxu0 0
          %3140 = vmatpush1.bf16.msra.mxu0 0
          %3141 = vmatprep.subr.bf16.mxu0 0
          %3142 = vmatpush1.bf16.msra.mxu0 0
          %3143 = vmatprep.subr.bf16.mxu0 0
          %3144 = vmatpush1.bf16.msra.mxu0 0
          %3145 = vmatprep.subr.bf16.mxu0 0
          %3146 = vmatpush1.bf16.msra.mxu0 0
          %3147 = vmatprep.subr.bf16.mxu0 0
          %3148 = vmatpush1.bf16.msra.mxu0 0
          %3149 = vmatprep.subr.bf16.mxu0 0
          %3150 = vmatpush1.bf16.msra.mxu0 0
          %3151 = vmatprep.subr.bf16.mxu0 0
          %3152 = vmatpush1.bf16.msra.mxu0 0
          %3153 = vmatprep.subr.bf16.mxu0 0
          %3154 = vmatpush1.bf16.msra.mxu0 0
          %3155 = vmatprep.subr.bf16.mxu0 0
          %3156 = vmatpush1.bf16.msra.mxu0 0
          %3157 = vmatprep.subr.bf16.mxu0 0
          %3158 = vmatpush1.bf16.msra.mxu0 0
          %3159 = vmatprep.subr.bf16.mxu0 0
          %3160 = vmatpush1.bf16.msra.mxu0 0
          %3161 = vmatprep.subr.bf16.mxu0 0
          %3162 = vmatpush1.bf16.msra.mxu0 0
          %3163 = vmatprep.subr.bf16.mxu0 0
          %3164 = vmatpush1.bf16.msra.mxu0 0
          %3165 = vmatprep.subr.bf16.mxu0 0
          %3166 = vmatpush1.bf16.msra.mxu0 0
          %3167 = vmatprep.mubr.bf16.mxu0 0
          %3168 = vmatmul.mubr.bf16.gmra.mrb[0].mxu0 %v3130
          %v3169 = vpop.f32.mrb[0].mxu0
          %v3170 = vadd.f32 0.0, %v3169
          %v3171 = vpop.f32.mrb[0].mxu0
          %v3172 = vpop.f32.mrb[0].mxu0
          %v3173 = vpop.f32.mrb[0].mxu0
          %3174 = vdwg.mxu0
          %v3176 = vsel %vm1480, %v3126, 0
          %v3179 = vsel %vm1708, %v2902, 0
          %3181 = vmatprep.subr.bf16.mxu0 0
          %3182 = vmatpush1.bf16.msra.mxu0 %v3179
          %3183 = vmatprep.subr.bf16.mxu0 0
          %3184 = vmatpush1.bf16.msra.mxu0 0
          %3185 = vmatprep.subr.bf16.mxu0 0
          %3186 = vmatpush1.bf16.msra.mxu0 0
          %3187 = vmatprep.subr.bf16.mxu0 0
          %3188 = vmatpush1.bf16.msra.mxu0 0
          %3189 = vmatprep.subr.bf16.mxu0 0
          %3190 = vmatpush1.bf16.msra.mxu0 0
          %3191 = vmatprep.subr.bf16.mxu0 0
          %3192 = vmatpush1.bf16.msra.mxu0 0
          %3193 = vmatprep.subr.bf16.mxu0 0
          %3194 = vmatpush1.bf16.msra.mxu0 0
          %3195 = vmatprep.subr.bf16.mxu0 0
          %3196 = vmatpush1.bf16.msra.mxu0 0
          %3197 = vmatprep.subr.bf16.mxu0 0
          %3198 = vmatpush1.bf16.msra.mxu0 0
          %3199 = vmatprep.subr.bf16.mxu0 0
          %3200 = vmatpush1.bf16.msra.mxu0 0
          %3201 = vmatprep.subr.bf16.mxu0 0
          %3202 = vmatpush1.bf16.msra.mxu0 0
          %3203 = vmatprep.subr.bf16.mxu0 0
          %3204 = vmatpush1.bf16.msra.mxu0 0
          %3205 = vmatprep.subr.bf16.mxu0 0
          %3206 = vmatpush1.bf16.msra.mxu0 0
          %3207 = vmatprep.subr.bf16.mxu0 0
          %3208 = vmatpush1.bf16.msra.mxu0 0
          %3209 = vmatprep.subr.bf16.mxu0 0
          %3210 = vmatpush1.bf16.msra.mxu0 0
          %3211 = vmatprep.subr.bf16.mxu0 0
          %3212 = vmatpush1.bf16.msra.mxu0 0
          %3213 = vmatprep.mubr.bf16.mxu0 0
          %3214 = vmatmul.mubr.bf16.gmra.mrb[0].mxu0 %v3176
          %v3215 = vpop.f32.mrb[0].mxu0
          %v3216 = vadd.f32 0.0, %v3215
          %v3217 = vpop.f32.mrb[0].mxu0
          %v3218 = vpop.f32.mrb[0].mxu0
          %v3219 = vpop.f32.mrb[0].mxu0
          %3220 = vdwg.mxu0
          %v3222 = vsel %vm1480, %v3127, 0
          %v3225 = vsel %vm1708, %v2903, 0
          %3227 = vmatprep.subr.bf16.mxu0 0
          %3228 = vmatpush1.bf16.msra.mxu0 %v3225
          %3229 = vmatprep.subr.bf16.mxu0 0
          %3230 = vmatpush1.bf16.msra.mxu0 0
          %3231 = vmatprep.subr.bf16.mxu0 0
          %3232 = vmatpush1.bf16.msra.mxu0 0
          %3233 = vmatprep.subr.bf16.mxu0 0
          %3234 = vmatpush1.bf16.msra.mxu0 0
          %3235 = vmatprep.subr.bf16.mxu0 0
          %3236 = vmatpush1.bf16.msra.mxu0 0
          %3237 = vmatprep.subr.bf16.mxu0 0
          %3238 = vmatpush1.bf16.msra.mxu0 0
          %3239 = vmatprep.subr.bf16.mxu0 0
          %3240 = vmatpush1.bf16.msra.mxu0 0
          %3241 = vmatprep.subr.bf16.mxu0 0
          %3242 = vmatpush1.bf16.msra.mxu0 0
          %3243 = vmatprep.subr.bf16.mxu0 0
          %3244 = vmatpush1.bf16.msra.mxu0 0
          %3245 = vmatprep.subr.bf16.mxu0 0
          %3246 = vmatpush1.bf16.msra.mxu0 0
          %3247 = vmatprep.subr.bf16.mxu0 0
          %3248 = vmatpush1.bf16.msra.mxu0 0
          %3249 = vmatprep.subr.bf16.mxu0 0
          %3250 = vmatpush1.bf16.msra.mxu0 0
          %3251 = vmatprep.subr.bf16.mxu0 0
          %3252 = vmatpush1.bf16.msra.mxu0 0
          %3253 = vmatprep.subr.bf16.mxu0 0
          %3254 = vmatpush1.bf16.msra.mxu0 0
          %3255 = vmatprep.subr.bf16.mxu0 0
          %3256 = vmatpush1.bf16.msra.mxu0 0
          %3257 = vmatprep.subr.bf16.mxu0 0
          %3258 = vmatpush1.bf16.msra.mxu0 0
          %3259 = vmatprep.mubr.bf16.mxu0 0
          %3260 = vmatmul.mubr.bf16.gmra.mrb[0].mxu0 %v3222
          %v3261 = vpop.f32.mrb[0].mxu0
          %v3262 = vadd.f32 0.0, %v3261
          %v3263 = vpop.f32.mrb[0].mxu0
          %v3264 = vpop.f32.mrb[0].mxu0
          %v3265 = vpop.f32.mrb[0].mxu0
          %3266 = vdwg.mxu0
          %v3268 = vsel %vm1480, %v3128, 0
          %v3271 = vsel %vm1708, %v2904, 0
          %3273 = vmatprep.subr.bf16.mxu0 0
          %3274 = vmatpush1.bf16.msra.mxu0 %v3271
          %3275 = vmatprep.subr.bf16.mxu0 0
          %3276 = vmatpush1.bf16.msra.mxu0 0
          %3277 = vmatprep.subr.bf16.mxu0 0
          %3278 = vmatpush1.bf16.msra.mxu0 0
          %3279 = vmatprep.subr.bf16.mxu0 0
          %3280 = vmatpush1.bf16.msra.mxu0 0
          %3281 = vmatprep.subr.bf16.mxu0 0
          %3282 = vmatpush1.bf16.msra.mxu0 0
          %3283 = vmatprep.subr.bf16.mxu0 0
          %3284 = vmatpush1.bf16.msra.mxu0 0
          %3285 = vmatprep.subr.bf16.mxu0 0
          %3286 = vmatpush1.bf16.msra.mxu0 0
          %3287 = vmatprep.subr.bf16.mxu0 0
          %3288 = vmatpush1.bf16.msra.mxu0 0
          %3289 = vmatprep.subr.bf16.mxu0 0
          %3290 = vmatpush1.bf16.msra.mxu0 0
          %3291 = vmatprep.subr.bf16.mxu0 0
          %3292 = vmatpush1.bf16.msra.mxu0 0
          %3293 = vmatprep.subr.bf16.mxu0 0
          %3294 = vmatpush1.bf16.msra.mxu0 0
          %3295 = vmatprep.subr.bf16.mxu0 0
          %3296 = vmatpush1.bf16.msra.mxu0 0
          %3297 = vmatprep.subr.bf16.mxu0 0
          %3298 = vmatpush1.bf16.msra.mxu0 0
          %3299 = vmatprep.subr.bf16.mxu0 0
          %3300 = vmatpush1.bf16.msra.mxu0 0
          %3301 = vmatprep.subr.bf16.mxu0 0
          %3302 = vmatpush1.bf16.msra.mxu0 0
          %3303 = vmatprep.subr.bf16.mxu0 0
          %3304 = vmatpush1.bf16.msra.mxu0 0
          %3305 = vmatprep.mubr.bf16.mxu0 0
          %3306 = vmatmul.mubr.bf16.gmra.mrb[0].mxu0 %v3268
          %v3307 = vpop.f32.mrb[0].mxu0
          %v3308 = vadd.f32 0.0, %v3307
          %v3309 = vpop.f32.mrb[0].mxu0
          %v3310 = vpop.f32.mrb[0].mxu0
          %v3311 = vpop.f32.mrb[0].mxu0
          %3312 = vdwg.mxu0
          %v3313 = vrcp.pop %v3115
          %v3314 = vrcp.pop %v3118
          %v3315 = vrcp.pop %v3121
          %v3316 = vrcp.pop %v3124
          %v3317 = vmul.f32 %v3170, %v3313
          %v3318 = vmul.f32 %v3216, %v3314
          %v3319 = vmul.f32 %v3262, %v3315
          %v3320 = vmul.f32 %v3308, %v3316
          %v3321 = vpack.c.bf16 %v3318, %v3317
          %v3322 = vpack.c.bf16 %v3320, %v3319
          %s3323 = scalar_lea.vmem %s1086, 8
          %v3324 = vld [vmem:[%s3323] sm:$0xf]
          %v3326 = vsel %vm1480, %v3321, 0
          %v3329 = vsel %vm1480, %v3322, 0
          %v3332 = vsel %vm1708, %v3324, 0
          %3334 = vmatprep.subr.bf16.mxu0 0
          %3335 = vmatpush1.bf16.msra.mxu0 %v3332
          %3336 = vmatprep.subr.bf16.mxu0 0
          %3337 = vmatpush1.bf16.msra.mxu0 0
          %3338 = vmatprep.subr.bf16.mxu0 0
          %3339 = vmatpush1.bf16.msra.mxu0 0
          %3340 = vmatprep.subr.bf16.mxu0 0
          %3341 = vmatpush1.bf16.msra.mxu0 0
          %3342 = vmatprep.subr.bf16.mxu0 0
          %3343 = vmatpush1.bf16.msra.mxu0 0
          %3344 = vmatprep.subr.bf16.mxu0 0
          %3345 = vmatpush1.bf16.msra.mxu0 0
          %3346 = vmatprep.subr.bf16.mxu0 0
          %3347 = vmatpush1.bf16.msra.mxu0 0
          %3348 = vmatprep.subr.bf16.mxu0 0
          %3349 = vmatpush1.bf16.msra.mxu0 0
          %3350 = vmatprep.subr.bf16.mxu0 0
          %3351 = vmatpush1.bf16.msra.mxu0 0
          %3352 = vmatprep.subr.bf16.mxu0 0
          %3353 = vmatpush1.bf16.msra.mxu0 0
          %3354 = vmatprep.subr.bf16.mxu0 0
          %3355 = vmatpush1.bf16.msra.mxu0 0
          %3356 = vmatprep.subr.bf16.mxu0 0
          %3357 = vmatpush1.bf16.msra.mxu0 0
          %3358 = vmatprep.subr.bf16.mxu0 0
          %3359 = vmatpush1.bf16.msra.mxu0 0
          %3360 = vmatprep.subr.bf16.mxu0 0
          %3361 = vmatpush1.bf16.msra.mxu0 0
          %3362 = vmatprep.subr.bf16.mxu0 0
          %3363 = vmatpush1.bf16.msra.mxu0 0
          %3364 = vmatprep.subr.bf16.mxu0 0
          %3365 = vmatpush1.bf16.msra.mxu0 0
          %3366 = vmatprep.mubr.bf16.mxu0 0
          %3367 = vmatmul.mubr.bf16.gmra.mrb[0].mxu0 %v3326
          %v3368 = vpop.f32.mrb[0].mxu0
          %v3369 = vadd.f32 0.0, %v3368
          %v3370 = vpop.f32.mrb[0].mxu0
          %v3371 = vpop.f32.mrb[0].mxu0
          %v3372 = vadd.f32 0.0, %v3371
          %v3373 = vpop.f32.mrb[0].mxu0
          %3374 = vmatprep.mubr.bf16.mxu0 0
          %3375 = vmatmul.mubr.bf16.gmra.mrb[0].mxu0 %v3329
          %v3376 = vpop.f32.mrb[0].mxu0
          %v3377 = vadd.f32 0.0, %v3376
          %v3378 = vpop.f32.mrb[0].mxu0
          %v3379 = vpop.f32.mrb[0].mxu0
          %v3380 = vadd.f32 0.0, %v3379
          %v3381 = vpop.f32.mrb[0].mxu0
          %3382 = vdwg.mxu0
          %v3383 = vadd.f32 %v2657, %v3369
          %v3384 = vadd.f32 %v2660, %v3372
          %v3385 = vadd.f32 %v2665, %v3377
          %v3386 = vadd.f32 %v2668, %v3380
          %s3387 = scalar_lea.vmem %s1035, 48
          %v3388 = vld [vmem:[%s3387] sm:$0xf]
          %v3389 = vld [vmem:[%s3387 + $0x4] sm:$0xf]
          %v3390 = vld [vmem:[%s3387 + $0x8] sm:$0xf]
          %v3391 = vld [vmem:[%s3387 + $0xc] sm:$0xf]
          %s3392 = scalar_lea.vmem %s1043, 3
          %v3393 = vld [vmem:[%s3392] sm:$0x1]
          %v3395 = vlaneseq
          %v3396 = vshrl.u32 %v3395, 7
          %v3397 = vsub.s32 0, %v3396
          %v3398 = vrot.slane %v3393, %v3397
          %v3404 = vunpack.c.l.b16 %v3388
          %v3405 = vunpack.c.l.b16 %v3389
          %v3406 = vunpack.c.l.b16 %v3390
          %v3407 = vunpack.c.l.b16 %v3391
          %v3408 = vpack.c.b16 %v3405, %v3404
          %v3409 = vpack.c.b16 %v3407, %v3406
          %3412 = vmatprep.subr.bf16.mxu0 0
          %3413 = vmatpush1.bf16.msra.mxu0 %v3408
          %3414 = vmatprep.subr.bf16.mxu0 0
          %3415 = vmatpush1.bf16.msra.mxu0 %v3409
          %3416 = vmatprep.subr.bf16.mxu0 0
          %3417 = vmatpush1.bf16.msra.mxu0 0
          %3418 = vmatprep.subr.bf16.mxu0 0
          %3419 = vmatpush1.bf16.msra.mxu0 0
          %3420 = vmatprep.subr.bf16.mxu0 0
          %3421 = vmatpush1.bf16.msra.mxu0 0
          %3422 = vmatprep.subr.bf16.mxu0 0
          %3423 = vmatpush1.bf16.msra.mxu0 0
          %3424 = vmatprep.subr.bf16.mxu0 0
          %3425 = vmatpush1.bf16.msra.mxu0 0
          %3426 = vmatprep.subr.bf16.mxu0 0
          %3427 = vmatpush1.bf16.msra.mxu0 0
          %3428 = vmatprep.subr.bf16.mxu0 0
          %3429 = vmatpush1.bf16.msra.mxu0 0
          %3430 = vmatprep.subr.bf16.mxu0 0
          %3431 = vmatpush1.bf16.msra.mxu0 0
          %3432 = vmatprep.subr.bf16.mxu0 0
          %3433 = vmatpush1.bf16.msra.mxu0 0
          %3434 = vmatprep.subr.bf16.mxu0 0
          %3435 = vmatpush1.bf16.msra.mxu0 0
          %3436 = vmatprep.subr.bf16.mxu0 0
          %3437 = vmatpush1.bf16.msra.mxu0 0
          %3438 = vmatprep.subr.bf16.mxu0 0
          %3439 = vmatpush1.bf16.msra.mxu0 0
          %3440 = vmatprep.subr.bf16.mxu0 0
          %3441 = vmatpush1.bf16.msra.mxu0 0
          %3442 = vmatprep.subr.bf16.mxu0 0
          %3443 = vmatpush1.bf16.msra.mxu0 0
          %3444 = vmatprep.mubr.bf16.mxu0 0
          %3445 = vmatmul.mubr.bf16.gmra.mrb[0].mxu0 %v1264
          %v3446 = vpop.f32.mrb[0].mxu0
          %v3447 = vadd.f32 %v3398, %v3446
          %v3448 = vpop.f32.mrb[0].mxu0
          %v3449 = vpop.f32.mrb[0].mxu0
          %v3450 = vadd.f32 %v3398, %v3449
          %v3451 = vpop.f32.mrb[0].mxu0
          %3452 = vmatprep.mubr.bf16.mxu0 0
          %3453 = vmatmul.mubr.bf16.gmra.mrb[0].mxu0 %v1267
          %v3454 = vpop.f32.mrb[0].mxu0
          %v3455 = vadd.f32 %v3398, %v3454
          %v3456 = vpop.f32.mrb[0].mxu0
          %v3457 = vpop.f32.mrb[0].mxu0
          %v3458 = vadd.f32 %v3398, %v3457
          %v3459 = vpop.f32.mrb[0].mxu0
          %3460 = vdwg.mxu0
          %s3461 = scalar_lea.vmem %s1052, 48
          %v3462 = vld [vmem:[%s3461] sm:$0xf]
          %v3463 = vld [vmem:[%s3461 + $0x4] sm:$0xf]
          %v3464 = vld [vmem:[%s3461 + $0x8] sm:$0xf]
          %v3465 = vld [vmem:[%s3461 + $0xc] sm:$0xf]
          %s3466 = scalar_lea.vmem %s1060, 3
          %v3467 = vld [vmem:[%s3466] sm:$0x1]
          %v3469 = vlaneseq
          %v3470 = vshrl.u32 %v3469, 7
          %v3471 = vsub.s32 0, %v3470
          %v3472 = vrot.slane %v3467, %v3471
          %v3478 = vunpack.c.l.b16 %v3462
          %v3479 = vunpack.c.l.b16 %v3463
          %v3480 = vunpack.c.l.b16 %v3464
          %v3481 = vunpack.c.l.b16 %v3465
          %v3482 = vpack.c.b16 %v3479, %v3478
          %v3483 = vpack.c.b16 %v3481, %v3480
          %3486 = vmatprep.subr.bf16.mxu0 0
          %3487 = vmatpush1.bf16.msra.mxu0 %v3482
          %3488 = vmatprep.subr.bf16.mxu0 0
          %3489 = vmatpush1.bf16.msra.mxu0 %v3483
          %3490 = vmatprep.subr.bf16.mxu0 0
          %3491 = vmatpush1.bf16.msra.mxu0 0
          %3492 = vmatprep.subr.bf16.mxu0 0
          %3493 = vmatpush1.bf16.msra.mxu0 0
          %3494 = vmatprep.subr.bf16.mxu0 0
          %3495 = vmatpush1.bf16.msra.mxu0 0
          %3496 = vmatprep.subr.bf16.mxu0 0
          %3497 = vmatpush1.bf16.msra.mxu0 0
          %3498 = vmatprep.subr.bf16.mxu0 0
          %3499 = vmatpush1.bf16.msra.mxu0 0
          %3500 = vmatprep.subr.bf16.mxu0 0
          %3501 = vmatpush1.bf16.msra.mxu0 0
          %3502 = vmatprep.subr.bf16.mxu0 0
          %3503 = vmatpush1.bf16.msra.mxu0 0
          %3504 = vmatprep.subr.bf16.mxu0 0
          %3505 = vmatpush1.bf16.msra.mxu0 0
          %3506 = vmatprep.subr.bf16.mxu0 0
          %3507 = vmatpush1.bf16.msra.mxu0 0
          %3508 = vmatprep.subr.bf16.mxu0 0
          %3509 = vmatpush1.bf16.msra.mxu0 0
          %3510 = vmatprep.subr.bf16.mxu0 0
          %3511 = vmatpush1.bf16.msra.mxu0 0
          %3512 = vmatprep.subr.bf16.mxu0 0
          %3513 = vmatpush1.bf16.msra.mxu0 0
          %3514 = vmatprep.subr.bf16.mxu0 0
          %3515 = vmatpush1.bf16.msra.mxu0 0
          %3516 = vmatprep.subr.bf16.mxu0 0
          %3517 = vmatpush1.bf16.msra.mxu0 0
          %3518 = vmatprep.mubr.bf16.mxu0 0
          %3519 = vmatmul.mubr.bf16.gmra.mrb[0].mxu0 %v1342
          %v3520 = vpop.f32.mrb[0].mxu0
          %v3521 = vadd.f32 %v3472, %v3520
          %v3522 = vpop.f32.mrb[0].mxu0
          %v3523 = vpop.f32.mrb[0].mxu0
          %v3524 = vadd.f32 %v3472, %v3523
          %v3525 = vpop.f32.mrb[0].mxu0
          %3526 = vmatprep.mubr.bf16.mxu0 0
          %3527 = vmatmul.mubr.bf16.gmra.mrb[0].mxu0 %v1345
          %v3528 = vpop.f32.mrb[0].mxu0
          %v3529 = vadd.f32 %v3472, %v3528
          %v3530 = vpop.f32.mrb[0].mxu0
          %v3531 = vpop.f32.mrb[0].mxu0
          %v3532 = vadd.f32 %v3472, %v3531
          %v3533 = vpop.f32.mrb[0].mxu0
          %3534 = vdwg.mxu0
          %s3535 = scalar_lea.vmem %s1069, 48
          %v3536 = vld [vmem:[%s3535] sm:$0xf]
          %v3537 = vld [vmem:[%s3535 + $0x4] sm:$0xf]
          %v3538 = vld [vmem:[%s3535 + $0x8] sm:$0xf]
          %v3539 = vld [vmem:[%s3535 + $0xc] sm:$0xf]
          %s3540 = scalar_lea.vmem %s1077, 3
          %v3541 = vld [vmem:[%s3540] sm:$0x1]
          %v3543 = vlaneseq
          %v3544 = vshrl.u32 %v3543, 7
          %v3545 = vsub.s32 0, %v3544
          %v3546 = vrot.slane %v3541, %v3545
          %v3552 = vunpack.c.l.b16 %v3536
          %v3553 = vunpack.c.l.b16 %v3537
          %v3554 = vunpack.c.l.b16 %v3538
          %v3555 = vunpack.c.l.b16 %v3539
          %v3556 = vpack.c.b16 %v3553, %v3552
          %v3557 = vpack.c.b16 %v3555, %v3554
          %3560 = vmatprep.subr.bf16.mxu0 0
          %3561 = vmatpush1.bf16.msra.mxu0 %v3556
          %3562 = vmatprep.subr.bf16.mxu0 0
          %3563 = vmatpush1.bf16.msra.mxu0 %v3557
          %3564 = vmatprep.subr.bf16.mxu0 0
          %3565 = vmatpush1.bf16.msra.mxu0 0
          %3566 = vmatprep.subr.bf16.mxu0 0
          %3567 = vmatpush1.bf16.msra.mxu0 0
          %3568 = vmatprep.subr.bf16.mxu0 0
          %3569 = vmatpush1.bf16.msra.mxu0 0
          %3570 = vmatprep.subr.bf16.mxu0 0
          %3571 = vmatpush1.bf16.msra.mxu0 0
          %3572 = vmatprep.subr.bf16.mxu0 0
          %3573 = vmatpush1.bf16.msra.mxu0 0
          %3574 = vmatprep.subr.bf16.mxu0 0
          %3575 = vmatpush1.bf16.msra.mxu0 0
          %3576 = vmatprep.subr.bf16.mxu0 0
          %3577 = vmatpush1.bf16.msra.mxu0 0
          %3578 = vmatprep.subr.bf16.mxu0 0
          %3579 = vmatpush1.bf16.msra.mxu0 0
          %3580 = vmatprep.subr.bf16.mxu0 0
          %3581 = vmatpush1.bf16.msra.mxu0 0
          %3582 = vmatprep.subr.bf16.mxu0 0
          %3583 = vmatpush1.bf16.msra.mxu0 0
          %3584 = vmatprep.subr.bf16.mxu0 0
          %3585 = vmatpush1.bf16.msra.mxu0 0
          %3586 = vmatprep.subr.bf16.mxu0 0
          %3587 = vmatpush1.bf16.msra.mxu0 0
          %3588 = vmatprep.subr.bf16.mxu0 0
          %3589 = vmatpush1.bf16.msra.mxu0 0
          %3590 = vmatprep.subr.bf16.mxu0 0
          %3591 = vmatpush1.bf16.msra.mxu0 0
          %3592 = vmatprep.mubr.bf16.mxu0 0
          %3593 = vmatmul.mubr.bf16.gmra.mrb[0].mxu0 %v1342
          %v3594 = vpop.f32.mrb[0].mxu0
          %v3595 = vadd.f32 %v3546, %v3594
          %v3596 = vpop.f32.mrb[0].mxu0
          %v3597 = vpop.f32.mrb[0].mxu0
          %v3598 = vadd.f32 %v3546, %v3597
          %v3599 = vpop.f32.mrb[0].mxu0
          %3600 = vmatprep.mubr.bf16.mxu0 0
          %3601 = vmatmul.mubr.bf16.gmra.mrb[0].mxu0 %v1345
          %v3602 = vpop.f32.mrb[0].mxu0
          %v3603 = vadd.f32 %v3546, %v3602
          %v3604 = vpop.f32.mrb[0].mxu0
          %v3605 = vpop.f32.mrb[0].mxu0
          %v3606 = vadd.f32 %v3546, %v3605
          %v3607 = vpop.f32.mrb[0].mxu0
          %3608 = vdwg.mxu0
          %v3609 = vpack.c.bf16 %v3447, %v3447
          %v3610 = vpack.c.bf16 %v3450, %v3450
          %v3611 = vpack.c.bf16 %v3455, %v3455
          %v3612 = vpack.c.bf16 %v3458, %v3458
          %v3613 = vpack.c.bf16 %v3521, %v3521
          %v3614 = vpack.c.bf16 %v3524, %v3524
          %v3615 = vpack.c.bf16 %v3529, %v3529
          %v3616 = vpack.c.bf16 %v3532, %v3532
          %v3617 = vpack.c.bf16 %v3595, %v3595
          %v3618 = vpack.c.bf16 %v3598, %v3598
          %v3619 = vpack.c.bf16 %v3603, %v3603
          %v3620 = vpack.c.bf16 %v3606, %v3606
          %v3622 = vsel %vm1480, %v3609, 0
          %v3625 = vsel %vm1480, %v3613, 0
          %3627 = vmatprep.subr.bf16.mxu0 0
          %3628 = vmatpush1.bf16.xpose.msra.mxu0 %v3625
          %3629 = vmatprep.subr.bf16.mxu0 0
          %3630 = vmatpush1.bf16.xpose.msra.mxu0 0
          %3631 = vmatprep.subr.bf16.mxu0 0
          %3632 = vmatpush1.bf16.xpose.msra.mxu0 0
          %3633 = vmatprep.subr.bf16.mxu0 0
          %3634 = vmatpush1.bf16.xpose.msra.mxu0 0
          %3635 = vmatprep.subr.bf16.mxu0 0
          %3636 = vmatpush1.bf16.xpose.msra.mxu0 0
          %3637 = vmatprep.subr.bf16.mxu0 0
          %3638 = vmatpush1.bf16.xpose.msra.mxu0 0
          %3639 = vmatprep.subr.bf16.mxu0 0
          %3640 = vmatpush1.bf16.xpose.msra.mxu0 0
          %3641 = vmatprep.subr.bf16.mxu0 0
          %3642 = vmatpush1.bf16.xpose.msra.mxu0 0
          %3643 = vmatprep.subr.bf16.mxu0 0
          %3644 = vmatpush1.bf16.xpose.msra.mxu0 0
          %3645 = vmatprep.subr.bf16.mxu0 0
          %3646 = vmatpush1.bf16.xpose.msra.mxu0 0
          %3647 = vmatprep.subr.bf16.mxu0 0
          %3648 = vmatpush1.bf16.xpose.msra.mxu0 0
          %3649 = vmatprep.subr.bf16.mxu0 0
          %3650 = vmatpush1.bf16.xpose.msra.mxu0 0
          %3651 = vmatprep.subr.bf16.mxu0 0
          %3652 = vmatpush1.bf16.xpose.msra.mxu0 0
          %3653 = vmatprep.subr.bf16.mxu0 0
          %3654 = vmatpush1.bf16.xpose.msra.mxu0 0
          %3655 = vmatprep.subr.bf16.mxu0 0
          %3656 = vmatpush1.bf16.xpose.msra.mxu0 0
          %3657 = vmatprep.subr.bf16.mxu0 0
          %3658 = vmatpush1.bf16.xpose.msra.mxu0 0
          %3659 = vmatprep.mubr.bf16.mxu0 0
          %3660 = vmatmul.mubr.bf16.gmra.mrb[0].mxu0 %v3622
          %v3661 = vpop.f32.mrb[0].mxu0
          %v3662 = vadd.f32 %v1222, %v3661
          %v3663 = vpop.f32.mrb[0].mxu0
          %v3664 = vpop.f32.mrb[0].mxu0
          %v3665 = vpop.f32.mrb[0].mxu0
          %3666 = vdwg.mxu0
          %v3668 = vsel %vm1480, %v3610, 0
          %v3671 = vsel %vm1480, %v3614, 0
          %3673 = vmatprep.subr.bf16.mxu0 0
          %3674 = vmatpush1.bf16.xpose.msra.mxu0 %v3671
          %3675 = vmatprep.subr.bf16.mxu0 0
          %3676 = vmatpush1.bf16.xpose.msra.mxu0 0
          %3677 = vmatprep.subr.bf16.mxu0 0
          %3678 = vmatpush1.bf16.xpose.msra.mxu0 0
          %3679 = vmatprep.subr.bf16.mxu0 0
          %3680 = vmatpush1.bf16.xpose.msra.mxu0 0
          %3681 = vmatprep.subr.bf16.mxu0 0
          %3682 = vmatpush1.bf16.xpose.msra.mxu0 0
          %3683 = vmatprep.subr.bf16.mxu0 0
          %3684 = vmatpush1.bf16.xpose.msra.mxu0 0
          %3685 = vmatprep.subr.bf16.mxu0 0
          %3686 = vmatpush1.bf16.xpose.msra.mxu0 0
          %3687 = vmatprep.subr.bf16.mxu0 0
          %3688 = vmatpush1.bf16.xpose.msra.mxu0 0
          %3689 = vmatprep.subr.bf16.mxu0 0
          %3690 = vmatpush1.bf16.xpose.msra.mxu0 0
          %3691 = vmatprep.subr.bf16.mxu0 0
          %3692 = vmatpush1.bf16.xpose.msra.mxu0 0
          %3693 = vmatprep.subr.bf16.mxu0 0
          %3694 = vmatpush1.bf16.xpose.msra.mxu0 0
          %3695 = vmatprep.subr.bf16.mxu0 0
          %3696 = vmatpush1.bf16.xpose.msra.mxu0 0
          %3697 = vmatprep.subr.bf16.mxu0 0
          %3698 = vmatpush1.bf16.xpose.msra.mxu0 0
          %3699 = vmatprep.subr.bf16.mxu0 0
          %3700 = vmatpush1.bf16.xpose.msra.mxu0 0
          %3701 = vmatprep.subr.bf16.mxu0 0
          %3702 = vmatpush1.bf16.xpose.msra.mxu0 0
          %3703 = vmatprep.subr.bf16.mxu0 0
          %3704 = vmatpush1.bf16.xpose.msra.mxu0 0
          %3705 = vmatprep.mubr.bf16.mxu0 0
          %3706 = vmatmul.mubr.bf16.gmra.mrb[0].mxu0 %v3668
          %v3707 = vpop.f32.mrb[0].mxu0
          %v3708 = vadd.f32 %v1226, %v3707
          %v3709 = vpop.f32.mrb[0].mxu0
          %v3710 = vpop.f32.mrb[0].mxu0
          %v3711 = vpop.f32.mrb[0].mxu0
          %3712 = vdwg.mxu0
          %v3714 = vsel %vm1480, %v3611, 0
          %v3717 = vsel %vm1480, %v3615, 0
          %3719 = vmatprep.subr.bf16.mxu0 0
          %3720 = vmatpush1.bf16.xpose.msra.mxu0 %v3717
          %3721 = vmatprep.subr.bf16.mxu0 0
          %3722 = vmatpush1.bf16.xpose.msra.mxu0 0
          %3723 = vmatprep.subr.bf16.mxu0 0
          %3724 = vmatpush1.bf16.xpose.msra.mxu0 0
          %3725 = vmatprep.subr.bf16.mxu0 0
          %3726 = vmatpush1.bf16.xpose.msra.mxu0 0
          %3727 = vmatprep.subr.bf16.mxu0 0
          %3728 = vmatpush1.bf16.xpose.msra.mxu0 0
          %3729 = vmatprep.subr.bf16.mxu0 0
          %3730 = vmatpush1.bf16.xpose.msra.mxu0 0
          %3731 = vmatprep.subr.bf16.mxu0 0
          %3732 = vmatpush1.bf16.xpose.msra.mxu0 0
          %3733 = vmatprep.subr.bf16.mxu0 0
          %3734 = vmatpush1.bf16.xpose.msra.mxu0 0
          %3735 = vmatprep.subr.bf16.mxu0 0
          %3736 = vmatpush1.bf16.xpose.msra.mxu0 0
          %3737 = vmatprep.subr.bf16.mxu0 0
          %3738 = vmatpush1.bf16.xpose.msra.mxu0 0
          %3739 = vmatprep.subr.bf16.mxu0 0
          %3740 = vmatpush1.bf16.xpose.msra.mxu0 0
          %3741 = vmatprep.subr.bf16.mxu0 0
          %3742 = vmatpush1.bf16.xpose.msra.mxu0 0
          %3743 = vmatprep.subr.bf16.mxu0 0
          %3744 = vmatpush1.bf16.xpose.msra.mxu0 0
          %3745 = vmatprep.subr.bf16.mxu0 0
          %3746 = vmatpush1.bf16.xpose.msra.mxu0 0
          %3747 = vmatprep.subr.bf16.mxu0 0
          %3748 = vmatpush1.bf16.xpose.msra.mxu0 0
          %3749 = vmatprep.subr.bf16.mxu0 0
          %3750 = vmatpush1.bf16.xpose.msra.mxu0 0
          %3751 = vmatprep.mubr.bf16.mxu0 0
          %3752 = vmatmul.mubr.bf16.gmra.mrb[0].mxu0 %v3714
          %v3753 = vpop.f32.mrb[0].mxu0
          %v3754 = vadd.f32 %v1230, %v3753
          %v3755 = vpop.f32.mrb[0].mxu0
          %v3756 = vpop.f32.mrb[0].mxu0
          %v3757 = vpop.f32.mrb[0].mxu0
          %3758 = vdwg.mxu0
          %v3760 = vsel %vm1480, %v3612, 0
          %v3763 = vsel %vm1480, %v3616, 0
          %3765 = vmatprep.subr.bf16.mxu0 0
          %3766 = vmatpush1.bf16.xpose.msra.mxu0 %v3763
          %3767 = vmatprep.subr.bf16.mxu0 0
          %3768 = vmatpush1.bf16.xpose.msra.mxu0 0
          %3769 = vmatprep.subr.bf16.mxu0 0
          %3770 = vmatpush1.bf16.xpose.msra.mxu0 0
          %3771 = vmatprep.subr.bf16.mxu0 0
          %3772 = vmatpush1.bf16.xpose.msra.mxu0 0
          %3773 = vmatprep.subr.bf16.mxu0 0
          %3774 = vmatpush1.bf16.xpose.msra.mxu0 0
          %3775 = vmatprep.subr.bf16.mxu0 0
          %3776 = vmatpush1.bf16.xpose.msra.mxu0 0
          %3777 = vmatprep.subr.bf16.mxu0 0
          %3778 = vmatpush1.bf16.xpose.msra.mxu0 0
          %3779 = vmatprep.subr.bf16.mxu0 0
          %3780 = vmatpush1.bf16.xpose.msra.mxu0 0
          %3781 = vmatprep.subr.bf16.mxu0 0
          %3782 = vmatpush1.bf16.xpose.msra.mxu0 0
          %3783 = vmatprep.subr.bf16.mxu0 0
          %3784 = vmatpush1.bf16.xpose.msra.mxu0 0
          %3785 = vmatprep.subr.bf16.mxu0 0
          %3786 = vmatpush1.bf16.xpose.msra.mxu0 0
          %3787 = vmatprep.subr.bf16.mxu0 0
          %3788 = vmatpush1.bf16.xpose.msra.mxu0 0
          %3789 = vmatprep.subr.bf16.mxu0 0
          %3790 = vmatpush1.bf16.xpose.msra.mxu0 0
          %3791 = vmatprep.subr.bf16.mxu0 0
          %3792 = vmatpush1.bf16.xpose.msra.mxu0 0
          %3793 = vmatprep.subr.bf16.mxu0 0
          %3794 = vmatpush1.bf16.xpose.msra.mxu0 0
          %3795 = vmatprep.subr.bf16.mxu0 0
          %3796 = vmatpush1.bf16.xpose.msra.mxu0 0
          %3797 = vmatprep.mubr.bf16.mxu0 0
          %3798 = vmatmul.mubr.bf16.gmra.mrb[0].mxu0 %v3760
          %v3799 = vpop.f32.mrb[0].mxu0
          %v3800 = vadd.f32 %v1234, %v3799
          %v3801 = vpop.f32.mrb[0].mxu0
          %v3802 = vpop.f32.mrb[0].mxu0
          %v3803 = vpop.f32.mrb[0].mxu0
          %3804 = vdwg.mxu0
          %v3805 = vsel %vm1480, %v3662, -inf
          %3806 = vmax.xlane.f32.xlu0 %v3805
          %v3807 = vpop.xlane.xlu0 %3806
          %v3808 = vsel %vm1480, %v3708, -inf
          %3809 = vmax.xlane.f32.xlu0 %v3808
          %v3810 = vpop.xlane.xlu0 %3809
          %v3811 = vsel %vm1480, %v3754, -inf
          %3812 = vmax.xlane.f32.xlu0 %v3811
          %v3813 = vpop.xlane.xlu0 %3812
          %v3814 = vsel %vm1480, %v3800, -inf
          %3815 = vmax.xlane.f32.xlu0 %v3814
          %v3816 = vpop.xlane.xlu0 %3815
          %v3817 = vsub.f32 %v3662, %v3807
          %v3818 = vsub.f32 %v3708, %v3810
          %v3819 = vsub.f32 %v3754, %v3813
          %v3820 = vsub.f32 %v3800, %v3816
          %v3821 = vmul.f32 %v3817, 1.442695
          %v3822 = vpow.pop %v3821
          %v3823 = vmul.f32 %v3818, 1.442695
          %v3824 = vpow.pop %v3823
          %v3825 = vmul.f32 %v3819, 1.442695
          %v3826 = vpow.pop %v3825
          %v3827 = vmul.f32 %v3820, 1.442695
          %v3828 = vpow.pop %v3827
          %v3829 = vsel %vm1480, %v3822, 0.0
          %3830 = vadd.xlane.f32.xlu0 %v3829
          %v3831 = vpop.xlane.xlu0 %3830
          %v3832 = vsel %vm1480, %v3824, 0.0
          %3833 = vadd.xlane.f32.xlu0 %v3832
          %v3834 = vpop.xlane.xlu0 %3833
          %v3835 = vsel %vm1480, %v3826, 0.0
          %3836 = vadd.xlane.f32.xlu0 %v3835
          %v3837 = vpop.xlane.xlu0 %3836
          %v3838 = vsel %vm1480, %v3828, 0.0
          %3839 = vadd.xlane.f32.xlu0 %v3838
          %v3840 = vpop.xlane.xlu0 %3839
          %v3841 = vpack.c.bf16 %v3822, %v3822
          %v3842 = vpack.c.bf16 %v3824, %v3824
          %v3843 = vpack.c.bf16 %v3826, %v3826
          %v3844 = vpack.c.bf16 %v3828, %v3828
          %v3846 = vsel %vm1480, %v3841, 0
          %v3849 = vsel %vm1708, %v3617, 0
          %3851 = vmatprep.subr.bf16.mxu0 0
          %3852 = vmatpush1.bf16.msra.mxu0 %v3849
          %3853 = vmatprep.subr.bf16.mxu0 0
          %3854 = vmatpush1.bf16.msra.mxu0 0
          %3855 = vmatprep.subr.bf16.mxu0 0
          %3856 = vmatpush1.bf16.msra.mxu0 0
          %3857 = vmatprep.subr.bf16.mxu0 0
          %3858 = vmatpush1.bf16.msra.mxu0 0
          %3859 = vmatprep.subr.bf16.mxu0 0
          %3860 = vmatpush1.bf16.msra.mxu0 0
          %3861 = vmatprep.subr.bf16.mxu0 0
          %3862 = vmatpush1.bf16.msra.mxu0 0
          %3863 = vmatprep.subr.bf16.mxu0 0
          %3864 = vmatpush1.bf16.msra.mxu0 0
          %3865 = vmatprep.subr.bf16.mxu0 0
          %3866 = vmatpush1.bf16.msra.mxu0 0
          %3867 = vmatprep.subr.bf16.mxu0 0
          %3868 = vmatpush1.bf16.msra.mxu0 0
          %3869 = vmatprep.subr.bf16.mxu0 0
          %3870 = vmatpush1.bf16.msra.mxu0 0
          %3871 = vmatprep.subr.bf16.mxu0 0
          %3872 = vmatpush1.bf16.msra.mxu0 0
          %3873 = vmatprep.subr.bf16.mxu0 0
          %3874 = vmatpush1.bf16.msra.mxu0 0
          %3875 = vmatprep.subr.bf16.mxu0 0
          %3876 = vmatpush1.bf16.msra.mxu0 0
          %3877 = vmatprep.subr.bf16.mxu0 0
          %3878 = vmatpush1.bf16.msra.mxu0 0
          %3879 = vmatprep.subr.bf16.mxu0 0
          %3880 = vmatpush1.bf16.msra.mxu0 0
          %3881 = vmatprep.subr.bf16.mxu0 0
          %3882 = vmatpush1.bf16.msra.mxu0 0
          %3883 = vmatprep.mubr.bf16.mxu0 0
          %3884 = vmatmul.mubr.bf16.gmra.mrb[0].mxu0 %v3846
          %v3885 = vpop.f32.mrb[0].mxu0
          %v3886 = vadd.f32 0.0, %v3885
          %v3887 = vpop.f32.mrb[0].mxu0
          %v3888 = vpop.f32.mrb[0].mxu0
          %v3889 = vpop.f32.mrb[0].mxu0
          %3890 = vdwg.mxu0
          %v3892 = vsel %vm1480, %v3842, 0
          %v3895 = vsel %vm1708, %v3618, 0
          %3897 = vmatprep.subr.bf16.mxu0 0
          %3898 = vmatpush1.bf16.msra.mxu0 %v3895
          %3899 = vmatprep.subr.bf16.mxu0 0
          %3900 = vmatpush1.bf16.msra.mxu0 0
          %3901 = vmatprep.subr.bf16.mxu0 0
          %3902 = vmatpush1.bf16.msra.mxu0 0
          %3903 = vmatprep.subr.bf16.mxu0 0
          %3904 = vmatpush1.bf16.msra.mxu0 0
          %3905 = vmatprep.subr.bf16.mxu0 0
          %3906 = vmatpush1.bf16.msra.mxu0 0
          %3907 = vmatprep.subr.bf16.mxu0 0
          %3908 = vmatpush1.bf16.msra.mxu0 0
          %3909 = vmatprep.subr.bf16.mxu0 0
          %3910 = vmatpush1.bf16.msra.mxu0 0
          %3911 = vmatprep.subr.bf16.mxu0 0
          %3912 = vmatpush1.bf16.msra.mxu0 0
          %3913 = vmatprep.subr.bf16.mxu0 0
          %3914 = vmatpush1.bf16.msra.mxu0 0
          %3915 = vmatprep.subr.bf16.mxu0 0
          %3916 = vmatpush1.bf16.msra.mxu0 0
          %3917 = vmatprep.subr.bf16.mxu0 0
          %3918 = vmatpush1.bf16.msra.mxu0 0
          %3919 = vmatprep.subr.bf16.mxu0 0
          %3920 = vmatpush1.bf16.msra.mxu0 0
          %3921 = vmatprep.subr.bf16.mxu0 0
          %3922 = vmatpush1.bf16.msra.mxu0 0
          %3923 = vmatprep.subr.bf16.mxu0 0
          %3924 = vmatpush1.bf16.msra.mxu0 0
          %3925 = vmatprep.subr.bf16.mxu0 0
          %3926 = vmatpush1.bf16.msra.mxu0 0
          %3927 = vmatprep.subr.bf16.mxu0 0
          %3928 = vmatpush1.bf16.msra.mxu0 0
          %3929 = vmatprep.mubr.bf16.mxu0 0
          %3930 = vmatmul.mubr.bf16.gmra.mrb[0].mxu0 %v3892
          %v3931 = vpop.f32.mrb[0].mxu0
          %v3932 = vadd.f32 0.0, %v3931
          %v3933 = vpop.f32.mrb[0].mxu0
          %v3934 = vpop.f32.mrb[0].mxu0
          %v3935 = vpop.f32.mrb[0].mxu0
          %3936 = vdwg.mxu0
          %v3938 = vsel %vm1480, %v3843, 0
          %v3941 = vsel %vm1708, %v3619, 0
          %3943 = vmatprep.subr.bf16.mxu0 0
          %3944 = vmatpush1.bf16.msra.mxu0 %v3941
          %3945 = vmatprep.subr.bf16.mxu0 0
          %3946 = vmatpush1.bf16.msra.mxu0 0
          %3947 = vmatprep.subr.bf16.mxu0 0
          %3948 = vmatpush1.bf16.msra.mxu0 0
          %3949 = vmatprep.subr.bf16.mxu0 0
          %3950 = vmatpush1.bf16.msra.mxu0 0
          %3951 = vmatprep.subr.bf16.mxu0 0
          %3952 = vmatpush1.bf16.msra.mxu0 0
          %3953 = vmatprep.subr.bf16.mxu0 0
          %3954 = vmatpush1.bf16.msra.mxu0 0
          %3955 = vmatprep.subr.bf16.mxu0 0
          %3956 = vmatpush1.bf16.msra.mxu0 0
          %3957 = vmatprep.subr.bf16.mxu0 0
          %3958 = vmatpush1.bf16.msra.mxu0 0
          %3959 = vmatprep.subr.bf16.mxu0 0
          %3960 = vmatpush1.bf16.msra.mxu0 0
          %3961 = vmatprep.subr.bf16.mxu0 0
          %3962 = vmatpush1.bf16.msra.mxu0 0
          %3963 = vmatprep.subr.bf16.mxu0 0
          %3964 = vmatpush1.bf16.msra.mxu0 0
          %3965 = vmatprep.subr.bf16.mxu0 0
          %3966 = vmatpush1.bf16.msra.mxu0 0
          %3967 = vmatprep.subr.bf16.mxu0 0
          %3968 = vmatpush1.bf16.msra.mxu0 0
          %3969 = vmatprep.subr.bf16.mxu0 0
          %3970 = vmatpush1.bf16.msra.mxu0 0
          %3971 = vmatprep.subr.bf16.mxu0 0
          %3972 = vmatpush1.bf16.msra.mxu0 0
          %3973 = vmatprep.subr.bf16.mxu0 0
          %3974 = vmatpush1.bf16.msra.mxu0 0
          %3975 = vmatprep.mubr.bf16.mxu0 0
          %3976 = vmatmul.mubr.bf16.gmra.mrb[0].mxu0 %v3938
          %v3977 = vpop.f32.mrb[0].mxu0
          %v3978 = vadd.f32 0.0, %v3977
          %v3979 = vpop.f32.mrb[0].mxu0
          %v3980 = vpop.f32.mrb[0].mxu0
          %v3981 = vpop.f32.mrb[0].mxu0
          %3982 = vdwg.mxu0
          %v3984 = vsel %vm1480, %v3844, 0
          %v3987 = vsel %vm1708, %v3620, 0
          %3989 = vmatprep.subr.bf16.mxu0 0
          %3990 = vmatpush1.bf16.msra.mxu0 %v3987
          %3991 = vmatprep.subr.bf16.mxu0 0
          %3992 = vmatpush1.bf16.msra.mxu0 0
          %3993 = vmatprep.subr.bf16.mxu0 0
          %3994 = vmatpush1.bf16.msra.mxu0 0
          %3995 = vmatprep.subr.bf16.mxu0 0
          %3996 = vmatpush1.bf16.msra.mxu0 0
          %3997 = vmatprep.subr.bf16.mxu0 0
          %3998 = vmatpush1.bf16.msra.mxu0 0
          %3999 = vmatprep.subr.bf16.mxu0 0
          %4000 = vmatpush1.bf16.msra.mxu0 0
          %4001 = vmatprep.subr.bf16.mxu0 0
          %4002 = vmatpush1.bf16.msra.mxu0 0
          %4003 = vmatprep.subr.bf16.mxu0 0
          %4004 = vmatpush1.bf16.msra.mxu0 0
          %4005 = vmatprep.subr.bf16.mxu0 0
          %4006 = vmatpush1.bf16.msra.mxu0 0
          %4007 = vmatprep.subr.bf16.mxu0 0
          %4008 = vmatpush1.bf16.msra.mxu0 0
          %4009 = vmatprep.subr.bf16.mxu0 0
          %4010 = vmatpush1.bf16.msra.mxu0 0
          %4011 = vmatprep.subr.bf16.mxu0 0
          %4012 = vmatpush1.bf16.msra.mxu0 0
          %4013 = vmatprep.subr.bf16.mxu0 0
          %4014 = vmatpush1.bf16.msra.mxu0 0
          %4015 = vmatprep.subr.bf16.mxu0 0
          %4016 = vmatpush1.bf16.msra.mxu0 0
          %4017 = vmatprep.subr.bf16.mxu0 0
          %4018 = vmatpush1.bf16.msra.mxu0 0
          %4019 = vmatprep.subr.bf16.mxu0 0
          %4020 = vmatpush1.bf16.msra.mxu0 0
          %4021 = vmatprep.mubr.bf16.mxu0 0
          %4022 = vmatmul.mubr.bf16.gmra.mrb[0].mxu0 %v3984
          %v4023 = vpop.f32.mrb[0].mxu0
          %v4024 = vadd.f32 0.0, %v4023
          %v4025 = vpop.f32.mrb[0].mxu0
          %v4026 = vpop.f32.mrb[0].mxu0
          %v4027 = vpop.f32.mrb[0].mxu0
          %4028 = vdwg.mxu0
          %v4029 = vrcp.pop %v3831
          %v4030 = vrcp.pop %v3834
          %v4031 = vrcp.pop %v3837
          %v4032 = vrcp.pop %v3840
          %v4033 = vmul.f32 %v3886, %v4029
          %v4034 = vmul.f32 %v3932, %v4030
          %v4035 = vmul.f32 %v3978, %v4031
          %v4036 = vmul.f32 %v4024, %v4032
          %v4037 = vpack.c.bf16 %v4034, %v4033
          %v4038 = vpack.c.bf16 %v4036, %v4035
          %s4039 = scalar_lea.vmem %s1086, 12
          %v4040 = vld [vmem:[%s4039] sm:$0xf]
          %v4042 = vsel %vm1480, %v4037, 0
          %v4045 = vsel %vm1480, %v4038, 0
          %v4048 = vsel %vm1708, %v4040, 0
          %4050 = vmatprep.subr.bf16.mxu0 0
          %4051 = vmatpush1.bf16.msra.mxu0 %v4048
          %4052 = vmatprep.subr.bf16.mxu0 0
          %4053 = vmatpush1.bf16.msra.mxu0 0
          %4054 = vmatprep.subr.bf16.mxu0 0
          %4055 = vmatpush1.bf16.msra.mxu0 0
          %4056 = vmatprep.subr.bf16.mxu0 0
          %4057 = vmatpush1.bf16.msra.mxu0 0
          %4058 = vmatprep.subr.bf16.mxu0 0
          %4059 = vmatpush1.bf16.msra.mxu0 0
          %4060 = vmatprep.subr.bf16.mxu0 0
          %4061 = vmatpush1.bf16.msra.mxu0 0
          %4062 = vmatprep.subr.bf16.mxu0 0
          %4063 = vmatpush1.bf16.msra.mxu0 0
          %4064 = vmatprep.subr.bf16.mxu0 0
          %4065 = vmatpush1.bf16.msra.mxu0 0
          %4066 = vmatprep.subr.bf16.mxu0 0
          %4067 = vmatpush1.bf16.msra.mxu0 0
          %4068 = vmatprep.subr.bf16.mxu0 0
          %4069 = vmatpush1.bf16.msra.mxu0 0
          %4070 = vmatprep.subr.bf16.mxu0 0
          %4071 = vmatpush1.bf16.msra.mxu0 0
          %4072 = vmatprep.subr.bf16.mxu0 0
          %4073 = vmatpush1.bf16.msra.mxu0 0
          %4074 = vmatprep.subr.bf16.mxu0 0
          %4075 = vmatpush1.bf16.msra.mxu0 0
          %4076 = vmatprep.subr.bf16.mxu0 0
          %4077 = vmatpush1.bf16.msra.mxu0 0
          %4078 = vmatprep.subr.bf16.mxu0 0
          %4079 = vmatpush1.bf16.msra.mxu0 0
          %4080 = vmatprep.subr.bf16.mxu0 0
          %4081 = vmatpush1.bf16.msra.mxu0 0
          %4082 = vmatprep.mubr.bf16.mxu0 0
          %4083 = vmatmul.mubr.bf16.gmra.mrb[0].mxu0 %v4042
          %v4084 = vpop.f32.mrb[0].mxu0
          %v4085 = vadd.f32 0.0, %v4084
          %v4086 = vpop.f32.mrb[0].mxu0
          %v4087 = vpop.f32.mrb[0].mxu0
          %v4088 = vadd.f32 0.0, %v4087
          %v4089 = vpop.f32.mrb[0].mxu0
          %4090 = vmatprep.mubr.bf16.mxu0 0
          %4091 = vmatmul.mubr.bf16.gmra.mrb[0].mxu0 %v4045
          %v4092 = vpop.f32.mrb[0].mxu0
          %v4093 = vadd.f32 0.0, %v4092
          %v4094 = vpop.f32.mrb[0].mxu0
          %v4095 = vpop.f32.mrb[0].mxu0
          %v4096 = vadd.f32 0.0, %v4095
          %v4097 = vpop.f32.mrb[0].mxu0
          %4098 = vdwg.mxu0
          %v4099 = vadd.f32 %v3383, %v4085
          %v4100 = vadd.f32 %v3384, %v4088
          %v4101 = vadd.f32 %v3385, %v4093
          %v4102 = vadd.f32 %v3386, %v4096
          %v4103 = vld [vmem:[%s1093] sm:$0x1]
          %v4105 = vlaneseq
          %v4106 = vshrl.u32 %v4105, 7
          %v4107 = vsub.s32 0, %v4106
          %v4108 = vrot.slane %v4103, %v4107
          %v4110 = vadd.f32 %v4099, %v4108
          %v4111 = vadd.f32 %v4100, %v4108
          %v4112 = vadd.f32 %v4101, %v4108
          %v4113 = vadd.f32 %v4102, %v4108
          %v4114 = vadd.f32 %v1178, %v4110
          %v4115 = vadd.f32 %v1179, %v4111
          %v4116 = vadd.f32 %v1180, %v4112
          %v4117 = vadd.f32 %v1181, %v4113
          %v4118 = vld [vmem:[%s1100] sm:$0x1]
          %v4119 = vld [vmem:[%s1107] sm:$0x1]
          %v4120 = vsel %vm1262, %v4114, 0.0
          %4121 = vadd.xlane.f32.xlu0 %v4120
          %v4122 = vpop.xlane.xlu0 %4121
          %v4123 = vsel %vm1262, %v4115, 0.0
          %4124 = vadd.xlane.f32.xlu0 %v4123
          %v4125 = vpop.xlane.xlu0 %4124
          %v4126 = vsel %vm1262, %v4116, 0.0
          %4127 = vadd.xlane.f32.xlu0 %v4126
          %v4128 = vpop.xlane.xlu0 %4127
          %v4129 = vsel %vm1262, %v4117, 0.0
          %4130 = vadd.xlane.f32.xlu0 %v4129
          %v4131 = vpop.xlane.xlu0 %4130
          %v4132 = vrcp.pop 32.0
          %v4133 = vmul.f32 %v4122, %v4132
          %v4134 = vmul.f32 %v4125, %v4132
          %v4135 = vmul.f32 %v4128, %v4132
          %v4136 = vmul.f32 %v4131, %v4132
          %v4137 = vsub.f32 %v4114, %v4133
          %v4138 = vsub.f32 %v4115, %v4134
          %v4139 = vsub.f32 %v4116, %v4135
          %v4140 = vsub.f32 %v4117, %v4136
          %v4141 = vmul.f32 %v4137, %v4137
          %v4142 = vmul.f32 %v4138, %v4138
          %v4143 = vmul.f32 %v4139, %v4139
          %v4144 = vmul.f32 %v4140, %v4140
          %v4145 = vsel %vm1262, %v4141, 0.0
          %4146 = vadd.xlane.f32.xlu0 %v4145
          %v4147 = vpop.xlane.xlu0 %4146
          %v4148 = vsel %vm1262, %v4142, 0.0
          %4149 = vadd.xlane.f32.xlu0 %v4148
          %v4150 = vpop.xlane.xlu0 %4149
          %v4151 = vsel %vm1262, %v4143, 0.0
          %4152 = vadd.xlane.f32.xlu0 %v4151
          %v4153 = vpop.xlane.xlu0 %4152
          %v4154 = vsel %vm1262, %v4144, 0.0
          %4155 = vadd.xlane.f32.xlu0 %v4154
          %v4156 = vpop.xlane.xlu0 %4155
          %v4157 = vmul.f32 %v4147, %v4132
          %v4158 = vmul.f32 %v4150, %v4132
          %v4159 = vmul.f32 %v4153, %v4132
          %v4160 = vmul.f32 %v4156, %v4132
          %v4161 = vadd.f32 %v4157, 1e-05
          %v4162 = vadd.f32 %v4158, 1e-05
          %v4163 = vadd.f32 %v4159, 1e-05
          %v4164 = vadd.f32 %v4160, 1e-05
          %v4165 = vrsqrt.pop %v4161
          %v4166 = vrsqrt.pop %v4162
          %v4167 = vrsqrt.pop %v4163
          %v4168 = vrsqrt.pop %v4164
          %v4169 = vmul.f32 %v4137, %v4165
          %v4170 = vmul.f32 %v4138, %v4166
          %v4171 = vmul.f32 %v4139, %v4167
          %v4172 = vmul.f32 %v4140, %v4168
          %v4174 = vlaneseq
          %v4175 = vshrl.u32 %v4174, 7
          %v4176 = vsub.s32 0, %v4175
          %v4177 = vrot.slane %v4118, %v4176
          %v4179 = vmul.f32 %v4169, %v4177
          %v4180 = vmul.f32 %v4170, %v4177
          %v4181 = vmul.f32 %v4171, %v4177
          %v4182 = vmul.f32 %v4172, %v4177
          %v4184 = vlaneseq
          %v4185 = vshrl.u32 %v4184, 7
          %v4186 = vsub.s32 0, %v4185
          %v4187 = vrot.slane %v4119, %v4186
          %v4189 = vadd.f32 %v4179, %v4187
          %v4190 = vadd.f32 %v4180, %v4187
          %v4191 = vadd.f32 %v4181, %v4187
          %v4192 = vadd.f32 %v4182, %v4187
          %v4193 = vpack.c.bf16 %v4190, %v4189
          %v4194 = vpack.c.bf16 %v4192, %v4191
          %v4195 = vld [vmem:[%s1116] sm:$0xf]
          %v4196 = vld [vmem:[%s1116 + $0x4] sm:$0xf]
          %v4197 = vld [vmem:[%s1116 + $0x8] sm:$0xf]
          %v4198 = vld [vmem:[%s1116 + $0xc] sm:$0xf]
          %v4199 = vld [vmem:[%s1123] sm:$0x1]
          %v4201 = vlaneseq
          %v4202 = vshrl.u32 %v4201, 7
          %v4203 = vsub.s32 0, %v4202
          %v4204 = vrot.slane %v4199, %v4203
          %v4210 = vunpack.c.l.b16 %v4195
          %v4211 = vunpack.c.l.b16 %v4196
          %v4212 = vunpack.c.l.b16 %v4197
          %v4213 = vunpack.c.l.b16 %v4198
          %v4214 = vpack.c.b16 %v4211, %v4210
          %v4215 = vpack.c.b16 %v4213, %v4212
          %v4219 = vsel %vm1262, %v4193, 0
          %v4222 = vsel %vm1262, %v4194, 0
          %4224 = vmatprep.subr.bf16.mxu0 0
          %4225 = vmatpush1.bf16.msra.mxu0 %v4214
          %4226 = vmatprep.subr.bf16.mxu0 0
          %4227 = vmatpush1.bf16.msra.mxu0 %v4215
          %4228 = vmatprep.subr.bf16.mxu0 0
          %4229 = vmatpush1.bf16.msra.mxu0 0
          %4230 = vmatprep.subr.bf16.mxu0 0
          %4231 = vmatpush1.bf16.msra.mxu0 0
          %4232 = vmatprep.subr.bf16.mxu0 0
          %4233 = vmatpush1.bf16.msra.mxu0 0
          %4234 = vmatprep.subr.bf16.mxu0 0
          %4235 = vmatpush1.bf16.msra.mxu0 0
          %4236 = vmatprep.subr.bf16.mxu0 0
          %4237 = vmatpush1.bf16.msra.mxu0 0
          %4238 = vmatprep.subr.bf16.mxu0 0
          %4239 = vmatpush1.bf16.msra.mxu0 0
          %4240 = vmatprep.subr.bf16.mxu0 0
          %4241 = vmatpush1.bf16.msra.mxu0 0
          %4242 = vmatprep.subr.bf16.mxu0 0
          %4243 = vmatpush1.bf16.msra.mxu0 0
          %4244 = vmatprep.subr.bf16.mxu0 0
          %4245 = vmatpush1.bf16.msra.mxu0 0
          %4246 = vmatprep.subr.bf16.mxu0 0
          %4247 = vmatpush1.bf16.msra.mxu0 0
          %4248 = vmatprep.subr.bf16.mxu0 0
          %4249 = vmatpush1.bf16.msra.mxu0 0
          %4250 = vmatprep.subr.bf16.mxu0 0
          %4251 = vmatpush1.bf16.msra.mxu0 0
          %4252 = vmatprep.subr.bf16.mxu0 0
          %4253 = vmatpush1.bf16.msra.mxu0 0
          %4254 = vmatprep.subr.bf16.mxu0 0
          %4255 = vmatpush1.bf16.msra.mxu0 0
          %4256 = vmatprep.mubr.bf16.mxu0 0
          %4257 = vmatmul.mubr.bf16.gmra.mrb[0].mxu0 %v4219
          %v4258 = vpop.f32.mrb[0].mxu0
          %v4259 = vadd.f32 %v4204, %v4258
          %v4260 = vpop.f32.mrb[0].mxu0
          %v4261 = vpop.f32.mrb[0].mxu0
          %v4262 = vadd.f32 %v4204, %v4261
          %v4263 = vpop.f32.mrb[0].mxu0
          %4264 = vmatprep.mubr.bf16.mxu0 0
          %4265 = vmatmul.mubr.bf16.gmra.mrb[0].mxu0 %v4222
          %v4266 = vpop.f32.mrb[0].mxu0
          %v4267 = vadd.f32 %v4204, %v4266
          %v4268 = vpop.f32.mrb[0].mxu0
          %v4269 = vpop.f32.mrb[0].mxu0
          %v4270 = vadd.f32 %v4204, %v4269
          %v4271 = vpop.f32.mrb[0].mxu0
          %4272 = vdwg.mxu0
          %v4273 = vmax.f32 %v4259, 0.0
          %v4274 = vmax.f32 %v4262, 0.0
          %v4275 = vmax.f32 %v4267, 0.0
          %v4276 = vmax.f32 %v4270, 0.0
          %v4277 = vpack.c.bf16 %v4274, %v4273
          %v4278 = vpack.c.bf16 %v4276, %v4275
          %v4279 = vld [vmem:[%s1132] sm:$0xf]
          %v4280 = vld [vmem:[%s1132 + $0x4] sm:$0xf]
          %v4281 = vld [vmem:[%s1132 + $0x8] sm:$0xf]
          %v4282 = vld [vmem:[%s1132 + $0xc] sm:$0xf]
          %v4283 = vld [vmem:[%s1132 + $0x10] sm:$0xf]
          %v4284 = vld [vmem:[%s1132 + $0x14] sm:$0xf]
          %v4285 = vld [vmem:[%s1132 + $0x18] sm:$0xf]
          %v4286 = vld [vmem:[%s1132 + $0x1c] sm:$0xf]
          %v4287 = vld [vmem:[%s1139] sm:$0x1]
          %v4289 = vlaneseq
          %v4290 = vshrl.u32 %v4289, 7
          %v4291 = vsub.s32 0, %v4290
          %v4292 = vrot.slane %v4287, %v4291
          %v4302 = vunpack.c.l.b16 %v4279
          %v4303 = vunpack.c.l.b16 %v4280
          %v4304 = vunpack.c.l.b16 %v4281
          %v4305 = vunpack.c.l.b16 %v4282
          %v4306 = vunpack.c.l.b16 %v4283
          %v4307 = vunpack.c.l.b16 %v4284
          %v4308 = vunpack.c.l.b16 %v4285
          %v4309 = vunpack.c.l.b16 %v4286
          %v4310 = vpack.c.b16 %v4303, %v4302
          %v4311 = vpack.c.b16 %v4305, %v4304
          %v4312 = vpack.c.b16 %v4307, %v4306
          %v4313 = vpack.c.b16 %v4309, %v4308
          %vm4318 = vcmask 523264
          %v4320 = vsel %vm4318, %v4277, 0
          %v4323 = vsel %vm4318, %v4278, 0
          %4325 = vmatprep.subr.bf16.mxu0 0
          %4326 = vmatpush1.bf16.msra.mxu0 %v4310
          %4327 = vmatprep.subr.bf16.mxu0 0
          %4328 = vmatpush1.bf16.msra.mxu0 %v4311
          %4329 = vmatprep.subr.bf16.mxu0 0
          %4330 = vmatpush1.bf16.msra.mxu0 %v4312
          %4331 = vmatprep.subr.bf16.mxu0 0
          %4332 = vmatpush1.bf16.msra.mxu0 %v4313
          %4333 = vmatprep.subr.bf16.mxu0 0
          %4334 = vmatpush1.bf16.msra.mxu0 0
          %4335 = vmatprep.subr.bf16.mxu0 0
          %4336 = vmatpush1.bf16.msra.mxu0 0
          %4337 = vmatprep.subr.bf16.mxu0 0
          %4338 = vmatpush1.bf16.msra.mxu0 0
          %4339 = vmatprep.subr.bf16.mxu0 0
          %4340 = vmatpush1.bf16.msra.mxu0 0
          %4341 = vmatprep.subr.bf16.mxu0 0
          %4342 = vmatpush1.bf16.msra.mxu0 0
          %4343 = vmatprep.subr.bf16.mxu0 0
          %4344 = vmatpush1.bf16.msra.mxu0 0
          %4345 = vmatprep.subr.bf16.mxu0 0
          %4346 = vmatpush1.bf16.msra.mxu0 0
          %4347 = vmatprep.subr.bf16.mxu0 0
          %4348 = vmatpush1.bf16.msra.mxu0 0
          %4349 = vmatprep.subr.bf16.mxu0 0
          %4350 = vmatpush1.bf16.msra.mxu0 0
          %4351 = vmatprep.subr.bf16.mxu0 0
          %4352 = vmatpush1.bf16.msra.mxu0 0
          %4353 = vmatprep.subr.bf16.mxu0 0
          %4354 = vmatpush1.bf16.msra.mxu0 0
          %4355 = vmatprep.subr.bf16.mxu0 0
          %4356 = vmatpush1.bf16.msra.mxu0 0
          %4357 = vmatprep.mubr.bf16.mxu0 0
          %4358 = vmatmul.mubr.bf16.gmra.mrb[0].mxu0 %v4320
          %v4359 = vpop.f32.mrb[0].mxu0
          %v4360 = vadd.f32 %v4292, %v4359
          %v4361 = vpop.f32.mrb[0].mxu0
          %v4362 = vpop.f32.mrb[0].mxu0
          %v4363 = vadd.f32 %v4292, %v4362
          %v4364 = vpop.f32.mrb[0].mxu0
          %4365 = vmatprep.mubr.bf16.mxu0 0
          %4366 = vmatmul.mubr.bf16.gmra.mrb[0].mxu0 %v4323
          %v4367 = vpop.f32.mrb[0].mxu0
          %v4368 = vadd.f32 %v4292, %v4367
          %v4369 = vpop.f32.mrb[0].mxu0
          %v4370 = vpop.f32.mrb[0].mxu0
          %v4371 = vadd.f32 %v4292, %v4370
          %v4372 = vpop.f32.mrb[0].mxu0
          %4373 = vdwg.mxu0
          %v4374 = vadd.f32 %v4189, %v4360
          %v4375 = vadd.f32 %v4190, %v4363
          %v4376 = vadd.f32 %v4191, %v4368
          %v4377 = vadd.f32 %v4192, %v4371
          %v4378 = vld [vmem:[%s1146] sm:$0x1]
          %v4379 = vld [vmem:[%s1153] sm:$0x1]
          %v4380 = vsel %vm1262, %v4374, 0.0
          %4381 = vadd.xlane.f32.xlu0 %v4380
          %v4382 = vpop.xlane.xlu0 %4381
          %v4383 = vsel %vm1262, %v4375, 0.0
          %4384 = vadd.xlane.f32.xlu0 %v4383
          %v4385 = vpop.xlane.xlu0 %4384
          %v4386 = vsel %vm1262, %v4376, 0.0
          %4387 = vadd.xlane.f32.xlu0 %v4386
          %v4388 = vpop.xlane.xlu0 %4387
          %v4389 = vsel %vm1262, %v4377, 0.0
          %4390 = vadd.xlane.f32.xlu0 %v4389
          %v4391 = vpop.xlane.xlu0 %4390
          %v4392 = vmul.f32 %v4382, %v4132
          %v4393 = vmul.f32 %v4385, %v4132
          %v4394 = vmul.f32 %v4388, %v4132
          %v4395 = vmul.f32 %v4391, %v4132
          %v4396 = vsub.f32 %v4374, %v4392
          %v4397 = vsub.f32 %v4375, %v4393
          %v4398 = vsub.f32 %v4376, %v4394
          %v4399 = vsub.f32 %v4377, %v4395
          %v4400 = vmul.f32 %v4396, %v4396
          %v4401 = vmul.f32 %v4397, %v4397
          %v4402 = vmul.f32 %v4398, %v4398
          %v4403 = vmul.f32 %v4399, %v4399
          %v4404 = vsel %vm1262, %v4400, 0.0
          %4405 = vadd.xlane.f32.xlu0 %v4404
          %v4406 = vpop.xlane.xlu0 %4405
          %v4407 = vsel %vm1262, %v4401, 0.0
          %4408 = vadd.xlane.f32.xlu0 %v4407
          %v4409 = vpop.xlane.xlu0 %4408
          %v4410 = vsel %vm1262, %v4402, 0.0
          %4411 = vadd.xlane.f32.xlu0 %v4410
          %v4412 = vpop.xlane.xlu0 %4411
          %v4413 = vsel %vm1262, %v4403, 0.0
          %4414 = vadd.xlane.f32.xlu0 %v4413
          %v4415 = vpop.xlane.xlu0 %4414
          %v4416 = vmul.f32 %v4406, %v4132
          %v4417 = vmul.f32 %v4409, %v4132
          %v4418 = vmul.f32 %v4412, %v4132
          %v4419 = vmul.f32 %v4415, %v4132
          %v4420 = vadd.f32 %v4416, 1e-05
          %v4421 = vadd.f32 %v4417, 1e-05
          %v4422 = vadd.f32 %v4418, 1e-05
          %v4423 = vadd.f32 %v4419, 1e-05
          %v4424 = vrsqrt.pop %v4420
          %v4425 = vrsqrt.pop %v4421
          %v4426 = vrsqrt.pop %v4422
          %v4427 = vrsqrt.pop %v4423
          %v4428 = vmul.f32 %v4396, %v4424
          %v4429 = vmul.f32 %v4397, %v4425
          %v4430 = vmul.f32 %v4398, %v4426
          %v4431 = vmul.f32 %v4399, %v4427
          %v4433 = vlaneseq
          %v4434 = vshrl.u32 %v4433, 7
          %v4435 = vsub.s32 0, %v4434
          %v4436 = vrot.slane %v4378, %v4435
          %v4438 = vmul.f32 %v4428, %v4436
          %v4439 = vmul.f32 %v4429, %v4436
          %v4440 = vmul.f32 %v4430, %v4436
          %v4441 = vmul.f32 %v4431, %v4436
          %v4443 = vlaneseq
          %v4444 = vshrl.u32 %v4443, 7
          %v4445 = vsub.s32 0, %v4444
          %v4446 = vrot.slane %v4379, %v4445
          %v4448 = vadd.f32 %v4438, %v4446
          %v4449 = vadd.f32 %v4439, %v4446
          %v4450 = vadd.f32 %v4440, %v4446
          %v4451 = vadd.f32 %v4441, %v4446
          %4452 = vst.msk [vmem:[#allocation2] sm:$0xff] %vm1262, %v4448
          %4453 = vst.msk [vmem:[#allocation2 + $0x8] sm:$0xff] %vm1262, %v4449
          %4454 = vst.msk [vmem:[#allocation2 + $0x10] sm:$0xff] %vm1262, %v4450
          %4455 = vst.msk [vmem:[#allocation2 + $0x18] sm:$0xff] %vm1262, %v4451
        $region112: #{tpu_custom_call.1} parent=103 // pred_fallthru
          _
        %p4456 = scmp.eq.s32.totalorder %s41, 1
        // Predicated region
        $region113: #{tpu_custom_call.1} parent=103 // pred_check
          %p4457 = pneg %p4456
        $region114: #{tpu_custom_call.1} parent=103 // pred_check_branch
          %4459 = sbr.rel (%p4457) target = $region116
        $region115: #{tpu_custom_call.1} parent=103 // pred_region
          %v4460 = vld [vmem:[%s3] sm:$0xf]
          %v4461 = vpack.c.bf16 %v1183, %v1182
          %v4462 = vpack.c.bf16 %v1185, %v1184
          %v4463 = vpack.c.bf16 %v1179, %v1178
          %v4464 = vpack.c.bf16 %v1181, %v1180
          %v4467 = vunpack.c.l.s4 1966171168
          %v4468 = vunpack.c.0.s8 %v4467
          %v4469 = vlaneseq
          %v4470 = vshrl.u32 %v4469, 7
          %v4471 = vsub.s32 %v4468, %v4470
          %v4472 = vrot.slane %v4460, %v4471
          %v4473 = vcombine.high %v4472, %v4472
          %v4475 = vunpack.c.l.s4 1966171168
          %v4476 = vunpack.c.0.s8 %v4475
          %v4477 = vlaneseq
          %v4478 = vshrl.u32 %v4477, 7
          %v4479 = vsub.s32 %v4476, %v4478
          %v4480 = vrot.slane %v4472, %v4479
          %v4482 = vunpack.c.l.s4 1966171168
          %v4483 = vunpack.c.0.s8 %v4482
          %v4484 = vlaneseq
          %v4485 = vshrl.u32 %v4484, 7
          %v4486 = vsub.s32 %v4483, %v4485
          %v4487 = vrot.slane %v4473, %v4486
          %v4488 = vcombine.high %v4480, %v4480
          %v4489 = vcombine.high %v4487, %v4487
          %v4490 = vlaneseq
          %v4491 = vshrl.u32 %v4490, 7
          %v4492 = vsub.s32 0, %v4491
          %v4493 = vrot.slane %v4480, %v4492
          %v4494 = vlaneseq
          %v4495 = vshrl.u32 %v4494, 7
          %v4496 = vsub.s32 0, %v4495
          %v4497 = vrot.slane %v4487, %v4496
          %v4498 = vlaneseq
          %v4499 = vshrl.u32 %v4498, 7
          %v4500 = vsub.s32 0, %v4499
          %v4501 = vrot.slane %v4488, %v4500
          %v4502 = vlaneseq
          %v4503 = vshrl.u32 %v4502, 7
          %v4504 = vsub.s32 0, %v4503
          %v4505 = vrot.slane %v4489, %v4504
          %v4510 = vld [vmem:[%s1035] sm:$0xf]
          %v4511 = vld [vmem:[%s1035 + $0x4] sm:$0xf]
          %v4512 = vld [vmem:[%s1035 + $0x8] sm:$0xf]
          %v4513 = vld [vmem:[%s1035 + $0xc] sm:$0xf]
          %v4514 = vld [vmem:[%s1043] sm:$0x1]
          %v4516 = vlaneseq
          %v4517 = vshrl.u32 %v4516, 7
          %v4518 = vsub.s32 0, %v4517
          %v4519 = vrot.slane %v4514, %v4518
          %v4525 = vunpack.c.l.b16 %v4510
          %v4526 = vunpack.c.l.b16 %v4511
          %v4527 = vunpack.c.l.b16 %v4512
          %v4528 = vunpack.c.l.b16 %v4513
          %v4529 = vpack.c.b16 %v4526, %v4525
          %v4530 = vpack.c.b16 %v4528, %v4527
          %vm4533 = vcmask 261120
          %v4535 = vsel %vm4533, %v4461, 0
          %v4538 = vsel %vm4533, %v4462, 0
          %4540 = vmatprep.subr.bf16.mxu0 0
          %4541 = vmatpush1.bf16.msra.mxu0 %v4529
          %4542 = vmatprep.subr.bf16.mxu0 0
          %4543 = vmatpush1.bf16.msra.mxu0 %v4530
          %4544 = vmatprep.subr.bf16.mxu0 0
          %4545 = vmatpush1.bf16.msra.mxu0 0
          %4546 = vmatprep.subr.bf16.mxu0 0
          %4547 = vmatpush1.bf16.msra.mxu0 0
          %4548 = vmatprep.subr.bf16.mxu0 0
          %4549 = vmatpush1.bf16.msra.mxu0 0
          %4550 = vmatprep.subr.bf16.mxu0 0
          %4551 = vmatpush1.bf16.msra.mxu0 0
          %4552 = vmatprep.subr.bf16.mxu0 0
          %4553 = vmatpush1.bf16.msra.mxu0 0
          %4554 = vmatprep.subr.bf16.mxu0 0
          %4555 = vmatpush1.bf16.msra.mxu0 0
          %4556 = vmatprep.subr.bf16.mxu0 0
          %4557 = vmatpush1.bf16.msra.mxu0 0
          %4558 = vmatprep.subr.bf16.mxu0 0
          %4559 = vmatpush1.bf16.msra.mxu0 0
          %4560 = vmatprep.subr.bf16.mxu0 0
          %4561 = vmatpush1.bf16.msra.mxu0 0
          %4562 = vmatprep.subr.bf16.mxu0 0
          %4563 = vmatpush1.bf16.msra.mxu0 0
          %4564 = vmatprep.subr.bf16.mxu0 0
          %4565 = vmatpush1.bf16.msra.mxu0 0
          %4566 = vmatprep.subr.bf16.mxu0 0
          %4567 = vmatpush1.bf16.msra.mxu0 0
          %4568 = vmatprep.subr.bf16.mxu0 0
          %4569 = vmatpush1.bf16.msra.mxu0 0
          %4570 = vmatprep.subr.bf16.mxu0 0
          %4571 = vmatpush1.bf16.msra.mxu0 0
          %4572 = vmatprep.mubr.bf16.mxu0 0
          %4573 = vmatmul.mubr.bf16.gmra.mrb[0].mxu0 %v4535
          %v4574 = vpop.f32.mrb[0].mxu0
          %v4575 = vadd.f32 %v4519, %v4574
          %v4576 = vpop.f32.mrb[0].mxu0
          %v4577 = vpop.f32.mrb[0].mxu0
          %v4578 = vadd.f32 %v4519, %v4577
          %v4579 = vpop.f32.mrb[0].mxu0
          %4580 = vmatprep.mubr.bf16.mxu0 0
          %4581 = vmatmul.mubr.bf16.gmra.mrb[0].mxu0 %v4538
          %v4582 = vpop.f32.mrb[0].mxu0
          %v4583 = vadd.f32 %v4519, %v4582
          %v4584 = vpop.f32.mrb[0].mxu0
          %v4585 = vpop.f32.mrb[0].mxu0
          %v4586 = vadd.f32 %v4519, %v4585
          %v4587 = vpop.f32.mrb[0].mxu0
          %4588 = vdwg.mxu0
          %v4589 = vld [vmem:[%s1052] sm:$0xf]
          %v4590 = vld [vmem:[%s1052 + $0x4] sm:$0xf]
          %v4591 = vld [vmem:[%s1052 + $0x8] sm:$0xf]
          %v4592 = vld [vmem:[%s1052 + $0xc] sm:$0xf]
          %v4593 = vld [vmem:[%s1060] sm:$0x1]
          %v4595 = vlaneseq
          %v4596 = vshrl.u32 %v4595, 7
          %v4597 = vsub.s32 0, %v4596
          %v4598 = vrot.slane %v4593, %v4597
          %v4604 = vunpack.c.l.b16 %v4589
          %v4605 = vunpack.c.l.b16 %v4590
          %v4606 = vunpack.c.l.b16 %v4591
          %v4607 = vunpack.c.l.b16 %v4592
          %v4608 = vpack.c.b16 %v4605, %v4604
          %v4609 = vpack.c.b16 %v4607, %v4606
          %v4613 = vsel %vm4533, %v4463, 0
          %v4616 = vsel %vm4533, %v4464, 0
          %4618 = vmatprep.subr.bf16.mxu0 0
          %4619 = vmatpush1.bf16.msra.mxu0 %v4608
          %4620 = vmatprep.subr.bf16.mxu0 0
          %4621 = vmatpush1.bf16.msra.mxu0 %v4609
          %4622 = vmatprep.subr.bf16.mxu0 0
          %4623 = vmatpush1.bf16.msra.mxu0 0
          %4624 = vmatprep.subr.bf16.mxu0 0
          %4625 = vmatpush1.bf16.msra.mxu0 0
          %4626 = vmatprep.subr.bf16.mxu0 0
          %4627 = vmatpush1.bf16.msra.mxu0 0
          %4628 = vmatprep.subr.bf16.mxu0 0
          %4629 = vmatpush1.bf16.msra.mxu0 0
          %4630 = vmatprep.subr.bf16.mxu0 0
          %4631 = vmatpush1.bf16.msra.mxu0 0
          %4632 = vmatprep.subr.bf16.mxu0 0
          %4633 = vmatpush1.bf16.msra.mxu0 0
          %4634 = vmatprep.subr.bf16.mxu0 0
          %4635 = vmatpush1.bf16.msra.mxu0 0
          %4636 = vmatprep.subr.bf16.mxu0 0
          %4637 = vmatpush1.bf16.msra.mxu0 0
          %4638 = vmatprep.subr.bf16.mxu0 0
          %4639 = vmatpush1.bf16.msra.mxu0 0
          %4640 = vmatprep.subr.bf16.mxu0 0
          %4641 = vmatpush1.bf16.msra.mxu0 0
          %4642 = vmatprep.subr.bf16.mxu0 0
          %4643 = vmatpush1.bf16.msra.mxu0 0
          %4644 = vmatprep.subr.bf16.mxu0 0
          %4645 = vmatpush1.bf16.msra.mxu0 0
          %4646 = vmatprep.subr.bf16.mxu0 0
          %4647 = vmatpush1.bf16.msra.mxu0 0
          %4648 = vmatprep.subr.bf16.mxu0 0
          %4649 = vmatpush1.bf16.msra.mxu0 0
          %4650 = vmatprep.mubr.bf16.mxu0 0
          %4651 = vmatmul.mubr.bf16.gmra.mrb[0].mxu0 %v4613
          %v4652 = vpop.f32.mrb[0].mxu0
          %v4653 = vadd.f32 %v4598, %v4652
          %v4654 = vpop.f32.mrb[0].mxu0
          %v4655 = vpop.f32.mrb[0].mxu0
          %v4656 = vadd.f32 %v4598, %v4655
          %v4657 = vpop.f32.mrb[0].mxu0
          %4658 = vmatprep.mubr.bf16.mxu0 0
          %4659 = vmatmul.mubr.bf16.gmra.mrb[0].mxu0 %v4616
          %v4660 = vpop.f32.mrb[0].mxu0
          %v4661 = vadd.f32 %v4598, %v4660
          %v4662 = vpop.f32.mrb[0].mxu0
          %v4663 = vpop.f32.mrb[0].mxu0
          %v4664 = vadd.f32 %v4598, %v4663
          %v4665 = vpop.f32.mrb[0].mxu0
          %4666 = vdwg.mxu0
          %v4667 = vld [vmem:[%s1069] sm:$0xf]
          %v4668 = vld [vmem:[%s1069 + $0x4] sm:$0xf]
          %v4669 = vld [vmem:[%s1069 + $0x8] sm:$0xf]
          %v4670 = vld [vmem:[%s1069 + $0xc] sm:$0xf]
          %v4671 = vld [vmem:[%s1077] sm:$0x1]
          %v4673 = vlaneseq
          %v4674 = vshrl.u32 %v4673, 7
          %v4675 = vsub.s32 0, %v4674
          %v4676 = vrot.slane %v4671, %v4675
          %v4682 = vunpack.c.l.b16 %v4667
          %v4683 = vunpack.c.l.b16 %v4668
          %v4684 = vunpack.c.l.b16 %v4669
          %v4685 = vunpack.c.l.b16 %v4670
          %v4686 = vpack.c.b16 %v4683, %v4682
          %v4687 = vpack.c.b16 %v4685, %v4684
          %4690 = vmatprep.subr.bf16.mxu0 0
          %4691 = vmatpush1.bf16.msra.mxu0 %v4686
          %4692 = vmatprep.subr.bf16.mxu0 0
          %4693 = vmatpush1.bf16.msra.mxu0 %v4687
          %4694 = vmatprep.subr.bf16.mxu0 0
          %4695 = vmatpush1.bf16.msra.mxu0 0
          %4696 = vmatprep.subr.bf16.mxu0 0
          %4697 = vmatpush1.bf16.msra.mxu0 0
          %4698 = vmatprep.subr.bf16.mxu0 0
          %4699 = vmatpush1.bf16.msra.mxu0 0
          %4700 = vmatprep.subr.bf16.mxu0 0
          %4701 = vmatpush1.bf16.msra.mxu0 0
          %4702 = vmatprep.subr.bf16.mxu0 0
          %4703 = vmatpush1.bf16.msra.mxu0 0
          %4704 = vmatprep.subr.bf16.mxu0 0
          %4705 = vmatpush1.bf16.msra.mxu0 0
          %4706 = vmatprep.subr.bf16.mxu0 0
          %4707 = vmatpush1.bf16.msra.mxu0 0
          %4708 = vmatprep.subr.bf16.mxu0 0
          %4709 = vmatpush1.bf16.msra.mxu0 0
          %4710 = vmatprep.subr.bf16.mxu0 0
          %4711 = vmatpush1.bf16.msra.mxu0 0
          %4712 = vmatprep.subr.bf16.mxu0 0
          %4713 = vmatpush1.bf16.msra.mxu0 0
          %4714 = vmatprep.subr.bf16.mxu0 0
          %4715 = vmatpush1.bf16.msra.mxu0 0
          %4716 = vmatprep.subr.bf16.mxu0 0
          %4717 = vmatpush1.bf16.msra.mxu0 0
          %4718 = vmatprep.subr.bf16.mxu0 0
          %4719 = vmatpush1.bf16.msra.mxu0 0
          %4720 = vmatprep.subr.bf16.mxu0 0
          %4721 = vmatpush1.bf16.msra.mxu0 0
          %4722 = vmatprep.mubr.bf16.mxu0 0
          %4723 = vmatmul.mubr.bf16.gmra.mrb[0].mxu0 %v4613
          %v4724 = vpop.f32.mrb[0].mxu0
          %v4725 = vadd.f32 %v4676, %v4724
          %v4726 = vpop.f32.mrb[0].mxu0
          %v4727 = vpop.f32.mrb[0].mxu0
          %v4728 = vadd.f32 %v4676, %v4727
          %v4729 = vpop.f32.mrb[0].mxu0
          %4730 = vmatprep.mubr.bf16.mxu0 0
          %4731 = vmatmul.mubr.bf16.gmra.mrb[0].mxu0 %v4616
          %v4732 = vpop.f32.mrb[0].mxu0
          %v4733 = vadd.f32 %v4676, %v4732
          %v4734 = vpop.f32.mrb[0].mxu0
          %v4735 = vpop.f32.mrb[0].mxu0
          %v4736 = vadd.f32 %v4676, %v4735
          %v4737 = vpop.f32.mrb[0].mxu0
          %4738 = vdwg.mxu0
          %v4739 = vpack.c.bf16 %v4575, %v4575
          %v4740 = vpack.c.bf16 %v4578, %v4578
          %v4741 = vpack.c.bf16 %v4583, %v4583
          %v4742 = vpack.c.bf16 %v4586, %v4586
          %v4743 = vpack.c.bf16 %v4653, %v4653
          %v4744 = vpack.c.bf16 %v4656, %v4656
          %v4745 = vpack.c.bf16 %v4661, %v4661
          %v4746 = vpack.c.bf16 %v4664, %v4664
          %v4747 = vpack.c.bf16 %v4725, %v4725
          %v4748 = vpack.c.bf16 %v4728, %v4728
          %v4749 = vpack.c.bf16 %v4733, %v4733
          %v4750 = vpack.c.bf16 %v4736, %v4736
          %vm4751 = vcmask 64512
          %v4753 = vsel %vm4751, %v4739, 0
          %v4756 = vsel %vm4751, %v4743, 0
          %4758 = vmatprep.subr.bf16.mxu0 0
          %4759 = vmatpush1.bf16.xpose.msra.mxu0 %v4756
          %4760 = vmatprep.subr.bf16.mxu0 0
          %4761 = vmatpush1.bf16.xpose.msra.mxu0 0
          %4762 = vmatprep.subr.bf16.mxu0 0
          %4763 = vmatpush1.bf16.xpose.msra.mxu0 0
          %4764 = vmatprep.subr.bf16.mxu0 0
          %4765 = vmatpush1.bf16.xpose.msra.mxu0 0
          %4766 = vmatprep.subr.bf16.mxu0 0
          %4767 = vmatpush1.bf16.xpose.msra.mxu0 0
          %4768 = vmatprep.subr.bf16.mxu0 0
          %4769 = vmatpush1.bf16.xpose.msra.mxu0 0
          %4770 = vmatprep.subr.bf16.mxu0 0
          %4771 = vmatpush1.bf16.xpose.msra.mxu0 0
          %4772 = vmatprep.subr.bf16.mxu0 0
          %4773 = vmatpush1.bf16.xpose.msra.mxu0 0
          %4774 = vmatprep.subr.bf16.mxu0 0
          %4775 = vmatpush1.bf16.xpose.msra.mxu0 0
          %4776 = vmatprep.subr.bf16.mxu0 0
          %4777 = vmatpush1.bf16.xpose.msra.mxu0 0
          %4778 = vmatprep.subr.bf16.mxu0 0
          %4779 = vmatpush1.bf16.xpose.msra.mxu0 0
          %4780 = vmatprep.subr.bf16.mxu0 0
          %4781 = vmatpush1.bf16.xpose.msra.mxu0 0
          %4782 = vmatprep.subr.bf16.mxu0 0
          %4783 = vmatpush1.bf16.xpose.msra.mxu0 0
          %4784 = vmatprep.subr.bf16.mxu0 0
          %4785 = vmatpush1.bf16.xpose.msra.mxu0 0
          %4786 = vmatprep.subr.bf16.mxu0 0
          %4787 = vmatpush1.bf16.xpose.msra.mxu0 0
          %4788 = vmatprep.subr.bf16.mxu0 0
          %4789 = vmatpush1.bf16.xpose.msra.mxu0 0
          %4790 = vmatprep.mubr.bf16.mxu0 0
          %4791 = vmatmul.mubr.bf16.gmra.mrb[0].mxu0 %v4753
          %v4792 = vpop.f32.mrb[0].mxu0
          %v4793 = vadd.f32 %v4493, %v4792
          %v4794 = vpop.f32.mrb[0].mxu0
          %v4795 = vpop.f32.mrb[0].mxu0
          %v4796 = vpop.f32.mrb[0].mxu0
          %4797 = vdwg.mxu0
          %v4799 = vsel %vm4751, %v4740, 0
          %v4802 = vsel %vm4751, %v4744, 0
          %4804 = vmatprep.subr.bf16.mxu0 0
          %4805 = vmatpush1.bf16.xpose.msra.mxu0 %v4802
          %4806 = vmatprep.subr.bf16.mxu0 0
          %4807 = vmatpush1.bf16.xpose.msra.mxu0 0
          %4808 = vmatprep.subr.bf16.mxu0 0
          %4809 = vmatpush1.bf16.xpose.msra.mxu0 0
          %4810 = vmatprep.subr.bf16.mxu0 0
          %4811 = vmatpush1.bf16.xpose.msra.mxu0 0
          %4812 = vmatprep.subr.bf16.mxu0 0
          %4813 = vmatpush1.bf16.xpose.msra.mxu0 0
          %4814 = vmatprep.subr.bf16.mxu0 0
          %4815 = vmatpush1.bf16.xpose.msra.mxu0 0
          %4816 = vmatprep.subr.bf16.mxu0 0
          %4817 = vmatpush1.bf16.xpose.msra.mxu0 0
          %4818 = vmatprep.subr.bf16.mxu0 0
          %4819 = vmatpush1.bf16.xpose.msra.mxu0 0
          %4820 = vmatprep.subr.bf16.mxu0 0
          %4821 = vmatpush1.bf16.xpose.msra.mxu0 0
          %4822 = vmatprep.subr.bf16.mxu0 0
          %4823 = vmatpush1.bf16.xpose.msra.mxu0 0
          %4824 = vmatprep.subr.bf16.mxu0 0
          %4825 = vmatpush1.bf16.xpose.msra.mxu0 0
          %4826 = vmatprep.subr.bf16.mxu0 0
          %4827 = vmatpush1.bf16.xpose.msra.mxu0 0
          %4828 = vmatprep.subr.bf16.mxu0 0
          %4829 = vmatpush1.bf16.xpose.msra.mxu0 0
          %4830 = vmatprep.subr.bf16.mxu0 0
          %4831 = vmatpush1.bf16.xpose.msra.mxu0 0
          %4832 = vmatprep.subr.bf16.mxu0 0
          %4833 = vmatpush1.bf16.xpose.msra.mxu0 0
          %4834 = vmatprep.subr.bf16.mxu0 0
          %4835 = vmatpush1.bf16.xpose.msra.mxu0 0
          %4836 = vmatprep.mubr.bf16.mxu0 0
          %4837 = vmatmul.mubr.bf16.gmra.mrb[0].mxu0 %v4799
          %v4838 = vpop.f32.mrb[0].mxu0
          %v4839 = vadd.f32 %v4497, %v4838
          %v4840 = vpop.f32.mrb[0].mxu0
          %v4841 = vpop.f32.mrb[0].mxu0
          %v4842 = vpop.f32.mrb[0].mxu0
          %4843 = vdwg.mxu0
          %v4845 = vsel %vm4751, %v4741, 0
          %v4848 = vsel %vm4751, %v4745, 0
          %4850 = vmatprep.subr.bf16.mxu0 0
          %4851 = vmatpush1.bf16.xpose.msra.mxu0 %v4848
          %4852 = vmatprep.subr.bf16.mxu0 0
          %4853 = vmatpush1.bf16.xpose.msra.mxu0 0
          %4854 = vmatprep.subr.bf16.mxu0 0
          %4855 = vmatpush1.bf16.xpose.msra.mxu0 0
          %4856 = vmatprep.subr.bf16.mxu0 0
          %4857 = vmatpush1.bf16.xpose.msra.mxu0 0
          %4858 = vmatprep.subr.bf16.mxu0 0
          %4859 = vmatpush1.bf16.xpose.msra.mxu0 0
          %4860 = vmatprep.subr.bf16.mxu0 0
          %4861 = vmatpush1.bf16.xpose.msra.mxu0 0
          %4862 = vmatprep.subr.bf16.mxu0 0
          %4863 = vmatpush1.bf16.xpose.msra.mxu0 0
          %4864 = vmatprep.subr.bf16.mxu0 0
          %4865 = vmatpush1.bf16.xpose.msra.mxu0 0
          %4866 = vmatprep.subr.bf16.mxu0 0
          %4867 = vmatpush1.bf16.xpose.msra.mxu0 0
          %4868 = vmatprep.subr.bf16.mxu0 0
          %4869 = vmatpush1.bf16.xpose.msra.mxu0 0
          %4870 = vmatprep.subr.bf16.mxu0 0
          %4871 = vmatpush1.bf16.xpose.msra.mxu0 0
          %4872 = vmatprep.subr.bf16.mxu0 0
          %4873 = vmatpush1.bf16.xpose.msra.mxu0 0
          %4874 = vmatprep.subr.bf16.mxu0 0
          %4875 = vmatpush1.bf16.xpose.msra.mxu0 0
          %4876 = vmatprep.subr.bf16.mxu0 0
          %4877 = vmatpush1.bf16.xpose.msra.mxu0 0
          %4878 = vmatprep.subr.bf16.mxu0 0
          %4879 = vmatpush1.bf16.xpose.msra.mxu0 0
          %4880 = vmatprep.subr.bf16.mxu0 0
          %4881 = vmatpush1.bf16.xpose.msra.mxu0 0
          %4882 = vmatprep.mubr.bf16.mxu0 0
          %4883 = vmatmul.mubr.bf16.gmra.mrb[0].mxu0 %v4845
          %v4884 = vpop.f32.mrb[0].mxu0
          %v4885 = vadd.f32 %v4501, %v4884
          %v4886 = vpop.f32.mrb[0].mxu0
          %v4887 = vpop.f32.mrb[0].mxu0
          %v4888 = vpop.f32.mrb[0].mxu0
          %4889 = vdwg.mxu0
          %v4891 = vsel %vm4751, %v4742, 0
          %v4894 = vsel %vm4751, %v4746, 0
          %4896 = vmatprep.subr.bf16.mxu0 0
          %4897 = vmatpush1.bf16.xpose.msra.mxu0 %v4894
          %4898 = vmatprep.subr.bf16.mxu0 0
          %4899 = vmatpush1.bf16.xpose.msra.mxu0 0
          %4900 = vmatprep.subr.bf16.mxu0 0
          %4901 = vmatpush1.bf16.xpose.msra.mxu0 0
          %4902 = vmatprep.subr.bf16.mxu0 0
          %4903 = vmatpush1.bf16.xpose.msra.mxu0 0
          %4904 = vmatprep.subr.bf16.mxu0 0
          %4905 = vmatpush1.bf16.xpose.msra.mxu0 0
          %4906 = vmatprep.subr.bf16.mxu0 0
          %4907 = vmatpush1.bf16.xpose.msra.mxu0 0
          %4908 = vmatprep.subr.bf16.mxu0 0
          %4909 = vmatpush1.bf16.xpose.msra.mxu0 0
          %4910 = vmatprep.subr.bf16.mxu0 0
          %4911 = vmatpush1.bf16.xpose.msra.mxu0 0
          %4912 = vmatprep.subr.bf16.mxu0 0
          %4913 = vmatpush1.bf16.xpose.msra.mxu0 0
          %4914 = vmatprep.subr.bf16.mxu0 0
          %4915 = vmatpush1.bf16.xpose.msra.mxu0 0
          %4916 = vmatprep.subr.bf16.mxu0 0
          %4917 = vmatpush1.bf16.xpose.msra.mxu0 0
          %4918 = vmatprep.subr.bf16.mxu0 0
          %4919 = vmatpush1.bf16.xpose.msra.mxu0 0
          %4920 = vmatprep.subr.bf16.mxu0 0
          %4921 = vmatpush1.bf16.xpose.msra.mxu0 0
          %4922 = vmatprep.subr.bf16.mxu0 0
          %4923 = vmatpush1.bf16.xpose.msra.mxu0 0
          %4924 = vmatprep.subr.bf16.mxu0 0
          %4925 = vmatpush1.bf16.xpose.msra.mxu0 0
          %4926 = vmatprep.subr.bf16.mxu0 0
          %4927 = vmatpush1.bf16.xpose.msra.mxu0 0
          %4928 = vmatprep.mubr.bf16.mxu0 0
          %4929 = vmatmul.mubr.bf16.gmra.mrb[0].mxu0 %v4891
          %v4930 = vpop.f32.mrb[0].mxu0
          %v4931 = vadd.f32 %v4505, %v4930
          %v4932 = vpop.f32.mrb[0].mxu0
          %v4933 = vpop.f32.mrb[0].mxu0
          %v4934 = vpop.f32.mrb[0].mxu0
          %4935 = vdwg.mxu0
          %v4936 = vsel %vm4751, %v4793, -inf
          %4937 = vmax.xlane.f32.xlu0 %v4936
          %v4938 = vpop.xlane.xlu0 %4937
          %v4939 = vsel %vm4751, %v4839, -inf
          %4940 = vmax.xlane.f32.xlu0 %v4939
          %v4941 = vpop.xlane.xlu0 %4940
          %v4942 = vsel %vm4751, %v4885, -inf
          %4943 = vmax.xlane.f32.xlu0 %v4942
          %v4944 = vpop.xlane.xlu0 %4943
          %v4945 = vsel %vm4751, %v4931, -inf
          %4946 = vmax.xlane.f32.xlu0 %v4945
          %v4947 = vpop.xlane.xlu0 %4946
          %v4948 = vsub.f32 %v4793, %v4938
          %v4949 = vsub.f32 %v4839, %v4941
          %v4950 = vsub.f32 %v4885, %v4944
          %v4951 = vsub.f32 %v4931, %v4947
          %v4952 = vmul.f32 %v4948, 1.442695
          %v4953 = vpow.pop %v4952
          %v4954 = vmul.f32 %v4949, 1.442695
          %v4955 = vpow.pop %v4954
          %v4956 = vmul.f32 %v4950, 1.442695
          %v4957 = vpow.pop %v4956
          %v4958 = vmul.f32 %v4951, 1.442695
          %v4959 = vpow.pop %v4958
          %v4960 = vsel %vm4751, %v4953, 0.0
          %4961 = vadd.xlane.f32.xlu0 %v4960
          %v4962 = vpop.xlane.xlu0 %4961
          %v4963 = vsel %vm4751, %v4955, 0.0
          %4964 = vadd.xlane.f32.xlu0 %v4963
          %v4965 = vpop.xlane.xlu0 %4964
          %v4966 = vsel %vm4751, %v4957, 0.0
          %4967 = vadd.xlane.f32.xlu0 %v4966
          %v4968 = vpop.xlane.xlu0 %4967
          %v4969 = vsel %vm4751, %v4959, 0.0
          %4970 = vadd.xlane.f32.xlu0 %v4969
          %v4971 = vpop.xlane.xlu0 %4970
          %v4972 = vpack.c.bf16 %v4953, %v4953
          %v4973 = vpack.c.bf16 %v4955, %v4955
          %v4974 = vpack.c.bf16 %v4957, %v4957
          %v4975 = vpack.c.bf16 %v4959, %v4959
          %v4977 = vsel %vm4751, %v4972, 0
          %vm4979 = vcmask 1043456
          %v4981 = vsel %vm4979, %v4747, 0
          %4983 = vmatprep.subr.bf16.mxu0 0
          %4984 = vmatpush1.bf16.msra.mxu0 %v4981
          %4985 = vmatprep.subr.bf16.mxu0 0
          %4986 = vmatpush1.bf16.msra.mxu0 0
          %4987 = vmatprep.subr.bf16.mxu0 0
          %4988 = vmatpush1.bf16.msra.mxu0 0
          %4989 = vmatprep.subr.bf16.mxu0 0
          %4990 = vmatpush1.bf16.msra.mxu0 0
          %4991 = vmatprep.subr.bf16.mxu0 0
          %4992 = vmatpush1.bf16.msra.mxu0 0
          %4993 = vmatprep.subr.bf16.mxu0 0
          %4994 = vmatpush1.bf16.msra.mxu0 0
          %4995 = vmatprep.subr.bf16.mxu0 0
          %4996 = vmatpush1.bf16.msra.mxu0 0
          %4997 = vmatprep.subr.bf16.mxu0 0
          %4998 = vmatpush1.bf16.msra.mxu0 0
          %4999 = vmatprep.subr.bf16.mxu0 0
          %5000 = vmatpush1.bf16.msra.mxu0 0
          %5001 = vmatprep.subr.bf16.mxu0 0
          %5002 = vmatpush1.bf16.msra.mxu0 0
          %5003 = vmatprep.subr.bf16.mxu0 0
          %5004 = vmatpush1.bf16.msra.mxu0 0
          %5005 = vmatprep.subr.bf16.mxu0 0
          %5006 = vmatpush1.bf16.msra.mxu0 0
          %5007 = vmatprep.subr.bf16.mxu0 0
          %5008 = vmatpush1.bf16.msra.mxu0 0
          %5009 = vmatprep.subr.bf16.mxu0 0
          %5010 = vmatpush1.bf16.msra.mxu0 0
          %5011 = vmatprep.subr.bf16.mxu0 0
          %5012 = vmatpush1.bf16.msra.mxu0 0
          %5013 = vmatprep.subr.bf16.mxu0 0
          %5014 = vmatpush1.bf16.msra.mxu0 0
          %5015 = vmatprep.mubr.bf16.mxu0 0
          %5016 = vmatmul.mubr.bf16.gmra.mrb[0].mxu0 %v4977
          %v5017 = vpop.f32.mrb[0].mxu0
          %v5018 = vadd.f32 0.0, %v5017
          %v5019 = vpop.f32.mrb[0].mxu0
          %v5020 = vpop.f32.mrb[0].mxu0
          %v5021 = vpop.f32.mrb[0].mxu0
          %5022 = vdwg.mxu0
          %v5024 = vsel %vm4751, %v4973, 0
          %v5027 = vsel %vm4979, %v4748, 0
          %5029 = vmatprep.subr.bf16.mxu0 0
          %5030 = vmatpush1.bf16.msra.mxu0 %v5027
          %5031 = vmatprep.subr.bf16.mxu0 0
          %5032 = vmatpush1.bf16.msra.mxu0 0
          %5033 = vmatprep.subr.bf16.mxu0 0
          %5034 = vmatpush1.bf16.msra.mxu0 0
          %5035 = vmatprep.subr.bf16.mxu0 0
          %5036 = vmatpush1.bf16.msra.mxu0 0
          %5037 = vmatprep.subr.bf16.mxu0 0
          %5038 = vmatpush1.bf16.msra.mxu0 0
          %5039 = vmatprep.subr.bf16.mxu0 0
          %5040 = vmatpush1.bf16.msra.mxu0 0
          %5041 = vmatprep.subr.bf16.mxu0 0
          %5042 = vmatpush1.bf16.msra.mxu0 0
          %5043 = vmatprep.subr.bf16.mxu0 0
          %5044 = vmatpush1.bf16.msra.mxu0 0
          %5045 = vmatprep.subr.bf16.mxu0 0
          %5046 = vmatpush1.bf16.msra.mxu0 0
          %5047 = vmatprep.subr.bf16.mxu0 0
          %5048 = vmatpush1.bf16.msra.mxu0 0
          %5049 = vmatprep.subr.bf16.mxu0 0
          %5050 = vmatpush1.bf16.msra.mxu0 0
          %5051 = vmatprep.subr.bf16.mxu0 0
          %5052 = vmatpush1.bf16.msra.mxu0 0
          %5053 = vmatprep.subr.bf16.mxu0 0
          %5054 = vmatpush1.bf16.msra.mxu0 0
          %5055 = vmatprep.subr.bf16.mxu0 0
          %5056 = vmatpush1.bf16.msra.mxu0 0
          %5057 = vmatprep.subr.bf16.mxu0 0
          %5058 = vmatpush1.bf16.msra.mxu0 0
          %5059 = vmatprep.subr.bf16.mxu0 0
          %5060 = vmatpush1.bf16.msra.mxu0 0
          %5061 = vmatprep.mubr.bf16.mxu0 0
          %5062 = vmatmul.mubr.bf16.gmra.mrb[0].mxu0 %v5024
          %v5063 = vpop.f32.mrb[0].mxu0
          %v5064 = vadd.f32 0.0, %v5063
          %v5065 = vpop.f32.mrb[0].mxu0
          %v5066 = vpop.f32.mrb[0].mxu0
          %v5067 = vpop.f32.mrb[0].mxu0
          %5068 = vdwg.mxu0
          %v5070 = vsel %vm4751, %v4974, 0
          %v5073 = vsel %vm4979, %v4749, 0
          %5075 = vmatprep.subr.bf16.mxu0 0
          %5076 = vmatpush1.bf16.msra.mxu0 %v5073
          %5077 = vmatprep.subr.bf16.mxu0 0
          %5078 = vmatpush1.bf16.msra.mxu0 0
          %5079 = vmatprep.subr.bf16.mxu0 0
          %5080 = vmatpush1.bf16.msra.mxu0 0
          %5081 = vmatprep.subr.bf16.mxu0 0
          %5082 = vmatpush1.bf16.msra.mxu0 0
          %5083 = vmatprep.subr.bf16.mxu0 0
          %5084 = vmatpush1.bf16.msra.mxu0 0
          %5085 = vmatprep.subr.bf16.mxu0 0
          %5086 = vmatpush1.bf16.msra.mxu0 0
          %5087 = vmatprep.subr.bf16.mxu0 0
          %5088 = vmatpush1.bf16.msra.mxu0 0
          %5089 = vmatprep.subr.bf16.mxu0 0
          %5090 = vmatpush1.bf16.msra.mxu0 0
          %5091 = vmatprep.subr.bf16.mxu0 0
          %5092 = vmatpush1.bf16.msra.mxu0 0
          %5093 = vmatprep.subr.bf16.mxu0 0
          %5094 = vmatpush1.bf16.msra.mxu0 0
          %5095 = vmatprep.subr.bf16.mxu0 0
          %5096 = vmatpush1.bf16.msra.mxu0 0
          %5097 = vmatprep.subr.bf16.mxu0 0
          %5098 = vmatpush1.bf16.msra.mxu0 0
          %5099 = vmatprep.subr.bf16.mxu0 0
          %5100 = vmatpush1.bf16.msra.mxu0 0
          %5101 = vmatprep.subr.bf16.mxu0 0
          %5102 = vmatpush1.bf16.msra.mxu0 0
          %5103 = vmatprep.subr.bf16.mxu0 0
          %5104 = vmatpush1.bf16.msra.mxu0 0
          %5105 = vmatprep.subr.bf16.mxu0 0
          %5106 = vmatpush1.bf16.msra.mxu0 0
          %5107 = vmatprep.mubr.bf16.mxu0 0
          %5108 = vmatmul.mubr.bf16.gmra.mrb[0].mxu0 %v5070
          %v5109 = vpop.f32.mrb[0].mxu0
          %v5110 = vadd.f32 0.0, %v5109
          %v5111 = vpop.f32.mrb[0].mxu0
          %v5112 = vpop.f32.mrb[0].mxu0
          %v5113 = vpop.f32.mrb[0].mxu0
          %5114 = vdwg.mxu0
          %v5116 = vsel %vm4751, %v4975, 0
          %v5119 = vsel %vm4979, %v4750, 0
          %5121 = vmatprep.subr.bf16.mxu0 0
          %5122 = vmatpush1.bf16.msra.mxu0 %v5119
          %5123 = vmatprep.subr.bf16.mxu0 0
          %5124 = vmatpush1.bf16.msra.mxu0 0
          %5125 = vmatprep.subr.bf16.mxu0 0
          %5126 = vmatpush1.bf16.msra.mxu0 0
          %5127 = vmatprep.subr.bf16.mxu0 0
          %5128 = vmatpush1.bf16.msra.mxu0 0
          %5129 = vmatprep.subr.bf16.mxu0 0
          %5130 = vmatpush1.bf16.msra.mxu0 0
          %5131 = vmatprep.subr.bf16.mxu0 0
          %5132 = vmatpush1.bf16.msra.mxu0 0
          %5133 = vmatprep.subr.bf16.mxu0 0
          %5134 = vmatpush1.bf16.msra.mxu0 0
          %5135 = vmatprep.subr.bf16.mxu0 0
          %5136 = vmatpush1.bf16.msra.mxu0 0
          %5137 = vmatprep.subr.bf16.mxu0 0
          %5138 = vmatpush1.bf16.msra.mxu0 0
          %5139 = vmatprep.subr.bf16.mxu0 0
          %5140 = vmatpush1.bf16.msra.mxu0 0
          %5141 = vmatprep.subr.bf16.mxu0 0
          %5142 = vmatpush1.bf16.msra.mxu0 0
          %5143 = vmatprep.subr.bf16.mxu0 0
          %5144 = vmatpush1.bf16.msra.mxu0 0
          %5145 = vmatprep.subr.bf16.mxu0 0
          %5146 = vmatpush1.bf16.msra.mxu0 0
          %5147 = vmatprep.subr.bf16.mxu0 0
          %5148 = vmatpush1.bf16.msra.mxu0 0
          %5149 = vmatprep.subr.bf16.mxu0 0
          %5150 = vmatpush1.bf16.msra.mxu0 0
          %5151 = vmatprep.subr.bf16.mxu0 0
          %5152 = vmatpush1.bf16.msra.mxu0 0
          %5153 = vmatprep.mubr.bf16.mxu0 0
          %5154 = vmatmul.mubr.bf16.gmra.mrb[0].mxu0 %v5116
          %v5155 = vpop.f32.mrb[0].mxu0
          %v5156 = vadd.f32 0.0, %v5155
          %v5157 = vpop.f32.mrb[0].mxu0
          %v5158 = vpop.f32.mrb[0].mxu0
          %v5159 = vpop.f32.mrb[0].mxu0
          %5160 = vdwg.mxu0
          %v5161 = vrcp.pop %v4962
          %v5162 = vrcp.pop %v4965
          %v5163 = vrcp.pop %v4968
          %v5164 = vrcp.pop %v4971
          %v5165 = vmul.f32 %v5018, %v5161
          %v5166 = vmul.f32 %v5064, %v5162
          %v5167 = vmul.f32 %v5110, %v5163
          %v5168 = vmul.f32 %v5156, %v5164
          %v5169 = vpack.c.bf16 %v5166, %v5165
          %v5170 = vpack.c.bf16 %v5168, %v5167
          %v5171 = vld [vmem:[%s1086] sm:$0xf]
          %s5172 = scalar_lea.vmem %s1035, 16
          %v5173 = vld [vmem:[%s5172] sm:$0xf]
          %v5174 = vld [vmem:[%s5172 + $0x4] sm:$0xf]
          %v5175 = vld [vmem:[%s5172 + $0x8] sm:$0xf]
          %v5176 = vld [vmem:[%s5172 + $0xc] sm:$0xf]
          %s5177 = scalar_lea.vmem %s1043, 1
          %v5178 = vld [vmem:[%s5177] sm:$0x1]
          %v5180 = vlaneseq
          %v5181 = vshrl.u32 %v5180, 7
          %v5182 = vsub.s32 0, %v5181
          %v5183 = vrot.slane %v5178, %v5182
          %v5189 = vunpack.c.l.b16 %v5173
          %v5190 = vunpack.c.l.b16 %v5174
          %v5191 = vunpack.c.l.b16 %v5175
          %v5192 = vunpack.c.l.b16 %v5176
          %v5193 = vpack.c.b16 %v5190, %v5189
          %v5194 = vpack.c.b16 %v5192, %v5191
          %5197 = vmatprep.subr.bf16.mxu0 0
          %5198 = vmatpush1.bf16.msra.mxu0 %v5193
          %5199 = vmatprep.subr.bf16.mxu0 0
          %5200 = vmatpush1.bf16.msra.mxu0 %v5194
          %5201 = vmatprep.subr.bf16.mxu0 0
          %5202 = vmatpush1.bf16.msra.mxu0 0
          %5203 = vmatprep.subr.bf16.mxu0 0
          %5204 = vmatpush1.bf16.msra.mxu0 0
          %5205 = vmatprep.subr.bf16.mxu0 0
          %5206 = vmatpush1.bf16.msra.mxu0 0
          %5207 = vmatprep.subr.bf16.mxu0 0
          %5208 = vmatpush1.bf16.msra.mxu0 0
          %5209 = vmatprep.subr.bf16.mxu0 0
          %5210 = vmatpush1.bf16.msra.mxu0 0
          %5211 = vmatprep.subr.bf16.mxu0 0
          %5212 = vmatpush1.bf16.msra.mxu0 0
          %5213 = vmatprep.subr.bf16.mxu0 0
          %5214 = vmatpush1.bf16.msra.mxu0 0
          %5215 = vmatprep.subr.bf16.mxu0 0
          %5216 = vmatpush1.bf16.msra.mxu0 0
          %5217 = vmatprep.subr.bf16.mxu0 0
          %5218 = vmatpush1.bf16.msra.mxu0 0
          %5219 = vmatprep.subr.bf16.mxu0 0
          %5220 = vmatpush1.bf16.msra.mxu0 0
          %5221 = vmatprep.subr.bf16.mxu0 0
          %5222 = vmatpush1.bf16.msra.mxu0 0
          %5223 = vmatprep.subr.bf16.mxu0 0
          %5224 = vmatpush1.bf16.msra.mxu0 0
          %5225 = vmatprep.subr.bf16.mxu0 0
          %5226 = vmatpush1.bf16.msra.mxu0 0
          %5227 = vmatprep.subr.bf16.mxu0 0
          %5228 = vmatpush1.bf16.msra.mxu0 0
          %5229 = vmatprep.mubr.bf16.mxu0 0
          %5230 = vmatmul.mubr.bf16.gmra.mrb[0].mxu0 %v4535
          %v5231 = vpop.f32.mrb[0].mxu0
          %v5232 = vadd.f32 %v5183, %v5231
          %v5233 = vpop.f32.mrb[0].mxu0
          %v5234 = vpop.f32.mrb[0].mxu0
          %v5235 = vadd.f32 %v5183, %v5234
          %v5236 = vpop.f32.mrb[0].mxu0
          %5237 = vmatprep.mubr.bf16.mxu0 0
          %5238 = vmatmul.mubr.bf16.gmra.mrb[0].mxu0 %v4538
          %v5239 = vpop.f32.mrb[0].mxu0
          %v5240 = vadd.f32 %v5183, %v5239
          %v5241 = vpop.f32.mrb[0].mxu0
          %v5242 = vpop.f32.mrb[0].mxu0
          %v5243 = vadd.f32 %v5183, %v5242
          %v5244 = vpop.f32.mrb[0].mxu0
          %5245 = vdwg.mxu0
          %s5246 = scalar_lea.vmem %s1052, 16
          %v5247 = vld [vmem:[%s5246] sm:$0xf]
          %v5248 = vld [vmem:[%s5246 + $0x4] sm:$0xf]
          %v5249 = vld [vmem:[%s5246 + $0x8] sm:$0xf]
          %v5250 = vld [vmem:[%s5246 + $0xc] sm:$0xf]
          %s5251 = scalar_lea.vmem %s1060, 1
          %v5252 = vld [vmem:[%s5251] sm:$0x1]
          %v5254 = vlaneseq
          %v5255 = vshrl.u32 %v5254, 7
          %v5256 = vsub.s32 0, %v5255
          %v5257 = vrot.slane %v5252, %v5256
          %v5263 = vunpack.c.l.b16 %v5247
          %v5264 = vunpack.c.l.b16 %v5248
          %v5265 = vunpack.c.l.b16 %v5249
          %v5266 = vunpack.c.l.b16 %v5250
          %v5267 = vpack.c.b16 %v5264, %v5263
          %v5268 = vpack.c.b16 %v5266, %v5265
          %5271 = vmatprep.subr.bf16.mxu0 0
          %5272 = vmatpush1.bf16.msra.mxu0 %v5267
          %5273 = vmatprep.subr.bf16.mxu0 0
          %5274 = vmatpush1.bf16.msra.mxu0 %v5268
          %5275 = vmatprep.subr.bf16.mxu0 0
          %5276 = vmatpush1.bf16.msra.mxu0 0
          %5277 = vmatprep.subr.bf16.mxu0 0
          %5278 = vmatpush1.bf16.msra.mxu0 0
          %5279 = vmatprep.subr.bf16.mxu0 0
          %5280 = vmatpush1.bf16.msra.mxu0 0
          %5281 = vmatprep.subr.bf16.mxu0 0
          %5282 = vmatpush1.bf16.msra.mxu0 0
          %5283 = vmatprep.subr.bf16.mxu0 0
          %5284 = vmatpush1.bf16.msra.mxu0 0
          %5285 = vmatprep.subr.bf16.mxu0 0
          %5286 = vmatpush1.bf16.msra.mxu0 0
          %5287 = vmatprep.subr.bf16.mxu0 0
          %5288 = vmatpush1.bf16.msra.mxu0 0
          %5289 = vmatprep.subr.bf16.mxu0 0
          %5290 = vmatpush1.bf16.msra.mxu0 0
          %5291 = vmatprep.subr.bf16.mxu0 0
          %5292 = vmatpush1.bf16.msra.mxu0 0
          %5293 = vmatprep.subr.bf16.mxu0 0
          %5294 = vmatpush1.bf16.msra.mxu0 0
          %5295 = vmatprep.subr.bf16.mxu0 0
          %5296 = vmatpush1.bf16.msra.mxu0 0
          %5297 = vmatprep.subr.bf16.mxu0 0
          %5298 = vmatpush1.bf16.msra.mxu0 0
          %5299 = vmatprep.subr.bf16.mxu0 0
          %5300 = vmatpush1.bf16.msra.mxu0 0
          %5301 = vmatprep.subr.bf16.mxu0 0
          %5302 = vmatpush1.bf16.msra.mxu0 0
          %5303 = vmatprep.mubr.bf16.mxu0 0
          %5304 = vmatmul.mubr.bf16.gmra.mrb[0].mxu0 %v4613
          %v5305 = vpop.f32.mrb[0].mxu0
          %v5306 = vadd.f32 %v5257, %v5305
          %v5307 = vpop.f32.mrb[0].mxu0
          %v5308 = vpop.f32.mrb[0].mxu0
          %v5309 = vadd.f32 %v5257, %v5308
          %v5310 = vpop.f32.mrb[0].mxu0
          %5311 = vmatprep.mubr.bf16.mxu0 0
          %5312 = vmatmul.mubr.bf16.gmra.mrb[0].mxu0 %v4616
          %v5313 = vpop.f32.mrb[0].mxu0
          %v5314 = vadd.f32 %v5257, %v5313
          %v5315 = vpop.f32.mrb[0].mxu0
          %v5316 = vpop.f32.mrb[0].mxu0
          %v5317 = vadd.f32 %v5257, %v5316
          %v5318 = vpop.f32.mrb[0].mxu0
          %5319 = vdwg.mxu0
          %s5320 = scalar_lea.vmem %s1069, 16
          %v5321 = vld [vmem:[%s5320] sm:$0xf]
          %v5322 = vld [vmem:[%s5320 + $0x4] sm:$0xf]
          %v5323 = vld [vmem:[%s5320 + $0x8] sm:$0xf]
          %v5324 = vld [vmem:[%s5320 + $0xc] sm:$0xf]
          %s5325 = scalar_lea.vmem %s1077, 1
          %v5326 = vld [vmem:[%s5325] sm:$0x1]
          %v5328 = vlaneseq
          %v5329 = vshrl.u32 %v5328, 7
          %v5330 = vsub.s32 0, %v5329
          %v5331 = vrot.slane %v5326, %v5330
          %v5337 = vunpack.c.l.b16 %v5321
          %v5338 = vunpack.c.l.b16 %v5322
          %v5339 = vunpack.c.l.b16 %v5323
          %v5340 = vunpack.c.l.b16 %v5324
          %v5341 = vpack.c.b16 %v5338, %v5337
          %v5342 = vpack.c.b16 %v5340, %v5339
          %5345 = vmatprep.subr.bf16.mxu0 0
          %5346 = vmatpush1.bf16.msra.mxu0 %v5341
          %5347 = vmatprep.subr.bf16.mxu0 0
          %5348 = vmatpush1.bf16.msra.mxu0 %v5342
          %5349 = vmatprep.subr.bf16.mxu0 0
          %5350 = vmatpush1.bf16.msra.mxu0 0
          %5351 = vmatprep.subr.bf16.mxu0 0
          %5352 = vmatpush1.bf16.msra.mxu0 0
          %5353 = vmatprep.subr.bf16.mxu0 0
          %5354 = vmatpush1.bf16.msra.mxu0 0
          %5355 = vmatprep.subr.bf16.mxu0 0
          %5356 = vmatpush1.bf16.msra.mxu0 0
          %5357 = vmatprep.subr.bf16.mxu0 0
          %5358 = vmatpush1.bf16.msra.mxu0 0
          %5359 = vmatprep.subr.bf16.mxu0 0
          %5360 = vmatpush1.bf16.msra.mxu0 0
          %5361 = vmatprep.subr.bf16.mxu0 0
          %5362 = vmatpush1.bf16.msra.mxu0 0
          %5363 = vmatprep.subr.bf16.mxu0 0
          %5364 = vmatpush1.bf16.msra.mxu0 0
          %5365 = vmatprep.subr.bf16.mxu0 0
          %5366 = vmatpush1.bf16.msra.mxu0 0
          %5367 = vmatprep.subr.bf16.mxu0 0
          %5368 = vmatpush1.bf16.msra.mxu0 0
          %5369 = vmatprep.subr.bf16.mxu0 0
          %5370 = vmatpush1.bf16.msra.mxu0 0
          %5371 = vmatprep.subr.bf16.mxu0 0
          %5372 = vmatpush1.bf16.msra.mxu0 0
          %5373 = vmatprep.subr.bf16.mxu0 0
          %5374 = vmatpush1.bf16.msra.mxu0 0
          %5375 = vmatprep.subr.bf16.mxu0 0
          %5376 = vmatpush1.bf16.msra.mxu0 0
          %5377 = vmatprep.mubr.bf16.mxu0 0
          %5378 = vmatmul.mubr.bf16.gmra.mrb[0].mxu0 %v4613
          %v5379 = vpop.f32.mrb[0].mxu0
          %v5380 = vadd.f32 %v5331, %v5379
          %v5381 = vpop.f32.mrb[0].mxu0
          %v5382 = vpop.f32.mrb[0].mxu0
          %v5383 = vadd.f32 %v5331, %v5382
          %v5384 = vpop.f32.mrb[0].mxu0
          %5385 = vmatprep.mubr.bf16.mxu0 0
          %5386 = vmatmul.mubr.bf16.gmra.mrb[0].mxu0 %v4616
          %v5387 = vpop.f32.mrb[0].mxu0
          %v5388 = vadd.f32 %v5331, %v5387
          %v5389 = vpop.f32.mrb[0].mxu0
          %v5390 = vpop.f32.mrb[0].mxu0
          %v5391 = vadd.f32 %v5331, %v5390
          %v5392 = vpop.f32.mrb[0].mxu0
          %5393 = vdwg.mxu0
          %v5394 = vpack.c.bf16 %v5232, %v5232
          %v5395 = vpack.c.bf16 %v5235, %v5235
          %v5396 = vpack.c.bf16 %v5240, %v5240
          %v5397 = vpack.c.bf16 %v5243, %v5243
          %v5398 = vpack.c.bf16 %v5306, %v5306
          %v5399 = vpack.c.bf16 %v5309, %v5309
          %v5400 = vpack.c.bf16 %v5314, %v5314
          %v5401 = vpack.c.bf16 %v5317, %v5317
          %v5402 = vpack.c.bf16 %v5380, %v5380
          %v5403 = vpack.c.bf16 %v5383, %v5383
          %v5404 = vpack.c.bf16 %v5388, %v5388
          %v5405 = vpack.c.bf16 %v5391, %v5391
          %v5407 = vsel %vm4751, %v5394, 0
          %v5410 = vsel %vm4751, %v5398, 0
          %5412 = vmatprep.subr.bf16.mxu0 0
          %5413 = vmatpush1.bf16.xpose.msra.mxu0 %v5410
          %5414 = vmatprep.subr.bf16.mxu0 0
          %5415 = vmatpush1.bf16.xpose.msra.mxu0 0
          %5416 = vmatprep.subr.bf16.mxu0 0
          %5417 = vmatpush1.bf16.xpose.msra.mxu0 0
          %5418 = vmatprep.subr.bf16.mxu0 0
          %5419 = vmatpush1.bf16.xpose.msra.mxu0 0
          %5420 = vmatprep.subr.bf16.mxu0 0
          %5421 = vmatpush1.bf16.xpose.msra.mxu0 0
          %5422 = vmatprep.subr.bf16.mxu0 0
          %5423 = vmatpush1.bf16.xpose.msra.mxu0 0
          %5424 = vmatprep.subr.bf16.mxu0 0
          %5425 = vmatpush1.bf16.xpose.msra.mxu0 0
          %5426 = vmatprep.subr.bf16.mxu0 0
          %5427 = vmatpush1.bf16.xpose.msra.mxu0 0
          %5428 = vmatprep.subr.bf16.mxu0 0
          %5429 = vmatpush1.bf16.xpose.msra.mxu0 0
          %5430 = vmatprep.subr.bf16.mxu0 0
          %5431 = vmatpush1.bf16.xpose.msra.mxu0 0
          %5432 = vmatprep.subr.bf16.mxu0 0
          %5433 = vmatpush1.bf16.xpose.msra.mxu0 0
          %5434 = vmatprep.subr.bf16.mxu0 0
          %5435 = vmatpush1.bf16.xpose.msra.mxu0 0
          %5436 = vmatprep.subr.bf16.mxu0 0
          %5437 = vmatpush1.bf16.xpose.msra.mxu0 0
          %5438 = vmatprep.subr.bf16.mxu0 0
          %5439 = vmatpush1.bf16.xpose.msra.mxu0 0
          %5440 = vmatprep.subr.bf16.mxu0 0
          %5441 = vmatpush1.bf16.xpose.msra.mxu0 0
          %5442 = vmatprep.subr.bf16.mxu0 0
          %5443 = vmatpush1.bf16.xpose.msra.mxu0 0
          %5444 = vmatprep.mubr.bf16.mxu0 0
          %5445 = vmatmul.mubr.bf16.gmra.mrb[0].mxu0 %v5407
          %v5446 = vpop.f32.mrb[0].mxu0
          %v5447 = vadd.f32 %v4493, %v5446
          %v5448 = vpop.f32.mrb[0].mxu0
          %v5449 = vpop.f32.mrb[0].mxu0
          %v5450 = vpop.f32.mrb[0].mxu0
          %5451 = vdwg.mxu0
          %v5453 = vsel %vm4751, %v5395, 0
          %v5456 = vsel %vm4751, %v5399, 0
          %5458 = vmatprep.subr.bf16.mxu0 0
          %5459 = vmatpush1.bf16.xpose.msra.mxu0 %v5456
          %5460 = vmatprep.subr.bf16.mxu0 0
          %5461 = vmatpush1.bf16.xpose.msra.mxu0 0
          %5462 = vmatprep.subr.bf16.mxu0 0
          %5463 = vmatpush1.bf16.xpose.msra.mxu0 0
          %5464 = vmatprep.subr.bf16.mxu0 0
          %5465 = vmatpush1.bf16.xpose.msra.mxu0 0
          %5466 = vmatprep.subr.bf16.mxu0 0
          %5467 = vmatpush1.bf16.xpose.msra.mxu0 0
          %5468 = vmatprep.subr.bf16.mxu0 0
          %5469 = vmatpush1.bf16.xpose.msra.mxu0 0
          %5470 = vmatprep.subr.bf16.mxu0 0
          %5471 = vmatpush1.bf16.xpose.msra.mxu0 0
          %5472 = vmatprep.subr.bf16.mxu0 0
          %5473 = vmatpush1.bf16.xpose.msra.mxu0 0
          %5474 = vmatprep.subr.bf16.mxu0 0
          %5475 = vmatpush1.bf16.xpose.msra.mxu0 0
          %5476 = vmatprep.subr.bf16.mxu0 0
          %5477 = vmatpush1.bf16.xpose.msra.mxu0 0
          %5478 = vmatprep.subr.bf16.mxu0 0
          %5479 = vmatpush1.bf16.xpose.msra.mxu0 0
          %5480 = vmatprep.subr.bf16.mxu0 0
          %5481 = vmatpush1.bf16.xpose.msra.mxu0 0
          %5482 = vmatprep.subr.bf16.mxu0 0
          %5483 = vmatpush1.bf16.xpose.msra.mxu0 0
          %5484 = vmatprep.subr.bf16.mxu0 0
          %5485 = vmatpush1.bf16.xpose.msra.mxu0 0
          %5486 = vmatprep.subr.bf16.mxu0 0
          %5487 = vmatpush1.bf16.xpose.msra.mxu0 0
          %5488 = vmatprep.subr.bf16.mxu0 0
          %5489 = vmatpush1.bf16.xpose.msra.mxu0 0
          %5490 = vmatprep.mubr.bf16.mxu0 0
          %5491 = vmatmul.mubr.bf16.gmra.mrb[0].mxu0 %v5453
          %v5492 = vpop.f32.mrb[0].mxu0
          %v5493 = vadd.f32 %v4497, %v5492
          %v5494 = vpop.f32.mrb[0].mxu0
          %v5495 = vpop.f32.mrb[0].mxu0
          %v5496 = vpop.f32.mrb[0].mxu0
          %5497 = vdwg.mxu0
          %v5499 = vsel %vm4751, %v5396, 0
          %v5502 = vsel %vm4751, %v5400, 0
          %5504 = vmatprep.subr.bf16.mxu0 0
          %5505 = vmatpush1.bf16.xpose.msra.mxu0 %v5502
          %5506 = vmatprep.subr.bf16.mxu0 0
          %5507 = vmatpush1.bf16.xpose.msra.mxu0 0
          %5508 = vmatprep.subr.bf16.mxu0 0
          %5509 = vmatpush1.bf16.xpose.msra.mxu0 0
          %5510 = vmatprep.subr.bf16.mxu0 0
          %5511 = vmatpush1.bf16.xpose.msra.mxu0 0
          %5512 = vmatprep.subr.bf16.mxu0 0
          %5513 = vmatpush1.bf16.xpose.msra.mxu0 0
          %5514 = vmatprep.subr.bf16.mxu0 0
          %5515 = vmatpush1.bf16.xpose.msra.mxu0 0
          %5516 = vmatprep.subr.bf16.mxu0 0
          %5517 = vmatpush1.bf16.xpose.msra.mxu0 0
          %5518 = vmatprep.subr.bf16.mxu0 0
          %5519 = vmatpush1.bf16.xpose.msra.mxu0 0
          %5520 = vmatprep.subr.bf16.mxu0 0
          %5521 = vmatpush1.bf16.xpose.msra.mxu0 0
          %5522 = vmatprep.subr.bf16.mxu0 0
          %5523 = vmatpush1.bf16.xpose.msra.mxu0 0
          %5524 = vmatprep.subr.bf16.mxu0 0
          %5525 = vmatpush1.bf16.xpose.msra.mxu0 0
          %5526 = vmatprep.subr.bf16.mxu0 0
          %5527 = vmatpush1.bf16.xpose.msra.mxu0 0
          %5528 = vmatprep.subr.bf16.mxu0 0
          %5529 = vmatpush1.bf16.xpose.msra.mxu0 0
          %5530 = vmatprep.subr.bf16.mxu0 0
          %5531 = vmatpush1.bf16.xpose.msra.mxu0 0
          %5532 = vmatprep.subr.bf16.mxu0 0
          %5533 = vmatpush1.bf16.xpose.msra.mxu0 0
          %5534 = vmatprep.subr.bf16.mxu0 0
          %5535 = vmatpush1.bf16.xpose.msra.mxu0 0
          %5536 = vmatprep.mubr.bf16.mxu0 0
          %5537 = vmatmul.mubr.bf16.gmra.mrb[0].mxu0 %v5499
          %v5538 = vpop.f32.mrb[0].mxu0
          %v5539 = vadd.f32 %v4501, %v5538
          %v5540 = vpop.f32.mrb[0].mxu0
          %v5541 = vpop.f32.mrb[0].mxu0
          %v5542 = vpop.f32.mrb[0].mxu0
          %5543 = vdwg.mxu0
          %v5545 = vsel %vm4751, %v5397, 0
          %v5548 = vsel %vm4751, %v5401, 0
          %5550 = vmatprep.subr.bf16.mxu0 0
          %5551 = vmatpush1.bf16.xpose.msra.mxu0 %v5548
          %5552 = vmatprep.subr.bf16.mxu0 0
          %5553 = vmatpush1.bf16.xpose.msra.mxu0 0
          %5554 = vmatprep.subr.bf16.mxu0 0
          %5555 = vmatpush1.bf16.xpose.msra.mxu0 0
          %5556 = vmatprep.subr.bf16.mxu0 0
          %5557 = vmatpush1.bf16.xpose.msra.mxu0 0
          %5558 = vmatprep.subr.bf16.mxu0 0
          %5559 = vmatpush1.bf16.xpose.msra.mxu0 0
          %5560 = vmatprep.subr.bf16.mxu0 0
          %5561 = vmatpush1.bf16.xpose.msra.mxu0 0
          %5562 = vmatprep.subr.bf16.mxu0 0
          %5563 = vmatpush1.bf16.xpose.msra.mxu0 0
          %5564 = vmatprep.subr.bf16.mxu0 0
          %5565 = vmatpush1.bf16.xpose.msra.mxu0 0
          %5566 = vmatprep.subr.bf16.mxu0 0
          %5567 = vmatpush1.bf16.xpose.msra.mxu0 0
          %5568 = vmatprep.subr.bf16.mxu0 0
          %5569 = vmatpush1.bf16.xpose.msra.mxu0 0
          %5570 = vmatprep.subr.bf16.mxu0 0
          %5571 = vmatpush1.bf16.xpose.msra.mxu0 0
          %5572 = vmatprep.subr.bf16.mxu0 0
          %5573 = vmatpush1.bf16.xpose.msra.mxu0 0
          %5574 = vmatprep.subr.bf16.mxu0 0
          %5575 = vmatpush1.bf16.xpose.msra.mxu0 0
          %5576 = vmatprep.subr.bf16.mxu0 0
          %5577 = vmatpush1.bf16.xpose.msra.mxu0 0
          %5578 = vmatprep.subr.bf16.mxu0 0
          %5579 = vmatpush1.bf16.xpose.msra.mxu0 0
          %5580 = vmatprep.subr.bf16.mxu0 0
          %5581 = vmatpush1.bf16.xpose.msra.mxu0 0
          %5582 = vmatprep.mubr.bf16.mxu0 0
          %5583 = vmatmul.mubr.bf16.gmra.mrb[0].mxu0 %v5545
          %v5584 = vpop.f32.mrb[0].mxu0
          %v5585 = vadd.f32 %v4505, %v5584
          %v5586 = vpop.f32.mrb[0].mxu0
          %v5587 = vpop.f32.mrb[0].mxu0
          %v5588 = vpop.f32.mrb[0].mxu0
          %5589 = vdwg.mxu0
          %v5590 = vsel %vm4751, %v5447, -inf
          %5591 = vmax.xlane.f32.xlu0 %v5590
          %v5592 = vpop.xlane.xlu0 %5591
          %v5593 = vsel %vm4751, %v5493, -inf
          %5594 = vmax.xlane.f32.xlu0 %v5593
          %v5595 = vpop.xlane.xlu0 %5594
          %v5596 = vsel %vm4751, %v5539, -inf
          %5597 = vmax.xlane.f32.xlu0 %v5596
          %v5598 = vpop.xlane.xlu0 %5597
          %v5599 = vsel %vm4751, %v5585, -inf
          %5600 = vmax.xlane.f32.xlu0 %v5599
          %v5601 = vpop.xlane.xlu0 %5600
          %v5602 = vsub.f32 %v5447, %v5592
          %v5603 = vsub.f32 %v5493, %v5595
          %v5604 = vsub.f32 %v5539, %v5598
          %v5605 = vsub.f32 %v5585, %v5601
          %v5606 = vmul.f32 %v5602, 1.442695
          %v5607 = vpow.pop %v5606
          %v5608 = vmul.f32 %v5603, 1.442695
          %v5609 = vpow.pop %v5608
          %v5610 = vmul.f32 %v5604, 1.442695
          %v5611 = vpow.pop %v5610
          %v5612 = vmul.f32 %v5605, 1.442695
          %v5613 = vpow.pop %v5612
          %v5614 = vsel %vm4751, %v5607, 0.0
          %5615 = vadd.xlane.f32.xlu0 %v5614
          %v5616 = vpop.xlane.xlu0 %5615
          %v5617 = vsel %vm4751, %v5609, 0.0
          %5618 = vadd.xlane.f32.xlu0 %v5617
          %v5619 = vpop.xlane.xlu0 %5618
          %v5620 = vsel %vm4751, %v5611, 0.0
          %5621 = vadd.xlane.f32.xlu0 %v5620
          %v5622 = vpop.xlane.xlu0 %5621
          %v5623 = vsel %vm4751, %v5613, 0.0
          %5624 = vadd.xlane.f32.xlu0 %v5623
          %v5625 = vpop.xlane.xlu0 %5624
          %v5626 = vpack.c.bf16 %v5607, %v5607
          %v5627 = vpack.c.bf16 %v5609, %v5609
          %v5628 = vpack.c.bf16 %v5611, %v5611
          %v5629 = vpack.c.bf16 %v5613, %v5613
          %v5631 = vsel %vm4751, %v5626, 0
          %v5634 = vsel %vm4979, %v5402, 0
          %5636 = vmatprep.subr.bf16.mxu0 0
          %5637 = vmatpush1.bf16.msra.mxu0 %v5634
          %5638 = vmatprep.subr.bf16.mxu0 0
          %5639 = vmatpush1.bf16.msra.mxu0 0
          %5640 = vmatprep.subr.bf16.mxu0 0
          %5641 = vmatpush1.bf16.msra.mxu0 0
          %5642 = vmatprep.subr.bf16.mxu0 0
          %5643 = vmatpush1.bf16.msra.mxu0 0
          %5644 = vmatprep.subr.bf16.mxu0 0
          %5645 = vmatpush1.bf16.msra.mxu0 0
          %5646 = vmatprep.subr.bf16.mxu0 0
          %5647 = vmatpush1.bf16.msra.mxu0 0
          %5648 = vmatprep.subr.bf16.mxu0 0
          %5649 = vmatpush1.bf16.msra.mxu0 0
          %5650 = vmatprep.subr.bf16.mxu0 0
          %5651 = vmatpush1.bf16.msra.mxu0 0
          %5652 = vmatprep.subr.bf16.mxu0 0
          %5653 = vmatpush1.bf16.msra.mxu0 0
          %5654 = vmatprep.subr.bf16.mxu0 0
          %5655 = vmatpush1.bf16.msra.mxu0 0
          %5656 = vmatprep.subr.bf16.mxu0 0
          %5657 = vmatpush1.bf16.msra.mxu0 0
          %5658 = vmatprep.subr.bf16.mxu0 0
          %5659 = vmatpush1.bf16.msra.mxu0 0
          %5660 = vmatprep.subr.bf16.mxu0 0
          %5661 = vmatpush1.bf16.msra.mxu0 0
          %5662 = vmatprep.subr.bf16.mxu0 0
          %5663 = vmatpush1.bf16.msra.mxu0 0
          %5664 = vmatprep.subr.bf16.mxu0 0
          %5665 = vmatpush1.bf16.msra.mxu0 0
          %5666 = vmatprep.subr.bf16.mxu0 0
          %5667 = vmatpush1.bf16.msra.mxu0 0
          %5668 = vmatprep.mubr.bf16.mxu0 0
          %5669 = vmatmul.mubr.bf16.gmra.mrb[0].mxu0 %v5631
          %v5670 = vpop.f32.mrb[0].mxu0
          %v5671 = vadd.f32 0.0, %v5670
          %v5672 = vpop.f32.mrb[0].mxu0
          %v5673 = vpop.f32.mrb[0].mxu0
          %v5674 = vpop.f32.mrb[0].mxu0
          %5675 = vdwg.mxu0
          %v5677 = vsel %vm4751, %v5627, 0
          %v5680 = vsel %vm4979, %v5403, 0
          %5682 = vmatprep.subr.bf16.mxu0 0
          %5683 = vmatpush1.bf16.msra.mxu0 %v5680
          %5684 = vmatprep.subr.bf16.mxu0 0
          %5685 = vmatpush1.bf16.msra.mxu0 0
          %5686 = vmatprep.subr.bf16.mxu0 0
          %5687 = vmatpush1.bf16.msra.mxu0 0
          %5688 = vmatprep.subr.bf16.mxu0 0
          %5689 = vmatpush1.bf16.msra.mxu0 0
          %5690 = vmatprep.subr.bf16.mxu0 0
          %5691 = vmatpush1.bf16.msra.mxu0 0
          %5692 = vmatprep.subr.bf16.mxu0 0
          %5693 = vmatpush1.bf16.msra.mxu0 0
          %5694 = vmatprep.subr.bf16.mxu0 0
          %5695 = vmatpush1.bf16.msra.mxu0 0
          %5696 = vmatprep.subr.bf16.mxu0 0
          %5697 = vmatpush1.bf16.msra.mxu0 0
          %5698 = vmatprep.subr.bf16.mxu0 0
          %5699 = vmatpush1.bf16.msra.mxu0 0
          %5700 = vmatprep.subr.bf16.mxu0 0
          %5701 = vmatpush1.bf16.msra.mxu0 0
          %5702 = vmatprep.subr.bf16.mxu0 0
          %5703 = vmatpush1.bf16.msra.mxu0 0
          %5704 = vmatprep.subr.bf16.mxu0 0
          %5705 = vmatpush1.bf16.msra.mxu0 0
          %5706 = vmatprep.subr.bf16.mxu0 0
          %5707 = vmatpush1.bf16.msra.mxu0 0
          %5708 = vmatprep.subr.bf16.mxu0 0
          %5709 = vmatpush1.bf16.msra.mxu0 0
          %5710 = vmatprep.subr.bf16.mxu0 0
          %5711 = vmatpush1.bf16.msra.mxu0 0
          %5712 = vmatprep.subr.bf16.mxu0 0
          %5713 = vmatpush1.bf16.msra.mxu0 0
          %5714 = vmatprep.mubr.bf16.mxu0 0
          %5715 = vmatmul.mubr.bf16.gmra.mrb[0].mxu0 %v5677
          %v5716 = vpop.f32.mrb[0].mxu0
          %v5717 = vadd.f32 0.0, %v5716
          %v5718 = vpop.f32.mrb[0].mxu0
          %v5719 = vpop.f32.mrb[0].mxu0
          %v5720 = vpop.f32.mrb[0].mxu0
          %5721 = vdwg.mxu0
          %v5723 = vsel %vm4751, %v5628, 0
          %v5726 = vsel %vm4979, %v5404, 0
          %5728 = vmatprep.subr.bf16.mxu0 0
          %5729 = vmatpush1.bf16.msra.mxu0 %v5726
          %5730 = vmatprep.subr.bf16.mxu0 0
          %5731 = vmatpush1.bf16.msra.mxu0 0
          %5732 = vmatprep.subr.bf16.mxu0 0
          %5733 = vmatpush1.bf16.msra.mxu0 0
          %5734 = vmatprep.subr.bf16.mxu0 0
          %5735 = vmatpush1.bf16.msra.mxu0 0
          %5736 = vmatprep.subr.bf16.mxu0 0
          %5737 = vmatpush1.bf16.msra.mxu0 0
          %5738 = vmatprep.subr.bf16.mxu0 0
          %5739 = vmatpush1.bf16.msra.mxu0 0
          %5740 = vmatprep.subr.bf16.mxu0 0
          %5741 = vmatpush1.bf16.msra.mxu0 0
          %5742 = vmatprep.subr.bf16.mxu0 0
          %5743 = vmatpush1.bf16.msra.mxu0 0
          %5744 = vmatprep.subr.bf16.mxu0 0
          %5745 = vmatpush1.bf16.msra.mxu0 0
          %5746 = vmatprep.subr.bf16.mxu0 0
          %5747 = vmatpush1.bf16.msra.mxu0 0
          %5748 = vmatprep.subr.bf16.mxu0 0
          %5749 = vmatpush1.bf16.msra.mxu0 0
          %5750 = vmatprep.subr.bf16.mxu0 0
          %5751 = vmatpush1.bf16.msra.mxu0 0
          %5752 = vmatprep.subr.bf16.mxu0 0
          %5753 = vmatpush1.bf16.msra.mxu0 0
          %5754 = vmatprep.subr.bf16.mxu0 0
          %5755 = vmatpush1.bf16.msra.mxu0 0
          %5756 = vmatprep.subr.bf16.mxu0 0
          %5757 = vmatpush1.bf16.msra.mxu0 0
          %5758 = vmatprep.subr.bf16.mxu0 0
          %5759 = vmatpush1.bf16.msra.mxu0 0
          %5760 = vmatprep.mubr.bf16.mxu0 0
          %5761 = vmatmul.mubr.bf16.gmra.mrb[0].mxu0 %v5723
          %v5762 = vpop.f32.mrb[0].mxu0
          %v5763 = vadd.f32 0.0, %v5762
          %v5764 = vpop.f32.mrb[0].mxu0
          %v5765 = vpop.f32.mrb[0].mxu0
          %v5766 = vpop.f32.mrb[0].mxu0
          %5767 = vdwg.mxu0
          %v5769 = vsel %vm4751, %v5629, 0
          %v5772 = vsel %vm4979, %v5405, 0
          %5774 = vmatprep.subr.bf16.mxu0 0
          %5775 = vmatpush1.bf16.msra.mxu0 %v5772
          %5776 = vmatprep.subr.bf16.mxu0 0
          %5777 = vmatpush1.bf16.msra.mxu0 0
          %5778 = vmatprep.subr.bf16.mxu0 0
          %5779 = vmatpush1.bf16.msra.mxu0 0
          %5780 = vmatprep.subr.bf16.mxu0 0
          %5781 = vmatpush1.bf16.msra.mxu0 0
          %5782 = vmatprep.subr.bf16.mxu0 0
          %5783 = vmatpush1.bf16.msra.mxu0 0
          %5784 = vmatprep.subr.bf16.mxu0 0
          %5785 = vmatpush1.bf16.msra.mxu0 0
          %5786 = vmatprep.subr.bf16.mxu0 0
          %5787 = vmatpush1.bf16.msra.mxu0 0
          %5788 = vmatprep.subr.bf16.mxu0 0
          %5789 = vmatpush1.bf16.msra.mxu0 0
          %5790 = vmatprep.subr.bf16.mxu0 0
          %5791 = vmatpush1.bf16.msra.mxu0 0
          %5792 = vmatprep.subr.bf16.mxu0 0
          %5793 = vmatpush1.bf16.msra.mxu0 0
          %5794 = vmatprep.subr.bf16.mxu0 0
          %5795 = vmatpush1.bf16.msra.mxu0 0
          %5796 = vmatprep.subr.bf16.mxu0 0
          %5797 = vmatpush1.bf16.msra.mxu0 0
          %5798 = vmatprep.subr.bf16.mxu0 0
          %5799 = vmatpush1.bf16.msra.mxu0 0
          %5800 = vmatprep.subr.bf16.mxu0 0
          %5801 = vmatpush1.bf16.msra.mxu0 0
          %5802 = vmatprep.subr.bf16.mxu0 0
          %5803 = vmatpush1.bf16.msra.mxu0 0
          %5804 = vmatprep.subr.bf16.mxu0 0
          %5805 = vmatpush1.bf16.msra.mxu0 0
          %5806 = vmatprep.mubr.bf16.mxu0 0
          %5807 = vmatmul.mubr.bf16.gmra.mrb[0].mxu0 %v5769
          %v5808 = vpop.f32.mrb[0].mxu0
          %v5809 = vadd.f32 0.0, %v5808
          %v5810 = vpop.f32.mrb[0].mxu0
          %v5811 = vpop.f32.mrb[0].mxu0
          %v5812 = vpop.f32.mrb[0].mxu0
          %5813 = vdwg.mxu0
          %v5814 = vrcp.pop %v5616
          %v5815 = vrcp.pop %v5619
          %v5816 = vrcp.pop %v5622
          %v5817 = vrcp.pop %v5625
          %v5818 = vmul.f32 %v5671, %v5814
          %v5819 = vmul.f32 %v5717, %v5815
          %v5820 = vmul.f32 %v5763, %v5816
          %v5821 = vmul.f32 %v5809, %v5817
          %v5822 = vpack.c.bf16 %v5819, %v5818
          %v5823 = vpack.c.bf16 %v5821, %v5820
          %s5824 = scalar_lea.vmem %s1086, 4
          %v5825 = vld [vmem:[%s5824] sm:$0xf]
          %v5827 = vsel %vm4751, %v5822, 0
          %v5830 = vsel %vm4751, %v5823, 0
          %v5833 = vsel %vm4979, %v5825, 0
          %5835 = vmatprep.subr.bf16.mxu0 0
          %5836 = vmatpush1.bf16.msra.mxu0 %v5833
          %5837 = vmatprep.subr.bf16.mxu0 0
          %5838 = vmatpush1.bf16.msra.mxu0 0
          %5839 = vmatprep.subr.bf16.mxu0 0
          %5840 = vmatpush1.bf16.msra.mxu0 0
          %5841 = vmatprep.subr.bf16.mxu0 0
          %5842 = vmatpush1.bf16.msra.mxu0 0
          %5843 = vmatprep.subr.bf16.mxu0 0
          %5844 = vmatpush1.bf16.msra.mxu0 0
          %5845 = vmatprep.subr.bf16.mxu0 0
          %5846 = vmatpush1.bf16.msra.mxu0 0
          %5847 = vmatprep.subr.bf16.mxu0 0
          %5848 = vmatpush1.bf16.msra.mxu0 0
          %5849 = vmatprep.subr.bf16.mxu0 0
          %5850 = vmatpush1.bf16.msra.mxu0 0
          %5851 = vmatprep.subr.bf16.mxu0 0
          %5852 = vmatpush1.bf16.msra.mxu0 0
          %5853 = vmatprep.subr.bf16.mxu0 0
          %5854 = vmatpush1.bf16.msra.mxu0 0
          %5855 = vmatprep.subr.bf16.mxu0 0
          %5856 = vmatpush1.bf16.msra.mxu0 0
          %5857 = vmatprep.subr.bf16.mxu0 0
          %5858 = vmatpush1.bf16.msra.mxu0 0
          %5859 = vmatprep.subr.bf16.mxu0 0
          %5860 = vmatpush1.bf16.msra.mxu0 0
          %5861 = vmatprep.subr.bf16.mxu0 0
          %5862 = vmatpush1.bf16.msra.mxu0 0
          %5863 = vmatprep.subr.bf16.mxu0 0
          %5864 = vmatpush1.bf16.msra.mxu0 0
          %5865 = vmatprep.subr.bf16.mxu0 0
          %5866 = vmatpush1.bf16.msra.mxu0 0
          %5867 = vmatprep.mubr.bf16.mxu0 0
          %5868 = vmatmul.mubr.bf16.gmra.mrb[0].mxu0 %v5827
          %v5869 = vpop.f32.mrb[0].mxu0
          %v5870 = vadd.f32 0.0, %v5869
          %v5871 = vpop.f32.mrb[0].mxu0
          %v5872 = vpop.f32.mrb[0].mxu0
          %v5873 = vadd.f32 0.0, %v5872
          %v5874 = vpop.f32.mrb[0].mxu0
          %5875 = vmatprep.mubr.bf16.mxu0 0
          %5876 = vmatmul.mubr.bf16.gmra.mrb[0].mxu0 %v5830
          %v5877 = vpop.f32.mrb[0].mxu0
          %v5878 = vadd.f32 0.0, %v5877
          %v5879 = vpop.f32.mrb[0].mxu0
          %v5880 = vpop.f32.mrb[0].mxu0
          %v5881 = vadd.f32 0.0, %v5880
          %v5882 = vpop.f32.mrb[0].mxu0
          %5883 = vdwg.mxu0
          %v5885 = vsel %vm4751, %v5169, 0
          %v5888 = vsel %vm4751, %v5170, 0
          %v5891 = vsel %vm4979, %v5171, 0
          %5893 = vmatprep.subr.bf16.mxu0 0
          %5894 = vmatpush1.bf16.msra.mxu0 %v5891
          %5895 = vmatprep.subr.bf16.mxu0 0
          %5896 = vmatpush1.bf16.msra.mxu0 0
          %5897 = vmatprep.subr.bf16.mxu0 0
          %5898 = vmatpush1.bf16.msra.mxu0 0
          %5899 = vmatprep.subr.bf16.mxu0 0
          %5900 = vmatpush1.bf16.msra.mxu0 0
          %5901 = vmatprep.subr.bf16.mxu0 0
          %5902 = vmatpush1.bf16.msra.mxu0 0
          %5903 = vmatprep.subr.bf16.mxu0 0
          %5904 = vmatpush1.bf16.msra.mxu0 0
          %5905 = vmatprep.subr.bf16.mxu0 0
          %5906 = vmatpush1.bf16.msra.mxu0 0
          %5907 = vmatprep.subr.bf16.mxu0 0
          %5908 = vmatpush1.bf16.msra.mxu0 0
          %5909 = vmatprep.subr.bf16.mxu0 0
          %5910 = vmatpush1.bf16.msra.mxu0 0
          %5911 = vmatprep.subr.bf16.mxu0 0
          %5912 = vmatpush1.bf16.msra.mxu0 0
          %5913 = vmatprep.subr.bf16.mxu0 0
          %5914 = vmatpush1.bf16.msra.mxu0 0
          %5915 = vmatprep.subr.bf16.mxu0 0
          %5916 = vmatpush1.bf16.msra.mxu0 0
          %5917 = vmatprep.subr.bf16.mxu0 0
          %5918 = vmatpush1.bf16.msra.mxu0 0
          %5919 = vmatprep.subr.bf16.mxu0 0
          %5920 = vmatpush1.bf16.msra.mxu0 0
          %5921 = vmatprep.subr.bf16.mxu0 0
          %5922 = vmatpush1.bf16.msra.mxu0 0
          %5923 = vmatprep.subr.bf16.mxu0 0
          %5924 = vmatpush1.bf16.msra.mxu0 0
          %5925 = vmatprep.mubr.bf16.mxu0 0
          %5926 = vmatmul.mubr.bf16.gmra.mrb[0].mxu0 %v5885
          %v5927 = vpop.f32.mrb[0].mxu0
          %v5928 = vadd.f32 %v5870, %v5927
          %v5929 = vpop.f32.mrb[0].mxu0
          %v5930 = vpop.f32.mrb[0].mxu0
          %v5931 = vadd.f32 %v5873, %v5930
          %v5932 = vpop.f32.mrb[0].mxu0
          %5933 = vmatprep.mubr.bf16.mxu0 0
          %5934 = vmatmul.mubr.bf16.gmra.mrb[0].mxu0 %v5888
          %v5935 = vpop.f32.mrb[0].mxu0
          %v5936 = vadd.f32 %v5878, %v5935
          %v5937 = vpop.f32.mrb[0].mxu0
          %v5938 = vpop.f32.mrb[0].mxu0
          %v5939 = vadd.f32 %v5881, %v5938
          %v5940 = vpop.f32.mrb[0].mxu0
          %5941 = vdwg.mxu0
          %s5942 = scalar_lea.vmem %s1035, 32
          %v5943 = vld [vmem:[%s5942] sm:$0xf]
          %v5944 = vld [vmem:[%s5942 + $0x4] sm:$0xf]
          %v5945 = vld [vmem:[%s5942 + $0x8] sm:$0xf]
          %v5946 = vld [vmem:[%s5942 + $0xc] sm:$0xf]
          %s5947 = scalar_lea.vmem %s1043, 2
          %v5948 = vld [vmem:[%s5947] sm:$0x1]
          %v5950 = vlaneseq
          %v5951 = vshrl.u32 %v5950, 7
          %v5952 = vsub.s32 0, %v5951
          %v5953 = vrot.slane %v5948, %v5952
          %v5959 = vunpack.c.l.b16 %v5943
          %v5960 = vunpack.c.l.b16 %v5944
          %v5961 = vunpack.c.l.b16 %v5945
          %v5962 = vunpack.c.l.b16 %v5946
          %v5963 = vpack.c.b16 %v5960, %v5959
          %v5964 = vpack.c.b16 %v5962, %v5961
          %5967 = vmatprep.subr.bf16.mxu0 0
          %5968 = vmatpush1.bf16.msra.mxu0 %v5963
          %5969 = vmatprep.subr.bf16.mxu0 0
          %5970 = vmatpush1.bf16.msra.mxu0 %v5964
          %5971 = vmatprep.subr.bf16.mxu0 0
          %5972 = vmatpush1.bf16.msra.mxu0 0
          %5973 = vmatprep.subr.bf16.mxu0 0
          %5974 = vmatpush1.bf16.msra.mxu0 0
          %5975 = vmatprep.subr.bf16.mxu0 0
          %5976 = vmatpush1.bf16.msra.mxu0 0
          %5977 = vmatprep.subr.bf16.mxu0 0
          %5978 = vmatpush1.bf16.msra.mxu0 0
          %5979 = vmatprep.subr.bf16.mxu0 0
          %5980 = vmatpush1.bf16.msra.mxu0 0
          %5981 = vmatprep.subr.bf16.mxu0 0
          %5982 = vmatpush1.bf16.msra.mxu0 0
          %5983 = vmatprep.subr.bf16.mxu0 0
          %5984 = vmatpush1.bf16.msra.mxu0 0
          %5985 = vmatprep.subr.bf16.mxu0 0
          %5986 = vmatpush1.bf16.msra.mxu0 0
          %5987 = vmatprep.subr.bf16.mxu0 0
          %5988 = vmatpush1.bf16.msra.mxu0 0
          %5989 = vmatprep.subr.bf16.mxu0 0
          %5990 = vmatpush1.bf16.msra.mxu0 0
          %5991 = vmatprep.subr.bf16.mxu0 0
          %5992 = vmatpush1.bf16.msra.mxu0 0
          %5993 = vmatprep.subr.bf16.mxu0 0
          %5994 = vmatpush1.bf16.msra.mxu0 0
          %5995 = vmatprep.subr.bf16.mxu0 0
          %5996 = vmatpush1.bf16.msra.mxu0 0
          %5997 = vmatprep.subr.bf16.mxu0 0
          %5998 = vmatpush1.bf16.msra.mxu0 0
          %5999 = vmatprep.mubr.bf16.mxu0 0
          %6000 = vmatmul.mubr.bf16.gmra.mrb[0].mxu0 %v4535
          %v6001 = vpop.f32.mrb[0].mxu0
          %v6002 = vadd.f32 %v5953, %v6001
          %v6003 = vpop.f32.mrb[0].mxu0
          %v6004 = vpop.f32.mrb[0].mxu0
          %v6005 = vadd.f32 %v5953, %v6004
          %v6006 = vpop.f32.mrb[0].mxu0
          %6007 = vmatprep.mubr.bf16.mxu0 0
          %6008 = vmatmul.mubr.bf16.gmra.mrb[0].mxu0 %v4538
          %v6009 = vpop.f32.mrb[0].mxu0
          %v6010 = vadd.f32 %v5953, %v6009
          %v6011 = vpop.f32.mrb[0].mxu0
          %v6012 = vpop.f32.mrb[0].mxu0
          %v6013 = vadd.f32 %v5953, %v6012
          %v6014 = vpop.f32.mrb[0].mxu0
          %6015 = vdwg.mxu0
          %s6016 = scalar_lea.vmem %s1052, 32
          %v6017 = vld [vmem:[%s6016] sm:$0xf]
          %v6018 = vld [vmem:[%s6016 + $0x4] sm:$0xf]
          %v6019 = vld [vmem:[%s6016 + $0x8] sm:$0xf]
          %v6020 = vld [vmem:[%s6016 + $0xc] sm:$0xf]
          %s6021 = scalar_lea.vmem %s1060, 2
          %v6022 = vld [vmem:[%s6021] sm:$0x1]
          %v6024 = vlaneseq
          %v6025 = vshrl.u32 %v6024, 7
          %v6026 = vsub.s32 0, %v6025
          %v6027 = vrot.slane %v6022, %v6026
          %v6033 = vunpack.c.l.b16 %v6017
          %v6034 = vunpack.c.l.b16 %v6018
          %v6035 = vunpack.c.l.b16 %v6019
          %v6036 = vunpack.c.l.b16 %v6020
          %v6037 = vpack.c.b16 %v6034, %v6033
          %v6038 = vpack.c.b16 %v6036, %v6035
          %6041 = vmatprep.subr.bf16.mxu0 0
          %6042 = vmatpush1.bf16.msra.mxu0 %v6037
          %6043 = vmatprep.subr.bf16.mxu0 0
          %6044 = vmatpush1.bf16.msra.mxu0 %v6038
          %6045 = vmatprep.subr.bf16.mxu0 0
          %6046 = vmatpush1.bf16.msra.mxu0 0
          %6047 = vmatprep.subr.bf16.mxu0 0
          %6048 = vmatpush1.bf16.msra.mxu0 0
          %6049 = vmatprep.subr.bf16.mxu0 0
          %6050 = vmatpush1.bf16.msra.mxu0 0
          %6051 = vmatprep.subr.bf16.mxu0 0
          %6052 = vmatpush1.bf16.msra.mxu0 0
          %6053 = vmatprep.subr.bf16.mxu0 0
          %6054 = vmatpush1.bf16.msra.mxu0 0
          %6055 = vmatprep.subr.bf16.mxu0 0
          %6056 = vmatpush1.bf16.msra.mxu0 0
          %6057 = vmatprep.subr.bf16.mxu0 0
          %6058 = vmatpush1.bf16.msra.mxu0 0
          %6059 = vmatprep.subr.bf16.mxu0 0
          %6060 = vmatpush1.bf16.msra.mxu0 0
          %6061 = vmatprep.subr.bf16.mxu0 0
          %6062 = vmatpush1.bf16.msra.mxu0 0
          %6063 = vmatprep.subr.bf16.mxu0 0
          %6064 = vmatpush1.bf16.msra.mxu0 0
          %6065 = vmatprep.subr.bf16.mxu0 0
          %6066 = vmatpush1.bf16.msra.mxu0 0
          %6067 = vmatprep.subr.bf16.mxu0 0
          %6068 = vmatpush1.bf16.msra.mxu0 0
          %6069 = vmatprep.subr.bf16.mxu0 0
          %6070 = vmatpush1.bf16.msra.mxu0 0
          %6071 = vmatprep.subr.bf16.mxu0 0
          %6072 = vmatpush1.bf16.msra.mxu0 0
          %6073 = vmatprep.mubr.bf16.mxu0 0
          %6074 = vmatmul.mubr.bf16.gmra.mrb[0].mxu0 %v4613
          %v6075 = vpop.f32.mrb[0].mxu0
          %v6076 = vadd.f32 %v6027, %v6075
          %v6077 = vpop.f32.mrb[0].mxu0
          %v6078 = vpop.f32.mrb[0].mxu0
          %v6079 = vadd.f32 %v6027, %v6078
          %v6080 = vpop.f32.mrb[0].mxu0
          %6081 = vmatprep.mubr.bf16.mxu0 0
          %6082 = vmatmul.mubr.bf16.gmra.mrb[0].mxu0 %v4616
          %v6083 = vpop.f32.mrb[0].mxu0
          %v6084 = vadd.f32 %v6027, %v6083
          %v6085 = vpop.f32.mrb[0].mxu0
          %v6086 = vpop.f32.mrb[0].mxu0
          %v6087 = vadd.f32 %v6027, %v6086
          %v6088 = vpop.f32.mrb[0].mxu0
          %6089 = vdwg.mxu0
          %s6090 = scalar_lea.vmem %s1069, 32
          %v6091 = vld [vmem:[%s6090] sm:$0xf]
          %v6092 = vld [vmem:[%s6090 + $0x4] sm:$0xf]
          %v6093 = vld [vmem:[%s6090 + $0x8] sm:$0xf]
          %v6094 = vld [vmem:[%s6090 + $0xc] sm:$0xf]
          %s6095 = scalar_lea.vmem %s1077, 2
          %v6096 = vld [vmem:[%s6095] sm:$0x1]
          %v6098 = vlaneseq
          %v6099 = vshrl.u32 %v6098, 7
          %v6100 = vsub.s32 0, %v6099
          %v6101 = vrot.slane %v6096, %v6100
          %v6107 = vunpack.c.l.b16 %v6091
          %v6108 = vunpack.c.l.b16 %v6092
          %v6109 = vunpack.c.l.b16 %v6093
          %v6110 = vunpack.c.l.b16 %v6094
          %v6111 = vpack.c.b16 %v6108, %v6107
          %v6112 = vpack.c.b16 %v6110, %v6109
          %6115 = vmatprep.subr.bf16.mxu0 0
          %6116 = vmatpush1.bf16.msra.mxu0 %v6111
          %6117 = vmatprep.subr.bf16.mxu0 0
          %6118 = vmatpush1.bf16.msra.mxu0 %v6112
          %6119 = vmatprep.subr.bf16.mxu0 0
          %6120 = vmatpush1.bf16.msra.mxu0 0
          %6121 = vmatprep.subr.bf16.mxu0 0
          %6122 = vmatpush1.bf16.msra.mxu0 0
          %6123 = vmatprep.subr.bf16.mxu0 0
          %6124 = vmatpush1.bf16.msra.mxu0 0
          %6125 = vmatprep.subr.bf16.mxu0 0
          %6126 = vmatpush1.bf16.msra.mxu0 0
          %6127 = vmatprep.subr.bf16.mxu0 0
          %6128 = vmatpush1.bf16.msra.mxu0 0
          %6129 = vmatprep.subr.bf16.mxu0 0
          %6130 = vmatpush1.bf16.msra.mxu0 0
          %6131 = vmatprep.subr.bf16.mxu0 0
          %6132 = vmatpush1.bf16.msra.mxu0 0
          %6133 = vmatprep.subr.bf16.mxu0 0
          %6134 = vmatpush1.bf16.msra.mxu0 0
          %6135 = vmatprep.subr.bf16.mxu0 0
          %6136 = vmatpush1.bf16.msra.mxu0 0
          %6137 = vmatprep.subr.bf16.mxu0 0
          %6138 = vmatpush1.bf16.msra.mxu0 0
          %6139 = vmatprep.subr.bf16.mxu0 0
          %6140 = vmatpush1.bf16.msra.mxu0 0
          %6141 = vmatprep.subr.bf16.mxu0 0
          %6142 = vmatpush1.bf16.msra.mxu0 0
          %6143 = vmatprep.subr.bf16.mxu0 0
          %6144 = vmatpush1.bf16.msra.mxu0 0
          %6145 = vmatprep.subr.bf16.mxu0 0
          %6146 = vmatpush1.bf16.msra.mxu0 0
          %6147 = vmatprep.mubr.bf16.mxu0 0
          %6148 = vmatmul.mubr.bf16.gmra.mrb[0].mxu0 %v4613
          %v6149 = vpop.f32.mrb[0].mxu0
          %v6150 = vadd.f32 %v6101, %v6149
          %v6151 = vpop.f32.mrb[0].mxu0
          %v6152 = vpop.f32.mrb[0].mxu0
          %v6153 = vadd.f32 %v6101, %v6152
          %v6154 = vpop.f32.mrb[0].mxu0
          %6155 = vmatprep.mubr.bf16.mxu0 0
          %6156 = vmatmul.mubr.bf16.gmra.mrb[0].mxu0 %v4616
          %v6157 = vpop.f32.mrb[0].mxu0
          %v6158 = vadd.f32 %v6101, %v6157
          %v6159 = vpop.f32.mrb[0].mxu0
          %v6160 = vpop.f32.mrb[0].mxu0
          %v6161 = vadd.f32 %v6101, %v6160
          %v6162 = vpop.f32.mrb[0].mxu0
          %6163 = vdwg.mxu0
          %v6164 = vpack.c.bf16 %v6002, %v6002
          %v6165 = vpack.c.bf16 %v6005, %v6005
          %v6166 = vpack.c.bf16 %v6010, %v6010
          %v6167 = vpack.c.bf16 %v6013, %v6013
          %v6168 = vpack.c.bf16 %v6076, %v6076
          %v6169 = vpack.c.bf16 %v6079, %v6079
          %v6170 = vpack.c.bf16 %v6084, %v6084
          %v6171 = vpack.c.bf16 %v6087, %v6087
          %v6172 = vpack.c.bf16 %v6150, %v6150
          %v6173 = vpack.c.bf16 %v6153, %v6153
          %v6174 = vpack.c.bf16 %v6158, %v6158
          %v6175 = vpack.c.bf16 %v6161, %v6161
          %v6177 = vsel %vm4751, %v6164, 0
          %v6180 = vsel %vm4751, %v6168, 0
          %6182 = vmatprep.subr.bf16.mxu0 0
          %6183 = vmatpush1.bf16.xpose.msra.mxu0 %v6180
          %6184 = vmatprep.subr.bf16.mxu0 0
          %6185 = vmatpush1.bf16.xpose.msra.mxu0 0
          %6186 = vmatprep.subr.bf16.mxu0 0
          %6187 = vmatpush1.bf16.xpose.msra.mxu0 0
          %6188 = vmatprep.subr.bf16.mxu0 0
          %6189 = vmatpush1.bf16.xpose.msra.mxu0 0
          %6190 = vmatprep.subr.bf16.mxu0 0
          %6191 = vmatpush1.bf16.xpose.msra.mxu0 0
          %6192 = vmatprep.subr.bf16.mxu0 0
          %6193 = vmatpush1.bf16.xpose.msra.mxu0 0
          %6194 = vmatprep.subr.bf16.mxu0 0
          %6195 = vmatpush1.bf16.xpose.msra.mxu0 0
          %6196 = vmatprep.subr.bf16.mxu0 0
          %6197 = vmatpush1.bf16.xpose.msra.mxu0 0
          %6198 = vmatprep.subr.bf16.mxu0 0
          %6199 = vmatpush1.bf16.xpose.msra.mxu0 0
          %6200 = vmatprep.subr.bf16.mxu0 0
          %6201 = vmatpush1.bf16.xpose.msra.mxu0 0
          %6202 = vmatprep.subr.bf16.mxu0 0
          %6203 = vmatpush1.bf16.xpose.msra.mxu0 0
          %6204 = vmatprep.subr.bf16.mxu0 0
          %6205 = vmatpush1.bf16.xpose.msra.mxu0 0
          %6206 = vmatprep.subr.bf16.mxu0 0
          %6207 = vmatpush1.bf16.xpose.msra.mxu0 0
          %6208 = vmatprep.subr.bf16.mxu0 0
          %6209 = vmatpush1.bf16.xpose.msra.mxu0 0
          %6210 = vmatprep.subr.bf16.mxu0 0
          %6211 = vmatpush1.bf16.xpose.msra.mxu0 0
          %6212 = vmatprep.subr.bf16.mxu0 0
          %6213 = vmatpush1.bf16.xpose.msra.mxu0 0
          %6214 = vmatprep.mubr.bf16.mxu0 0
          %6215 = vmatmul.mubr.bf16.gmra.mrb[0].mxu0 %v6177
          %v6216 = vpop.f32.mrb[0].mxu0
          %v6217 = vadd.f32 %v4493, %v6216
          %v6218 = vpop.f32.mrb[0].mxu0
          %v6219 = vpop.f32.mrb[0].mxu0
          %v6220 = vpop.f32.mrb[0].mxu0
          %6221 = vdwg.mxu0
          %v6223 = vsel %vm4751, %v6165, 0
          %v6226 = vsel %vm4751, %v6169, 0
          %6228 = vmatprep.subr.bf16.mxu0 0
          %6229 = vmatpush1.bf16.xpose.msra.mxu0 %v6226
          %6230 = vmatprep.subr.bf16.mxu0 0
          %6231 = vmatpush1.bf16.xpose.msra.mxu0 0
          %6232 = vmatprep.subr.bf16.mxu0 0
          %6233 = vmatpush1.bf16.xpose.msra.mxu0 0
          %6234 = vmatprep.subr.bf16.mxu0 0
          %6235 = vmatpush1.bf16.xpose.msra.mxu0 0
          %6236 = vmatprep.subr.bf16.mxu0 0
          %6237 = vmatpush1.bf16.xpose.msra.mxu0 0
          %6238 = vmatprep.subr.bf16.mxu0 0
          %6239 = vmatpush1.bf16.xpose.msra.mxu0 0
          %6240 = vmatprep.subr.bf16.mxu0 0
          %6241 = vmatpush1.bf16.xpose.msra.mxu0 0
          %6242 = vmatprep.subr.bf16.mxu0 0
          %6243 = vmatpush1.bf16.xpose.msra.mxu0 0
          %6244 = vmatprep.subr.bf16.mxu0 0
          %6245 = vmatpush1.bf16.xpose.msra.mxu0 0
          %6246 = vmatprep.subr.bf16.mxu0 0
          %6247 = vmatpush1.bf16.xpose.msra.mxu0 0
          %6248 = vmatprep.subr.bf16.mxu0 0
          %6249 = vmatpush1.bf16.xpose.msra.mxu0 0
          %6250 = vmatprep.subr.bf16.mxu0 0
          %6251 = vmatpush1.bf16.xpose.msra.mxu0 0
          %6252 = vmatprep.subr.bf16.mxu0 0
          %6253 = vmatpush1.bf16.xpose.msra.mxu0 0
          %6254 = vmatprep.subr.bf16.mxu0 0
          %6255 = vmatpush1.bf16.xpose.msra.mxu0 0
          %6256 = vmatprep.subr.bf16.mxu0 0
          %6257 = vmatpush1.bf16.xpose.msra.mxu0 0
          %6258 = vmatprep.subr.bf16.mxu0 0
          %6259 = vmatpush1.bf16.xpose.msra.mxu0 0
          %6260 = vmatprep.mubr.bf16.mxu0 0
          %6261 = vmatmul.mubr.bf16.gmra.mrb[0].mxu0 %v6223
          %v6262 = vpop.f32.mrb[0].mxu0
          %v6263 = vadd.f32 %v4497, %v6262
          %v6264 = vpop.f32.mrb[0].mxu0
          %v6265 = vpop.f32.mrb[0].mxu0
          %v6266 = vpop.f32.mrb[0].mxu0
          %6267 = vdwg.mxu0
          %v6269 = vsel %vm4751, %v6166, 0
          %v6272 = vsel %vm4751, %v6170, 0
          %6274 = vmatprep.subr.bf16.mxu0 0
          %6275 = vmatpush1.bf16.xpose.msra.mxu0 %v6272
          %6276 = vmatprep.subr.bf16.mxu0 0
          %6277 = vmatpush1.bf16.xpose.msra.mxu0 0
          %6278 = vmatprep.subr.bf16.mxu0 0
          %6279 = vmatpush1.bf16.xpose.msra.mxu0 0
          %6280 = vmatprep.subr.bf16.mxu0 0
          %6281 = vmatpush1.bf16.xpose.msra.mxu0 0
          %6282 = vmatprep.subr.bf16.mxu0 0
          %6283 = vmatpush1.bf16.xpose.msra.mxu0 0
          %6284 = vmatprep.subr.bf16.mxu0 0
          %6285 = vmatpush1.bf16.xpose.msra.mxu0 0
          %6286 = vmatprep.subr.bf16.mxu0 0
          %6287 = vmatpush1.bf16.xpose.msra.mxu0 0
          %6288 = vmatprep.subr.bf16.mxu0 0
          %6289 = vmatpush1.bf16.xpose.msra.mxu0 0
          %6290 = vmatprep.subr.bf16.mxu0 0
          %6291 = vmatpush1.bf16.xpose.msra.mxu0 0
          %6292 = vmatprep.subr.bf16.mxu0 0
          %6293 = vmatpush1.bf16.xpose.msra.mxu0 0
          %6294 = vmatprep.subr.bf16.mxu0 0
          %6295 = vmatpush1.bf16.xpose.msra.mxu0 0
          %6296 = vmatprep.subr.bf16.mxu0 0
          %6297 = vmatpush1.bf16.xpose.msra.mxu0 0
          %6298 = vmatprep.subr.bf16.mxu0 0
          %6299 = vmatpush1.bf16.xpose.msra.mxu0 0
          %6300 = vmatprep.subr.bf16.mxu0 0
          %6301 = vmatpush1.bf16.xpose.msra.mxu0 0
          %6302 = vmatprep.subr.bf16.mxu0 0
          %6303 = vmatpush1.bf16.xpose.msra.mxu0 0
          %6304 = vmatprep.subr.bf16.mxu0 0
          %6305 = vmatpush1.bf16.xpose.msra.mxu0 0
          %6306 = vmatprep.mubr.bf16.mxu0 0
          %6307 = vmatmul.mubr.bf16.gmra.mrb[0].mxu0 %v6269
          %v6308 = vpop.f32.mrb[0].mxu0
          %v6309 = vadd.f32 %v4501, %v6308
          %v6310 = vpop.f32.mrb[0].mxu0
          %v6311 = vpop.f32.mrb[0].mxu0
          %v6312 = vpop.f32.mrb[0].mxu0
          %6313 = vdwg.mxu0
          %v6315 = vsel %vm4751, %v6167, 0
          %v6318 = vsel %vm4751, %v6171, 0
          %6320 = vmatprep.subr.bf16.mxu0 0
          %6321 = vmatpush1.bf16.xpose.msra.mxu0 %v6318
          %6322 = vmatprep.subr.bf16.mxu0 0
          %6323 = vmatpush1.bf16.xpose.msra.mxu0 0
          %6324 = vmatprep.subr.bf16.mxu0 0
          %6325 = vmatpush1.bf16.xpose.msra.mxu0 0
          %6326 = vmatprep.subr.bf16.mxu0 0
          %6327 = vmatpush1.bf16.xpose.msra.mxu0 0
          %6328 = vmatprep.subr.bf16.mxu0 0
          %6329 = vmatpush1.bf16.xpose.msra.mxu0 0
          %6330 = vmatprep.subr.bf16.mxu0 0
          %6331 = vmatpush1.bf16.xpose.msra.mxu0 0
          %6332 = vmatprep.subr.bf16.mxu0 0
          %6333 = vmatpush1.bf16.xpose.msra.mxu0 0
          %6334 = vmatprep.subr.bf16.mxu0 0
          %6335 = vmatpush1.bf16.xpose.msra.mxu0 0
          %6336 = vmatprep.subr.bf16.mxu0 0
          %6337 = vmatpush1.bf16.xpose.msra.mxu0 0
          %6338 = vmatprep.subr.bf16.mxu0 0
          %6339 = vmatpush1.bf16.xpose.msra.mxu0 0
          %6340 = vmatprep.subr.bf16.mxu0 0
          %6341 = vmatpush1.bf16.xpose.msra.mxu0 0
          %6342 = vmatprep.subr.bf16.mxu0 0
          %6343 = vmatpush1.bf16.xpose.msra.mxu0 0
          %6344 = vmatprep.subr.bf16.mxu0 0
          %6345 = vmatpush1.bf16.xpose.msra.mxu0 0
          %6346 = vmatprep.subr.bf16.mxu0 0
          %6347 = vmatpush1.bf16.xpose.msra.mxu0 0
          %6348 = vmatprep.subr.bf16.mxu0 0
          %6349 = vmatpush1.bf16.xpose.msra.mxu0 0
          %6350 = vmatprep.subr.bf16.mxu0 0
          %6351 = vmatpush1.bf16.xpose.msra.mxu0 0
          %6352 = vmatprep.mubr.bf16.mxu0 0
          %6353 = vmatmul.mubr.bf16.gmra.mrb[0].mxu0 %v6315
          %v6354 = vpop.f32.mrb[0].mxu0
          %v6355 = vadd.f32 %v4505, %v6354
          %v6356 = vpop.f32.mrb[0].mxu0
          %v6357 = vpop.f32.mrb[0].mxu0
          %v6358 = vpop.f32.mrb[0].mxu0
          %6359 = vdwg.mxu0
          %v6360 = vsel %vm4751, %v6217, -inf
          %6361 = vmax.xlane.f32.xlu0 %v6360
          %v6362 = vpop.xlane.xlu0 %6361
          %v6363 = vsel %vm4751, %v6263, -inf
          %6364 = vmax.xlane.f32.xlu0 %v6363
          %v6365 = vpop.xlane.xlu0 %6364
          %v6366 = vsel %vm4751, %v6309, -inf
          %6367 = vmax.xlane.f32.xlu0 %v6366
          %v6368 = vpop.xlane.xlu0 %6367
          %v6369 = vsel %vm4751, %v6355, -inf
          %6370 = vmax.xlane.f32.xlu0 %v6369
          %v6371 = vpop.xlane.xlu0 %6370
          %v6372 = vsub.f32 %v6217, %v6362
          %v6373 = vsub.f32 %v6263, %v6365
          %v6374 = vsub.f32 %v6309, %v6368
          %v6375 = vsub.f32 %v6355, %v6371
          %v6376 = vmul.f32 %v6372, 1.442695
          %v6377 = vpow.pop %v6376
          %v6378 = vmul.f32 %v6373, 1.442695
          %v6379 = vpow.pop %v6378
          %v6380 = vmul.f32 %v6374, 1.442695
          %v6381 = vpow.pop %v6380
          %v6382 = vmul.f32 %v6375, 1.442695
          %v6383 = vpow.pop %v6382
          %v6384 = vsel %vm4751, %v6377, 0.0
          %6385 = vadd.xlane.f32.xlu0 %v6384
          %v6386 = vpop.xlane.xlu0 %6385
          %v6387 = vsel %vm4751, %v6379, 0.0
          %6388 = vadd.xlane.f32.xlu0 %v6387
          %v6389 = vpop.xlane.xlu0 %6388
          %v6390 = vsel %vm4751, %v6381, 0.0
          %6391 = vadd.xlane.f32.xlu0 %v6390
          %v6392 = vpop.xlane.xlu0 %6391
          %v6393 = vsel %vm4751, %v6383, 0.0
          %6394 = vadd.xlane.f32.xlu0 %v6393
          %v6395 = vpop.xlane.xlu0 %6394
          %v6396 = vpack.c.bf16 %v6377, %v6377
          %v6397 = vpack.c.bf16 %v6379, %v6379
          %v6398 = vpack.c.bf16 %v6381, %v6381
          %v6399 = vpack.c.bf16 %v6383, %v6383
          %v6401 = vsel %vm4751, %v6396, 0
          %v6404 = vsel %vm4979, %v6172, 0
          %6406 = vmatprep.subr.bf16.mxu0 0
          %6407 = vmatpush1.bf16.msra.mxu0 %v6404
          %6408 = vmatprep.subr.bf16.mxu0 0
          %6409 = vmatpush1.bf16.msra.mxu0 0
          %6410 = vmatprep.subr.bf16.mxu0 0
          %6411 = vmatpush1.bf16.msra.mxu0 0
          %6412 = vmatprep.subr.bf16.mxu0 0
          %6413 = vmatpush1.bf16.msra.mxu0 0
          %6414 = vmatprep.subr.bf16.mxu0 0
          %6415 = vmatpush1.bf16.msra.mxu0 0
          %6416 = vmatprep.subr.bf16.mxu0 0
          %6417 = vmatpush1.bf16.msra.mxu0 0
          %6418 = vmatprep.subr.bf16.mxu0 0
          %6419 = vmatpush1.bf16.msra.mxu0 0
          %6420 = vmatprep.subr.bf16.mxu0 0
          %6421 = vmatpush1.bf16.msra.mxu0 0
          %6422 = vmatprep.subr.bf16.mxu0 0
          %6423 = vmatpush1.bf16.msra.mxu0 0
          %6424 = vmatprep.subr.bf16.mxu0 0
          %6425 = vmatpush1.bf16.msra.mxu0 0
          %6426 = vmatprep.subr.bf16.mxu0 0
          %6427 = vmatpush1.bf16.msra.mxu0 0
          %6428 = vmatprep.subr.bf16.mxu0 0
          %6429 = vmatpush1.bf16.msra.mxu0 0
          %6430 = vmatprep.subr.bf16.mxu0 0
          %6431 = vmatpush1.bf16.msra.mxu0 0
          %6432 = vmatprep.subr.bf16.mxu0 0
          %6433 = vmatpush1.bf16.msra.mxu0 0
          %6434 = vmatprep.subr.bf16.mxu0 0
          %6435 = vmatpush1.bf16.msra.mxu0 0
          %6436 = vmatprep.subr.bf16.mxu0 0
          %6437 = vmatpush1.bf16.msra.mxu0 0
          %6438 = vmatprep.mubr.bf16.mxu0 0
          %6439 = vmatmul.mubr.bf16.gmra.mrb[0].mxu0 %v6401
          %v6440 = vpop.f32.mrb[0].mxu0
          %v6441 = vadd.f32 0.0, %v6440
          %v6442 = vpop.f32.mrb[0].mxu0
          %v6443 = vpop.f32.mrb[0].mxu0
          %v6444 = vpop.f32.mrb[0].mxu0
          %6445 = vdwg.mxu0
          %v6447 = vsel %vm4751, %v6397, 0
          %v6450 = vsel %vm4979, %v6173, 0
          %6452 = vmatprep.subr.bf16.mxu0 0
          %6453 = vmatpush1.bf16.msra.mxu0 %v6450
          %6454 = vmatprep.subr.bf16.mxu0 0
          %6455 = vmatpush1.bf16.msra.mxu0 0
          %6456 = vmatprep.subr.bf16.mxu0 0
          %6457 = vmatpush1.bf16.msra.mxu0 0
          %6458 = vmatprep.subr.bf16.mxu0 0
          %6459 = vmatpush1.bf16.msra.mxu0 0
          %6460 = vmatprep.subr.bf16.mxu0 0
          %6461 = vmatpush1.bf16.msra.mxu0 0
          %6462 = vmatprep.subr.bf16.mxu0 0
          %6463 = vmatpush1.bf16.msra.mxu0 0
          %6464 = vmatprep.subr.bf16.mxu0 0
          %6465 = vmatpush1.bf16.msra.mxu0 0
          %6466 = vmatprep.subr.bf16.mxu0 0
          %6467 = vmatpush1.bf16.msra.mxu0 0
          %6468 = vmatprep.subr.bf16.mxu0 0
          %6469 = vmatpush1.bf16.msra.mxu0 0
          %6470 = vmatprep.subr.bf16.mxu0 0
          %6471 = vmatpush1.bf16.msra.mxu0 0
          %6472 = vmatprep.subr.bf16.mxu0 0
          %6473 = vmatpush1.bf16.msra.mxu0 0
          %6474 = vmatprep.subr.bf16.mxu0 0
          %6475 = vmatpush1.bf16.msra.mxu0 0
          %6476 = vmatprep.subr.bf16.mxu0 0
          %6477 = vmatpush1.bf16.msra.mxu0 0
          %6478 = vmatprep.subr.bf16.mxu0 0
          %6479 = vmatpush1.bf16.msra.mxu0 0
          %6480 = vmatprep.subr.bf16.mxu0 0
          %6481 = vmatpush1.bf16.msra.mxu0 0
          %6482 = vmatprep.subr.bf16.mxu0 0
          %6483 = vmatpush1.bf16.msra.mxu0 0
          %6484 = vmatprep.mubr.bf16.mxu0 0
          %6485 = vmatmul.mubr.bf16.gmra.mrb[0].mxu0 %v6447
          %v6486 = vpop.f32.mrb[0].mxu0
          %v6487 = vadd.f32 0.0, %v6486
          %v6488 = vpop.f32.mrb[0].mxu0
          %v6489 = vpop.f32.mrb[0].mxu0
          %v6490 = vpop.f32.mrb[0].mxu0
          %6491 = vdwg.mxu0
          %v6493 = vsel %vm4751, %v6398, 0
          %v6496 = vsel %vm4979, %v6174, 0
          %6498 = vmatprep.subr.bf16.mxu0 0
          %6499 = vmatpush1.bf16.msra.mxu0 %v6496
          %6500 = vmatprep.subr.bf16.mxu0 0
          %6501 = vmatpush1.bf16.msra.mxu0 0
          %6502 = vmatprep.subr.bf16.mxu0 0
          %6503 = vmatpush1.bf16.msra.mxu0 0
          %6504 = vmatprep.subr.bf16.mxu0 0
          %6505 = vmatpush1.bf16.msra.mxu0 0
          %6506 = vmatprep.subr.bf16.mxu0 0
          %6507 = vmatpush1.bf16.msra.mxu0 0
          %6508 = vmatprep.subr.bf16.mxu0 0
          %6509 = vmatpush1.bf16.msra.mxu0 0
          %6510 = vmatprep.subr.bf16.mxu0 0
          %6511 = vmatpush1.bf16.msra.mxu0 0
          %6512 = vmatprep.subr.bf16.mxu0 0
          %6513 = vmatpush1.bf16.msra.mxu0 0
          %6514 = vmatprep.subr.bf16.mxu0 0
          %6515 = vmatpush1.bf16.msra.mxu0 0
          %6516 = vmatprep.subr.bf16.mxu0 0
          %6517 = vmatpush1.bf16.msra.mxu0 0
          %6518 = vmatprep.subr.bf16.mxu0 0
          %6519 = vmatpush1.bf16.msra.mxu0 0
          %6520 = vmatprep.subr.bf16.mxu0 0
          %6521 = vmatpush1.bf16.msra.mxu0 0
          %6522 = vmatprep.subr.bf16.mxu0 0
          %6523 = vmatpush1.bf16.msra.mxu0 0
          %6524 = vmatprep.subr.bf16.mxu0 0
          %6525 = vmatpush1.bf16.msra.mxu0 0
          %6526 = vmatprep.subr.bf16.mxu0 0
          %6527 = vmatpush1.bf16.msra.mxu0 0
          %6528 = vmatprep.subr.bf16.mxu0 0
          %6529 = vmatpush1.bf16.msra.mxu0 0
          %6530 = vmatprep.mubr.bf16.mxu0 0
          %6531 = vmatmul.mubr.bf16.gmra.mrb[0].mxu0 %v6493
          %v6532 = vpop.f32.mrb[0].mxu0
          %v6533 = vadd.f32 0.0, %v6532
          %v6534 = vpop.f32.mrb[0].mxu0
          %v6535 = vpop.f32.mrb[0].mxu0
          %v6536 = vpop.f32.mrb[0].mxu0
          %6537 = vdwg.mxu0
          %v6539 = vsel %vm4751, %v6399, 0
          %v6542 = vsel %vm4979, %v6175, 0
          %6544 = vmatprep.subr.bf16.mxu0 0
          %6545 = vmatpush1.bf16.msra.mxu0 %v6542
          %6546 = vmatprep.subr.bf16.mxu0 0
          %6547 = vmatpush1.bf16.msra.mxu0 0
          %6548 = vmatprep.subr.bf16.mxu0 0
          %6549 = vmatpush1.bf16.msra.mxu0 0
          %6550 = vmatprep.subr.bf16.mxu0 0
          %6551 = vmatpush1.bf16.msra.mxu0 0
          %6552 = vmatprep.subr.bf16.mxu0 0
          %6553 = vmatpush1.bf16.msra.mxu0 0
          %6554 = vmatprep.subr.bf16.mxu0 0
          %6555 = vmatpush1.bf16.msra.mxu0 0
          %6556 = vmatprep.subr.bf16.mxu0 0
          %6557 = vmatpush1.bf16.msra.mxu0 0
          %6558 = vmatprep.subr.bf16.mxu0 0
          %6559 = vmatpush1.bf16.msra.mxu0 0
          %6560 = vmatprep.subr.bf16.mxu0 0
          %6561 = vmatpush1.bf16.msra.mxu0 0
          %6562 = vmatprep.subr.bf16.mxu0 0
          %6563 = vmatpush1.bf16.msra.mxu0 0
          %6564 = vmatprep.subr.bf16.mxu0 0
          %6565 = vmatpush1.bf16.msra.mxu0 0
          %6566 = vmatprep.subr.bf16.mxu0 0
          %6567 = vmatpush1.bf16.msra.mxu0 0
          %6568 = vmatprep.subr.bf16.mxu0 0
          %6569 = vmatpush1.bf16.msra.mxu0 0
          %6570 = vmatprep.subr.bf16.mxu0 0
          %6571 = vmatpush1.bf16.msra.mxu0 0
          %6572 = vmatprep.subr.bf16.mxu0 0
          %6573 = vmatpush1.bf16.msra.mxu0 0
          %6574 = vmatprep.subr.bf16.mxu0 0
          %6575 = vmatpush1.bf16.msra.mxu0 0
          %6576 = vmatprep.mubr.bf16.mxu0 0
          %6577 = vmatmul.mubr.bf16.gmra.mrb[0].mxu0 %v6539
          %v6578 = vpop.f32.mrb[0].mxu0
          %v6579 = vadd.f32 0.0, %v6578
          %v6580 = vpop.f32.mrb[0].mxu0
          %v6581 = vpop.f32.mrb[0].mxu0
          %v6582 = vpop.f32.mrb[0].mxu0
          %6583 = vdwg.mxu0
          %v6584 = vrcp.pop %v6386
          %v6585 = vrcp.pop %v6389
          %v6586 = vrcp.pop %v6392
          %v6587 = vrcp.pop %v6395
          %v6588 = vmul.f32 %v6441, %v6584
          %v6589 = vmul.f32 %v6487, %v6585
          %v6590 = vmul.f32 %v6533, %v6586
          %v6591 = vmul.f32 %v6579, %v6587
          %v6592 = vpack.c.bf16 %v6589, %v6588
          %v6593 = vpack.c.bf16 %v6591, %v6590
          %s6594 = scalar_lea.vmem %s1086, 8
          %v6595 = vld [vmem:[%s6594] sm:$0xf]
          %v6597 = vsel %vm4751, %v6592, 0
          %v6600 = vsel %vm4751, %v6593, 0
          %v6603 = vsel %vm4979, %v6595, 0
          %6605 = vmatprep.subr.bf16.mxu0 0
          %6606 = vmatpush1.bf16.msra.mxu0 %v6603
          %6607 = vmatprep.subr.bf16.mxu0 0
          %6608 = vmatpush1.bf16.msra.mxu0 0
          %6609 = vmatprep.subr.bf16.mxu0 0
          %6610 = vmatpush1.bf16.msra.mxu0 0
          %6611 = vmatprep.subr.bf16.mxu0 0
          %6612 = vmatpush1.bf16.msra.mxu0 0
          %6613 = vmatprep.subr.bf16.mxu0 0
          %6614 = vmatpush1.bf16.msra.mxu0 0
          %6615 = vmatprep.subr.bf16.mxu0 0
          %6616 = vmatpush1.bf16.msra.mxu0 0
          %6617 = vmatprep.subr.bf16.mxu0 0
          %6618 = vmatpush1.bf16.msra.mxu0 0
          %6619 = vmatprep.subr.bf16.mxu0 0
          %6620 = vmatpush1.bf16.msra.mxu0 0
          %6621 = vmatprep.subr.bf16.mxu0 0
          %6622 = vmatpush1.bf16.msra.mxu0 0
          %6623 = vmatprep.subr.bf16.mxu0 0
          %6624 = vmatpush1.bf16.msra.mxu0 0
          %6625 = vmatprep.subr.bf16.mxu0 0
          %6626 = vmatpush1.bf16.msra.mxu0 0
          %6627 = vmatprep.subr.bf16.mxu0 0
          %6628 = vmatpush1.bf16.msra.mxu0 0
          %6629 = vmatprep.subr.bf16.mxu0 0
          %6630 = vmatpush1.bf16.msra.mxu0 0
          %6631 = vmatprep.subr.bf16.mxu0 0
          %6632 = vmatpush1.bf16.msra.mxu0 0
          %6633 = vmatprep.subr.bf16.mxu0 0
          %6634 = vmatpush1.bf16.msra.mxu0 0
          %6635 = vmatprep.subr.bf16.mxu0 0
          %6636 = vmatpush1.bf16.msra.mxu0 0
          %6637 = vmatprep.mubr.bf16.mxu0 0
          %6638 = vmatmul.mubr.bf16.gmra.mrb[0].mxu0 %v6597
          %v6639 = vpop.f32.mrb[0].mxu0
          %v6640 = vadd.f32 0.0, %v6639
          %v6641 = vpop.f32.mrb[0].mxu0
          %v6642 = vpop.f32.mrb[0].mxu0
          %v6643 = vadd.f32 0.0, %v6642
          %v6644 = vpop.f32.mrb[0].mxu0
          %6645 = vmatprep.mubr.bf16.mxu0 0
          %6646 = vmatmul.mubr.bf16.gmra.mrb[0].mxu0 %v6600
          %v6647 = vpop.f32.mrb[0].mxu0
          %v6648 = vadd.f32 0.0, %v6647
          %v6649 = vpop.f32.mrb[0].mxu0
          %v6650 = vpop.f32.mrb[0].mxu0
          %v6651 = vadd.f32 0.0, %v6650
          %v6652 = vpop.f32.mrb[0].mxu0
          %6653 = vdwg.mxu0
          %v6654 = vadd.f32 %v5928, %v6640
          %v6655 = vadd.f32 %v5931, %v6643
          %v6656 = vadd.f32 %v5936, %v6648
          %v6657 = vadd.f32 %v5939, %v6651
          %s6658 = scalar_lea.vmem %s1035, 48
          %v6659 = vld [vmem:[%s6658] sm:$0xf]
          %v6660 = vld [vmem:[%s6658 + $0x4] sm:$0xf]
          %v6661 = vld [vmem:[%s6658 + $0x8] sm:$0xf]
          %v6662 = vld [vmem:[%s6658 + $0xc] sm:$0xf]
          %s6663 = scalar_lea.vmem %s1043, 3
          %v6664 = vld [vmem:[%s6663] sm:$0x1]
          %v6666 = vlaneseq
          %v6667 = vshrl.u32 %v6666, 7
          %v6668 = vsub.s32 0, %v6667
          %v6669 = vrot.slane %v6664, %v6668
          %v6675 = vunpack.c.l.b16 %v6659
          %v6676 = vunpack.c.l.b16 %v6660
          %v6677 = vunpack.c.l.b16 %v6661
          %v6678 = vunpack.c.l.b16 %v6662
          %v6679 = vpack.c.b16 %v6676, %v6675
          %v6680 = vpack.c.b16 %v6678, %v6677
          %6683 = vmatprep.subr.bf16.mxu0 0
          %6684 = vmatpush1.bf16.msra.mxu0 %v6679
          %6685 = vmatprep.subr.bf16.mxu0 0
          %6686 = vmatpush1.bf16.msra.mxu0 %v6680
          %6687 = vmatprep.subr.bf16.mxu0 0
          %6688 = vmatpush1.bf16.msra.mxu0 0
          %6689 = vmatprep.subr.bf16.mxu0 0
          %6690 = vmatpush1.bf16.msra.mxu0 0
          %6691 = vmatprep.subr.bf16.mxu0 0
          %6692 = vmatpush1.bf16.msra.mxu0 0
          %6693 = vmatprep.subr.bf16.mxu0 0
          %6694 = vmatpush1.bf16.msra.mxu0 0
          %6695 = vmatprep.subr.bf16.mxu0 0
          %6696 = vmatpush1.bf16.msra.mxu0 0
          %6697 = vmatprep.subr.bf16.mxu0 0
          %6698 = vmatpush1.bf16.msra.mxu0 0
          %6699 = vmatprep.subr.bf16.mxu0 0
          %6700 = vmatpush1.bf16.msra.mxu0 0
          %6701 = vmatprep.subr.bf16.mxu0 0
          %6702 = vmatpush1.bf16.msra.mxu0 0
          %6703 = vmatprep.subr.bf16.mxu0 0
          %6704 = vmatpush1.bf16.msra.mxu0 0
          %6705 = vmatprep.subr.bf16.mxu0 0
          %6706 = vmatpush1.bf16.msra.mxu0 0
          %6707 = vmatprep.subr.bf16.mxu0 0
          %6708 = vmatpush1.bf16.msra.mxu0 0
          %6709 = vmatprep.subr.bf16.mxu0 0
          %6710 = vmatpush1.bf16.msra.mxu0 0
          %6711 = vmatprep.subr.bf16.mxu0 0
          %6712 = vmatpush1.bf16.msra.mxu0 0
          %6713 = vmatprep.subr.bf16.mxu0 0
          %6714 = vmatpush1.bf16.msra.mxu0 0
          %6715 = vmatprep.mubr.bf16.mxu0 0
          %6716 = vmatmul.mubr.bf16.gmra.mrb[0].mxu0 %v4535
          %v6717 = vpop.f32.mrb[0].mxu0
          %v6718 = vadd.f32 %v6669, %v6717
          %v6719 = vpop.f32.mrb[0].mxu0
          %v6720 = vpop.f32.mrb[0].mxu0
          %v6721 = vadd.f32 %v6669, %v6720
          %v6722 = vpop.f32.mrb[0].mxu0
          %6723 = vmatprep.mubr.bf16.mxu0 0
          %6724 = vmatmul.mubr.bf16.gmra.mrb[0].mxu0 %v4538
          %v6725 = vpop.f32.mrb[0].mxu0
          %v6726 = vadd.f32 %v6669, %v6725
          %v6727 = vpop.f32.mrb[0].mxu0
          %v6728 = vpop.f32.mrb[0].mxu0
          %v6729 = vadd.f32 %v6669, %v6728
          %v6730 = vpop.f32.mrb[0].mxu0
          %6731 = vdwg.mxu0
          %s6732 = scalar_lea.vmem %s1052, 48
          %v6733 = vld [vmem:[%s6732] sm:$0xf]
          %v6734 = vld [vmem:[%s6732 + $0x4] sm:$0xf]
          %v6735 = vld [vmem:[%s6732 + $0x8] sm:$0xf]
          %v6736 = vld [vmem:[%s6732 + $0xc] sm:$0xf]
          %s6737 = scalar_lea.vmem %s1060, 3
          %v6738 = vld [vmem:[%s6737] sm:$0x1]
          %v6740 = vlaneseq
          %v6741 = vshrl.u32 %v6740, 7
          %v6742 = vsub.s32 0, %v6741
          %v6743 = vrot.slane %v6738, %v6742
          %v6749 = vunpack.c.l.b16 %v6733
          %v6750 = vunpack.c.l.b16 %v6734
          %v6751 = vunpack.c.l.b16 %v6735
          %v6752 = vunpack.c.l.b16 %v6736
          %v6753 = vpack.c.b16 %v6750, %v6749
          %v6754 = vpack.c.b16 %v6752, %v6751
          %6757 = vmatprep.subr.bf16.mxu0 0
          %6758 = vmatpush1.bf16.msra.mxu0 %v6753
          %6759 = vmatprep.subr.bf16.mxu0 0
          %6760 = vmatpush1.bf16.msra.mxu0 %v6754
          %6761 = vmatprep.subr.bf16.mxu0 0
          %6762 = vmatpush1.bf16.msra.mxu0 0
          %6763 = vmatprep.subr.bf16.mxu0 0
          %6764 = vmatpush1.bf16.msra.mxu0 0
          %6765 = vmatprep.subr.bf16.mxu0 0
          %6766 = vmatpush1.bf16.msra.mxu0 0
          %6767 = vmatprep.subr.bf16.mxu0 0
          %6768 = vmatpush1.bf16.msra.mxu0 0
          %6769 = vmatprep.subr.bf16.mxu0 0
          %6770 = vmatpush1.bf16.msra.mxu0 0
          %6771 = vmatprep.subr.bf16.mxu0 0
          %6772 = vmatpush1.bf16.msra.mxu0 0
          %6773 = vmatprep.subr.bf16.mxu0 0
          %6774 = vmatpush1.bf16.msra.mxu0 0
          %6775 = vmatprep.subr.bf16.mxu0 0
          %6776 = vmatpush1.bf16.msra.mxu0 0
          %6777 = vmatprep.subr.bf16.mxu0 0
          %6778 = vmatpush1.bf16.msra.mxu0 0
          %6779 = vmatprep.subr.bf16.mxu0 0
          %6780 = vmatpush1.bf16.msra.mxu0 0
          %6781 = vmatprep.subr.bf16.mxu0 0
          %6782 = vmatpush1.bf16.msra.mxu0 0
          %6783 = vmatprep.subr.bf16.mxu0 0
          %6784 = vmatpush1.bf16.msra.mxu0 0
          %6785 = vmatprep.subr.bf16.mxu0 0
          %6786 = vmatpush1.bf16.msra.mxu0 0
          %6787 = vmatprep.subr.bf16.mxu0 0
          %6788 = vmatpush1.bf16.msra.mxu0 0
          %6789 = vmatprep.mubr.bf16.mxu0 0
          %6790 = vmatmul.mubr.bf16.gmra.mrb[0].mxu0 %v4613
          %v6791 = vpop.f32.mrb[0].mxu0
          %v6792 = vadd.f32 %v6743, %v6791
          %v6793 = vpop.f32.mrb[0].mxu0
          %v6794 = vpop.f32.mrb[0].mxu0
          %v6795 = vadd.f32 %v6743, %v6794
          %v6796 = vpop.f32.mrb[0].mxu0
          %6797 = vmatprep.mubr.bf16.mxu0 0
          %6798 = vmatmul.mubr.bf16.gmra.mrb[0].mxu0 %v4616
          %v6799 = vpop.f32.mrb[0].mxu0
          %v6800 = vadd.f32 %v6743, %v6799
          %v6801 = vpop.f32.mrb[0].mxu0
          %v6802 = vpop.f32.mrb[0].mxu0
          %v6803 = vadd.f32 %v6743, %v6802
          %v6804 = vpop.f32.mrb[0].mxu0
          %6805 = vdwg.mxu0
          %s6806 = scalar_lea.vmem %s1069, 48
          %v6807 = vld [vmem:[%s6806] sm:$0xf]
          %v6808 = vld [vmem:[%s6806 + $0x4] sm:$0xf]
          %v6809 = vld [vmem:[%s6806 + $0x8] sm:$0xf]
          %v6810 = vld [vmem:[%s6806 + $0xc] sm:$0xf]
          %s6811 = scalar_lea.vmem %s1077, 3
          %v6812 = vld [vmem:[%s6811] sm:$0x1]
          %v6814 = vlaneseq
          %v6815 = vshrl.u32 %v6814, 7
          %v6816 = vsub.s32 0, %v6815
          %v6817 = vrot.slane %v6812, %v6816
          %v6823 = vunpack.c.l.b16 %v6807
          %v6824 = vunpack.c.l.b16 %v6808
          %v6825 = vunpack.c.l.b16 %v6809
          %v6826 = vunpack.c.l.b16 %v6810
          %v6827 = vpack.c.b16 %v6824, %v6823
          %v6828 = vpack.c.b16 %v6826, %v6825
          %6831 = vmatprep.subr.bf16.mxu0 0
          %6832 = vmatpush1.bf16.msra.mxu0 %v6827
          %6833 = vmatprep.subr.bf16.mxu0 0
          %6834 = vmatpush1.bf16.msra.mxu0 %v6828
          %6835 = vmatprep.subr.bf16.mxu0 0
          %6836 = vmatpush1.bf16.msra.mxu0 0
          %6837 = vmatprep.subr.bf16.mxu0 0
          %6838 = vmatpush1.bf16.msra.mxu0 0
          %6839 = vmatprep.subr.bf16.mxu0 0
          %6840 = vmatpush1.bf16.msra.mxu0 0
          %6841 = vmatprep.subr.bf16.mxu0 0
          %6842 = vmatpush1.bf16.msra.mxu0 0
          %6843 = vmatprep.subr.bf16.mxu0 0
          %6844 = vmatpush1.bf16.msra.mxu0 0
          %6845 = vmatprep.subr.bf16.mxu0 0
          %6846 = vmatpush1.bf16.msra.mxu0 0
          %6847 = vmatprep.subr.bf16.mxu0 0
          %6848 = vmatpush1.bf16.msra.mxu0 0
          %6849 = vmatprep.subr.bf16.mxu0 0
          %6850 = vmatpush1.bf16.msra.mxu0 0
          %6851 = vmatprep.subr.bf16.mxu0 0
          %6852 = vmatpush1.bf16.msra.mxu0 0
          %6853 = vmatprep.subr.bf16.mxu0 0
          %6854 = vmatpush1.bf16.msra.mxu0 0
          %6855 = vmatprep.subr.bf16.mxu0 0
          %6856 = vmatpush1.bf16.msra.mxu0 0
          %6857 = vmatprep.subr.bf16.mxu0 0
          %6858 = vmatpush1.bf16.msra.mxu0 0
          %6859 = vmatprep.subr.bf16.mxu0 0
          %6860 = vmatpush1.bf16.msra.mxu0 0
          %6861 = vmatprep.subr.bf16.mxu0 0
          %6862 = vmatpush1.bf16.msra.mxu0 0
          %6863 = vmatprep.mubr.bf16.mxu0 0
          %6864 = vmatmul.mubr.bf16.gmra.mrb[0].mxu0 %v4613
          %v6865 = vpop.f32.mrb[0].mxu0
          %v6866 = vadd.f32 %v6817, %v6865
          %v6867 = vpop.f32.mrb[0].mxu0
          %v6868 = vpop.f32.mrb[0].mxu0
          %v6869 = vadd.f32 %v6817, %v6868
          %v6870 = vpop.f32.mrb[0].mxu0
          %6871 = vmatprep.mubr.bf16.mxu0 0
          %6872 = vmatmul.mubr.bf16.gmra.mrb[0].mxu0 %v4616
          %v6873 = vpop.f32.mrb[0].mxu0
          %v6874 = vadd.f32 %v6817, %v6873
          %v6875 = vpop.f32.mrb[0].mxu0
          %v6876 = vpop.f32.mrb[0].mxu0
          %v6877 = vadd.f32 %v6817, %v6876
          %v6878 = vpop.f32.mrb[0].mxu0
          %6879 = vdwg.mxu0
          %v6880 = vpack.c.bf16 %v6718, %v6718
          %v6881 = vpack.c.bf16 %v6721, %v6721
          %v6882 = vpack.c.bf16 %v6726, %v6726
          %v6883 = vpack.c.bf16 %v6729, %v6729
          %v6884 = vpack.c.bf16 %v6792, %v6792
          %v6885 = vpack.c.bf16 %v6795, %v6795
          %v6886 = vpack.c.bf16 %v6800, %v6800
          %v6887 = vpack.c.bf16 %v6803, %v6803
          %v6888 = vpack.c.bf16 %v6866, %v6866
          %v6889 = vpack.c.bf16 %v6869, %v6869
          %v6890 = vpack.c.bf16 %v6874, %v6874
          %v6891 = vpack.c.bf16 %v6877, %v6877
          %v6893 = vsel %vm4751, %v6880, 0
          %v6896 = vsel %vm4751, %v6884, 0
          %6898 = vmatprep.subr.bf16.mxu0 0
          %6899 = vmatpush1.bf16.xpose.msra.mxu0 %v6896
          %6900 = vmatprep.subr.bf16.mxu0 0
          %6901 = vmatpush1.bf16.xpose.msra.mxu0 0
          %6902 = vmatprep.subr.bf16.mxu0 0
          %6903 = vmatpush1.bf16.xpose.msra.mxu0 0
          %6904 = vmatprep.subr.bf16.mxu0 0
          %6905 = vmatpush1.bf16.xpose.msra.mxu0 0
          %6906 = vmatprep.subr.bf16.mxu0 0
          %6907 = vmatpush1.bf16.xpose.msra.mxu0 0
          %6908 = vmatprep.subr.bf16.mxu0 0
          %6909 = vmatpush1.bf16.xpose.msra.mxu0 0
          %6910 = vmatprep.subr.bf16.mxu0 0
          %6911 = vmatpush1.bf16.xpose.msra.mxu0 0
          %6912 = vmatprep.subr.bf16.mxu0 0
          %6913 = vmatpush1.bf16.xpose.msra.mxu0 0
          %6914 = vmatprep.subr.bf16.mxu0 0
          %6915 = vmatpush1.bf16.xpose.msra.mxu0 0
          %6916 = vmatprep.subr.bf16.mxu0 0
          %6917 = vmatpush1.bf16.xpose.msra.mxu0 0
          %6918 = vmatprep.subr.bf16.mxu0 0
          %6919 = vmatpush1.bf16.xpose.msra.mxu0 0
          %6920 = vmatprep.subr.bf16.mxu0 0
          %6921 = vmatpush1.bf16.xpose.msra.mxu0 0
          %6922 = vmatprep.subr.bf16.mxu0 0
          %6923 = vmatpush1.bf16.xpose.msra.mxu0 0
          %6924 = vmatprep.subr.bf16.mxu0 0
          %6925 = vmatpush1.bf16.xpose.msra.mxu0 0
          %6926 = vmatprep.subr.bf16.mxu0 0
          %6927 = vmatpush1.bf16.xpose.msra.mxu0 0
          %6928 = vmatprep.subr.bf16.mxu0 0
          %6929 = vmatpush1.bf16.xpose.msra.mxu0 0
          %6930 = vmatprep.mubr.bf16.mxu0 0
          %6931 = vmatmul.mubr.bf16.gmra.mrb[0].mxu0 %v6893
          %v6932 = vpop.f32.mrb[0].mxu0
          %v6933 = vadd.f32 %v4493, %v6932
          %v6934 = vpop.f32.mrb[0].mxu0
          %v6935 = vpop.f32.mrb[0].mxu0
          %v6936 = vpop.f32.mrb[0].mxu0
          %6937 = vdwg.mxu0
          %v6939 = vsel %vm4751, %v6881, 0
          %v6942 = vsel %vm4751, %v6885, 0
          %6944 = vmatprep.subr.bf16.mxu0 0
          %6945 = vmatpush1.bf16.xpose.msra.mxu0 %v6942
          %6946 = vmatprep.subr.bf16.mxu0 0
          %6947 = vmatpush1.bf16.xpose.msra.mxu0 0
          %6948 = vmatprep.subr.bf16.mxu0 0
          %6949 = vmatpush1.bf16.xpose.msra.mxu0 0
          %6950 = vmatprep.subr.bf16.mxu0 0
          %6951 = vmatpush1.bf16.xpose.msra.mxu0 0
          %6952 = vmatprep.subr.bf16.mxu0 0
          %6953 = vmatpush1.bf16.xpose.msra.mxu0 0
          %6954 = vmatprep.subr.bf16.mxu0 0
          %6955 = vmatpush1.bf16.xpose.msra.mxu0 0
          %6956 = vmatprep.subr.bf16.mxu0 0
          %6957 = vmatpush1.bf16.xpose.msra.mxu0 0
          %6958 = vmatprep.subr.bf16.mxu0 0
          %6959 = vmatpush1.bf16.xpose.msra.mxu0 0
          %6960 = vmatprep.subr.bf16.mxu0 0
          %6961 = vmatpush1.bf16.xpose.msra.mxu0 0
          %6962 = vmatprep.subr.bf16.mxu0 0
          %6963 = vmatpush1.bf16.xpose.msra.mxu0 0
          %6964 = vmatprep.subr.bf16.mxu0 0
          %6965 = vmatpush1.bf16.xpose.msra.mxu0 0
          %6966 = vmatprep.subr.bf16.mxu0 0
          %6967 = vmatpush1.bf16.xpose.msra.mxu0 0
          %6968 = vmatprep.subr.bf16.mxu0 0
          %6969 = vmatpush1.bf16.xpose.msra.mxu0 0
          %6970 = vmatprep.subr.bf16.mxu0 0
          %6971 = vmatpush1.bf16.xpose.msra.mxu0 0
          %6972 = vmatprep.subr.bf16.mxu0 0
          %6973 = vmatpush1.bf16.xpose.msra.mxu0 0
          %6974 = vmatprep.subr.bf16.mxu0 0
          %6975 = vmatpush1.bf16.xpose.msra.mxu0 0
          %6976 = vmatprep.mubr.bf16.mxu0 0
          %6977 = vmatmul.mubr.bf16.gmra.mrb[0].mxu0 %v6939
          %v6978 = vpop.f32.mrb[0].mxu0
          %v6979 = vadd.f32 %v4497, %v6978
          %v6980 = vpop.f32.mrb[0].mxu0
          %v6981 = vpop.f32.mrb[0].mxu0
          %v6982 = vpop.f32.mrb[0].mxu0
          %6983 = vdwg.mxu0
          %v6985 = vsel %vm4751, %v6882, 0
          %v6988 = vsel %vm4751, %v6886, 0
          %6990 = vmatprep.subr.bf16.mxu0 0
          %6991 = vmatpush1.bf16.xpose.msra.mxu0 %v6988
          %6992 = vmatprep.subr.bf16.mxu0 0
          %6993 = vmatpush1.bf16.xpose.msra.mxu0 0
          %6994 = vmatprep.subr.bf16.mxu0 0
          %6995 = vmatpush1.bf16.xpose.msra.mxu0 0
          %6996 = vmatprep.subr.bf16.mxu0 0
          %6997 = vmatpush1.bf16.xpose.msra.mxu0 0
          %6998 = vmatprep.subr.bf16.mxu0 0
          %6999 = vmatpush1.bf16.xpose.msra.mxu0 0
          %7000 = vmatprep.subr.bf16.mxu0 0
          %7001 = vmatpush1.bf16.xpose.msra.mxu0 0
          %7002 = vmatprep.subr.bf16.mxu0 0
          %7003 = vmatpush1.bf16.xpose.msra.mxu0 0
          %7004 = vmatprep.subr.bf16.mxu0 0
          %7005 = vmatpush1.bf16.xpose.msra.mxu0 0
          %7006 = vmatprep.subr.bf16.mxu0 0
          %7007 = vmatpush1.bf16.xpose.msra.mxu0 0
          %7008 = vmatprep.subr.bf16.mxu0 0
          %7009 = vmatpush1.bf16.xpose.msra.mxu0 0
          %7010 = vmatprep.subr.bf16.mxu0 0
          %7011 = vmatpush1.bf16.xpose.msra.mxu0 0
          %7012 = vmatprep.subr.bf16.mxu0 0
          %7013 = vmatpush1.bf16.xpose.msra.mxu0 0
          %7014 = vmatprep.subr.bf16.mxu0 0
          %7015 = vmatpush1.bf16.xpose.msra.mxu0 0
          %7016 = vmatprep.subr.bf16.mxu0 0
          %7017 = vmatpush1.bf16.xpose.msra.mxu0 0
          %7018 = vmatprep.subr.bf16.mxu0 0
          %7019 = vmatpush1.bf16.xpose.msra.mxu0 0
          %7020 = vmatprep.subr.bf16.mxu0 0
          %7021 = vmatpush1.bf16.xpose.msra.mxu0 0
          %7022 = vmatprep.mubr.bf16.mxu0 0
          %7023 = vmatmul.mubr.bf16.gmra.mrb[0].mxu0 %v6985
          %v7024 = vpop.f32.mrb[0].mxu0
          %v7025 = vadd.f32 %v4501, %v7024
          %v7026 = vpop.f32.mrb[0].mxu0
          %v7027 = vpop.f32.mrb[0].mxu0
          %v7028 = vpop.f32.mrb[0].mxu0
          %7029 = vdwg.mxu0
          %v7031 = vsel %vm4751, %v6883, 0
          %v7034 = vsel %vm4751, %v6887, 0
          %7036 = vmatprep.subr.bf16.mxu0 0
          %7037 = vmatpush1.bf16.xpose.msra.mxu0 %v7034
          %7038 = vmatprep.subr.bf16.mxu0 0
          %7039 = vmatpush1.bf16.xpose.msra.mxu0 0
          %7040 = vmatprep.subr.bf16.mxu0 0
          %7041 = vmatpush1.bf16.xpose.msra.mxu0 0
          %7042 = vmatprep.subr.bf16.mxu0 0
          %7043 = vmatpush1.bf16.xpose.msra.mxu0 0
          %7044 = vmatprep.subr.bf16.mxu0 0
          %7045 = vmatpush1.bf16.xpose.msra.mxu0 0
          %7046 = vmatprep.subr.bf16.mxu0 0
          %7047 = vmatpush1.bf16.xpose.msra.mxu0 0
          %7048 = vmatprep.subr.bf16.mxu0 0
          %7049 = vmatpush1.bf16.xpose.msra.mxu0 0
          %7050 = vmatprep.subr.bf16.mxu0 0
          %7051 = vmatpush1.bf16.xpose.msra.mxu0 0
          %7052 = vmatprep.subr.bf16.mxu0 0
          %7053 = vmatpush1.bf16.xpose.msra.mxu0 0
          %7054 = vmatprep.subr.bf16.mxu0 0
          %7055 = vmatpush1.bf16.xpose.msra.mxu0 0
          %7056 = vmatprep.subr.bf16.mxu0 0
          %7057 = vmatpush1.bf16.xpose.msra.mxu0 0
          %7058 = vmatprep.subr.bf16.mxu0 0
          %7059 = vmatpush1.bf16.xpose.msra.mxu0 0
          %7060 = vmatprep.subr.bf16.mxu0 0
          %7061 = vmatpush1.bf16.xpose.msra.mxu0 0
          %7062 = vmatprep.subr.bf16.mxu0 0
          %7063 = vmatpush1.bf16.xpose.msra.mxu0 0
          %7064 = vmatprep.subr.bf16.mxu0 0
          %7065 = vmatpush1.bf16.xpose.msra.mxu0 0
          %7066 = vmatprep.subr.bf16.mxu0 0
          %7067 = vmatpush1.bf16.xpose.msra.mxu0 0
          %7068 = vmatprep.mubr.bf16.mxu0 0
          %7069 = vmatmul.mubr.bf16.gmra.mrb[0].mxu0 %v7031
          %v7070 = vpop.f32.mrb[0].mxu0
          %v7071 = vadd.f32 %v4505, %v7070
          %v7072 = vpop.f32.mrb[0].mxu0
          %v7073 = vpop.f32.mrb[0].mxu0
          %v7074 = vpop.f32.mrb[0].mxu0
          %7075 = vdwg.mxu0
          %v7076 = vsel %vm4751, %v6933, -inf
          %7077 = vmax.xlane.f32.xlu0 %v7076
          %v7078 = vpop.xlane.xlu0 %7077
          %v7079 = vsel %vm4751, %v6979, -inf
          %7080 = vmax.xlane.f32.xlu0 %v7079
          %v7081 = vpop.xlane.xlu0 %7080
          %v7082 = vsel %vm4751, %v7025, -inf
          %7083 = vmax.xlane.f32.xlu0 %v7082
          %v7084 = vpop.xlane.xlu0 %7083
          %v7085 = vsel %vm4751, %v7071, -inf
          %7086 = vmax.xlane.f32.xlu0 %v7085
          %v7087 = vpop.xlane.xlu0 %7086
          %v7088 = vsub.f32 %v6933, %v7078
          %v7089 = vsub.f32 %v6979, %v7081
          %v7090 = vsub.f32 %v7025, %v7084
          %v7091 = vsub.f32 %v7071, %v7087
          %v7092 = vmul.f32 %v7088, 1.442695
          %v7093 = vpow.pop %v7092
          %v7094 = vmul.f32 %v7089, 1.442695
          %v7095 = vpow.pop %v7094
          %v7096 = vmul.f32 %v7090, 1.442695
          %v7097 = vpow.pop %v7096
          %v7098 = vmul.f32 %v7091, 1.442695
          %v7099 = vpow.pop %v7098
          %v7100 = vsel %vm4751, %v7093, 0.0
          %7101 = vadd.xlane.f32.xlu0 %v7100
          %v7102 = vpop.xlane.xlu0 %7101
          %v7103 = vsel %vm4751, %v7095, 0.0
          %7104 = vadd.xlane.f32.xlu0 %v7103
          %v7105 = vpop.xlane.xlu0 %7104
          %v7106 = vsel %vm4751, %v7097, 0.0
          %7107 = vadd.xlane.f32.xlu0 %v7106
          %v7108 = vpop.xlane.xlu0 %7107
          %v7109 = vsel %vm4751, %v7099, 0.0
          %7110 = vadd.xlane.f32.xlu0 %v7109
          %v7111 = vpop.xlane.xlu0 %7110
          %v7112 = vpack.c.bf16 %v7093, %v7093
          %v7113 = vpack.c.bf16 %v7095, %v7095
          %v7114 = vpack.c.bf16 %v7097, %v7097
          %v7115 = vpack.c.bf16 %v7099, %v7099
          %v7117 = vsel %vm4751, %v7112, 0
          %v7120 = vsel %vm4979, %v6888, 0
          %7122 = vmatprep.subr.bf16.mxu0 0
          %7123 = vmatpush1.bf16.msra.mxu0 %v7120
          %7124 = vmatprep.subr.bf16.mxu0 0
          %7125 = vmatpush1.bf16.msra.mxu0 0
          %7126 = vmatprep.subr.bf16.mxu0 0
          %7127 = vmatpush1.bf16.msra.mxu0 0
          %7128 = vmatprep.subr.bf16.mxu0 0
          %7129 = vmatpush1.bf16.msra.mxu0 0
          %7130 = vmatprep.subr.bf16.mxu0 0
          %7131 = vmatpush1.bf16.msra.mxu0 0
          %7132 = vmatprep.subr.bf16.mxu0 0
          %7133 = vmatpush1.bf16.msra.mxu0 0
          %7134 = vmatprep.subr.bf16.mxu0 0
          %7135 = vmatpush1.bf16.msra.mxu0 0
          %7136 = vmatprep.subr.bf16.mxu0 0
          %7137 = vmatpush1.bf16.msra.mxu0 0
          %7138 = vmatprep.subr.bf16.mxu0 0
          %7139 = vmatpush1.bf16.msra.mxu0 0
          %7140 = vmatprep.subr.bf16.mxu0 0
          %7141 = vmatpush1.bf16.msra.mxu0 0
          %7142 = vmatprep.subr.bf16.mxu0 0
          %7143 = vmatpush1.bf16.msra.mxu0 0
          %7144 = vmatprep.subr.bf16.mxu0 0
          %7145 = vmatpush1.bf16.msra.mxu0 0
          %7146 = vmatprep.subr.bf16.mxu0 0
          %7147 = vmatpush1.bf16.msra.mxu0 0
          %7148 = vmatprep.subr.bf16.mxu0 0
          %7149 = vmatpush1.bf16.msra.mxu0 0
          %7150 = vmatprep.subr.bf16.mxu0 0
          %7151 = vmatpush1.bf16.msra.mxu0 0
          %7152 = vmatprep.subr.bf16.mxu0 0
          %7153 = vmatpush1.bf16.msra.mxu0 0
          %7154 = vmatprep.mubr.bf16.mxu0 0
          %7155 = vmatmul.mubr.bf16.gmra.mrb[0].mxu0 %v7117
          %v7156 = vpop.f32.mrb[0].mxu0
          %v7157 = vadd.f32 0.0, %v7156
          %v7158 = vpop.f32.mrb[0].mxu0
          %v7159 = vpop.f32.mrb[0].mxu0
          %v7160 = vpop.f32.mrb[0].mxu0
          %7161 = vdwg.mxu0
          %v7163 = vsel %vm4751, %v7113, 0
          %v7166 = vsel %vm4979, %v6889, 0
          %7168 = vmatprep.subr.bf16.mxu0 0
          %7169 = vmatpush1.bf16.msra.mxu0 %v7166
          %7170 = vmatprep.subr.bf16.mxu0 0
          %7171 = vmatpush1.bf16.msra.mxu0 0
          %7172 = vmatprep.subr.bf16.mxu0 0
          %7173 = vmatpush1.bf16.msra.mxu0 0
          %7174 = vmatprep.subr.bf16.mxu0 0
          %7175 = vmatpush1.bf16.msra.mxu0 0
          %7176 = vmatprep.subr.bf16.mxu0 0
          %7177 = vmatpush1.bf16.msra.mxu0 0
          %7178 = vmatprep.subr.bf16.mxu0 0
          %7179 = vmatpush1.bf16.msra.mxu0 0
          %7180 = vmatprep.subr.bf16.mxu0 0
          %7181 = vmatpush1.bf16.msra.mxu0 0
          %7182 = vmatprep.subr.bf16.mxu0 0
          %7183 = vmatpush1.bf16.msra.mxu0 0
          %7184 = vmatprep.subr.bf16.mxu0 0
          %7185 = vmatpush1.bf16.msra.mxu0 0
          %7186 = vmatprep.subr.bf16.mxu0 0
          %7187 = vmatpush1.bf16.msra.mxu0 0
          %7188 = vmatprep.subr.bf16.mxu0 0
          %7189 = vmatpush1.bf16.msra.mxu0 0
          %7190 = vmatprep.subr.bf16.mxu0 0
          %7191 = vmatpush1.bf16.msra.mxu0 0
          %7192 = vmatprep.subr.bf16.mxu0 0
          %7193 = vmatpush1.bf16.msra.mxu0 0
          %7194 = vmatprep.subr.bf16.mxu0 0
          %7195 = vmatpush1.bf16.msra.mxu0 0
          %7196 = vmatprep.subr.bf16.mxu0 0
          %7197 = vmatpush1.bf16.msra.mxu0 0
          %7198 = vmatprep.subr.bf16.mxu0 0
          %7199 = vmatpush1.bf16.msra.mxu0 0
          %7200 = vmatprep.mubr.bf16.mxu0 0
          %7201 = vmatmul.mubr.bf16.gmra.mrb[0].mxu0 %v7163
          %v7202 = vpop.f32.mrb[0].mxu0
          %v7203 = vadd.f32 0.0, %v7202
          %v7204 = vpop.f32.mrb[0].mxu0
          %v7205 = vpop.f32.mrb[0].mxu0
          %v7206 = vpop.f32.mrb[0].mxu0
          %7207 = vdwg.mxu0
          %v7209 = vsel %vm4751, %v7114, 0
          %v7212 = vsel %vm4979, %v6890, 0
          %7214 = vmatprep.subr.bf16.mxu0 0
          %7215 = vmatpush1.bf16.msra.mxu0 %v7212
          %7216 = vmatprep.subr.bf16.mxu0 0
          %7217 = vmatpush1.bf16.msra.mxu0 0
          %7218 = vmatprep.subr.bf16.mxu0 0
          %7219 = vmatpush1.bf16.msra.mxu0 0
          %7220 = vmatprep.subr.bf16.mxu0 0
          %7221 = vmatpush1.bf16.msra.mxu0 0
          %7222 = vmatprep.subr.bf16.mxu0 0
          %7223 = vmatpush1.bf16.msra.mxu0 0
          %7224 = vmatprep.subr.bf16.mxu0 0
          %7225 = vmatpush1.bf16.msra.mxu0 0
          %7226 = vmatprep.subr.bf16.mxu0 0
          %7227 = vmatpush1.bf16.msra.mxu0 0
          %7228 = vmatprep.subr.bf16.mxu0 0
          %7229 = vmatpush1.bf16.msra.mxu0 0
          %7230 = vmatprep.subr.bf16.mxu0 0
          %7231 = vmatpush1.bf16.msra.mxu0 0
          %7232 = vmatprep.subr.bf16.mxu0 0
          %7233 = vmatpush1.bf16.msra.mxu0 0
          %7234 = vmatprep.subr.bf16.mxu0 0
          %7235 = vmatpush1.bf16.msra.mxu0 0
          %7236 = vmatprep.subr.bf16.mxu0 0
          %7237 = vmatpush1.bf16.msra.mxu0 0
          %7238 = vmatprep.subr.bf16.mxu0 0
          %7239 = vmatpush1.bf16.msra.mxu0 0
          %7240 = vmatprep.subr.bf16.mxu0 0
          %7241 = vmatpush1.bf16.msra.mxu0 0
          %7242 = vmatprep.subr.bf16.mxu0 0
          %7243 = vmatpush1.bf16.msra.mxu0 0
          %7244 = vmatprep.subr.bf16.mxu0 0
          %7245 = vmatpush1.bf16.msra.mxu0 0
          %7246 = vmatprep.mubr.bf16.mxu0 0
          %7247 = vmatmul.mubr.bf16.gmra.mrb[0].mxu0 %v7209
          %v7248 = vpop.f32.mrb[0].mxu0
          %v7249 = vadd.f32 0.0, %v7248
          %v7250 = vpop.f32.mrb[0].mxu0
          %v7251 = vpop.f32.mrb[0].mxu0
          %v7252 = vpop.f32.mrb[0].mxu0
          %7253 = vdwg.mxu0
          %v7255 = vsel %vm4751, %v7115, 0
          %v7258 = vsel %vm4979, %v6891, 0
          %7260 = vmatprep.subr.bf16.mxu0 0
          %7261 = vmatpush1.bf16.msra.mxu0 %v7258
          %7262 = vmatprep.subr.bf16.mxu0 0
          %7263 = vmatpush1.bf16.msra.mxu0 0
          %7264 = vmatprep.subr.bf16.mxu0 0
          %7265 = vmatpush1.bf16.msra.mxu0 0
          %7266 = vmatprep.subr.bf16.mxu0 0
          %7267 = vmatpush1.bf16.msra.mxu0 0
          %7268 = vmatprep.subr.bf16.mxu0 0
          %7269 = vmatpush1.bf16.msra.mxu0 0
          %7270 = vmatprep.subr.bf16.mxu0 0
          %7271 = vmatpush1.bf16.msra.mxu0 0
          %7272 = vmatprep.subr.bf16.mxu0 0
          %7273 = vmatpush1.bf16.msra.mxu0 0
          %7274 = vmatprep.subr.bf16.mxu0 0
          %7275 = vmatpush1.bf16.msra.mxu0 0
          %7276 = vmatprep.subr.bf16.mxu0 0
          %7277 = vmatpush1.bf16.msra.mxu0 0
          %7278 = vmatprep.subr.bf16.mxu0 0
          %7279 = vmatpush1.bf16.msra.mxu0 0
          %7280 = vmatprep.subr.bf16.mxu0 0
          %7281 = vmatpush1.bf16.msra.mxu0 0
          %7282 = vmatprep.subr.bf16.mxu0 0
          %7283 = vmatpush1.bf16.msra.mxu0 0
          %7284 = vmatprep.subr.bf16.mxu0 0
          %7285 = vmatpush1.bf16.msra.mxu0 0
          %7286 = vmatprep.subr.bf16.mxu0 0
          %7287 = vmatpush1.bf16.msra.mxu0 0
          %7288 = vmatprep.subr.bf16.mxu0 0
          %7289 = vmatpush1.bf16.msra.mxu0 0
          %7290 = vmatprep.subr.bf16.mxu0 0
          %7291 = vmatpush1.bf16.msra.mxu0 0
          %7292 = vmatprep.mubr.bf16.mxu0 0
          %7293 = vmatmul.mubr.bf16.gmra.mrb[0].mxu0 %v7255
          %v7294 = vpop.f32.mrb[0].mxu0
          %v7295 = vadd.f32 0.0, %v7294
          %v7296 = vpop.f32.mrb[0].mxu0
          %v7297 = vpop.f32.mrb[0].mxu0
          %v7298 = vpop.f32.mrb[0].mxu0
          %7299 = vdwg.mxu0
          %v7300 = vrcp.pop %v7102
          %v7301 = vrcp.pop %v7105
          %v7302 = vrcp.pop %v7108
          %v7303 = vrcp.pop %v7111
          %v7304 = vmul.f32 %v7157, %v7300
          %v7305 = vmul.f32 %v7203, %v7301
          %v7306 = vmul.f32 %v7249, %v7302
          %v7307 = vmul.f32 %v7295, %v7303
          %v7308 = vpack.c.bf16 %v7305, %v7304
          %v7309 = vpack.c.bf16 %v7307, %v7306
          %s7310 = scalar_lea.vmem %s1086, 12
          %v7311 = vld [vmem:[%s7310] sm:$0xf]
          %v7313 = vsel %vm4751, %v7308, 0
          %v7316 = vsel %vm4751, %v7309, 0
          %v7319 = vsel %vm4979, %v7311, 0
          %7321 = vmatprep.subr.bf16.mxu0 0
          %7322 = vmatpush1.bf16.msra.mxu0 %v7319
          %7323 = vmatprep.subr.bf16.mxu0 0
          %7324 = vmatpush1.bf16.msra.mxu0 0
          %7325 = vmatprep.subr.bf16.mxu0 0
          %7326 = vmatpush1.bf16.msra.mxu0 0
          %7327 = vmatprep.subr.bf16.mxu0 0
          %7328 = vmatpush1.bf16.msra.mxu0 0
          %7329 = vmatprep.subr.bf16.mxu0 0
          %7330 = vmatpush1.bf16.msra.mxu0 0
          %7331 = vmatprep.subr.bf16.mxu0 0
          %7332 = vmatpush1.bf16.msra.mxu0 0
          %7333 = vmatprep.subr.bf16.mxu0 0
          %7334 = vmatpush1.bf16.msra.mxu0 0
          %7335 = vmatprep.subr.bf16.mxu0 0
          %7336 = vmatpush1.bf16.msra.mxu0 0
          %7337 = vmatprep.subr.bf16.mxu0 0
          %7338 = vmatpush1.bf16.msra.mxu0 0
          %7339 = vmatprep.subr.bf16.mxu0 0
          %7340 = vmatpush1.bf16.msra.mxu0 0
          %7341 = vmatprep.subr.bf16.mxu0 0
          %7342 = vmatpush1.bf16.msra.mxu0 0
          %7343 = vmatprep.subr.bf16.mxu0 0
          %7344 = vmatpush1.bf16.msra.mxu0 0
          %7345 = vmatprep.subr.bf16.mxu0 0
          %7346 = vmatpush1.bf16.msra.mxu0 0
          %7347 = vmatprep.subr.bf16.mxu0 0
          %7348 = vmatpush1.bf16.msra.mxu0 0
          %7349 = vmatprep.subr.bf16.mxu0 0
          %7350 = vmatpush1.bf16.msra.mxu0 0
          %7351 = vmatprep.subr.bf16.mxu0 0
          %7352 = vmatpush1.bf16.msra.mxu0 0
          %7353 = vmatprep.mubr.bf16.mxu0 0
          %7354 = vmatmul.mubr.bf16.gmra.mrb[0].mxu0 %v7313
          %v7355 = vpop.f32.mrb[0].mxu0
          %v7356 = vadd.f32 0.0, %v7355
          %v7357 = vpop.f32.mrb[0].mxu0
          %v7358 = vpop.f32.mrb[0].mxu0
          %v7359 = vadd.f32 0.0, %v7358
          %v7360 = vpop.f32.mrb[0].mxu0
          %7361 = vmatprep.mubr.bf16.mxu0 0
          %7362 = vmatmul.mubr.bf16.gmra.mrb[0].mxu0 %v7316
          %v7363 = vpop.f32.mrb[0].mxu0
          %v7364 = vadd.f32 0.0, %v7363
          %v7365 = vpop.f32.mrb[0].mxu0
          %v7366 = vpop.f32.mrb[0].mxu0
          %v7367 = vadd.f32 0.0, %v7366
          %v7368 = vpop.f32.mrb[0].mxu0
          %7369 = vdwg.mxu0
          %v7370 = vadd.f32 %v6654, %v7356
          %v7371 = vadd.f32 %v6655, %v7359
          %v7372 = vadd.f32 %v6656, %v7364
          %v7373 = vadd.f32 %v6657, %v7367
          %v7374 = vld [vmem:[%s1093] sm:$0x1]
          %v7376 = vlaneseq
          %v7377 = vshrl.u32 %v7376, 7
          %v7378 = vsub.s32 0, %v7377
          %v7379 = vrot.slane %v7374, %v7378
          %v7381 = vadd.f32 %v7370, %v7379
          %v7382 = vadd.f32 %v7371, %v7379
          %v7383 = vadd.f32 %v7372, %v7379
          %v7384 = vadd.f32 %v7373, %v7379
          %v7385 = vadd.f32 %v1182, %v7381
          %v7386 = vadd.f32 %v1183, %v7382
          %v7387 = vadd.f32 %v1184, %v7383
          %v7388 = vadd.f32 %v1185, %v7384
          %v7389 = vld [vmem:[%s1100] sm:$0x1]
          %v7390 = vld [vmem:[%s1107] sm:$0x1]
          %v7391 = vsel %vm4533, %v7385, 0.0
          %7392 = vadd.xlane.f32.xlu0 %v7391
          %v7393 = vpop.xlane.xlu0 %7392
          %v7394 = vsel %vm4533, %v7386, 0.0
          %7395 = vadd.xlane.f32.xlu0 %v7394
          %v7396 = vpop.xlane.xlu0 %7395
          %v7397 = vsel %vm4533, %v7387, 0.0
          %7398 = vadd.xlane.f32.xlu0 %v7397
          %v7399 = vpop.xlane.xlu0 %7398
          %v7400 = vsel %vm4533, %v7388, 0.0
          %7401 = vadd.xlane.f32.xlu0 %v7400
          %v7402 = vpop.xlane.xlu0 %7401
          %v7403 = vrcp.pop 32.0
          %v7404 = vmul.f32 %v7393, %v7403
          %v7405 = vmul.f32 %v7396, %v7403
          %v7406 = vmul.f32 %v7399, %v7403
          %v7407 = vmul.f32 %v7402, %v7403
          %v7408 = vsub.f32 %v7385, %v7404
          %v7409 = vsub.f32 %v7386, %v7405
          %v7410 = vsub.f32 %v7387, %v7406
          %v7411 = vsub.f32 %v7388, %v7407
          %v7412 = vmul.f32 %v7408, %v7408
          %v7413 = vmul.f32 %v7409, %v7409
          %v7414 = vmul.f32 %v7410, %v7410
          %v7415 = vmul.f32 %v7411, %v7411
          %v7416 = vsel %vm4533, %v7412, 0.0
          %7417 = vadd.xlane.f32.xlu0 %v7416
          %v7418 = vpop.xlane.xlu0 %7417
          %v7419 = vsel %vm4533, %v7413, 0.0
          %7420 = vadd.xlane.f32.xlu0 %v7419
          %v7421 = vpop.xlane.xlu0 %7420
          %v7422 = vsel %vm4533, %v7414, 0.0
          %7423 = vadd.xlane.f32.xlu0 %v7422
          %v7424 = vpop.xlane.xlu0 %7423
          %v7425 = vsel %vm4533, %v7415, 0.0
          %7426 = vadd.xlane.f32.xlu0 %v7425
          %v7427 = vpop.xlane.xlu0 %7426
          %v7428 = vmul.f32 %v7418, %v7403
          %v7429 = vmul.f32 %v7421, %v7403
          %v7430 = vmul.f32 %v7424, %v7403
          %v7431 = vmul.f32 %v7427, %v7403
          %v7432 = vadd.f32 %v7428, 1e-05
          %v7433 = vadd.f32 %v7429, 1e-05
          %v7434 = vadd.f32 %v7430, 1e-05
          %v7435 = vadd.f32 %v7431, 1e-05
          %v7436 = vrsqrt.pop %v7432
          %v7437 = vrsqrt.pop %v7433
          %v7438 = vrsqrt.pop %v7434
          %v7439 = vrsqrt.pop %v7435
          %v7440 = vmul.f32 %v7408, %v7436
          %v7441 = vmul.f32 %v7409, %v7437
          %v7442 = vmul.f32 %v7410, %v7438
          %v7443 = vmul.f32 %v7411, %v7439
          %v7445 = vlaneseq
          %v7446 = vshrl.u32 %v7445, 7
          %v7447 = vsub.s32 0, %v7446
          %v7448 = vrot.slane %v7389, %v7447
          %v7450 = vmul.f32 %v7440, %v7448
          %v7451 = vmul.f32 %v7441, %v7448
          %v7452 = vmul.f32 %v7442, %v7448
          %v7453 = vmul.f32 %v7443, %v7448
          %v7455 = vlaneseq
          %v7456 = vshrl.u32 %v7455, 7
          %v7457 = vsub.s32 0, %v7456
          %v7458 = vrot.slane %v7390, %v7457
          %v7460 = vadd.f32 %v7450, %v7458
          %v7461 = vadd.f32 %v7451, %v7458
          %v7462 = vadd.f32 %v7452, %v7458
          %v7463 = vadd.f32 %v7453, %v7458
          %v7464 = vpack.c.bf16 %v7461, %v7460
          %v7465 = vpack.c.bf16 %v7463, %v7462
          %v7466 = vld [vmem:[%s1116] sm:$0xf]
          %v7467 = vld [vmem:[%s1116 + $0x4] sm:$0xf]
          %v7468 = vld [vmem:[%s1116 + $0x8] sm:$0xf]
          %v7469 = vld [vmem:[%s1116 + $0xc] sm:$0xf]
          %v7470 = vld [vmem:[%s1123] sm:$0x1]
          %v7472 = vlaneseq
          %v7473 = vshrl.u32 %v7472, 7
          %v7474 = vsub.s32 0, %v7473
          %v7475 = vrot.slane %v7470, %v7474
          %v7481 = vunpack.c.l.b16 %v7466
          %v7482 = vunpack.c.l.b16 %v7467
          %v7483 = vunpack.c.l.b16 %v7468
          %v7484 = vunpack.c.l.b16 %v7469
          %v7485 = vpack.c.b16 %v7482, %v7481
          %v7486 = vpack.c.b16 %v7484, %v7483
          %v7490 = vsel %vm4533, %v7464, 0
          %v7493 = vsel %vm4533, %v7465, 0
          %7495 = vmatprep.subr.bf16.mxu0 0
          %7496 = vmatpush1.bf16.msra.mxu0 %v7485
          %7497 = vmatprep.subr.bf16.mxu0 0
          %7498 = vmatpush1.bf16.msra.mxu0 %v7486
          %7499 = vmatprep.subr.bf16.mxu0 0
          %7500 = vmatpush1.bf16.msra.mxu0 0
          %7501 = vmatprep.subr.bf16.mxu0 0
          %7502 = vmatpush1.bf16.msra.mxu0 0
          %7503 = vmatprep.subr.bf16.mxu0 0
          %7504 = vmatpush1.bf16.msra.mxu0 0
          %7505 = vmatprep.subr.bf16.mxu0 0
          %7506 = vmatpush1.bf16.msra.mxu0 0
          %7507 = vmatprep.subr.bf16.mxu0 0
          %7508 = vmatpush1.bf16.msra.mxu0 0
          %7509 = vmatprep.subr.bf16.mxu0 0
          %7510 = vmatpush1.bf16.msra.mxu0 0
          %7511 = vmatprep.subr.bf16.mxu0 0
          %7512 = vmatpush1.bf16.msra.mxu0 0
          %7513 = vmatprep.subr.bf16.mxu0 0
          %7514 = vmatpush1.bf16.msra.mxu0 0
          %7515 = vmatprep.subr.bf16.mxu0 0
          %7516 = vmatpush1.bf16.msra.mxu0 0
          %7517 = vmatprep.subr.bf16.mxu0 0
          %7518 = vmatpush1.bf16.msra.mxu0 0
          %7519 = vmatprep.subr.bf16.mxu0 0
          %7520 = vmatpush1.bf16.msra.mxu0 0
          %7521 = vmatprep.subr.bf16.mxu0 0
          %7522 = vmatpush1.bf16.msra.mxu0 0
          %7523 = vmatprep.subr.bf16.mxu0 0
          %7524 = vmatpush1.bf16.msra.mxu0 0
          %7525 = vmatprep.subr.bf16.mxu0 0
          %7526 = vmatpush1.bf16.msra.mxu0 0
          %7527 = vmatprep.mubr.bf16.mxu0 0
          %7528 = vmatmul.mubr.bf16.gmra.mrb[0].mxu0 %v7490
          %v7529 = vpop.f32.mrb[0].mxu0
          %v7530 = vadd.f32 %v7475, %v7529
          %v7531 = vpop.f32.mrb[0].mxu0
          %v7532 = vpop.f32.mrb[0].mxu0
          %v7533 = vadd.f32 %v7475, %v7532
          %v7534 = vpop.f32.mrb[0].mxu0
          %7535 = vmatprep.mubr.bf16.mxu0 0
          %7536 = vmatmul.mubr.bf16.gmra.mrb[0].mxu0 %v7493
          %v7537 = vpop.f32.mrb[0].mxu0
          %v7538 = vadd.f32 %v7475, %v7537
          %v7539 = vpop.f32.mrb[0].mxu0
          %v7540 = vpop.f32.mrb[0].mxu0
          %v7541 = vadd.f32 %v7475, %v7540
          %v7542 = vpop.f32.mrb[0].mxu0
          %7543 = vdwg.mxu0
          %v7544 = vmax.f32 %v7530, 0.0
          %v7545 = vmax.f32 %v7533, 0.0
          %v7546 = vmax.f32 %v7538, 0.0
          %v7547 = vmax.f32 %v7541, 0.0
          %v7548 = vpack.c.bf16 %v7545, %v7544
          %v7549 = vpack.c.bf16 %v7547, %v7546
          %v7550 = vld [vmem:[%s1132] sm:$0xf]
          %v7551 = vld [vmem:[%s1132 + $0x4] sm:$0xf]
          %v7552 = vld [vmem:[%s1132 + $0x8] sm:$0xf]
          %v7553 = vld [vmem:[%s1132 + $0xc] sm:$0xf]
          %v7554 = vld [vmem:[%s1132 + $0x10] sm:$0xf]
          %v7555 = vld [vmem:[%s1132 + $0x14] sm:$0xf]
          %v7556 = vld [vmem:[%s1132 + $0x18] sm:$0xf]
          %v7557 = vld [vmem:[%s1132 + $0x1c] sm:$0xf]
          %v7558 = vld [vmem:[%s1139] sm:$0x1]
          %v7560 = vlaneseq
          %v7561 = vshrl.u32 %v7560, 7
          %v7562 = vsub.s32 0, %v7561
          %v7563 = vrot.slane %v7558, %v7562
          %v7573 = vunpack.c.l.b16 %v7550
          %v7574 = vunpack.c.l.b16 %v7551
          %v7575 = vunpack.c.l.b16 %v7552
          %v7576 = vunpack.c.l.b16 %v7553
          %v7577 = vunpack.c.l.b16 %v7554
          %v7578 = vunpack.c.l.b16 %v7555
          %v7579 = vunpack.c.l.b16 %v7556
          %v7580 = vunpack.c.l.b16 %v7557
          %v7581 = vpack.c.b16 %v7574, %v7573
          %v7582 = vpack.c.b16 %v7576, %v7575
          %v7583 = vpack.c.b16 %v7578, %v7577
          %v7584 = vpack.c.b16 %v7580, %v7579
          %vm7589 = vcmask 523264
          %v7591 = vsel %vm7589, %v7548, 0
          %v7594 = vsel %vm7589, %v7549, 0
          %7596 = vmatprep.subr.bf16.mxu0 0
          %7597 = vmatpush1.bf16.msra.mxu0 %v7581
          %7598 = vmatprep.subr.bf16.mxu0 0
          %7599 = vmatpush1.bf16.msra.mxu0 %v7582
          %7600 = vmatprep.subr.bf16.mxu0 0
          %7601 = vmatpush1.bf16.msra.mxu0 %v7583
          %7602 = vmatprep.subr.bf16.mxu0 0
          %7603 = vmatpush1.bf16.msra.mxu0 %v7584
          %7604 = vmatprep.subr.bf16.mxu0 0
          %7605 = vmatpush1.bf16.msra.mxu0 0
          %7606 = vmatprep.subr.bf16.mxu0 0
          %7607 = vmatpush1.bf16.msra.mxu0 0
          %7608 = vmatprep.subr.bf16.mxu0 0
          %7609 = vmatpush1.bf16.msra.mxu0 0
          %7610 = vmatprep.subr.bf16.mxu0 0
          %7611 = vmatpush1.bf16.msra.mxu0 0
          %7612 = vmatprep.subr.bf16.mxu0 0
          %7613 = vmatpush1.bf16.msra.mxu0 0
          %7614 = vmatprep.subr.bf16.mxu0 0
          %7615 = vmatpush1.bf16.msra.mxu0 0
          %7616 = vmatprep.subr.bf16.mxu0 0
          %7617 = vmatpush1.bf16.msra.mxu0 0
          %7618 = vmatprep.subr.bf16.mxu0 0
          %7619 = vmatpush1.bf16.msra.mxu0 0
          %7620 = vmatprep.subr.bf16.mxu0 0
          %7621 = vmatpush1.bf16.msra.mxu0 0
          %7622 = vmatprep.subr.bf16.mxu0 0
          %7623 = vmatpush1.bf16.msra.mxu0 0
          %7624 = vmatprep.subr.bf16.mxu0 0
          %7625 = vmatpush1.bf16.msra.mxu0 0
          %7626 = vmatprep.subr.bf16.mxu0 0
          %7627 = vmatpush1.bf16.msra.mxu0 0
          %7628 = vmatprep.mubr.bf16.mxu0 0
          %7629 = vmatmul.mubr.bf16.gmra.mrb[0].mxu0 %v7591
          %v7630 = vpop.f32.mrb[0].mxu0
          %v7631 = vadd.f32 %v7563, %v7630
          %v7632 = vpop.f32.mrb[0].mxu0
          %v7633 = vpop.f32.mrb[0].mxu0
          %v7634 = vadd.f32 %v7563, %v7633
          %v7635 = vpop.f32.mrb[0].mxu0
          %7636 = vmatprep.mubr.bf16.mxu0 0
          %7637 = vmatmul.mubr.bf16.gmra.mrb[0].mxu0 %v7594
          %v7638 = vpop.f32.mrb[0].mxu0
          %v7639 = vadd.f32 %v7563, %v7638
          %v7640 = vpop.f32.mrb[0].mxu0
          %v7641 = vpop.f32.mrb[0].mxu0
          %v7642 = vadd.f32 %v7563, %v7641
          %v7643 = vpop.f32.mrb[0].mxu0
          %7644 = vdwg.mxu0
          %v7645 = vadd.f32 %v7460, %v7631
          %v7646 = vadd.f32 %v7461, %v7634
          %v7647 = vadd.f32 %v7462, %v7639
          %v7648 = vadd.f32 %v7463, %v7642
          %v7649 = vld [vmem:[%s1146] sm:$0x1]
          %v7650 = vld [vmem:[%s1153] sm:$0x1]
          %v7651 = vsel %vm4533, %v7645, 0.0
          %7652 = vadd.xlane.f32.xlu0 %v7651
          %v7653 = vpop.xlane.xlu0 %7652
          %v7654 = vsel %vm4533, %v7646, 0.0
          %7655 = vadd.xlane.f32.xlu0 %v7654
          %v7656 = vpop.xlane.xlu0 %7655
          %v7657 = vsel %vm4533, %v7647, 0.0
          %7658 = vadd.xlane.f32.xlu0 %v7657
          %v7659 = vpop.xlane.xlu0 %7658
          %v7660 = vsel %vm4533, %v7648, 0.0
          %7661 = vadd.xlane.f32.xlu0 %v7660
          %v7662 = vpop.xlane.xlu0 %7661
          %v7663 = vmul.f32 %v7653, %v7403
          %v7664 = vmul.f32 %v7656, %v7403
          %v7665 = vmul.f32 %v7659, %v7403
          %v7666 = vmul.f32 %v7662, %v7403
          %v7667 = vsub.f32 %v7645, %v7663
          %v7668 = vsub.f32 %v7646, %v7664
          %v7669 = vsub.f32 %v7647, %v7665
          %v7670 = vsub.f32 %v7648, %v7666
          %v7671 = vmul.f32 %v7667, %v7667
          %v7672 = vmul.f32 %v7668, %v7668
          %v7673 = vmul.f32 %v7669, %v7669
          %v7674 = vmul.f32 %v7670, %v7670
          %v7675 = vsel %vm4533, %v7671, 0.0
          %7676 = vadd.xlane.f32.xlu0 %v7675
          %v7677 = vpop.xlane.xlu0 %7676
          %v7678 = vsel %vm4533, %v7672, 0.0
          %7679 = vadd.xlane.f32.xlu0 %v7678
          %v7680 = vpop.xlane.xlu0 %7679
          %v7681 = vsel %vm4533, %v7673, 0.0
          %7682 = vadd.xlane.f32.xlu0 %v7681
          %v7683 = vpop.xlane.xlu0 %7682
          %v7684 = vsel %vm4533, %v7674, 0.0
          %7685 = vadd.xlane.f32.xlu0 %v7684
          %v7686 = vpop.xlane.xlu0 %7685
          %v7687 = vmul.f32 %v7677, %v7403
          %v7688 = vmul.f32 %v7680, %v7403
          %v7689 = vmul.f32 %v7683, %v7403
          %v7690 = vmul.f32 %v7686, %v7403
          %v7691 = vadd.f32 %v7687, 1e-05
          %v7692 = vadd.f32 %v7688, 1e-05
          %v7693 = vadd.f32 %v7689, 1e-05
          %v7694 = vadd.f32 %v7690, 1e-05
          %v7695 = vrsqrt.pop %v7691
          %v7696 = vrsqrt.pop %v7692
          %v7697 = vrsqrt.pop %v7693
          %v7698 = vrsqrt.pop %v7694
          %v7699 = vmul.f32 %v7667, %v7695
          %v7700 = vmul.f32 %v7668, %v7696
          %v7701 = vmul.f32 %v7669, %v7697
          %v7702 = vmul.f32 %v7670, %v7698
          %v7704 = vlaneseq
          %v7705 = vshrl.u32 %v7704, 7
          %v7706 = vsub.s32 0, %v7705
          %v7707 = vrot.slane %v7649, %v7706
          %v7709 = vmul.f32 %v7699, %v7707
          %v7710 = vmul.f32 %v7700, %v7707
          %v7711 = vmul.f32 %v7701, %v7707
          %v7712 = vmul.f32 %v7702, %v7707
          %v7714 = vlaneseq
          %v7715 = vshrl.u32 %v7714, 7
          %v7716 = vsub.s32 0, %v7715
          %v7717 = vrot.slane %v7650, %v7716
          %v7719 = vadd.f32 %v7709, %v7717
          %v7720 = vadd.f32 %v7710, %v7717
          %v7721 = vadd.f32 %v7711, %v7717
          %v7722 = vadd.f32 %v7712, %v7717
          %v7723 = vld [vmem:[#allocation2] sm:$0xff]
          %v7724 = vld [vmem:[#allocation2 + $0x8] sm:$0xff]
          %v7725 = vld [vmem:[#allocation2 + $0x10] sm:$0xff]
          %v7726 = vld [vmem:[#allocation2 + $0x18] sm:$0xff]
          %7727 = vst.msk [vmem:[#allocation3] sm:$0xff] %vm4533, %v7723
          %7728 = vst.msk [vmem:[#allocation3 + $0x8] sm:$0xff] %vm4533, %v7724
          %7729 = vst.msk [vmem:[#allocation3 + $0x10] sm:$0xff] %vm4533, %v7725
          %7730 = vst.msk [vmem:[#allocation3 + $0x18] sm:$0xff] %vm4533, %v7726
          %7731 = vst.msk [vmem:[#allocation5] sm:$0xff] %vm4533, %v7719
          %7732 = vst.msk [vmem:[#allocation5 + $0x8] sm:$0xff] %vm4533, %v7720
          %7733 = vst.msk [vmem:[#allocation5 + $0x10] sm:$0xff] %vm4533, %v7721
          %7734 = vst.msk [vmem:[#allocation5 + $0x18] sm:$0xff] %vm4533, %v7722
          %p7735 = scmp.eq.s32.totalorder %s40, 1
          // Predicated region
          $region117: #{tpu_custom_call.1} parent=115 // pred_check
            %p7736 = pneg %p7735
          $region118: #{tpu_custom_call.1} parent=115 // pred_check_branch
            %7738 = sbr.rel (%p7736) target = $region120
          $region119: #{tpu_custom_call.1} parent=115 // pred_region
            %v7739 = vld [vmem:[%s20] sm:$0xf]
            %v7740 = vld [vmem:[#allocation2] sm:$0xff]
            %v7741 = vld [vmem:[#allocation2 + $0x8] sm:$0xff]
            %v7742 = vld [vmem:[#allocation2 + $0x10] sm:$0xff]
            %v7743 = vld [vmem:[#allocation2 + $0x18] sm:$0xff]
            %v7744 = vsel %vm4533, %v7740, 0.0
            %7745 = vadd.xlane.f32.xlu0 %v7744
            %v7746 = vpop.xlane.xlu0 %7745
            %v7747 = vsel %vm4533, %v7741, 0.0
            %7748 = vadd.xlane.f32.xlu0 %v7747
            %v7749 = vpop.xlane.xlu0 %7748
            %v7750 = vsel %vm4533, %v7742, 0.0
            %7751 = vadd.xlane.f32.xlu0 %v7750
            %v7752 = vpop.xlane.xlu0 %7751
            %v7753 = vsel %vm4533, %v7743, 0.0
            %7754 = vadd.xlane.f32.xlu0 %v7753
            %v7755 = vpop.xlane.xlu0 %7754
            %v7756 = vmul.f32 %v7746, %v7403
            %v7757 = vmul.f32 %v7749, %v7403
            %v7758 = vmul.f32 %v7752, %v7403
            %v7759 = vmul.f32 %v7755, %v7403
            %v7760 = vsub.f32 %v7740, %v7756
            %v7761 = vsub.f32 %v7741, %v7757
            %v7762 = vsub.f32 %v7742, %v7758
            %v7763 = vsub.f32 %v7743, %v7759
            %v7764 = vmul.f32 %v7760, %v7760
            %v7765 = vmul.f32 %v7761, %v7761
            %v7766 = vmul.f32 %v7762, %v7762
            %v7767 = vmul.f32 %v7763, %v7763
            %v7768 = vsel %vm4533, %v7764, 0.0
            %7769 = vadd.xlane.f32.xlu0 %v7768
            %v7770 = vpop.xlane.xlu0 %7769
            %v7771 = vsel %vm4533, %v7765, 0.0
            %7772 = vadd.xlane.f32.xlu0 %v7771
            %v7773 = vpop.xlane.xlu0 %7772
            %v7774 = vsel %vm4533, %v7766, 0.0
            %7775 = vadd.xlane.f32.xlu0 %v7774
            %v7776 = vpop.xlane.xlu0 %7775
            %v7777 = vsel %vm4533, %v7767, 0.0
            %7778 = vadd.xlane.f32.xlu0 %v7777
            %v7779 = vpop.xlane.xlu0 %7778
            %v7780 = vmul.f32 %v7770, %v7403
            %v7781 = vmul.f32 %v7773, %v7403
            %v7782 = vmul.f32 %v7776, %v7403
            %v7783 = vmul.f32 %v7779, %v7403
            %v7784 = vadd.f32 %v7780, 1e-05
            %v7785 = vadd.f32 %v7781, 1e-05
            %v7786 = vadd.f32 %v7782, 1e-05
            %v7787 = vadd.f32 %v7783, 1e-05
            %v7788 = vrsqrt.pop %v7784
            %v7789 = vrsqrt.pop %v7785
            %v7790 = vrsqrt.pop %v7786
            %v7791 = vrsqrt.pop %v7787
            %v7792 = vmul.f32 %v7760, %v7788
            %v7793 = vmul.f32 %v7761, %v7789
            %v7794 = vmul.f32 %v7762, %v7790
            %v7795 = vmul.f32 %v7763, %v7791
            %v7796 = vlaneseq
            %v7797 = vshrl.u32 %v7796, 7
            %v7798 = vsub.s32 0, %v7797
            %v7799 = vrot.slane %v7739, %v7798
            %v7800 = vmul.f32 %v7792, %v7799
            %v7801 = vmul.f32 %v7793, %v7799
            %v7802 = vmul.f32 %v7794, %v7799
            %v7803 = vmul.f32 %v7795, %v7799
            %v7804 = vlaneseq
            %v7805 = vshrl.u32 %v7804, 7
            %v7806 = vsub.s32 1, %v7805
            %v7807 = vrot.slane %v7739, %v7806
            %v7808 = vadd.f32 %v7800, %v7807
            %v7809 = vadd.f32 %v7801, %v7807
            %v7810 = vadd.f32 %v7802, %v7807
            %v7811 = vadd.f32 %v7803, %v7807
            %7812 = vst.msk [vmem:[#allocation3] sm:$0xff] %vm4533, %v7808
            %7813 = vst.msk [vmem:[#allocation3 + $0x8] sm:$0xff] %vm4533, %v7809
            %7814 = vst.msk [vmem:[#allocation3 + $0x10] sm:$0xff] %vm4533, %v7810
            %7815 = vst.msk [vmem:[#allocation3 + $0x18] sm:$0xff] %vm4533, %v7811
            %v7816 = vsel %vm4533, %v7719, 0.0
            %7817 = vadd.xlane.f32.xlu0 %v7816
            %v7818 = vpop.xlane.xlu0 %7817
            %v7819 = vsel %vm4533, %v7720, 0.0
            %7820 = vadd.xlane.f32.xlu0 %v7819
            %v7821 = vpop.xlane.xlu0 %7820
            %v7822 = vsel %vm4533, %v7721, 0.0
            %7823 = vadd.xlane.f32.xlu0 %v7822
            %v7824 = vpop.xlane.xlu0 %7823
            %v7825 = vsel %vm4533, %v7722, 0.0
            %7826 = vadd.xlane.f32.xlu0 %v7825
            %v7827 = vpop.xlane.xlu0 %7826
            %v7828 = vmul.f32 %v7818, %v7403
            %v7829 = vmul.f32 %v7821, %v7403
            %v7830 = vmul.f32 %v7824, %v7403
            %v7831 = vmul.f32 %v7827, %v7403
            %v7832 = vsub.f32 %v7719, %v7828
            %v7833 = vsub.f32 %v7720, %v7829
            %v7834 = vsub.f32 %v7721, %v7830
            %v7835 = vsub.f32 %v7722, %v7831
            %v7836 = vmul.f32 %v7832, %v7832
            %v7837 = vmul.f32 %v7833, %v7833
            %v7838 = vmul.f32 %v7834, %v7834
            %v7839 = vmul.f32 %v7835, %v7835
            %v7840 = vsel %vm4533, %v7836, 0.0
            %7841 = vadd.xlane.f32.xlu0 %v7840
            %v7842 = vpop.xlane.xlu0 %7841
            %v7843 = vsel %vm4533, %v7837, 0.0
            %7844 = vadd.xlane.f32.xlu0 %v7843
            %v7845 = vpop.xlane.xlu0 %7844
            %v7846 = vsel %vm4533, %v7838, 0.0
            %7847 = vadd.xlane.f32.xlu0 %v7846
            %v7848 = vpop.xlane.xlu0 %7847
            %v7849 = vsel %vm4533, %v7839, 0.0
            %7850 = vadd.xlane.f32.xlu0 %v7849
            %v7851 = vpop.xlane.xlu0 %7850
            %v7852 = vmul.f32 %v7842, %v7403
            %v7853 = vmul.f32 %v7845, %v7403
            %v7854 = vmul.f32 %v7848, %v7403
            %v7855 = vmul.f32 %v7851, %v7403
            %v7856 = vadd.f32 %v7852, 1e-05
            %v7857 = vadd.f32 %v7853, 1e-05
            %v7858 = vadd.f32 %v7854, 1e-05
            %v7859 = vadd.f32 %v7855, 1e-05
            %v7860 = vrsqrt.pop %v7856
            %v7861 = vrsqrt.pop %v7857
            %v7862 = vrsqrt.pop %v7858
            %v7863 = vrsqrt.pop %v7859
            %v7864 = vmul.f32 %v7832, %v7860
            %v7865 = vmul.f32 %v7833, %v7861
            %v7866 = vmul.f32 %v7834, %v7862
            %v7867 = vmul.f32 %v7835, %v7863
            %v7868 = vlaneseq
            %v7869 = vshrl.u32 %v7868, 7
            %v7870 = vsub.s32 2, %v7869
            %v7871 = vrot.slane %v7739, %v7870
            %v7872 = vmul.f32 %v7864, %v7871
            %v7873 = vmul.f32 %v7865, %v7871
            %v7874 = vmul.f32 %v7866, %v7871
            %v7875 = vmul.f32 %v7867, %v7871
            %v7876 = vlaneseq
            %v7877 = vshrl.u32 %v7876, 7
            %v7878 = vsub.s32 3, %v7877
            %v7879 = vrot.slane %v7739, %v7878
            %v7880 = vadd.f32 %v7872, %v7879
            %v7881 = vadd.f32 %v7873, %v7879
            %v7882 = vadd.f32 %v7874, %v7879
            %v7883 = vadd.f32 %v7875, %v7879
            %7884 = vst.msk [vmem:[#allocation5] sm:$0xff] %vm4533, %v7880
            %7885 = vst.msk [vmem:[#allocation5 + $0x8] sm:$0xff] %vm4533, %v7881
            %7886 = vst.msk [vmem:[#allocation5 + $0x10] sm:$0xff] %vm4533, %v7882
            %7887 = vst.msk [vmem:[#allocation5 + $0x18] sm:$0xff] %vm4533, %v7883
          $region120: #{tpu_custom_call.1} parent=115 // pred_fallthru
            _
        $region116: #{tpu_custom_call.1} parent=103 // pred_fallthru
          _
        // Predicated region
        $region121: #{tpu_custom_call.1} parent=103 // pred_check
          %p7888 = pneg %p614
        $region122: #{tpu_custom_call.1} parent=103 // pred_check_branch
          %7890 = sbr.rel (%p7888) target = $region124
        $region123: #{tpu_custom_call.1} parent=103 // pred_region
          %s7892 = ssub.s32 512, 512
          %7893 = vsyncadd [#allocation4], %s7892
          %s7894 = sshll.u32 [#allocation3], 4
          %s7895 = int_to_ptr.vmem [resolvable:$true] %s7894
          %7900 = dma.vmem_to_hbm [thread:$0]  %s7895, 512, %s21, [#allocation4], 128, 128, 8
        $region124: #{tpu_custom_call.1} parent=103 // pred_fallthru
          _
        // Predicated region
        $region125: #{tpu_custom_call.1} parent=103 // pred_check
          %p7901 = pneg %p635
        $region126: #{tpu_custom_call.1} parent=103 // pred_check_branch
          %7903 = sbr.rel (%p7901) target = $region128
        $region127: #{tpu_custom_call.1} parent=103 // pred_region
          %s7905 = ssub.s32 512, 512
          %7906 = vsyncadd [#allocation6], %s7905
          %s7907 = sshll.u32 [#allocation5], 4
          %s7908 = int_to_ptr.vmem [resolvable:$true] %s7907
          %7913 = dma.vmem_to_hbm [thread:$0]  %s7908, 512, %s22, [#allocation6], 128, 128, 8
        $region128: #{tpu_custom_call.1} parent=103 // pred_fallthru
          _
        // Predicated region
        $region129: #{tpu_custom_call.1} parent=103 // pred_check
          %p7914 = pneg %p614
        $region130: #{tpu_custom_call.1} parent=103 // pred_check_branch
          %7916 = sbr.rel (%p7914) target = $region132
        $region131: #{tpu_custom_call.1} parent=103 // pred_region
          %7917 = dma.done [#allocation4], 512
        $region132: #{tpu_custom_call.1} parent=103 // pred_fallthru
          _
        // Predicated region
        $region133: #{tpu_custom_call.1} parent=103 // pred_check
          %p7918 = pneg %p635
        $region134: #{tpu_custom_call.1} parent=103 // pred_check_branch
          %7920 = sbr.rel (%p7918) target = $region136
        $region135: #{tpu_custom_call.1} parent=103 // pred_region
          %7921 = dma.done [#allocation6], 512
        $region136: #{tpu_custom_call.1} parent=103 // pred_fallthru
          _
      $region104: #{tpu_custom_call.1} parent=5 // pred_fallthru
        _
      %p7922 = scmp.le.s32.totalorder 2, %s31
      // Predicated region
      $region137: #{tpu_custom_call.1} parent=5 // pred_check
        %p7923 = pneg %p7922
      $region138: #{tpu_custom_call.1} parent=5 // pred_check_branch
        %7925 = sbr.rel (%p7923) target = $region140
      $region139: #{tpu_custom_call.1} parent=5 // pred_region
        %s7926 = ssub.s32 %s31, 2
      $region140: #{tpu_custom_call.1} parent=5 // pred_fallthru
        _
    $region6: #{tpu_custom_call.1} parent=1 // loop_footer
      %s35 = sadd.s32 1, %s31
    $region7: #{tpu_custom_call.1} parent=1 // loop_footer_branch
      %30 = sbr.rel target = $region3
    $region8: #{tpu_custom_call.1} parent=1 // loop_exit
      _
    %7927 = vsyncpa [#allocation4], 1
    %s7928 = scalar_lea.sflag [#allocation4], 1
    %7929 = vsyncpa %s7928, 1
    %7930 = vsyncpa [#allocation6], 1

</llo_original>
